<compile_context>
chip_gen: v6e
topology: v6e:2x2x1
jax: 0.10.0
libtpu: 0.0.40
codegen_flags: <defaults>
</compile_context>

<pallas_src>
import jax
import jax.numpy as jnp
import numpy as np
from jax.experimental import pallas as pl
from jax.experimental.pallas import tpu as pltpu

HDIM = 128   # latent dim
K = 5        # conv kernel size
YPAD = 16    # one-hot label dim padded 10 -> 16


def _rup8(v):
    return ((v + 7) // 8) * 8


# ---------------------------------------------------------------------------
# Fused forward kernel (grid=(1,), everything VMEM resident)
# ---------------------------------------------------------------------------
def _make_kernel(n):
    nhop = {1: _rup8(n * 14), 2: _rup8(n * 7), 3: _rup8(n * 14), 4: _rup8(n * 28)}

    def conv_block(a_bf, rs_ref, m_ref, b_ref, nho, nho_p, act, m_copy=None):
        # a_bf: (rows_in, Wi*Ci) bf16 activations
        # rs  : (5*nho_p, rows_in) bf16 0/1 row-gather (stride/pad along H)
        # m   : (5*Wi*Ci, Wo*Co) bf16 kh-stacked banded weights (taps along W)
        # b   : (1, Wo*Co) f32 bias row
        ball = jnp.dot(rs_ref[...], a_bf,
                       preferred_element_type=jnp.float32).astype(jnp.bfloat16)
        g = jnp.concatenate(
            [ball[kh * nho_p: kh * nho_p + nho, :] for kh in range(K)], axis=1)
        if m_copy is not None:        # weight DMA only has to land here
            m_copy.wait()
        o = jnp.dot(g, m_ref[...], preferred_element_type=jnp.float32) + b_ref[...]
        if act == "leaky_relu":       # nn.LeakyReLU(negative_slope=0.2)
            return jnp.where(o > 0, o, 0.2 * o)
        if act == "relu":
            return jnp.maximum(o, 0.0)
        return jnp.tanh(o)

    def kernel(x_ref, y_ref, eps_ref,
               rs1_ref, m1_ref, b1_ref, rs2_ref, b2_ref, bms_ref, bfc_ref,
               rs3_ref, b3_ref, rs4_ref, b4_ref,
               m2_hbm, wms_hbm, wfc_hbm, m3_hbm, m4_hbm,
               rec_ref, mu_ref, logvar_ref,
               m2_v, wms_v, wfc_v, m3_v, m4_v, a3_ref, sem):
        # ---- kick off DMAs of the big, late-used weights (overlap encoder) --
        cp_m2 = pltpu.make_async_copy(m2_hbm, m2_v, sem.at[0]); cp_m2.start()
        cp_wms = pltpu.make_async_copy(wms_hbm, wms_v, sem.at[1]); cp_wms.start()
        cp_wfc = pltpu.make_async_copy(wfc_hbm, wfc_v, sem.at[2]); cp_wfc.start()
        cp_m3 = pltpu.make_async_copy(m3_hbm, m3_v, sem.at[3]); cp_m3.start()
        cp_m4 = pltpu.make_async_copy(m4_hbm, m4_v, sem.at[4]); cp_m4.start()

        y_bf = y_ref[...]                                     # (n, 16) bf16 one-hot

        # ---- encoder --------------------------------------------------------
        h1 = conv_block(x_ref[...].astype(jnp.bfloat16), rs1_ref, m1_ref, b1_ref,
                        n * 14, nhop[1], "leaky_relu")          # (n*14, 14*16)
        h2 = conv_block(h1.astype(jnp.bfloat16), rs2_ref, m2_v, b2_ref,
                        n * 7, nhop[2], "leaky_relu",
                        m_copy=cp_m2)                           # (n*7, 7*32) h-major rows

        # ---- flatten + fused mean/std head (single dot over [feat, y]) ------
        h2_bf = h2.astype(jnp.bfloat16)
        zin = jnp.concatenate(
            [h2_bf[h * n:(h + 1) * n, :] for h in range(7)] + [y_bf], axis=1)  # (n,1584)
        cp_wms.wait()
        ms = jnp.dot(zin, wms_v[...],
                     preferred_element_type=jnp.float32) + bms_ref[...]        # (n, 256)
        mu = ms[:, :HDIM]
        logvar = ms[:, HDIM:]

        # ---- reparametrize (EUP exp) -----------------------------------------
        z = eps_ref[...] * jnp.exp(0.5 * logvar) + mu                           # (n, 128)

        # ---- fc + ReLU (single dot over [z, y]) ------------------------------
        zy = jnp.concatenate([z.astype(jnp.bfloat16), y_bf], axis=1)            # (n, 144)
        cp_wfc.wait()
        t = jnp.dot(zy, wfc_v[...],
                    preferred_element_type=jnp.float32) + bfc_ref[...]          # (n, 1568)
        t = jnp.maximum(t, 0.0)

        # ---- unflatten (n, 7*224) -> (7*n, 224) via direct scratch stores ----
        for h in range(7):
            a3_ref[pl.ds(h * n, n), :] = t[:, h * 224:(h + 1) * 224]

        # ---- decoder (sub-pixel transposed convs, no inserted zeros) ---------
        d1 = conv_block(a3_ref[...].astype(jnp.bfloat16), rs3_ref, m3_v, b3_ref,
                        n * 14, nhop[3], "relu", m_copy=cp_m3)   # (n*14, 14*16)
        d2 = conv_block(d1.astype(jnp.bfloat16), rs4_ref, m4_v, b4_ref,
                        n * 28, nhop[4], "tanh", m_copy=cp_m4)   # (n*28, 28)

        rec_ref[...] = d2
        mu_ref[...] = mu
        logvar_ref[...] = logvar

    return kernel


def _fused_call(packed, x2d, y16, eps):
    n = eps.shape[0]
    kernel = _make_kernel(n)

    auto_ins = [x2d, y16, eps,
                packed["rs1"], packed["m1"], packed["b1"],
                packed["rs2"], packed["b2"], packed["bms"], packed["bfc"],
                packed["rs3"], packed["b3"], packed["rs4"], packed["b4"]]
    hbm_ins = [packed["m2"], packed["wms"], packed["wfczy"],
               packed["m3"], packed["m4"]]

    in_specs = ([pl.BlockSpec(a.shape, lambda i: (0, 0)) for a in auto_ins]
                + [pl.BlockSpec(memory_space=pl.ANY)] * len(hbm_ins))

    out_shape = (jax.ShapeDtypeStruct((n * 28, 28), jnp.float32),
                 jax.ShapeDtypeStruct((n, HDIM), jnp.float32),
                 jax.ShapeDtypeStruct((n, HDIM), jnp.float32))
    out_specs = (pl.BlockSpec((n * 28, 28), lambda i: (0, 0)),
                 pl.BlockSpec((n, HDIM), lambda i: (0, 0)),
                 pl.BlockSpec((n, HDIM), lambda i: (0, 0)))

    scratch_shapes = [
        pltpu.VMEM(packed["m2"].shape, jnp.bfloat16),
        pltpu.VMEM(packed["wms"].shape, jnp.bfloat16),
        pltpu.VMEM(packed["wfczy"].shape, jnp.bfloat16),
        pltpu.VMEM(packed["m3"].shape, jnp.bfloat16),
        pltpu.VMEM(packed["m4"].shape, jnp.bfloat16),
        pltpu.VMEM((n * 7, 224), jnp.float32),       # unflatten buffer
        pltpu.SemaphoreType.DMA((5,)),
    ]

    return pl.pallas_call(
        kernel,
        out_shape=out_shape,
        grid=(1,),
        in_specs=in_specs,
        out_specs=out_specs,
        scratch_shapes=scratch_shapes,
        compiler_params=pltpu.CompilerParams(
            dimension_semantics=("arbitrary",),
            vmem_limit_bytes=32 * 1024 * 1024),
    )(*(auto_ins + hbm_ins))


# ---------------------------------------------------------------------------
# One-time weight packing (plain JAX / numpy, outside the kernel)
# ---------------------------------------------------------------------------
def pack_params(p, n):
    """Packs PyTorch-layout params into the constants the fused kernel uses:
    bf16 0/1 row-gather matrices, kh-stacked banded conv weights, and the
    reordered / label-padded linear weights.  Batch size n is baked in."""

    def rs_conv(hi, ho, in_row, out_row):      # Conv2d stride 2, pad 2
        nho_p = _rup8(n * ho)
        rs = np.zeros((K * nho_p, n * hi), np.float32)
        for kh in range(K):
            for b in range(n):
                for oh in range(ho):
                    ih = 2 * oh + kh - 2
                    if 0 <= ih < hi:
                        rs[kh * nho_p + out_row(b, oh), in_row(b, ih)] = 1.0
        return jnp.asarray(rs, jnp.bfloat16)

    def rs_deconv(hi, ho, in_row, out_row):    # ConvT stride 2, pad 2, out_pad 1
        nho_p = _rup8(n * ho)
        rs = np.zeros((K * nho_p, n * hi), np.float32)
        for kh in range(K):
            for b in range(n):
                for oh in range(ho):
                    num = oh + 2 - kh
                    if num % 2 == 0 and 0 <= num // 2 < hi:
                        rs[kh * nho_p + out_row(b, oh), in_row(b, num // 2)] = 1.0
        return jnp.asarray(rs, jnp.bfloat16)

    def selw_conv(wi, wo):
        s = np.zeros((K, wi, wo), np.float32)
        for kw in range(K):
            for ow in range(wo):
                iw = 2 * ow + kw - 2
                if 0 <= iw < wi:
                    s[kw, iw, ow] = 1.0
        return jnp.asarray(s)

    def selw_deconv(wi, wo):
        s = np.zeros((K, wi, wo), np.float32)
        for kw in range(K):
            for iw in range(wi):
                ow = 2 * iw + kw - 2
                if 0 <= ow < wo:
                    s[kw, iw, ow] = 1.0
        return jnp.asarray(s)

    def conv_m(w, wi, wo):                     # w: (Co, Ci, K, K) -> (5*wi*ci, wo*co)
        wperm = jnp.transpose(w, (2, 3, 1, 0))            # (kh, kw, ci, co)
        ci, co = wperm.shape[2], wperm.shape[3]
        m = jnp.einsum("kxo,hkcd->hxcod", selw_conv(wi, wo), wperm)
        return m.reshape(K * wi * ci, wo * co).astype(jnp.bfloat16)

    def deconv_m(w, wi, wo):                   # w: (Ci, Co, K, K) -> (5*wi*ci, wo*co)
        wperm = jnp.transpose(w, (2, 3, 0, 1))            # (kh, kw, ci, co)
        ci, co = wperm.shape[2], wperm.shape[3]
        m = jnp.einsum("kxo,hkcd->hxcod", selw_deconv(wi, wo), wperm)
        return m.reshape(K * wi * ci, wo * co).astype(jnp.bfloat16)

    # row-order helpers (b-major vs h-major activation row layouts)
    def bmaj(H):
        return lambda b, h: b * H + h

    def hmaj(b, h):
        return h * n + b

    # linear weights: reorder PyTorch (c,h,w)-flat indexing to kernel (h,w,c)
    def rows_chw_to_hwc(w):                    # (1568, D)
        return w.reshape(32, 7, 7, -1).transpose(1, 2, 0, 3).reshape(7 * 7 * 32, -1)

    def cols_chw_to_hwc(w):                    # (D, 1568)
        return w.reshape(-1, 32, 7, 7).transpose(0, 2, 3, 1).reshape(-1, 7 * 7 * 32)

    wms_hwc = jnp.concatenate([rows_chw_to_hwc(p["mean_w"][:1568]),
                               rows_chw_to_hwc(p["std_w"][:1568])], axis=1)  # (1568,256)
    wms_y = jnp.concatenate([p["mean_w"][1568:], p["std_w"][1568:]], axis=1)  # (10, 256)
    wms_y = jnp.pad(wms_y, ((0, YPAD - 10), (0, 0)))                          # (16, 256)
    wms = jnp.concatenate([wms_hwc, wms_y], axis=0).astype(jnp.bfloat16)      # (1584,256)
    bms = jnp.concatenate([p["mean_b"], p["std_b"]])[None, :]                 # (1, 256)

    fcw = cols_chw_to_hwc(p["fc_w"])                                          # (138,1568)
    wfczy = jnp.concatenate(
        [fcw[:HDIM], jnp.pad(fcw[HDIM:], ((0, YPAD - 10), (0, 0)))],
        axis=0).astype(jnp.bfloat16)                                          # (144,1568)
    bfc = cols_chw_to_hwc(p["fc_b"][None, :])                                 # (1, 1568)

    return dict(
        rs1=rs_conv(28, 14, bmaj(28), bmaj(14)),
        m1=conv_m(p["enc1_w"], 28, 14),
        b1=jnp.tile(p["enc1_b"], 14)[None, :],
        rs2=rs_conv(14, 7, bmaj(14), hmaj),          # h-major output rows -> flatten
        m2=conv_m(p["enc2_w"], 14, 7),
        b2=jnp.tile(p["enc2_b"], 7)[None, :],
        wms=wms, bms=bms, wfczy=wfczy, bfc=bfc,
        rs3=rs_deconv(7, 14, hmaj, bmaj(14)),        # h-major input rows (unflatten buf)
        m3=deconv_m(p["dec1_w"], 7, 14),
        b3=jnp.tile(p["dec1_b"], 14)[None, :],
        rs4=rs_deconv(14, 28, bmaj(14), bmaj(28)),
        m4=deconv_m(p["dec2_w"], 14, 28),
        b4=jnp.tile(p["dec2_b"], 28)[None, :],
    )


# ---------------------------------------------------------------------------
# Parameters (deterministic synthetic init; weights stored (in_dim, out_dim))
# ---------------------------------------------------------------------------
def init_params(key):
    keys = jax.random.split(key, 16)
    s = 0.05

    def nrm(k, shape):
        return jax.random.normal(k, shape, jnp.float32) * s

    return {
        "enc1_w": nrm(keys[0], (16, 1, 5, 5)),   "enc1_b": nrm(keys[1], (16,)),
        "enc2_w": nrm(keys[2], (32, 16, 5, 5)),  "enc2_b": nrm(keys[3], (32,)),
        "mean_w": nrm(keys[4], (7 * 7 * 32 + 10, HDIM)), "mean_b": nrm(keys[5], (HDIM,)),
        "std_w":  nrm(keys[6], (7 * 7 * 32 + 10, HDIM)), "std_b":  nrm(keys[7], (HDIM,)),
        "fc_w":   nrm(keys[8], (HDIM + 10, 7 * 7 * 32)), "fc_b":   nrm(keys[9], (7 * 7 * 32,)),
        "dec1_w": nrm(keys[10], (32, 16, 5, 5)), "dec1_b": nrm(keys[11], (16,)),
        "dec2_w": nrm(keys[12], (16, 1, 5, 5)),  "dec2_b": nrm(keys[13], (1,)),
    }


# ---------------------------------------------------------------------------
# Forward pass (mirrors autoencoder.forward; eps supplied deterministically)
# ---------------------------------------------------------------------------
def autoencoder_forward(packed, x, y, eps):
    n = x.shape[0]
    if packed["rs1"].shape[1] != n * 28:
        raise ValueError("pack_params batch size does not match input batch size")
    x2d = x.reshape(n * 28, 28)                                   # (N*28, 28)
    y16 = jnp.pad(y.astype(jnp.float32),
                  ((0, 0), (0, YPAD - y.shape[1]))).astype(jnp.bfloat16)
    rec2d, mu, logvar = _fused_call(packed, x2d, y16, eps)
    recon = rec2d.reshape(n, 1, 28, 28)
    return recon, mu, logvar


# ---------------------------------------------------------------------------
# Pure-JAX f32 reference (for a loose numerical check)
# ---------------------------------------------------------------------------
def _reference_forward(p, x, y, eps):
    def conv(u, w, b):
        o = jax.lax.conv_general_dilated(
            u, w, (2, 2), ((2, 2), (2, 2)),
            dimension_numbers=("NCHW", "OIHW", "NCHW"))
        return o + b[None, :, None, None]

    def convT(u, w, b):   # stride 2, pad 2, output_padding 1, k 5
        wf = jnp.transpose(jnp.flip(w, (2, 3)), (1, 0, 2, 3))
        o = jax.lax.conv_general_dilated(
            u, wf, (1, 1), ((2, 3), (2, 3)), lhs_dilation=(2, 2),
            dimension_numbers=("NCHW", "OIHW", "NCHW"))
        return o + b[None, :, None, None]

    h = conv(x, p["enc1_w"], p["enc1_b"])
    h = jnp.where(h > 0, h, 0.2 * h)
    h = conv(h, p["enc2_w"], p["enc2_b"])
    h = jnp.where(h > 0, h, 0.2 * h)
    hf = jnp.concatenate([h.reshape(h.shape[0], -1), y], axis=1)
    mu = hf @ p["mean_w"] + p["mean_b"]
    logvar = hf @ p["std_w"] + p["std_b"]
    z = eps * jnp.exp(0.5 * logvar) + mu
    t = jnp.concatenate([z, y], axis=1) @ p["fc_w"] + p["fc_b"]
    t = jnp.maximum(t, 0.0).reshape(-1, 32, 7, 7)
    d = jnp.maximum(convT(t, p["dec1_w"], p["dec1_b"]), 0.0)
    d = jnp.tanh(convT(d, p["dec2_w"], p["dec2_b"]))
    return d, mu, logvar


if __name__ == "__main__":
    key = jax.random.PRNGKey(0)
    k_param, k_x, k_y, k_eps = jax.random.split(key, 4)

    batch = 2
    params = init_params(k_param)
    packed = pack_params(params, batch)

    # MNIST-shaped input (the module's flatten hard-codes 28x28 inputs)
    x = jax.random.normal(k_x, (batch, 1, 28, 28), jnp.float32)
    labels = jax.random.randint(k_y, (batch,), 0, 10)
    y = jax.nn.one_hot(labels, 10, dtype=jnp.float32)
    eps = jax.random.normal(k_eps, (batch, HDIM), jnp.float32)

    fwd = jax.jit(autoencoder_forward)
    recon, mu, logvar = fwd(packed, x, y, eps)
    jax.block_until_ready((recon, mu, logvar))

    assert recon.shape == (batch, 1, 28, 28)
    assert mu.shape == (batch, HDIM)
    assert logvar.shape == (batch, HDIM)

    # loose tolerance: kernel runs bf16 operands / f32 accumulation
    rec_ref, mu_ref, lv_ref = _reference_forward(params, x, y, eps)
    np.testing.assert_allclose(np.asarray(recon), np.asarray(rec_ref), atol=8e-2, rtol=0)
    np.testing.assert_allclose(np.asarray(mu), np.asarray(mu_ref), atol=8e-2, rtol=0)
    np.testing.assert_allclose(np.asarray(logvar), np.asarray(lv_ref), atol=8e-2, rtol=0)

    print("KERNEL_OK")
</pallas_src>

<mosaic_0001>
module attributes {stable_mosaic.version = 11 : i64} {
  func.func @kernel(%arg0: i32, %arg1: memref<56x28xf32, #tpu.memory_space<vmem>>, %arg2: memref<2x16xbf16, #tpu.memory_space<vmem>>, %arg3: memref<2x128xf32, #tpu.memory_space<vmem>>, %arg4: memref<160x56xbf16, #tpu.memory_space<vmem>>, %arg5: memref<140x224xbf16, #tpu.memory_space<vmem>>, %arg6: memref<1x224xf32, #tpu.memory_space<vmem>>, %arg7: memref<80x28xbf16, #tpu.memory_space<vmem>>, %arg8: memref<1x224xf32, #tpu.memory_space<vmem>>, %arg9: memref<1x256xf32, #tpu.memory_space<vmem>>, %arg10: memref<1x1568xf32, #tpu.memory_space<vmem>>, %arg11: memref<160x14xbf16, #tpu.memory_space<vmem>>, %arg12: memref<1x224xf32, #tpu.memory_space<vmem>>, %arg13: memref<280x28xbf16, #tpu.memory_space<vmem>>, %arg14: memref<1x28xf32, #tpu.memory_space<vmem>>, %arg15: memref<1120x224xbf16, #tpu.memory_space<any>>, %arg16: memref<1584x256xbf16, #tpu.memory_space<any>>, %arg17: memref<144x1568xbf16, #tpu.memory_space<any>>, %arg18: memref<1120x224xbf16, #tpu.memory_space<any>>, %arg19: memref<1120x28xbf16, #tpu.memory_space<any>>, %arg20: memref<56x28xf32, #tpu.memory_space<vmem>>, %arg21: memref<2x128xf32, #tpu.memory_space<vmem>>, %arg22: memref<2x128xf32, #tpu.memory_space<vmem>>, %arg23: memref<1120x224xbf16, #tpu.memory_space<vmem>>, %arg24: memref<1584x256xbf16, #tpu.memory_space<vmem>>, %arg25: memref<144x1568xbf16, #tpu.memory_space<vmem>>, %arg26: memref<1120x224xbf16, #tpu.memory_space<vmem>>, %arg27: memref<1120x28xbf16, #tpu.memory_space<vmem>>, %arg28: memref<14x224xf32, #tpu.memory_space<vmem>>, %arg29: memref<5x!tpu.dma_semaphore, #tpu.memory_space<semaphore_mem>>) attributes {dimension_semantics = [#tpu.dimension_semantics<arbitrary>], iteration_bounds = array<i64: 1>, scalar_prefetch = 0 : i64, scratch_operands = 7 : i64, tpu.core_type = #tpu.core_type<tc>, window_params = [{pipeline_mode = #tpu.pipeline_mode<synchronous>, transform_indices = @transform_0, window_bounds = array<i64: 56, 28>}, {pipeline_mode = #tpu.pipeline_mode<synchronous>, transform_indices = @transform_1, window_bounds = array<i64: 2, 16>}, {pipeline_mode = #tpu.pipeline_mode<synchronous>, transform_indices = @transform_2, window_bounds = array<i64: 2, 128>}, {pipeline_mode = #tpu.pipeline_mode<synchronous>, transform_indices = @transform_3, window_bounds = array<i64: 160, 56>}, {pipeline_mode = #tpu.pipeline_mode<synchronous>, transform_indices = @transform_4, window_bounds = array<i64: 140, 224>}, {pipeline_mode = #tpu.pipeline_mode<synchronous>, transform_indices = @transform_5, window_bounds = array<i64: 1, 224>}, {pipeline_mode = #tpu.pipeline_mode<synchronous>, transform_indices = @transform_6, window_bounds = array<i64: 80, 28>}, {pipeline_mode = #tpu.pipeline_mode<synchronous>, transform_indices = @transform_7, window_bounds = array<i64: 1, 224>}, {pipeline_mode = #tpu.pipeline_mode<synchronous>, transform_indices = @transform_8, window_bounds = array<i64: 1, 256>}, {pipeline_mode = #tpu.pipeline_mode<synchronous>, transform_indices = @transform_9, window_bounds = array<i64: 1, 1568>}, {pipeline_mode = #tpu.pipeline_mode<synchronous>, transform_indices = @transform_10, window_bounds = array<i64: 160, 14>}, {pipeline_mode = #tpu.pipeline_mode<synchronous>, transform_indices = @transform_11, window_bounds = array<i64: 1, 224>}, {pipeline_mode = #tpu.pipeline_mode<synchronous>, transform_indices = @transform_12, window_bounds = array<i64: 280, 28>}, {pipeline_mode = #tpu.pipeline_mode<synchronous>, transform_indices = @transform_13, window_bounds = array<i64: 1, 28>}, {}, {}, {}, {}, {}, {pipeline_mode = #tpu.pipeline_mode<synchronous>, transform_indices = @transform_19, window_bounds = array<i64: 56, 28>}, {pipeline_mode = #tpu.pipeline_mode<synchronous>, transform_indices = @transform_20, window_bounds = array<i64: 2, 128>}, {pipeline_mode = #tpu.pipeline_mode<synchronous>, transform_indices = @transform_21, window_bounds = array<i64: 2, 128>}]} {
    %c0_i32 = arith.constant 0 : i32
    %0 = tpu.memref_slice %arg29[%c0_i32] : memref<5x!tpu.dma_semaphore, #tpu.memory_space<semaphore_mem>> -> memref<1x!tpu.dma_semaphore, #tpu.memory_space<semaphore_mem>>
    %1 = tpu.memref_squeeze %0 : memref<1x!tpu.dma_semaphore, #tpu.memory_space<semaphore_mem>> -> memref<!tpu.dma_semaphore, #tpu.memory_space<semaphore_mem>>
    tpu.enqueue_dma source(%arg15 : memref<1120x224xbf16, #tpu.memory_space<any>>) target(%arg23 : memref<1120x224xbf16, #tpu.memory_space<vmem>>) target_semaphore(%1 : memref<!tpu.dma_semaphore, #tpu.memory_space<semaphore_mem>>)
    %c1_i32 = arith.constant 1 : i32
    %2 = tpu.memref_slice %arg29[%c1_i32] : memref<5x!tpu.dma_semaphore, #tpu.memory_space<semaphore_mem>> -> memref<1x!tpu.dma_semaphore, #tpu.memory_space<semaphore_mem>>
    %3 = tpu.memref_squeeze %2 : memref<1x!tpu.dma_semaphore, #tpu.memory_space<semaphore_mem>> -> memref<!tpu.dma_semaphore, #tpu.memory_space<semaphore_mem>>
    tpu.enqueue_dma source(%arg16 : memref<1584x256xbf16, #tpu.memory_space<any>>) target(%arg24 : memref<1584x256xbf16, #tpu.memory_space<vmem>>) target_semaphore(%3 : memref<!tpu.dma_semaphore, #tpu.memory_space<semaphore_mem>>)
    %c2_i32 = arith.constant 2 : i32
    %4 = tpu.memref_slice %arg29[%c2_i32] : memref<5x!tpu.dma_semaphore, #tpu.memory_space<semaphore_mem>> -> memref<1x!tpu.dma_semaphore, #tpu.memory_space<semaphore_mem>>
    %5 = tpu.memref_squeeze %4 : memref<1x!tpu.dma_semaphore, #tpu.memory_space<semaphore_mem>> -> memref<!tpu.dma_semaphore, #tpu.memory_space<semaphore_mem>>
    tpu.enqueue_dma source(%arg17 : memref<144x1568xbf16, #tpu.memory_space<any>>) target(%arg25 : memref<144x1568xbf16, #tpu.memory_space<vmem>>) target_semaphore(%5 : memref<!tpu.dma_semaphore, #tpu.memory_space<semaphore_mem>>)
    %c3_i32 = arith.constant 3 : i32
    %6 = tpu.memref_slice %arg29[%c3_i32] : memref<5x!tpu.dma_semaphore, #tpu.memory_space<semaphore_mem>> -> memref<1x!tpu.dma_semaphore, #tpu.memory_space<semaphore_mem>>
    %7 = tpu.memref_squeeze %6 : memref<1x!tpu.dma_semaphore, #tpu.memory_space<semaphore_mem>> -> memref<!tpu.dma_semaphore, #tpu.memory_space<semaphore_mem>>
    tpu.enqueue_dma source(%arg18 : memref<1120x224xbf16, #tpu.memory_space<any>>) target(%arg26 : memref<1120x224xbf16, #tpu.memory_space<vmem>>) target_semaphore(%7 : memref<!tpu.dma_semaphore, #tpu.memory_space<semaphore_mem>>)
    %c4_i32 = arith.constant 4 : i32
    %8 = tpu.memref_slice %arg29[%c4_i32] : memref<5x!tpu.dma_semaphore, #tpu.memory_space<semaphore_mem>> -> memref<1x!tpu.dma_semaphore, #tpu.memory_space<semaphore_mem>>
    %9 = tpu.memref_squeeze %8 : memref<1x!tpu.dma_semaphore, #tpu.memory_space<semaphore_mem>> -> memref<!tpu.dma_semaphore, #tpu.memory_space<semaphore_mem>>
    tpu.enqueue_dma source(%arg19 : memref<1120x28xbf16, #tpu.memory_space<any>>) target(%arg27 : memref<1120x28xbf16, #tpu.memory_space<vmem>>) target_semaphore(%9 : memref<!tpu.dma_semaphore, #tpu.memory_space<semaphore_mem>>)
    %c0 = arith.constant 0 : index
    %c0_0 = arith.constant 0 : index
    %10 = vector.load %arg2[%c0, %c0_0] : memref<2x16xbf16, #tpu.memory_space<vmem>>, vector<2x16xbf16>
    %c0_1 = arith.constant 0 : index
    %c0_2 = arith.constant 0 : index
    %11 = vector.load %arg1[%c0_1, %c0_2] : memref<56x28xf32, #tpu.memory_space<vmem>>, vector<56x28xf32>
    %12 = arith.truncf %11 : vector<56x28xf32> to vector<56x28xbf16>
    %c0_3 = arith.constant 0 : index
    %c0_4 = arith.constant 0 : index
    %13 = vector.load %arg4[%c0_3, %c0_4] : memref<160x56xbf16, #tpu.memory_space<vmem>>, vector<160x56xbf16>
    %cst = arith.constant dense<0.000000e+00> : vector<160x28xf32>
    %14 = tpu.matmul %13, %12, %cst {dimension_numbers = #tpu.dot_dimension_numbers<[1], [0], [0], [1], [0, 0, 1, 1], [], []>} : vector<160x56xbf16>, vector<56x28xbf16>, vector<160x28xf32> -> vector<160x28xf32>
    %15 = arith.truncf %14 : vector<160x28xf32> to vector<160x28xbf16>
    %16 = vector.extract_strided_slice %15 {offsets = [0, 0], sizes = [28, 28], strides = [1, 1]} : vector<160x28xbf16> to vector<28x28xbf16>
    %17 = vector.extract_strided_slice %15 {offsets = [32, 0], sizes = [28, 28], strides = [1, 1]} : vector<160x28xbf16> to vector<28x28xbf16>
    %18 = vector.extract_strided_slice %15 {offsets = [64, 0], sizes = [28, 28], strides = [1, 1]} : vector<160x28xbf16> to vector<28x28xbf16>
    %19 = vector.extract_strided_slice %15 {offsets = [96, 0], sizes = [28, 28], strides = [1, 1]} : vector<160x28xbf16> to vector<28x28xbf16>
    %20 = vector.extract_strided_slice %15 {offsets = [128, 0], sizes = [28, 28], strides = [1, 1]} : vector<160x28xbf16> to vector<28x28xbf16>
    %21 = tpu.concatenate %16, %17, %18, %19, %20 in 1 : vector<28x28xbf16>, vector<28x28xbf16>, vector<28x28xbf16>, vector<28x28xbf16>, vector<28x28xbf16> -> vector<28x140xbf16>
    %c0_5 = arith.constant 0 : index
    %c0_6 = arith.constant 0 : index
    %22 = vector.load %arg5[%c0_5, %c0_6] : memref<140x224xbf16, #tpu.memory_space<vmem>>, vector<140x224xbf16>
    %cst_7 = arith.constant dense<0.000000e+00> : vector<28x224xf32>
    %23 = tpu.matmul %21, %22, %cst_7 {dimension_numbers = #tpu.dot_dimension_numbers<[1], [0], [0], [1], [0, 0, 1, 1], [], []>} : vector<28x140xbf16>, vector<140x224xbf16>, vector<28x224xf32> -> vector<28x224xf32>
    %c0_8 = arith.constant 0 : index
    %c0_9 = arith.constant 0 : index
    %24 = vector.load %arg6[%c0_8, %c0_9] : memref<1x224xf32, #tpu.memory_space<vmem>>, vector<1x224xf32>
    %25 = vector.broadcast %24 : vector<1x224xf32> to vector<28x224xf32>
    %26 = arith.addf %23, %25 : vector<28x224xf32>
    %cst_10 = arith.constant 0.000000e+00 : f32
    %27 = vector.broadcast %cst_10 : f32 to vector<28x224xf32>
    %28 = arith.cmpf ogt, %26, %27 : vector<28x224xf32>
    %cst_11 = arith.constant 2.000000e-01 : f32
    %29 = vector.broadcast %cst_11 : f32 to vector<28x224xf32>
    %30 = arith.mulf %29, %26 : vector<28x224xf32>
    %31 = arith.select %28, %26, %30 : vector<28x224xi1>, vector<28x224xf32>
    %32 = arith.truncf %31 : vector<28x224xf32> to vector<28x224xbf16>
    %c0_12 = arith.constant 0 : index
    %c0_13 = arith.constant 0 : index
    %33 = vector.load %arg7[%c0_12, %c0_13] : memref<80x28xbf16, #tpu.memory_space<vmem>>, vector<80x28xbf16>
    %cst_14 = arith.constant dense<0.000000e+00> : vector<80x224xf32>
    %34 = tpu.matmul %33, %32, %cst_14 {dimension_numbers = #tpu.dot_dimension_numbers<[1], [0], [0], [1], [0, 0, 1, 1], [], []>} : vector<80x28xbf16>, vector<28x224xbf16>, vector<80x224xf32> -> vector<80x224xf32>
    %35 = arith.truncf %34 : vector<80x224xf32> to vector<80x224xbf16>
    %36 = vector.extract_strided_slice %35 {offsets = [0, 0], sizes = [14, 224], strides = [1, 1]} : vector<80x224xbf16> to vector<14x224xbf16>
    %37 = vector.extract_strided_slice %35 {offsets = [16, 0], sizes = [14, 224], strides = [1, 1]} : vector<80x224xbf16> to vector<14x224xbf16>
    %38 = vector.extract_strided_slice %35 {offsets = [32, 0], sizes = [14, 224], strides = [1, 1]} : vector<80x224xbf16> to vector<14x224xbf16>
    %39 = vector.extract_strided_slice %35 {offsets = [48, 0], sizes = [14, 224], strides = [1, 1]} : vector<80x224xbf16> to vector<14x224xbf16>
    %40 = vector.extract_strided_slice %35 {offsets = [64, 0], sizes = [14, 224], strides = [1, 1]} : vector<80x224xbf16> to vector<14x224xbf16>
    %41 = tpu.concatenate %36, %37, %38, %39, %40 in 1 : vector<14x224xbf16>, vector<14x224xbf16>, vector<14x224xbf16>, vector<14x224xbf16>, vector<14x224xbf16> -> vector<14x1120xbf16>
    %c0_i32_15 = arith.constant 0 : i32
    %42 = tpu.memref_slice %arg29[%c0_i32_15] : memref<5x!tpu.dma_semaphore, #tpu.memory_space<semaphore_mem>> -> memref<1x!tpu.dma_semaphore, #tpu.memory_space<semaphore_mem>>
    %43 = tpu.memref_squeeze %42 : memref<1x!tpu.dma_semaphore, #tpu.memory_space<semaphore_mem>> -> memref<!tpu.dma_semaphore, #tpu.memory_space<semaphore_mem>>
    tpu.wait_dma2 semaphore(%43 : memref<!tpu.dma_semaphore, #tpu.memory_space<semaphore_mem>>) src(%arg15 : memref<1120x224xbf16, #tpu.memory_space<any>>) dst(%arg23 : memref<1120x224xbf16, #tpu.memory_space<vmem>>)
    %c0_16 = arith.constant 0 : index
    %c0_17 = arith.constant 0 : index
    %44 = vector.load %arg23[%c0_16, %c0_17] : memref<1120x224xbf16, #tpu.memory_space<vmem>>, vector<1120x224xbf16>
    %cst_18 = arith.constant dense<0.000000e+00> : vector<14x224xf32>
    %45 = tpu.matmul %41, %44, %cst_18 {dimension_numbers = #tpu.dot_dimension_numbers<[1], [0], [0], [1], [0, 0, 1, 1], [], []>} : vector<14x1120xbf16>, vector<1120x224xbf16>, vector<14x224xf32> -> vector<14x224xf32>
    %c0_19 = arith.constant 0 : index
    %c0_20 = arith.constant 0 : index
    %46 = vector.load %arg8[%c0_19, %c0_20] : memref<1x224xf32, #tpu.memory_space<vmem>>, vector<1x224xf32>
    %47 = vector.broadcast %46 : vector<1x224xf32> to vector<14x224xf32>
    %48 = arith.addf %45, %47 : vector<14x224xf32>
    %cst_21 = arith.constant 0.000000e+00 : f32
    %49 = vector.broadcast %cst_21 : f32 to vector<14x224xf32>
    %50 = arith.cmpf ogt, %48, %49 : vector<14x224xf32>
    %cst_22 = arith.constant 2.000000e-01 : f32
    %51 = vector.broadcast %cst_22 : f32 to vector<14x224xf32>
    %52 = arith.mulf %51, %48 : vector<14x224xf32>
    %53 = arith.select %50, %48, %52 : vector<14x224xi1>, vector<14x224xf32>
    %54 = arith.truncf %53 : vector<14x224xf32> to vector<14x224xbf16>
    %55 = vector.extract_strided_slice %54 {offsets = [0, 0], sizes = [2, 224], strides = [1, 1]} : vector<14x224xbf16> to vector<2x224xbf16>
    %56 = vector.extract_strided_slice %54 {offsets = [2, 0], sizes = [2, 224], strides = [1, 1]} : vector<14x224xbf16> to vector<2x224xbf16>
    %57 = vector.extract_strided_slice %54 {offsets = [4, 0], sizes = [2, 224], strides = [1, 1]} : vector<14x224xbf16> to vector<2x224xbf16>
    %58 = vector.extract_strided_slice %54 {offsets = [6, 0], sizes = [2, 224], strides = [1, 1]} : vector<14x224xbf16> to vector<2x224xbf16>
    %59 = vector.extract_strided_slice %54 {offsets = [8, 0], sizes = [2, 224], strides = [1, 1]} : vector<14x224xbf16> to vector<2x224xbf16>
    %60 = vector.extract_strided_slice %54 {offsets = [10, 0], sizes = [2, 224], strides = [1, 1]} : vector<14x224xbf16> to vector<2x224xbf16>
    %61 = vector.extract_strided_slice %54 {offsets = [12, 0], sizes = [2, 224], strides = [1, 1]} : vector<14x224xbf16> to vector<2x224xbf16>
    %62 = tpu.concatenate %55, %56, %57, %58, %59, %60, %61, %10 in 1 : vector<2x224xbf16>, vector<2x224xbf16>, vector<2x224xbf16>, vector<2x224xbf16>, vector<2x224xbf16>, vector<2x224xbf16>, vector<2x224xbf16>, vector<2x16xbf16> -> vector<2x1584xbf16>
    %c1_i32_23 = arith.constant 1 : i32
    %63 = tpu.memref_slice %arg29[%c1_i32_23] : memref<5x!tpu.dma_semaphore, #tpu.memory_space<semaphore_mem>> -> memref<1x!tpu.dma_semaphore, #tpu.memory_space<semaphore_mem>>
    %64 = tpu.memref_squeeze %63 : memref<1x!tpu.dma_semaphore, #tpu.memory_space<semaphore_mem>> -> memref<!tpu.dma_semaphore, #tpu.memory_space<semaphore_mem>>
    tpu.wait_dma2 semaphore(%64 : memref<!tpu.dma_semaphore, #tpu.memory_space<semaphore_mem>>) src(%arg16 : memref<1584x256xbf16, #tpu.memory_space<any>>) dst(%arg24 : memref<1584x256xbf16, #tpu.memory_space<vmem>>)
    %c0_24 = arith.constant 0 : index
    %c0_25 = arith.constant 0 : index
    %65 = vector.load %arg24[%c0_24, %c0_25] : memref<1584x256xbf16, #tpu.memory_space<vmem>>, vector<1584x256xbf16>
    %cst_26 = arith.constant dense<0.000000e+00> : vector<2x256xf32>
    %66 = tpu.matmul %62, %65, %cst_26 {dimension_numbers = #tpu.dot_dimension_numbers<[1], [0], [0], [1], [0, 0, 1, 1], [], []>} : vector<2x1584xbf16>, vector<1584x256xbf16>, vector<2x256xf32> -> vector<2x256xf32>
    %c0_27 = arith.constant 0 : index
    %c0_28 = arith.constant 0 : index
    %67 = vector.load %arg9[%c0_27, %c0_28] : memref<1x256xf32, #tpu.memory_space<vmem>>, vector<1x256xf32>
    %68 = vector.broadcast %67 : vector<1x256xf32> to vector<2x256xf32>
    %69 = arith.addf %66, %68 : vector<2x256xf32>
    %70 = vector.extract_strided_slice %69 {offsets = [0, 0], sizes = [2, 128], strides = [1, 1]} : vector<2x256xf32> to vector<2x128xf32>
    %71 = vector.extract_strided_slice %69 {offsets = [0, 128], sizes = [2, 128], strides = [1, 1]} : vector<2x256xf32> to vector<2x128xf32>
    %c0_29 = arith.constant 0 : index
    %c0_30 = arith.constant 0 : index
    %72 = vector.load %arg3[%c0_29, %c0_30] : memref<2x128xf32, #tpu.memory_space<vmem>>, vector<2x128xf32>
    %cst_31 = arith.constant 5.000000e-01 : f32
    %73 = vector.broadcast %cst_31 : f32 to vector<2x128xf32>
    %74 = arith.mulf %73, %71 : vector<2x128xf32>
    %75 = math.exp %74 : vector<2x128xf32>
    %76 = arith.mulf %72, %75 : vector<2x128xf32>
    %77 = arith.addf %76, %70 : vector<2x128xf32>
    %78 = arith.truncf %77 : vector<2x128xf32> to vector<2x128xbf16>
    %79 = tpu.concatenate %78, %10 in 1 : vector<2x128xbf16>, vector<2x16xbf16> -> vector<2x144xbf16>
    %c2_i32_32 = arith.constant 2 : i32
    %80 = tpu.memref_slice %arg29[%c2_i32_32] : memref<5x!tpu.dma_semaphore, #tpu.memory_space<semaphore_mem>> -> memref<1x!tpu.dma_semaphore, #tpu.memory_space<semaphore_mem>>
    %81 = tpu.memref_squeeze %80 : memref<1x!tpu.dma_semaphore, #tpu.memory_space<semaphore_mem>> -> memref<!tpu.dma_semaphore, #tpu.memory_space<semaphore_mem>>
    tpu.wait_dma2 semaphore(%81 : memref<!tpu.dma_semaphore, #tpu.memory_space<semaphore_mem>>) src(%arg17 : memref<144x1568xbf16, #tpu.memory_space<any>>) dst(%arg25 : memref<144x1568xbf16, #tpu.memory_space<vmem>>)
    %c0_33 = arith.constant 0 : index
    %c0_34 = arith.constant 0 : index
    %82 = vector.load %arg25[%c0_33, %c0_34] : memref<144x1568xbf16, #tpu.memory_space<vmem>>, vector<144x1568xbf16>
    %cst_35 = arith.constant dense<0.000000e+00> : vector<2x1568xf32>
    %83 = tpu.matmul %79, %82, %cst_35 {dimension_numbers = #tpu.dot_dimension_numbers<[1], [0], [0], [1], [0, 0, 1, 1], [], []>} : vector<2x144xbf16>, vector<144x1568xbf16>, vector<2x1568xf32> -> vector<2x1568xf32>
    %c0_36 = arith.constant 0 : index
    %c0_37 = arith.constant 0 : index
    %84 = vector.load %arg10[%c0_36, %c0_37] : memref<1x1568xf32, #tpu.memory_space<vmem>>, vector<1x1568xf32>
    %85 = vector.broadcast %84 : vector<1x1568xf32> to vector<2x1568xf32>
    %86 = arith.addf %83, %85 : vector<2x1568xf32>
    %cst_38 = arith.constant 0.000000e+00 : f32
    %87 = vector.broadcast %cst_38 : f32 to vector<2x1568xf32>
    %88 = arith.maximumf %86, %87 : vector<2x1568xf32>
    %89 = vector.extract_strided_slice %88 {offsets = [0, 0], sizes = [2, 224], strides = [1, 1]} : vector<2x1568xf32> to vector<2x224xf32>
    %c0_39 = arith.constant 0 : index
    %c0_40 = arith.constant 0 : index
    %90 = vector.load %arg28[%c0_39, %c0_40] : memref<14x224xf32, #tpu.memory_space<vmem>>, vector<2x224xf32>
    tpu.vector_store %arg28[%c0_39, %c0_40], %89 {strides = array<i32>} : memref<14x224xf32, #tpu.memory_space<vmem>>, vector<2x224xf32>,
    %91 = vector.extract_strided_slice %88 {offsets = [0, 224], sizes = [2, 224], strides = [1, 1]} : vector<2x1568xf32> to vector<2x224xf32>
    %c2 = arith.constant 2 : index
    %c0_41 = arith.constant 0 : index
    %92 = vector.load %arg28[%c2, %c0_41] : memref<14x224xf32, #tpu.memory_space<vmem>>, vector<2x224xf32>
    tpu.vector_store %arg28[%c2, %c0_41], %91 {strides = array<i32>} : memref<14x224xf32, #tpu.memory_space<vmem>>, vector<2x224xf32>,
    %93 = vector.extract_strided_slice %88 {offsets = [0, 448], sizes = [2, 224], strides = [1, 1]} : vector<2x1568xf32> to vector<2x224xf32>
    %c4 = arith.constant 4 : index
    %c0_42 = arith.constant 0 : index
    %94 = vector.load %arg28[%c4, %c0_42] : memref<14x224xf32, #tpu.memory_space<vmem>>, vector<2x224xf32>
    tpu.vector_store %arg28[%c4, %c0_42], %93 {strides = array<i32>} : memref<14x224xf32, #tpu.memory_space<vmem>>, vector<2x224xf32>,
    %95 = vector.extract_strided_slice %88 {offsets = [0, 672], sizes = [2, 224], strides = [1, 1]} : vector<2x1568xf32> to vector<2x224xf32>
    %c6 = arith.constant 6 : index
    %c0_43 = arith.constant 0 : index
    %96 = vector.load %arg28[%c6, %c0_43] : memref<14x224xf32, #tpu.memory_space<vmem>>, vector<2x224xf32>
    tpu.vector_store %arg28[%c6, %c0_43], %95 {strides = array<i32>} : memref<14x224xf32, #tpu.memory_space<vmem>>, vector<2x224xf32>,
    %97 = vector.extract_strided_slice %88 {offsets = [0, 896], sizes = [2, 224], strides = [1, 1]} : vector<2x1568xf32> to vector<2x224xf32>
    %c8 = arith.constant 8 : index
    %c0_44 = arith.constant 0 : index
    %98 = vector.load %arg28[%c8, %c0_44] : memref<14x224xf32, #tpu.memory_space<vmem>>, vector<2x224xf32>
    tpu.vector_store %arg28[%c8, %c0_44], %97 {strides = array<i32>} : memref<14x224xf32, #tpu.memory_space<vmem>>, vector<2x224xf32>,
    %99 = vector.extract_strided_slice %88 {offsets = [0, 1120], sizes = [2, 224], strides = [1, 1]} : vector<2x1568xf32> to vector<2x224xf32>
    %c10 = arith.constant 10 : index
    %c0_45 = arith.constant 0 : index
    %100 = vector.load %arg28[%c10, %c0_45] : memref<14x224xf32, #tpu.memory_space<vmem>>, vector<2x224xf32>
    tpu.vector_store %arg28[%c10, %c0_45], %99 {strides = array<i32>} : memref<14x224xf32, #tpu.memory_space<vmem>>, vector<2x224xf32>,
    %101 = vector.extract_strided_slice %88 {offsets = [0, 1344], sizes = [2, 224], strides = [1, 1]} : vector<2x1568xf32> to vector<2x224xf32>
    %c12 = arith.constant 12 : index
    %c0_46 = arith.constant 0 : index
    %102 = vector.load %arg28[%c12, %c0_46] : memref<14x224xf32, #tpu.memory_space<vmem>>, vector<2x224xf32>
    tpu.vector_store %arg28[%c12, %c0_46], %101 {strides = array<i32>} : memref<14x224xf32, #tpu.memory_space<vmem>>, vector<2x224xf32>,
    %c0_47 = arith.constant 0 : index
    %c0_48 = arith.constant 0 : index
    %103 = vector.load %arg28[%c0_47, %c0_48] : memref<14x224xf32, #tpu.memory_space<vmem>>, vector<14x224xf32>
    %104 = arith.truncf %103 : vector<14x224xf32> to vector<14x224xbf16>
    %c0_49 = arith.constant 0 : index
    %c0_50 = arith.constant 0 : index
    %105 = vector.load %arg11[%c0_49, %c0_50] : memref<160x14xbf16, #tpu.memory_space<vmem>>, vector<160x14xbf16>
    %cst_51 = arith.constant dense<0.000000e+00> : vector<160x224xf32>
    %106 = tpu.matmul %105, %104, %cst_51 {dimension_numbers = #tpu.dot_dimension_numbers<[1], [0], [0], [1], [0, 0, 1, 1], [], []>} : vector<160x14xbf16>, vector<14x224xbf16>, vector<160x224xf32> -> vector<160x224xf32>
    %107 = arith.truncf %106 : vector<160x224xf32> to vector<160x224xbf16>
    %108 = vector.extract_strided_slice %107 {offsets = [0, 0], sizes = [28, 224], strides = [1, 1]} : vector<160x224xbf16> to vector<28x224xbf16>
    %109 = vector.extract_strided_slice %107 {offsets = [32, 0], sizes = [28, 224], strides = [1, 1]} : vector<160x224xbf16> to vector<28x224xbf16>
    %110 = vector.extract_strided_slice %107 {offsets = [64, 0], sizes = [28, 224], strides = [1, 1]} : vector<160x224xbf16> to vector<28x224xbf16>
    %111 = vector.extract_strided_slice %107 {offsets = [96, 0], sizes = [28, 224], strides = [1, 1]} : vector<160x224xbf16> to vector<28x224xbf16>
    %112 = vector.extract_strided_slice %107 {offsets = [128, 0], sizes = [28, 224], strides = [1, 1]} : vector<160x224xbf16> to vector<28x224xbf16>
    %113 = tpu.concatenate %108, %109, %110, %111, %112 in 1 : vector<28x224xbf16>, vector<28x224xbf16>, vector<28x224xbf16>, vector<28x224xbf16>, vector<28x224xbf16> -> vector<28x1120xbf16>
    %c3_i32_52 = arith.constant 3 : i32
    %114 = tpu.memref_slice %arg29[%c3_i32_52] : memref<5x!tpu.dma_semaphore, #tpu.memory_space<semaphore_mem>> -> memref<1x!tpu.dma_semaphore, #tpu.memory_space<semaphore_mem>>
    %115 = tpu.memref_squeeze %114 : memref<1x!tpu.dma_semaphore, #tpu.memory_space<semaphore_mem>> -> memref<!tpu.dma_semaphore, #tpu.memory_space<semaphore_mem>>
    tpu.wait_dma2 semaphore(%115 : memref<!tpu.dma_semaphore, #tpu.memory_space<semaphore_mem>>) src(%arg18 : memref<1120x224xbf16, #tpu.memory_space<any>>) dst(%arg26 : memref<1120x224xbf16, #tpu.memory_space<vmem>>)
    %c0_53 = arith.constant 0 : index
    %c0_54 = arith.constant 0 : index
    %116 = vector.load %arg26[%c0_53, %c0_54] : memref<1120x224xbf16, #tpu.memory_space<vmem>>, vector<1120x224xbf16>
    %cst_55 = arith.constant dense<0.000000e+00> : vector<28x224xf32>
    %117 = tpu.matmul %113, %116, %cst_55 {dimension_numbers = #tpu.dot_dimension_numbers<[1], [0], [0], [1], [0, 0, 1, 1], [], []>} : vector<28x1120xbf16>, vector<1120x224xbf16>, vector<28x224xf32> -> vector<28x224xf32>
    %c0_56 = arith.constant 0 : index
    %c0_57 = arith.constant 0 : index
    %118 = vector.load %arg12[%c0_56, %c0_57] : memref<1x224xf32, #tpu.memory_space<vmem>>, vector<1x224xf32>
    %119 = vector.broadcast %118 : vector<1x224xf32> to vector<28x224xf32>
    %120 = arith.addf %117, %119 : vector<28x224xf32>
    %cst_58 = arith.constant 0.000000e+00 : f32
    %121 = vector.broadcast %cst_58 : f32 to vector<28x224xf32>
    %122 = arith.maximumf %120, %121 : vector<28x224xf32>
    %123 = arith.truncf %122 : vector<28x224xf32> to vector<28x224xbf16>
    %c0_59 = arith.constant 0 : index
    %c0_60 = arith.constant 0 : index
    %124 = vector.load %arg13[%c0_59, %c0_60] : memref<280x28xbf16, #tpu.memory_space<vmem>>, vector<280x28xbf16>
    %cst_61 = arith.constant dense<0.000000e+00> : vector<280x224xf32>
    %125 = tpu.matmul %124, %123, %cst_61 {dimension_numbers = #tpu.dot_dimension_numbers<[1], [0], [0], [1], [0, 0, 1, 1], [], []>} : vector<280x28xbf16>, vector<28x224xbf16>, vector<280x224xf32> -> vector<280x224xf32>
    %126 = arith.truncf %125 : vector<280x224xf32> to vector<280x224xbf16>
    %127 = vector.extract_strided_slice %126 {offsets = [0, 0], sizes = [56, 224], strides = [1, 1]} : vector<280x224xbf16> to vector<56x224xbf16>
    %128 = vector.extract_strided_slice %126 {offsets = [56, 0], sizes = [56, 224], strides = [1, 1]} : vector<280x224xbf16> to vector<56x224xbf16>
    %129 = vector.extract_strided_slice %126 {offsets = [112, 0], sizes = [56, 224], strides = [1, 1]} : vector<280x224xbf16> to vector<56x224xbf16>
    %130 = vector.extract_strided_slice %126 {offsets = [168, 0], sizes = [56, 224], strides = [1, 1]} : vector<280x224xbf16> to vector<56x224xbf16>
    %131 = vector.extract_strided_slice %126 {offsets = [224, 0], sizes = [56, 224], strides = [1, 1]} : vector<280x224xbf16> to vector<56x224xbf16>
    %132 = tpu.concatenate %127, %128, %129, %130, %131 in 1 : vector<56x224xbf16>, vector<56x224xbf16>, vector<56x224xbf16>, vector<56x224xbf16>, vector<56x224xbf16> -> vector<56x1120xbf16>
    %c4_i32_62 = arith.constant 4 : i32
    %133 = tpu.memref_slice %arg29[%c4_i32_62] : memref<5x!tpu.dma_semaphore, #tpu.memory_space<semaphore_mem>> -> memref<1x!tpu.dma_semaphore, #tpu.memory_space<semaphore_mem>>
    %134 = tpu.memref_squeeze %133 : memref<1x!tpu.dma_semaphore, #tpu.memory_space<semaphore_mem>> -> memref<!tpu.dma_semaphore, #tpu.memory_space<semaphore_mem>>
    tpu.wait_dma2 semaphore(%134 : memref<!tpu.dma_semaphore, #tpu.memory_space<semaphore_mem>>) src(%arg19 : memref<1120x28xbf16, #tpu.memory_space<any>>) dst(%arg27 : memref<1120x28xbf16, #tpu.memory_space<vmem>>)
    %c0_63 = arith.constant 0 : index
    %c0_64 = arith.constant 0 : index
    %135 = vector.load %arg27[%c0_63, %c0_64] : memref<1120x28xbf16, #tpu.memory_space<vmem>>, vector<1120x28xbf16>
    %cst_65 = arith.constant dense<0.000000e+00> : vector<56x28xf32>
    %136 = tpu.matmul %132, %135, %cst_65 {dimension_numbers = #tpu.dot_dimension_numbers<[1], [0], [0], [1], [0, 0, 1, 1], [], []>} : vector<56x1120xbf16>, vector<1120x28xbf16>, vector<56x28xf32> -> vector<56x28xf32>
    %c0_66 = arith.constant 0 : index
    %c0_67 = arith.constant 0 : index
    %137 = vector.load %arg14[%c0_66, %c0_67] : memref<1x28xf32, #tpu.memory_space<vmem>>, vector<1x28xf32>
    %138 = vector.broadcast %137 : vector<1x28xf32> to vector<56x28xf32>
    %139 = arith.addf %136, %138 : vector<56x28xf32>
    %140 = math.tanh %139 : vector<56x28xf32>
    %c0_68 = arith.constant 0 : index
    %c0_69 = arith.constant 0 : index
    %141 = vector.load %arg20[%c0_68, %c0_69] : memref<56x28xf32, #tpu.memory_space<vmem>>, vector<56x28xf32>
    tpu.vector_store %arg20[%c0_68, %c0_69], %140 {strides = array<i32>} : memref<56x28xf32, #tpu.memory_space<vmem>>, vector<56x28xf32>,
    %c0_70 = arith.constant 0 : index
    %c0_71 = arith.constant 0 : index
    %142 = vector.load %arg21[%c0_70, %c0_71] : memref<2x128xf32, #tpu.memory_space<vmem>>, vector<2x128xf32>
    tpu.vector_store %arg21[%c0_70, %c0_71], %70 {strides = array<i32>} : memref<2x128xf32, #tpu.memory_space<vmem>>, vector<2x128xf32>,
    %c0_72 = arith.constant 0 : index
    %c0_73 = arith.constant 0 : index
    %143 = vector.load %arg22[%c0_72, %c0_73] : memref<2x128xf32, #tpu.memory_space<vmem>>, vector<2x128xf32>
    tpu.vector_store %arg22[%c0_72, %c0_73], %71 {strides = array<i32>} : memref<2x128xf32, #tpu.memory_space<vmem>>, vector<2x128xf32>,
    return
  }
  func.func @transform_0(%arg0: i32) -> (i32, i32) {
    %c0_i32 = arith.constant 0 : i32
    %c0_i32_0 = arith.constant 0 : i32
    %c0_i32_1 = arith.constant 0 : i32
    return %c0_i32, %c0_i32_0 : i32, i32
  }
  func.func @transform_1(%arg0: i32) -> (i32, i32) {
    %c0_i32 = arith.constant 0 : i32
    %c0_i32_0 = arith.constant 0 : i32
    %c0_i32_1 = arith.constant 0 : i32
    return %c0_i32, %c0_i32_0 : i32, i32
  }
  func.func @transform_2(%arg0: i32) -> (i32, i32) {
    %c0_i32 = arith.constant 0 : i32
    %c0_i32_0 = arith.constant 0 : i32
    %c0_i32_1 = arith.constant 0 : i32
    return %c0_i32, %c0_i32_0 : i32, i32
  }
  func.func @transform_3(%arg0: i32) -> (i32, i32) {
    %c0_i32 = arith.constant 0 : i32
    %c0_i32_0 = arith.constant 0 : i32
    %c0_i32_1 = arith.constant 0 : i32
    return %c0_i32, %c0_i32_0 : i32, i32
  }
  func.func @transform_4(%arg0: i32) -> (i32, i32) {
    %c0_i32 = arith.constant 0 : i32
    %c0_i32_0 = arith.constant 0 : i32
    %c0_i32_1 = arith.constant 0 : i32
    return %c0_i32, %c0_i32_0 : i32, i32
  }
  func.func @transform_5(%arg0: i32) -> (i32, i32) {
    %c0_i32 = arith.constant 0 : i32
    %c0_i32_0 = arith.constant 0 : i32
    %c0_i32_1 = arith.constant 0 : i32
    return %c0_i32, %c0_i32_0 : i32, i32
  }
  func.func @transform_6(%arg0: i32) -> (i32, i32) {
    %c0_i32 = arith.constant 0 : i32
    %c0_i32_0 = arith.constant 0 : i32
    %c0_i32_1 = arith.constant 0 : i32
    return %c0_i32, %c0_i32_0 : i32, i32
  }
  func.func @transform_7(%arg0: i32) -> (i32, i32) {
    %c0_i32 = arith.constant 0 : i32
    %c0_i32_0 = arith.constant 0 : i32
    %c0_i32_1 = arith.constant 0 : i32
    return %c0_i32, %c0_i32_0 : i32, i32
  }
  func.func @transform_8(%arg0: i32) -> (i32, i32) {
    %c0_i32 = arith.constant 0 : i32
    %c0_i32_0 = arith.constant 0 : i32
    %c0_i32_1 = arith.constant 0 : i32
    return %c0_i32, %c0_i32_0 : i32, i32
  }
  func.func @transform_9(%arg0: i32) -> (i32, i32) {
    %c0_i32 = arith.constant 0 : i32
    %c0_i32_0 = arith.constant 0 : i32
    %c0_i32_1 = arith.constant 0 : i32
    return %c0_i32, %c0_i32_0 : i32, i32
  }
  func.func @transform_10(%arg0: i32) -> (i32, i32) {
    %c0_i32 = arith.constant 0 : i32
    %c0_i32_0 = arith.constant 0 : i32
    %c0_i32_1 = arith.constant 0 : i32
    return %c0_i32, %c0_i32_0 : i32, i32
  }
  func.func @transform_11(%arg0: i32) -> (i32, i32) {
    %c0_i32 = arith.constant 0 : i32
    %c0_i32_0 = arith.constant 0 : i32
    %c0_i32_1 = arith.constant 0 : i32
    return %c0_i32, %c0_i32_0 : i32, i32
  }
  func.func @transform_12(%arg0: i32) -> (i32, i32) {
    %c0_i32 = arith.constant 0 : i32
    %c0_i32_0 = arith.constant 0 : i32
    %c0_i32_1 = arith.constant 0 : i32
    return %c0_i32, %c0_i32_0 : i32, i32
  }
  func.func @transform_13(%arg0: i32) -> (i32, i32) {
    %c0_i32 = arith.constant 0 : i32
    %c0_i32_0 = arith.constant 0 : i32
    %c0_i32_1 = arith.constant 0 : i32
    return %c0_i32, %c0_i32_0 : i32, i32
  }
  func.func @transform_19(%arg0: i32) -> (i32, i32) {
    %c0_i32 = arith.constant 0 : i32
    %c0_i32_0 = arith.constant 0 : i32
    %c0_i32_1 = arith.constant 0 : i32
    return %c0_i32, %c0_i32_0 : i32, i32
  }
  func.func @transform_20(%arg0: i32) -> (i32, i32) {
    %c0_i32 = arith.constant 0 : i32
    %c0_i32_0 = arith.constant 0 : i32
    %c0_i32_1 = arith.constant 0 : i32
    return %c0_i32, %c0_i32_0 : i32, i32
  }
  func.func @transform_21(%arg0: i32) -> (i32, i32) {
    %c0_i32 = arith.constant 0 : i32
    %c0_i32_0 = arith.constant 0 : i32
    %c0_i32_1 = arith.constant 0 : i32
    return %c0_i32, %c0_i32_0 : i32, i32
  }
}

</mosaic_0001>

<llo_original>
// kernel: autoencoder_forward.1
$region0: #{autoencoder_forward.1}
  #allocation0 [shape = 'u32[]', space=smem, size = 0x4, offset = 0x4, fixed_abs, tag = 'smem constant byte address 0x4 - core index']
  #allocation1 [shape = 'u32[144,128]{1,0:T(1,128)}', space=vmem, size = 0x12000, scoped, tag = 'internal scratch']
  #allocation2 [shape = 'bf16[1120,224]{1,0:T(8,128)(2,1)}', space=vmem, size = 0x8c000, scoped, tag = 'scratch operand']
  #allocation3 [shape = 'bf16[1584,256]{1,0:T(8,128)(2,1)}', space=vmem, size = 0xc6000, scoped, tag = 'scratch operand']
  #allocation4 [shape = 'bf16[144,1568]{1,0:T(8,128)(2,1)}', space=vmem, size = 0x75000, scoped, tag = 'scratch operand']
  #allocation5 [shape = 'bf16[1120,224]{1,0:T(8,128)(2,1)}', space=vmem, size = 0x8c000, scoped, tag = 'scratch operand']
  #allocation6 [shape = 'bf16[1120,28]{1,0:T(8,128)(2,1)}', space=vmem, size = 0x46000, scoped, tag = 'scratch operand']
  #allocation7 [shape = 'f32[14,224]{1,0:T(8,128)}', space=vmem, size = 0x4000, scoped, tag = 'scratch operand']
  #allocation8 [shape = 's32[5]{0}', space=sflag, size = 0x14, scoped, tag = 'scratch operand']
  #allocation14 [shape = 's32[]', space=sflag, size = 0x4, offset = 0, fixed_abs, tag = 'sflag constant byte address 0x0 - dummy sync flag']
  #allocation15 [shape = 's32[]', space=sflag, size = 0x4, offset = 0, fixed_abs, tag = 'sflag constant byte address 0x0 - dummy sync flag']
  #allocation16 [shape = 's32[]', space=sflag, size = 0x4, offset = 0, fixed_abs, tag = 'sflag constant byte address 0x0 - dummy sync flag']
  #allocation17 [shape = 's32[]', space=sflag, size = 0x4, offset = 0, fixed_abs, tag = 'sflag constant byte address 0x0 - dummy sync flag']
  #allocation18 [shape = 's32[]', space=sflag, size = 0x4, offset = 0, fixed_abs, tag = 'sflag constant byte address 0x0 - dummy sync flag']
  %s0 = inlined_call_operand.vmem [shape: f32[56,28], index: 0, kind: input, shape index: {}]
  %s1 = inlined_call_operand.vmem [shape: bf16[2,16], index: 1, kind: input, shape index: {}]
  %s2 = inlined_call_operand.vmem [shape: f32[2,128], index: 2, kind: input, shape index: {}]
  %s3 = inlined_call_operand.vmem [shape: bf16[160,56], index: 3, kind: input, shape index: {}]
  %s4 = inlined_call_operand.vmem [shape: bf16[140,224], index: 4, kind: input, shape index: {}]
  %s5 = inlined_call_operand.vmem [shape: f32[1,224], index: 5, kind: input, shape index: {}]
  %s6 = inlined_call_operand.vmem [shape: bf16[80,28], index: 6, kind: input, shape index: {}]
  %s7 = inlined_call_operand.vmem [shape: f32[1,224], index: 7, kind: input, shape index: {}]
  %s8 = inlined_call_operand.vmem [shape: f32[1,256], index: 8, kind: input, shape index: {}]
  %s9 = inlined_call_operand.vmem [shape: f32[1,1568], index: 9, kind: input, shape index: {}]
  %s10 = inlined_call_operand.vmem [shape: bf16[160,14], index: 10, kind: input, shape index: {}]
  %s11 = inlined_call_operand.vmem [shape: f32[1,224], index: 11, kind: input, shape index: {}]
  %s12 = inlined_call_operand.vmem [shape: bf16[280,28], index: 12, kind: input, shape index: {}]
  %s13 = inlined_call_operand.vmem [shape: f32[1,28], index: 13, kind: input, shape index: {}]
  %s14 = inlined_call_operand.vmem [shape: bf16[1120,224], index: 14, kind: input, shape index: {}]
  %s15 = inlined_call_operand.vmem [shape: bf16[1584,256], index: 15, kind: input, shape index: {}]
  %s16 = inlined_call_operand.vmem [shape: bf16[144,1568], index: 16, kind: input, shape index: {}]
  %s17 = inlined_call_operand.vmem [shape: bf16[1120,224], index: 17, kind: input, shape index: {}]
  %s18 = inlined_call_operand.vmem [shape: bf16[1120,28], index: 18, kind: input, shape index: {}]
  %s19 = inlined_call_operand.hbm [shape: f32[56,28], index: 19, kind: output, shape index: {0}]
  %s20 = inlined_call_operand.hbm [shape: f32[2,128], index: 20, kind: output, shape index: {1}]
  %s21 = inlined_call_operand.hbm [shape: f32[2,128], index: 21, kind: output, shape index: {2}]
  %22 = xla_tuple %s19, %s20, %s21
  %s23 = sld [smem:[#allocation0]]
  $region252: #{autoencoder_forward.1} parent=0
    _
  %s25 = ssub.s32 1, %s23
  %s26 = scalar_select 0, %s25, %s23
  $region1: #{autoencoder_forward.1} parent=0
    #allocation9 [shape = 'u8[28672]{0}', space=vmem, size = 0x7000, scoped, tag = 'output window, operand 0, single buffered']
    #allocation10 [shape = 's32[1]{0}', space=sflag, size = 0x4, scoped, tag = 'scoped memory for autoencoder_forward.1']
    #allocation11 [shape = 'u8[1024]{0}', space=vmem, size = 0x400, scoped, tag = 'output window, operand 1, single buffered']
    #allocation12 [shape = 's32[1]{0}', space=sflag, size = 0x4, scoped, tag = 'scoped memory for autoencoder_forward.1']
    #allocation13 [shape = 'u8[1024]{0}', space=vmem, size = 0x400, scoped, tag = 'output window, operand 2, single buffered']
    %27 = vsyncpa [#allocation10], 0
    %28 = vsyncpa [#allocation12], 0
    // Predicated region
    $region2: #{autoencoder_forward.1} parent=1 // pred_check
      _
    $region3: #{autoencoder_forward.1} parent=1 // pred_check_branch
      %30 = sbr.rel (0) target = $region5
    $region4: #{autoencoder_forward.1} parent=1 // pred_region
      _
    $region5: #{autoencoder_forward.1} parent=1 // pred_fallthru
      _
    // Predicated region
    $region6: #{autoencoder_forward.1} parent=1 // pred_check
      _
    $region7: #{autoencoder_forward.1} parent=1 // pred_check_branch
      %32 = sbr.rel (0) target = $region9
    $region8: #{autoencoder_forward.1} parent=1 // pred_region
      _
    $region9: #{autoencoder_forward.1} parent=1 // pred_fallthru
      _
    // Predicated region
    $region10: #{autoencoder_forward.1} parent=1 // pred_check
      _
    $region11: #{autoencoder_forward.1} parent=1 // pred_check_branch
      %34 = sbr.rel (0) target = $region13
    $region12: #{autoencoder_forward.1} parent=1 // pred_region
      _
    $region13: #{autoencoder_forward.1} parent=1 // pred_fallthru
      _
    // Predicated region
    $region14: #{autoencoder_forward.1} parent=1 // pred_check
      _
    $region15: #{autoencoder_forward.1} parent=1 // pred_check_branch
      %36 = sbr.rel (0) target = $region17
    $region16: #{autoencoder_forward.1} parent=1 // pred_region
      _
    $region17: #{autoencoder_forward.1} parent=1 // pred_fallthru
      _
    // Predicated region
    $region18: #{autoencoder_forward.1} parent=1 // pred_check
      _
    $region19: #{autoencoder_forward.1} parent=1 // pred_check_branch
      %38 = sbr.rel (0) target = $region21
    $region20: #{autoencoder_forward.1} parent=1 // pred_region
      _
    $region21: #{autoencoder_forward.1} parent=1 // pred_fallthru
      _
    // Predicated region
    $region22: #{autoencoder_forward.1} parent=1 // pred_check
      _
    $region23: #{autoencoder_forward.1} parent=1 // pred_check_branch
      %40 = sbr.rel (0) target = $region25
    $region24: #{autoencoder_forward.1} parent=1 // pred_region
      _
    $region25: #{autoencoder_forward.1} parent=1 // pred_fallthru
      _
    // Predicated region
    $region26: #{autoencoder_forward.1} parent=1 // pred_check
      _
    $region27: #{autoencoder_forward.1} parent=1 // pred_check_branch
      %42 = sbr.rel (0) target = $region29
    $region28: #{autoencoder_forward.1} parent=1 // pred_region
      _
    $region29: #{autoencoder_forward.1} parent=1 // pred_fallthru
      _
    // Predicated region
    $region30: #{autoencoder_forward.1} parent=1 // pred_check
      _
    $region31: #{autoencoder_forward.1} parent=1 // pred_check_branch
      %44 = sbr.rel (0) target = $region33
    $region32: #{autoencoder_forward.1} parent=1 // pred_region
      _
    $region33: #{autoencoder_forward.1} parent=1 // pred_fallthru
      _
    // Predicated region
    $region34: #{autoencoder_forward.1} parent=1 // pred_check
      _
    $region35: #{autoencoder_forward.1} parent=1 // pred_check_branch
      %46 = sbr.rel (0) target = $region37
    $region36: #{autoencoder_forward.1} parent=1 // pred_region
      _
    $region37: #{autoencoder_forward.1} parent=1 // pred_fallthru
      _
    // Predicated region
    $region38: #{autoencoder_forward.1} parent=1 // pred_check
      _
    $region39: #{autoencoder_forward.1} parent=1 // pred_check_branch
      %48 = sbr.rel (0) target = $region41
    $region40: #{autoencoder_forward.1} parent=1 // pred_region
      _
    $region41: #{autoencoder_forward.1} parent=1 // pred_fallthru
      _
    // Predicated region
    $region42: #{autoencoder_forward.1} parent=1 // pred_check
      _
    $region43: #{autoencoder_forward.1} parent=1 // pred_check_branch
      %50 = sbr.rel (0) target = $region45
    $region44: #{autoencoder_forward.1} parent=1 // pred_region
      _
    $region45: #{autoencoder_forward.1} parent=1 // pred_fallthru
      _
    // Predicated region
    $region46: #{autoencoder_forward.1} parent=1 // pred_check
      _
    $region47: #{autoencoder_forward.1} parent=1 // pred_check_branch
      %52 = sbr.rel (0) target = $region49
    $region48: #{autoencoder_forward.1} parent=1 // pred_region
      _
    $region49: #{autoencoder_forward.1} parent=1 // pred_fallthru
      _
    // Predicated region
    $region50: #{autoencoder_forward.1} parent=1 // pred_check
      _
    $region51: #{autoencoder_forward.1} parent=1 // pred_check_branch
      %54 = sbr.rel (0) target = $region53
    $region52: #{autoencoder_forward.1} parent=1 // pred_region
      _
    $region53: #{autoencoder_forward.1} parent=1 // pred_fallthru
      _
    // Predicated region
    $region54: #{autoencoder_forward.1} parent=1 // pred_check
      _
    $region55: #{autoencoder_forward.1} parent=1 // pred_check_branch
      %56 = sbr.rel (0) target = $region57
    $region56: #{autoencoder_forward.1} parent=1 // pred_region
      _
    $region57: #{autoencoder_forward.1} parent=1 // pred_fallthru
      _
    %p59 = scmp.lt.u32.totalorder 1120, 8
    %p60 = pneg %p59
    // Predicated region
    $region58: #{autoencoder_forward.1} parent=1 // pred_check
      _
    $region59: #{autoencoder_forward.1} parent=1 // pred_check_branch
      %62 = sbr.rel (%p59) target = $region61
    $region60: #{autoencoder_forward.1} parent=1 // pred_region
      %s78 = sand.u32 1120, 7
      %p79 = scmp.eq.s32.totalorder %s78, 0
      // Predicated region
      $region73: #{autoencoder_forward.1} parent=60 // pred_check
        %p80 = pneg %p79
      $region74: #{autoencoder_forward.1} parent=60 // pred_check_branch
        %82 = sbr.rel (%p80) target = $region76
      $region75: #{autoencoder_forward.1} parent=60 // pred_region
        loop: start=0, step=1, limit=1
        $region77: #{autoencoder_forward.1} parent=75 // loop_pre_header
          _
        $region78: #{autoencoder_forward.1} parent=75 // loop_header
          %s84 = sphi 0, %s88
          %p85 = scmp.ge.s32.totalorder %s84, 1
          %s89 = sphi %s14, %s14
          %s90 = sphi [#allocation2], [#allocation2]
        $region79: #{autoencoder_forward.1} parent=75 // loop_header_branch
          %87 = sbr.rel (%p85) target = $region83
        $region80: #{autoencoder_forward.1} parent=75 // loop_body
          %v91 = vld [vmem:[%s89] sm:$0xff]
          %92 = vst [vmem:[%s90] sm:$0xff] %v91
          %v93 = vld [vmem:[%s89 + $0x8] sm:$0xff]
          %94 = vst [vmem:[%s90 + $0x8] sm:$0xff] %v93
          %v95 = vld [vmem:[%s89 + $0x10] sm:$0xff]
          %96 = vst [vmem:[%s90 + $0x10] sm:$0xff] %v95
          %v97 = vld [vmem:[%s89 + $0x18] sm:$0xff]
          %98 = vst [vmem:[%s90 + $0x18] sm:$0xff] %v97
          %v99 = vld [vmem:[%s89 + $0x20] sm:$0xff]
          %100 = vst [vmem:[%s90 + $0x20] sm:$0xff] %v99
          %v101 = vld [vmem:[%s89 + $0x28] sm:$0xff]
          %102 = vst [vmem:[%s90 + $0x28] sm:$0xff] %v101
          %v103 = vld [vmem:[%s89 + $0x30] sm:$0xff]
          %104 = vst [vmem:[%s90 + $0x30] sm:$0xff] %v103
          %v105 = vld [vmem:[%s89 + $0x38] sm:$0xff]
          %106 = vst [vmem:[%s90 + $0x38] sm:$0xff] %v105
          %v107 = vld [vmem:[%s89 + $0x40] sm:$0xff]
          %108 = vst [vmem:[%s90 + $0x40] sm:$0xff] %v107
          %v109 = vld [vmem:[%s89 + $0x48] sm:$0xff]
          %110 = vst [vmem:[%s90 + $0x48] sm:$0xff] %v109
          %v111 = vld [vmem:[%s89 + $0x50] sm:$0xff]
          %112 = vst [vmem:[%s90 + $0x50] sm:$0xff] %v111
          %v113 = vld [vmem:[%s89 + $0x58] sm:$0xff]
          %114 = vst [vmem:[%s90 + $0x58] sm:$0xff] %v113
          %v115 = vld [vmem:[%s89 + $0x60] sm:$0xff]
          %116 = vst [vmem:[%s90 + $0x60] sm:$0xff] %v115
          %v117 = vld [vmem:[%s89 + $0x68] sm:$0xff]
          %118 = vst [vmem:[%s90 + $0x68] sm:$0xff] %v117
          %v119 = vld [vmem:[%s89 + $0x70] sm:$0xff]
          %120 = vst [vmem:[%s90 + $0x70] sm:$0xff] %v119
          %v121 = vld [vmem:[%s89 + $0x78] sm:$0xff]
          %122 = vst [vmem:[%s90 + $0x78] sm:$0xff] %v121
          %v123 = vld [vmem:[%s89 + $0x80] sm:$0xff]
          %124 = vst [vmem:[%s90 + $0x80] sm:$0xff] %v123
          %v125 = vld [vmem:[%s89 + $0x88] sm:$0xff]
          %126 = vst [vmem:[%s90 + $0x88] sm:$0xff] %v125
          %v127 = vld [vmem:[%s89 + $0x90] sm:$0xff]
          %128 = vst [vmem:[%s90 + $0x90] sm:$0xff] %v127
          %v129 = vld [vmem:[%s89 + $0x98] sm:$0xff]
          %130 = vst [vmem:[%s90 + $0x98] sm:$0xff] %v129
          %v131 = vld [vmem:[%s89 + $0xa0] sm:$0xff]
          %132 = vst [vmem:[%s90 + $0xa0] sm:$0xff] %v131
          %v133 = vld [vmem:[%s89 + $0xa8] sm:$0xff]
          %134 = vst [vmem:[%s90 + $0xa8] sm:$0xff] %v133
          %v135 = vld [vmem:[%s89 + $0xb0] sm:$0xff]
          %136 = vst [vmem:[%s90 + $0xb0] sm:$0xff] %v135
          %v137 = vld [vmem:[%s89 + $0xb8] sm:$0xff]
          %138 = vst [vmem:[%s90 + $0xb8] sm:$0xff] %v137
          %v139 = vld [vmem:[%s89 + $0xc0] sm:$0xff]
          %140 = vst [vmem:[%s90 + $0xc0] sm:$0xff] %v139
          %v141 = vld [vmem:[%s89 + $0xc8] sm:$0xff]
          %142 = vst [vmem:[%s90 + $0xc8] sm:$0xff] %v141
          %v143 = vld [vmem:[%s89 + $0xd0] sm:$0xff]
          %144 = vst [vmem:[%s90 + $0xd0] sm:$0xff] %v143
          %v145 = vld [vmem:[%s89 + $0xd8] sm:$0xff]
          %146 = vst [vmem:[%s90 + $0xd8] sm:$0xff] %v145
          %v147 = vld [vmem:[%s89 + $0xe0] sm:$0xff]
          %148 = vst [vmem:[%s90 + $0xe0] sm:$0xff] %v147
          %v149 = vld [vmem:[%s89 + $0xe8] sm:$0xff]
          %150 = vst [vmem:[%s90 + $0xe8] sm:$0xff] %v149
          %v151 = vld [vmem:[%s89 + $0xf0] sm:$0xff]
          %152 = vst [vmem:[%s90 + $0xf0] sm:$0xff] %v151
          %v153 = vld [vmem:[%s89 + $0xf8] sm:$0xff]
          %154 = vst [vmem:[%s90 + $0xf8] sm:$0xff] %v153
          %v155 = vld [vmem:[%s89 + $0x100] sm:$0xff]
          %156 = vst [vmem:[%s90 + $0x100] sm:$0xff] %v155
          %v157 = vld [vmem:[%s89 + $0x108] sm:$0xff]
          %158 = vst [vmem:[%s90 + $0x108] sm:$0xff] %v157
          %v159 = vld [vmem:[%s89 + $0x110] sm:$0xff]
          %160 = vst [vmem:[%s90 + $0x110] sm:$0xff] %v159
          %v161 = vld [vmem:[%s89 + $0x118] sm:$0xff]
          %162 = vst [vmem:[%s90 + $0x118] sm:$0xff] %v161
          %v163 = vld [vmem:[%s89 + $0x120] sm:$0xff]
          %164 = vst [vmem:[%s90 + $0x120] sm:$0xff] %v163
          %v165 = vld [vmem:[%s89 + $0x128] sm:$0xff]
          %166 = vst [vmem:[%s90 + $0x128] sm:$0xff] %v165
          %v167 = vld [vmem:[%s89 + $0x130] sm:$0xff]
          %168 = vst [vmem:[%s90 + $0x130] sm:$0xff] %v167
          %v169 = vld [vmem:[%s89 + $0x138] sm:$0xff]
          %170 = vst [vmem:[%s90 + $0x138] sm:$0xff] %v169
          %v171 = vld [vmem:[%s89 + $0x140] sm:$0xff]
          %172 = vst [vmem:[%s90 + $0x140] sm:$0xff] %v171
          %v173 = vld [vmem:[%s89 + $0x148] sm:$0xff]
          %174 = vst [vmem:[%s90 + $0x148] sm:$0xff] %v173
          %v175 = vld [vmem:[%s89 + $0x150] sm:$0xff]
          %176 = vst [vmem:[%s90 + $0x150] sm:$0xff] %v175
          %v177 = vld [vmem:[%s89 + $0x158] sm:$0xff]
          %178 = vst [vmem:[%s90 + $0x158] sm:$0xff] %v177
          %v179 = vld [vmem:[%s89 + $0x160] sm:$0xff]
          %180 = vst [vmem:[%s90 + $0x160] sm:$0xff] %v179
          %v181 = vld [vmem:[%s89 + $0x168] sm:$0xff]
          %182 = vst [vmem:[%s90 + $0x168] sm:$0xff] %v181
          %v183 = vld [vmem:[%s89 + $0x170] sm:$0xff]
          %184 = vst [vmem:[%s90 + $0x170] sm:$0xff] %v183
          %v185 = vld [vmem:[%s89 + $0x178] sm:$0xff]
          %186 = vst [vmem:[%s90 + $0x178] sm:$0xff] %v185
          %v187 = vld [vmem:[%s89 + $0x180] sm:$0xff]
          %188 = vst [vmem:[%s90 + $0x180] sm:$0xff] %v187
          %v189 = vld [vmem:[%s89 + $0x188] sm:$0xff]
          %190 = vst [vmem:[%s90 + $0x188] sm:$0xff] %v189
          %v191 = vld [vmem:[%s89 + $0x190] sm:$0xff]
          %192 = vst [vmem:[%s90 + $0x190] sm:$0xff] %v191
          %v193 = vld [vmem:[%s89 + $0x198] sm:$0xff]
          %194 = vst [vmem:[%s90 + $0x198] sm:$0xff] %v193
          %v195 = vld [vmem:[%s89 + $0x1a0] sm:$0xff]
          %196 = vst [vmem:[%s90 + $0x1a0] sm:$0xff] %v195
          %v197 = vld [vmem:[%s89 + $0x1a8] sm:$0xff]
          %198 = vst [vmem:[%s90 + $0x1a8] sm:$0xff] %v197
          %v199 = vld [vmem:[%s89 + $0x1b0] sm:$0xff]
          %200 = vst [vmem:[%s90 + $0x1b0] sm:$0xff] %v199
          %v201 = vld [vmem:[%s89 + $0x1b8] sm:$0xff]
          %202 = vst [vmem:[%s90 + $0x1b8] sm:$0xff] %v201
          %v203 = vld [vmem:[%s89 + $0x1c0] sm:$0xff]
          %204 = vst [vmem:[%s90 + $0x1c0] sm:$0xff] %v203
          %v205 = vld [vmem:[%s89 + $0x1c8] sm:$0xff]
          %206 = vst [vmem:[%s90 + $0x1c8] sm:$0xff] %v205
          %v207 = vld [vmem:[%s89 + $0x1d0] sm:$0xff]
          %208 = vst [vmem:[%s90 + $0x1d0] sm:$0xff] %v207
          %v209 = vld [vmem:[%s89 + $0x1d8] sm:$0xff]
          %210 = vst [vmem:[%s90 + $0x1d8] sm:$0xff] %v209
          %v211 = vld [vmem:[%s89 + $0x1e0] sm:$0xff]
          %212 = vst [vmem:[%s90 + $0x1e0] sm:$0xff] %v211
          %v213 = vld [vmem:[%s89 + $0x1e8] sm:$0xff]
          %214 = vst [vmem:[%s90 + $0x1e8] sm:$0xff] %v213
          %v215 = vld [vmem:[%s89 + $0x1f0] sm:$0xff]
          %216 = vst [vmem:[%s90 + $0x1f0] sm:$0xff] %v215
          %v217 = vld [vmem:[%s89 + $0x1f8] sm:$0xff]
          %218 = vst [vmem:[%s90 + $0x1f8] sm:$0xff] %v217
          %v219 = vld [vmem:[%s89 + $0x200] sm:$0xff]
          %220 = vst [vmem:[%s90 + $0x200] sm:$0xff] %v219
          %v221 = vld [vmem:[%s89 + $0x208] sm:$0xff]
          %222 = vst [vmem:[%s90 + $0x208] sm:$0xff] %v221
          %v223 = vld [vmem:[%s89 + $0x210] sm:$0xff]
          %224 = vst [vmem:[%s90 + $0x210] sm:$0xff] %v223
          %v225 = vld [vmem:[%s89 + $0x218] sm:$0xff]
          %226 = vst [vmem:[%s90 + $0x218] sm:$0xff] %v225
          %v227 = vld [vmem:[%s89 + $0x220] sm:$0xff]
          %228 = vst [vmem:[%s90 + $0x220] sm:$0xff] %v227
          %v229 = vld [vmem:[%s89 + $0x228] sm:$0xff]
          %230 = vst [vmem:[%s90 + $0x228] sm:$0xff] %v229
          %v231 = vld [vmem:[%s89 + $0x230] sm:$0xff]
          %232 = vst [vmem:[%s90 + $0x230] sm:$0xff] %v231
          %v233 = vld [vmem:[%s89 + $0x238] sm:$0xff]
          %234 = vst [vmem:[%s90 + $0x238] sm:$0xff] %v233
          %v235 = vld [vmem:[%s89 + $0x240] sm:$0xff]
          %236 = vst [vmem:[%s90 + $0x240] sm:$0xff] %v235
          %v237 = vld [vmem:[%s89 + $0x248] sm:$0xff]
          %238 = vst [vmem:[%s90 + $0x248] sm:$0xff] %v237
          %v239 = vld [vmem:[%s89 + $0x250] sm:$0xff]
          %240 = vst [vmem:[%s90 + $0x250] sm:$0xff] %v239
          %v241 = vld [vmem:[%s89 + $0x258] sm:$0xff]
          %242 = vst [vmem:[%s90 + $0x258] sm:$0xff] %v241
          %v243 = vld [vmem:[%s89 + $0x260] sm:$0xff]
          %244 = vst [vmem:[%s90 + $0x260] sm:$0xff] %v243
          %v245 = vld [vmem:[%s89 + $0x268] sm:$0xff]
          %246 = vst [vmem:[%s90 + $0x268] sm:$0xff] %v245
          %v247 = vld [vmem:[%s89 + $0x270] sm:$0xff]
          %248 = vst [vmem:[%s90 + $0x270] sm:$0xff] %v247
          %v249 = vld [vmem:[%s89 + $0x278] sm:$0xff]
          %250 = vst [vmem:[%s90 + $0x278] sm:$0xff] %v249
          %v251 = vld [vmem:[%s89 + $0x280] sm:$0xff]
          %252 = vst [vmem:[%s90 + $0x280] sm:$0xff] %v251
          %v253 = vld [vmem:[%s89 + $0x288] sm:$0xff]
          %254 = vst [vmem:[%s90 + $0x288] sm:$0xff] %v253
          %v255 = vld [vmem:[%s89 + $0x290] sm:$0xff]
          %256 = vst [vmem:[%s90 + $0x290] sm:$0xff] %v255
          %v257 = vld [vmem:[%s89 + $0x298] sm:$0xff]
          %258 = vst [vmem:[%s90 + $0x298] sm:$0xff] %v257
          %v259 = vld [vmem:[%s89 + $0x2a0] sm:$0xff]
          %260 = vst [vmem:[%s90 + $0x2a0] sm:$0xff] %v259
          %v261 = vld [vmem:[%s89 + $0x2a8] sm:$0xff]
          %262 = vst [vmem:[%s90 + $0x2a8] sm:$0xff] %v261
          %v263 = vld [vmem:[%s89 + $0x2b0] sm:$0xff]
          %264 = vst [vmem:[%s90 + $0x2b0] sm:$0xff] %v263
          %v265 = vld [vmem:[%s89 + $0x2b8] sm:$0xff]
          %266 = vst [vmem:[%s90 + $0x2b8] sm:$0xff] %v265
          %v267 = vld [vmem:[%s89 + $0x2c0] sm:$0xff]
          %268 = vst [vmem:[%s90 + $0x2c0] sm:$0xff] %v267
          %v269 = vld [vmem:[%s89 + $0x2c8] sm:$0xff]
          %270 = vst [vmem:[%s90 + $0x2c8] sm:$0xff] %v269
          %v271 = vld [vmem:[%s89 + $0x2d0] sm:$0xff]
          %272 = vst [vmem:[%s90 + $0x2d0] sm:$0xff] %v271
          %v273 = vld [vmem:[%s89 + $0x2d8] sm:$0xff]
          %274 = vst [vmem:[%s90 + $0x2d8] sm:$0xff] %v273
          %v275 = vld [vmem:[%s89 + $0x2e0] sm:$0xff]
          %276 = vst [vmem:[%s90 + $0x2e0] sm:$0xff] %v275
          %v277 = vld [vmem:[%s89 + $0x2e8] sm:$0xff]
          %278 = vst [vmem:[%s90 + $0x2e8] sm:$0xff] %v277
          %v279 = vld [vmem:[%s89 + $0x2f0] sm:$0xff]
          %280 = vst [vmem:[%s90 + $0x2f0] sm:$0xff] %v279
          %v281 = vld [vmem:[%s89 + $0x2f8] sm:$0xff]
          %282 = vst [vmem:[%s90 + $0x2f8] sm:$0xff] %v281
          %v283 = vld [vmem:[%s89 + $0x300] sm:$0xff]
          %284 = vst [vmem:[%s90 + $0x300] sm:$0xff] %v283
          %v285 = vld [vmem:[%s89 + $0x308] sm:$0xff]
          %286 = vst [vmem:[%s90 + $0x308] sm:$0xff] %v285
          %v287 = vld [vmem:[%s89 + $0x310] sm:$0xff]
          %288 = vst [vmem:[%s90 + $0x310] sm:$0xff] %v287
          %v289 = vld [vmem:[%s89 + $0x318] sm:$0xff]
          %290 = vst [vmem:[%s90 + $0x318] sm:$0xff] %v289
          %v291 = vld [vmem:[%s89 + $0x320] sm:$0xff]
          %292 = vst [vmem:[%s90 + $0x320] sm:$0xff] %v291
          %v293 = vld [vmem:[%s89 + $0x328] sm:$0xff]
          %294 = vst [vmem:[%s90 + $0x328] sm:$0xff] %v293
          %v295 = vld [vmem:[%s89 + $0x330] sm:$0xff]
          %296 = vst [vmem:[%s90 + $0x330] sm:$0xff] %v295
          %v297 = vld [vmem:[%s89 + $0x338] sm:$0xff]
          %298 = vst [vmem:[%s90 + $0x338] sm:$0xff] %v297
          %v299 = vld [vmem:[%s89 + $0x340] sm:$0xff]
          %300 = vst [vmem:[%s90 + $0x340] sm:$0xff] %v299
          %v301 = vld [vmem:[%s89 + $0x348] sm:$0xff]
          %302 = vst [vmem:[%s90 + $0x348] sm:$0xff] %v301
          %v303 = vld [vmem:[%s89 + $0x350] sm:$0xff]
          %304 = vst [vmem:[%s90 + $0x350] sm:$0xff] %v303
          %v305 = vld [vmem:[%s89 + $0x358] sm:$0xff]
          %306 = vst [vmem:[%s90 + $0x358] sm:$0xff] %v305
          %v307 = vld [vmem:[%s89 + $0x360] sm:$0xff]
          %308 = vst [vmem:[%s90 + $0x360] sm:$0xff] %v307
          %v309 = vld [vmem:[%s89 + $0x368] sm:$0xff]
          %310 = vst [vmem:[%s90 + $0x368] sm:$0xff] %v309
          %v311 = vld [vmem:[%s89 + $0x370] sm:$0xff]
          %312 = vst [vmem:[%s90 + $0x370] sm:$0xff] %v311
          %v313 = vld [vmem:[%s89 + $0x378] sm:$0xff]
          %314 = vst [vmem:[%s90 + $0x378] sm:$0xff] %v313
          %v315 = vld [vmem:[%s89 + $0x380] sm:$0xff]
          %316 = vst [vmem:[%s90 + $0x380] sm:$0xff] %v315
          %v317 = vld [vmem:[%s89 + $0x388] sm:$0xff]
          %318 = vst [vmem:[%s90 + $0x388] sm:$0xff] %v317
          %v319 = vld [vmem:[%s89 + $0x390] sm:$0xff]
          %320 = vst [vmem:[%s90 + $0x390] sm:$0xff] %v319
          %v321 = vld [vmem:[%s89 + $0x398] sm:$0xff]
          %322 = vst [vmem:[%s90 + $0x398] sm:$0xff] %v321
          %v323 = vld [vmem:[%s89 + $0x3a0] sm:$0xff]
          %324 = vst [vmem:[%s90 + $0x3a0] sm:$0xff] %v323
          %v325 = vld [vmem:[%s89 + $0x3a8] sm:$0xff]
          %326 = vst [vmem:[%s90 + $0x3a8] sm:$0xff] %v325
          %v327 = vld [vmem:[%s89 + $0x3b0] sm:$0xff]
          %328 = vst [vmem:[%s90 + $0x3b0] sm:$0xff] %v327
          %v329 = vld [vmem:[%s89 + $0x3b8] sm:$0xff]
          %330 = vst [vmem:[%s90 + $0x3b8] sm:$0xff] %v329
          %v331 = vld [vmem:[%s89 + $0x3c0] sm:$0xff]
          %332 = vst [vmem:[%s90 + $0x3c0] sm:$0xff] %v331
          %v333 = vld [vmem:[%s89 + $0x3c8] sm:$0xff]
          %334 = vst [vmem:[%s90 + $0x3c8] sm:$0xff] %v333
          %v335 = vld [vmem:[%s89 + $0x3d0] sm:$0xff]
          %336 = vst [vmem:[%s90 + $0x3d0] sm:$0xff] %v335
          %v337 = vld [vmem:[%s89 + $0x3d8] sm:$0xff]
          %338 = vst [vmem:[%s90 + $0x3d8] sm:$0xff] %v337
          %v339 = vld [vmem:[%s89 + $0x3e0] sm:$0xff]
          %340 = vst [vmem:[%s90 + $0x3e0] sm:$0xff] %v339
          %v341 = vld [vmem:[%s89 + $0x3e8] sm:$0xff]
          %342 = vst [vmem:[%s90 + $0x3e8] sm:$0xff] %v341
          %v343 = vld [vmem:[%s89 + $0x3f0] sm:$0xff]
          %344 = vst [vmem:[%s90 + $0x3f0] sm:$0xff] %v343
          %v345 = vld [vmem:[%s89 + $0x3f8] sm:$0xff]
          %346 = vst [vmem:[%s90 + $0x3f8] sm:$0xff] %v345
          %v347 = vld [vmem:[%s89 + $0x400] sm:$0xff]
          %348 = vst [vmem:[%s90 + $0x400] sm:$0xff] %v347
          %v349 = vld [vmem:[%s89 + $0x408] sm:$0xff]
          %350 = vst [vmem:[%s90 + $0x408] sm:$0xff] %v349
          %v351 = vld [vmem:[%s89 + $0x410] sm:$0xff]
          %352 = vst [vmem:[%s90 + $0x410] sm:$0xff] %v351
          %v353 = vld [vmem:[%s89 + $0x418] sm:$0xff]
          %354 = vst [vmem:[%s90 + $0x418] sm:$0xff] %v353
          %v355 = vld [vmem:[%s89 + $0x420] sm:$0xff]
          %356 = vst [vmem:[%s90 + $0x420] sm:$0xff] %v355
          %v357 = vld [vmem:[%s89 + $0x428] sm:$0xff]
          %358 = vst [vmem:[%s90 + $0x428] sm:$0xff] %v357
          %v359 = vld [vmem:[%s89 + $0x430] sm:$0xff]
          %360 = vst [vmem:[%s90 + $0x430] sm:$0xff] %v359
          %v361 = vld [vmem:[%s89 + $0x438] sm:$0xff]
          %362 = vst [vmem:[%s90 + $0x438] sm:$0xff] %v361
          %v363 = vld [vmem:[%s89 + $0x440] sm:$0xff]
          %364 = vst [vmem:[%s90 + $0x440] sm:$0xff] %v363
          %v365 = vld [vmem:[%s89 + $0x448] sm:$0xff]
          %366 = vst [vmem:[%s90 + $0x448] sm:$0xff] %v365
          %v367 = vld [vmem:[%s89 + $0x450] sm:$0xff]
          %368 = vst [vmem:[%s90 + $0x450] sm:$0xff] %v367
          %v369 = vld [vmem:[%s89 + $0x458] sm:$0xff]
          %370 = vst [vmem:[%s90 + $0x458] sm:$0xff] %v369
        $region81: #{autoencoder_forward.1} parent=75 // loop_footer
          %s88 = sadd.s32 1, %s84
        $region82: #{autoencoder_forward.1} parent=75 // loop_footer_branch
          %83 = sbr.rel target = $region78
        $region83: #{autoencoder_forward.1} parent=75 // loop_exit
          _
      $region76: #{autoencoder_forward.1} parent=60 // pred_fallthru
        _
      %p371 = pneg %p79
      // Predicated region
      $region84: #{autoencoder_forward.1} parent=60 // pred_check
        _
      $region85: #{autoencoder_forward.1} parent=60 // pred_check_branch
        %373 = sbr.rel (%p79) target = $region87
      $region86: #{autoencoder_forward.1} parent=60 // pred_region
        %s374 = sand.u32 1120, 7
      $region87: #{autoencoder_forward.1} parent=60 // pred_fallthru
        _
    $region61: #{autoencoder_forward.1} parent=1 // pred_fallthru
      _
    // Predicated region
    $region62: #{autoencoder_forward.1} parent=1 // pred_check
      %p63 = pneg %p59
    $region63: #{autoencoder_forward.1} parent=1 // pred_check_branch
      %65 = sbr.rel (%p63) target = $region65
    $region64: #{autoencoder_forward.1} parent=1 // pred_region
      %s66 = sshll.u32 1, 1120
      %s67 = ssub.s32 %s66, 1
      loop: start=0, step=1, limit=1
      $region66: #{autoencoder_forward.1} parent=64 // loop_pre_header
        _
      $region67: #{autoencoder_forward.1} parent=64 // loop_header
        %s69 = sphi 0, %s73
        %p70 = scmp.ge.s32.totalorder %s69, 1
        %s74 = sphi %s14, %s14
        %s75 = sphi [#allocation2], [#allocation2]
      $region68: #{autoencoder_forward.1} parent=64 // loop_header_branch
        %72 = sbr.rel (%p70) target = $region72
      $region69: #{autoencoder_forward.1} parent=64 // loop_body
        %v76 = vld [vmem:[%s74] sm:%s67]
        %77 = vst [vmem:[%s75] sm:%s67] %v76
      $region70: #{autoencoder_forward.1} parent=64 // loop_footer
        %s73 = sadd.s32 1, %s69
      $region71: #{autoencoder_forward.1} parent=64 // loop_footer_branch
        %68 = sbr.rel target = $region67
      $region72: #{autoencoder_forward.1} parent=64 // loop_exit
        _
    $region65: #{autoencoder_forward.1} parent=1 // pred_fallthru
      _
    // Predicated region
    $region88: #{autoencoder_forward.1} parent=1 // pred_check
      _
    $region89: #{autoencoder_forward.1} parent=1 // pred_check_branch
      %377 = sbr.rel (0) target = $region91
    $region90: #{autoencoder_forward.1} parent=1 // pred_region
      %378 = vsyncadd [#allocation8], 17920
    $region91: #{autoencoder_forward.1} parent=1 // pred_fallthru
      _
    %s379 = scalar_lea.sflag [#allocation8], 1
    %p381 = scmp.lt.u32.totalorder 1584, 8
    %p382 = pneg %p381
    // Predicated region
    $region92: #{autoencoder_forward.1} parent=1 // pred_check
      _
    $region93: #{autoencoder_forward.1} parent=1 // pred_check_branch
      %384 = sbr.rel (%p381) target = $region95
    $region94: #{autoencoder_forward.1} parent=1 // pred_region
      %s400 = sand.u32 1584, 7
      %p401 = scmp.eq.s32.totalorder %s400, 0
      // Predicated region
      $region107: #{autoencoder_forward.1} parent=94 // pred_check
        %p402 = pneg %p401
      $region108: #{autoencoder_forward.1} parent=94 // pred_check_branch
        %404 = sbr.rel (%p402) target = $region110
      $region109: #{autoencoder_forward.1} parent=94 // pred_region
        loop: start=0, step=1, limit=1
        $region111: #{autoencoder_forward.1} parent=109 // loop_pre_header
          _
        $region112: #{autoencoder_forward.1} parent=109 // loop_header
          %s406 = sphi 0, %s410
          %p407 = scmp.ge.s32.totalorder %s406, 1
          %s411 = sphi %s15, %s15
          %s412 = sphi [#allocation3], [#allocation3]
        $region113: #{autoencoder_forward.1} parent=109 // loop_header_branch
          %409 = sbr.rel (%p407) target = $region117
        $region114: #{autoencoder_forward.1} parent=109 // loop_body
          %v413 = vld [vmem:[%s411] sm:$0xff]
          %414 = vst [vmem:[%s412] sm:$0xff] %v413
          %v415 = vld [vmem:[%s411 + $0x8] sm:$0xff]
          %416 = vst [vmem:[%s412 + $0x8] sm:$0xff] %v415
          %v417 = vld [vmem:[%s411 + $0x10] sm:$0xff]
          %418 = vst [vmem:[%s412 + $0x10] sm:$0xff] %v417
          %v419 = vld [vmem:[%s411 + $0x18] sm:$0xff]
          %420 = vst [vmem:[%s412 + $0x18] sm:$0xff] %v419
          %v421 = vld [vmem:[%s411 + $0x20] sm:$0xff]
          %422 = vst [vmem:[%s412 + $0x20] sm:$0xff] %v421
          %v423 = vld [vmem:[%s411 + $0x28] sm:$0xff]
          %424 = vst [vmem:[%s412 + $0x28] sm:$0xff] %v423
          %v425 = vld [vmem:[%s411 + $0x30] sm:$0xff]
          %426 = vst [vmem:[%s412 + $0x30] sm:$0xff] %v425
          %v427 = vld [vmem:[%s411 + $0x38] sm:$0xff]
          %428 = vst [vmem:[%s412 + $0x38] sm:$0xff] %v427
          %v429 = vld [vmem:[%s411 + $0x40] sm:$0xff]
          %430 = vst [vmem:[%s412 + $0x40] sm:$0xff] %v429
          %v431 = vld [vmem:[%s411 + $0x48] sm:$0xff]
          %432 = vst [vmem:[%s412 + $0x48] sm:$0xff] %v431
          %v433 = vld [vmem:[%s411 + $0x50] sm:$0xff]
          %434 = vst [vmem:[%s412 + $0x50] sm:$0xff] %v433
          %v435 = vld [vmem:[%s411 + $0x58] sm:$0xff]
          %436 = vst [vmem:[%s412 + $0x58] sm:$0xff] %v435
          %v437 = vld [vmem:[%s411 + $0x60] sm:$0xff]
          %438 = vst [vmem:[%s412 + $0x60] sm:$0xff] %v437
          %v439 = vld [vmem:[%s411 + $0x68] sm:$0xff]
          %440 = vst [vmem:[%s412 + $0x68] sm:$0xff] %v439
          %v441 = vld [vmem:[%s411 + $0x70] sm:$0xff]
          %442 = vst [vmem:[%s412 + $0x70] sm:$0xff] %v441
          %v443 = vld [vmem:[%s411 + $0x78] sm:$0xff]
          %444 = vst [vmem:[%s412 + $0x78] sm:$0xff] %v443
          %v445 = vld [vmem:[%s411 + $0x80] sm:$0xff]
          %446 = vst [vmem:[%s412 + $0x80] sm:$0xff] %v445
          %v447 = vld [vmem:[%s411 + $0x88] sm:$0xff]
          %448 = vst [vmem:[%s412 + $0x88] sm:$0xff] %v447
          %v449 = vld [vmem:[%s411 + $0x90] sm:$0xff]
          %450 = vst [vmem:[%s412 + $0x90] sm:$0xff] %v449
          %v451 = vld [vmem:[%s411 + $0x98] sm:$0xff]
          %452 = vst [vmem:[%s412 + $0x98] sm:$0xff] %v451
          %v453 = vld [vmem:[%s411 + $0xa0] sm:$0xff]
          %454 = vst [vmem:[%s412 + $0xa0] sm:$0xff] %v453
          %v455 = vld [vmem:[%s411 + $0xa8] sm:$0xff]
          %456 = vst [vmem:[%s412 + $0xa8] sm:$0xff] %v455
          %v457 = vld [vmem:[%s411 + $0xb0] sm:$0xff]
          %458 = vst [vmem:[%s412 + $0xb0] sm:$0xff] %v457
          %v459 = vld [vmem:[%s411 + $0xb8] sm:$0xff]
          %460 = vst [vmem:[%s412 + $0xb8] sm:$0xff] %v459
          %v461 = vld [vmem:[%s411 + $0xc0] sm:$0xff]
          %462 = vst [vmem:[%s412 + $0xc0] sm:$0xff] %v461
          %v463 = vld [vmem:[%s411 + $0xc8] sm:$0xff]
          %464 = vst [vmem:[%s412 + $0xc8] sm:$0xff] %v463
          %v465 = vld [vmem:[%s411 + $0xd0] sm:$0xff]
          %466 = vst [vmem:[%s412 + $0xd0] sm:$0xff] %v465
          %v467 = vld [vmem:[%s411 + $0xd8] sm:$0xff]
          %468 = vst [vmem:[%s412 + $0xd8] sm:$0xff] %v467
          %v469 = vld [vmem:[%s411 + $0xe0] sm:$0xff]
          %470 = vst [vmem:[%s412 + $0xe0] sm:$0xff] %v469
          %v471 = vld [vmem:[%s411 + $0xe8] sm:$0xff]
          %472 = vst [vmem:[%s412 + $0xe8] sm:$0xff] %v471
          %v473 = vld [vmem:[%s411 + $0xf0] sm:$0xff]
          %474 = vst [vmem:[%s412 + $0xf0] sm:$0xff] %v473
          %v475 = vld [vmem:[%s411 + $0xf8] sm:$0xff]
          %476 = vst [vmem:[%s412 + $0xf8] sm:$0xff] %v475
          %v477 = vld [vmem:[%s411 + $0x100] sm:$0xff]
          %478 = vst [vmem:[%s412 + $0x100] sm:$0xff] %v477
          %v479 = vld [vmem:[%s411 + $0x108] sm:$0xff]
          %480 = vst [vmem:[%s412 + $0x108] sm:$0xff] %v479
          %v481 = vld [vmem:[%s411 + $0x110] sm:$0xff]
          %482 = vst [vmem:[%s412 + $0x110] sm:$0xff] %v481
          %v483 = vld [vmem:[%s411 + $0x118] sm:$0xff]
          %484 = vst [vmem:[%s412 + $0x118] sm:$0xff] %v483
          %v485 = vld [vmem:[%s411 + $0x120] sm:$0xff]
          %486 = vst [vmem:[%s412 + $0x120] sm:$0xff] %v485
          %v487 = vld [vmem:[%s411 + $0x128] sm:$0xff]
          %488 = vst [vmem:[%s412 + $0x128] sm:$0xff] %v487
          %v489 = vld [vmem:[%s411 + $0x130] sm:$0xff]
          %490 = vst [vmem:[%s412 + $0x130] sm:$0xff] %v489
          %v491 = vld [vmem:[%s411 + $0x138] sm:$0xff]
          %492 = vst [vmem:[%s412 + $0x138] sm:$0xff] %v491
          %v493 = vld [vmem:[%s411 + $0x140] sm:$0xff]
          %494 = vst [vmem:[%s412 + $0x140] sm:$0xff] %v493
          %v495 = vld [vmem:[%s411 + $0x148] sm:$0xff]
          %496 = vst [vmem:[%s412 + $0x148] sm:$0xff] %v495
          %v497 = vld [vmem:[%s411 + $0x150] sm:$0xff]
          %498 = vst [vmem:[%s412 + $0x150] sm:$0xff] %v497
          %v499 = vld [vmem:[%s411 + $0x158] sm:$0xff]
          %500 = vst [vmem:[%s412 + $0x158] sm:$0xff] %v499
          %v501 = vld [vmem:[%s411 + $0x160] sm:$0xff]
          %502 = vst [vmem:[%s412 + $0x160] sm:$0xff] %v501
          %v503 = vld [vmem:[%s411 + $0x168] sm:$0xff]
          %504 = vst [vmem:[%s412 + $0x168] sm:$0xff] %v503
          %v505 = vld [vmem:[%s411 + $0x170] sm:$0xff]
          %506 = vst [vmem:[%s412 + $0x170] sm:$0xff] %v505
          %v507 = vld [vmem:[%s411 + $0x178] sm:$0xff]
          %508 = vst [vmem:[%s412 + $0x178] sm:$0xff] %v507
          %v509 = vld [vmem:[%s411 + $0x180] sm:$0xff]
          %510 = vst [vmem:[%s412 + $0x180] sm:$0xff] %v509
          %v511 = vld [vmem:[%s411 + $0x188] sm:$0xff]
          %512 = vst [vmem:[%s412 + $0x188] sm:$0xff] %v511
          %v513 = vld [vmem:[%s411 + $0x190] sm:$0xff]
          %514 = vst [vmem:[%s412 + $0x190] sm:$0xff] %v513
          %v515 = vld [vmem:[%s411 + $0x198] sm:$0xff]
          %516 = vst [vmem:[%s412 + $0x198] sm:$0xff] %v515
          %v517 = vld [vmem:[%s411 + $0x1a0] sm:$0xff]
          %518 = vst [vmem:[%s412 + $0x1a0] sm:$0xff] %v517
          %v519 = vld [vmem:[%s411 + $0x1a8] sm:$0xff]
          %520 = vst [vmem:[%s412 + $0x1a8] sm:$0xff] %v519
          %v521 = vld [vmem:[%s411 + $0x1b0] sm:$0xff]
          %522 = vst [vmem:[%s412 + $0x1b0] sm:$0xff] %v521
          %v523 = vld [vmem:[%s411 + $0x1b8] sm:$0xff]
          %524 = vst [vmem:[%s412 + $0x1b8] sm:$0xff] %v523
          %v525 = vld [vmem:[%s411 + $0x1c0] sm:$0xff]
          %526 = vst [vmem:[%s412 + $0x1c0] sm:$0xff] %v525
          %v527 = vld [vmem:[%s411 + $0x1c8] sm:$0xff]
          %528 = vst [vmem:[%s412 + $0x1c8] sm:$0xff] %v527
          %v529 = vld [vmem:[%s411 + $0x1d0] sm:$0xff]
          %530 = vst [vmem:[%s412 + $0x1d0] sm:$0xff] %v529
          %v531 = vld [vmem:[%s411 + $0x1d8] sm:$0xff]
          %532 = vst [vmem:[%s412 + $0x1d8] sm:$0xff] %v531
          %v533 = vld [vmem:[%s411 + $0x1e0] sm:$0xff]
          %534 = vst [vmem:[%s412 + $0x1e0] sm:$0xff] %v533
          %v535 = vld [vmem:[%s411 + $0x1e8] sm:$0xff]
          %536 = vst [vmem:[%s412 + $0x1e8] sm:$0xff] %v535
          %v537 = vld [vmem:[%s411 + $0x1f0] sm:$0xff]
          %538 = vst [vmem:[%s412 + $0x1f0] sm:$0xff] %v537
          %v539 = vld [vmem:[%s411 + $0x1f8] sm:$0xff]
          %540 = vst [vmem:[%s412 + $0x1f8] sm:$0xff] %v539
          %v541 = vld [vmem:[%s411 + $0x200] sm:$0xff]
          %542 = vst [vmem:[%s412 + $0x200] sm:$0xff] %v541
          %v543 = vld [vmem:[%s411 + $0x208] sm:$0xff]
          %544 = vst [vmem:[%s412 + $0x208] sm:$0xff] %v543
          %v545 = vld [vmem:[%s411 + $0x210] sm:$0xff]
          %546 = vst [vmem:[%s412 + $0x210] sm:$0xff] %v545
          %v547 = vld [vmem:[%s411 + $0x218] sm:$0xff]
          %548 = vst [vmem:[%s412 + $0x218] sm:$0xff] %v547
          %v549 = vld [vmem:[%s411 + $0x220] sm:$0xff]
          %550 = vst [vmem:[%s412 + $0x220] sm:$0xff] %v549
          %v551 = vld [vmem:[%s411 + $0x228] sm:$0xff]
          %552 = vst [vmem:[%s412 + $0x228] sm:$0xff] %v551
          %v553 = vld [vmem:[%s411 + $0x230] sm:$0xff]
          %554 = vst [vmem:[%s412 + $0x230] sm:$0xff] %v553
          %v555 = vld [vmem:[%s411 + $0x238] sm:$0xff]
          %556 = vst [vmem:[%s412 + $0x238] sm:$0xff] %v555
          %v557 = vld [vmem:[%s411 + $0x240] sm:$0xff]
          %558 = vst [vmem:[%s412 + $0x240] sm:$0xff] %v557
          %v559 = vld [vmem:[%s411 + $0x248] sm:$0xff]
          %560 = vst [vmem:[%s412 + $0x248] sm:$0xff] %v559
          %v561 = vld [vmem:[%s411 + $0x250] sm:$0xff]
          %562 = vst [vmem:[%s412 + $0x250] sm:$0xff] %v561
          %v563 = vld [vmem:[%s411 + $0x258] sm:$0xff]
          %564 = vst [vmem:[%s412 + $0x258] sm:$0xff] %v563
          %v565 = vld [vmem:[%s411 + $0x260] sm:$0xff]
          %566 = vst [vmem:[%s412 + $0x260] sm:$0xff] %v565
          %v567 = vld [vmem:[%s411 + $0x268] sm:$0xff]
          %568 = vst [vmem:[%s412 + $0x268] sm:$0xff] %v567
          %v569 = vld [vmem:[%s411 + $0x270] sm:$0xff]
          %570 = vst [vmem:[%s412 + $0x270] sm:$0xff] %v569
          %v571 = vld [vmem:[%s411 + $0x278] sm:$0xff]
          %572 = vst [vmem:[%s412 + $0x278] sm:$0xff] %v571
          %v573 = vld [vmem:[%s411 + $0x280] sm:$0xff]
          %574 = vst [vmem:[%s412 + $0x280] sm:$0xff] %v573
          %v575 = vld [vmem:[%s411 + $0x288] sm:$0xff]
          %576 = vst [vmem:[%s412 + $0x288] sm:$0xff] %v575
          %v577 = vld [vmem:[%s411 + $0x290] sm:$0xff]
          %578 = vst [vmem:[%s412 + $0x290] sm:$0xff] %v577
          %v579 = vld [vmem:[%s411 + $0x298] sm:$0xff]
          %580 = vst [vmem:[%s412 + $0x298] sm:$0xff] %v579
          %v581 = vld [vmem:[%s411 + $0x2a0] sm:$0xff]
          %582 = vst [vmem:[%s412 + $0x2a0] sm:$0xff] %v581
          %v583 = vld [vmem:[%s411 + $0x2a8] sm:$0xff]
          %584 = vst [vmem:[%s412 + $0x2a8] sm:$0xff] %v583
          %v585 = vld [vmem:[%s411 + $0x2b0] sm:$0xff]
          %586 = vst [vmem:[%s412 + $0x2b0] sm:$0xff] %v585
          %v587 = vld [vmem:[%s411 + $0x2b8] sm:$0xff]
          %588 = vst [vmem:[%s412 + $0x2b8] sm:$0xff] %v587
          %v589 = vld [vmem:[%s411 + $0x2c0] sm:$0xff]
          %590 = vst [vmem:[%s412 + $0x2c0] sm:$0xff] %v589
          %v591 = vld [vmem:[%s411 + $0x2c8] sm:$0xff]
          %592 = vst [vmem:[%s412 + $0x2c8] sm:$0xff] %v591
          %v593 = vld [vmem:[%s411 + $0x2d0] sm:$0xff]
          %594 = vst [vmem:[%s412 + $0x2d0] sm:$0xff] %v593
          %v595 = vld [vmem:[%s411 + $0x2d8] sm:$0xff]
          %596 = vst [vmem:[%s412 + $0x2d8] sm:$0xff] %v595
          %v597 = vld [vmem:[%s411 + $0x2e0] sm:$0xff]
          %598 = vst [vmem:[%s412 + $0x2e0] sm:$0xff] %v597
          %v599 = vld [vmem:[%s411 + $0x2e8] sm:$0xff]
          %600 = vst [vmem:[%s412 + $0x2e8] sm:$0xff] %v599
          %v601 = vld [vmem:[%s411 + $0x2f0] sm:$0xff]
          %602 = vst [vmem:[%s412 + $0x2f0] sm:$0xff] %v601
          %v603 = vld [vmem:[%s411 + $0x2f8] sm:$0xff]
          %604 = vst [vmem:[%s412 + $0x2f8] sm:$0xff] %v603
          %v605 = vld [vmem:[%s411 + $0x300] sm:$0xff]
          %606 = vst [vmem:[%s412 + $0x300] sm:$0xff] %v605
          %v607 = vld [vmem:[%s411 + $0x308] sm:$0xff]
          %608 = vst [vmem:[%s412 + $0x308] sm:$0xff] %v607
          %v609 = vld [vmem:[%s411 + $0x310] sm:$0xff]
          %610 = vst [vmem:[%s412 + $0x310] sm:$0xff] %v609
          %v611 = vld [vmem:[%s411 + $0x318] sm:$0xff]
          %612 = vst [vmem:[%s412 + $0x318] sm:$0xff] %v611
          %v613 = vld [vmem:[%s411 + $0x320] sm:$0xff]
          %614 = vst [vmem:[%s412 + $0x320] sm:$0xff] %v613
          %v615 = vld [vmem:[%s411 + $0x328] sm:$0xff]
          %616 = vst [vmem:[%s412 + $0x328] sm:$0xff] %v615
          %v617 = vld [vmem:[%s411 + $0x330] sm:$0xff]
          %618 = vst [vmem:[%s412 + $0x330] sm:$0xff] %v617
          %v619 = vld [vmem:[%s411 + $0x338] sm:$0xff]
          %620 = vst [vmem:[%s412 + $0x338] sm:$0xff] %v619
          %v621 = vld [vmem:[%s411 + $0x340] sm:$0xff]
          %622 = vst [vmem:[%s412 + $0x340] sm:$0xff] %v621
          %v623 = vld [vmem:[%s411 + $0x348] sm:$0xff]
          %624 = vst [vmem:[%s412 + $0x348] sm:$0xff] %v623
          %v625 = vld [vmem:[%s411 + $0x350] sm:$0xff]
          %626 = vst [vmem:[%s412 + $0x350] sm:$0xff] %v625
          %v627 = vld [vmem:[%s411 + $0x358] sm:$0xff]
          %628 = vst [vmem:[%s412 + $0x358] sm:$0xff] %v627
          %v629 = vld [vmem:[%s411 + $0x360] sm:$0xff]
          %630 = vst [vmem:[%s412 + $0x360] sm:$0xff] %v629
          %v631 = vld [vmem:[%s411 + $0x368] sm:$0xff]
          %632 = vst [vmem:[%s412 + $0x368] sm:$0xff] %v631
          %v633 = vld [vmem:[%s411 + $0x370] sm:$0xff]
          %634 = vst [vmem:[%s412 + $0x370] sm:$0xff] %v633
          %v635 = vld [vmem:[%s411 + $0x378] sm:$0xff]
          %636 = vst [vmem:[%s412 + $0x378] sm:$0xff] %v635
          %v637 = vld [vmem:[%s411 + $0x380] sm:$0xff]
          %638 = vst [vmem:[%s412 + $0x380] sm:$0xff] %v637
          %v639 = vld [vmem:[%s411 + $0x388] sm:$0xff]
          %640 = vst [vmem:[%s412 + $0x388] sm:$0xff] %v639
          %v641 = vld [vmem:[%s411 + $0x390] sm:$0xff]
          %642 = vst [vmem:[%s412 + $0x390] sm:$0xff] %v641
          %v643 = vld [vmem:[%s411 + $0x398] sm:$0xff]
          %644 = vst [vmem:[%s412 + $0x398] sm:$0xff] %v643
          %v645 = vld [vmem:[%s411 + $0x3a0] sm:$0xff]
          %646 = vst [vmem:[%s412 + $0x3a0] sm:$0xff] %v645
          %v647 = vld [vmem:[%s411 + $0x3a8] sm:$0xff]
          %648 = vst [vmem:[%s412 + $0x3a8] sm:$0xff] %v647
          %v649 = vld [vmem:[%s411 + $0x3b0] sm:$0xff]
          %650 = vst [vmem:[%s412 + $0x3b0] sm:$0xff] %v649
          %v651 = vld [vmem:[%s411 + $0x3b8] sm:$0xff]
          %652 = vst [vmem:[%s412 + $0x3b8] sm:$0xff] %v651
          %v653 = vld [vmem:[%s411 + $0x3c0] sm:$0xff]
          %654 = vst [vmem:[%s412 + $0x3c0] sm:$0xff] %v653
          %v655 = vld [vmem:[%s411 + $0x3c8] sm:$0xff]
          %656 = vst [vmem:[%s412 + $0x3c8] sm:$0xff] %v655
          %v657 = vld [vmem:[%s411 + $0x3d0] sm:$0xff]
          %658 = vst [vmem:[%s412 + $0x3d0] sm:$0xff] %v657
          %v659 = vld [vmem:[%s411 + $0x3d8] sm:$0xff]
          %660 = vst [vmem:[%s412 + $0x3d8] sm:$0xff] %v659
          %v661 = vld [vmem:[%s411 + $0x3e0] sm:$0xff]
          %662 = vst [vmem:[%s412 + $0x3e0] sm:$0xff] %v661
          %v663 = vld [vmem:[%s411 + $0x3e8] sm:$0xff]
          %664 = vst [vmem:[%s412 + $0x3e8] sm:$0xff] %v663
          %v665 = vld [vmem:[%s411 + $0x3f0] sm:$0xff]
          %666 = vst [vmem:[%s412 + $0x3f0] sm:$0xff] %v665
          %v667 = vld [vmem:[%s411 + $0x3f8] sm:$0xff]
          %668 = vst [vmem:[%s412 + $0x3f8] sm:$0xff] %v667
          %v669 = vld [vmem:[%s411 + $0x400] sm:$0xff]
          %670 = vst [vmem:[%s412 + $0x400] sm:$0xff] %v669
          %v671 = vld [vmem:[%s411 + $0x408] sm:$0xff]
          %672 = vst [vmem:[%s412 + $0x408] sm:$0xff] %v671
          %v673 = vld [vmem:[%s411 + $0x410] sm:$0xff]
          %674 = vst [vmem:[%s412 + $0x410] sm:$0xff] %v673
          %v675 = vld [vmem:[%s411 + $0x418] sm:$0xff]
          %676 = vst [vmem:[%s412 + $0x418] sm:$0xff] %v675
          %v677 = vld [vmem:[%s411 + $0x420] sm:$0xff]
          %678 = vst [vmem:[%s412 + $0x420] sm:$0xff] %v677
          %v679 = vld [vmem:[%s411 + $0x428] sm:$0xff]
          %680 = vst [vmem:[%s412 + $0x428] sm:$0xff] %v679
          %v681 = vld [vmem:[%s411 + $0x430] sm:$0xff]
          %682 = vst [vmem:[%s412 + $0x430] sm:$0xff] %v681
          %v683 = vld [vmem:[%s411 + $0x438] sm:$0xff]
          %684 = vst [vmem:[%s412 + $0x438] sm:$0xff] %v683
          %v685 = vld [vmem:[%s411 + $0x440] sm:$0xff]
          %686 = vst [vmem:[%s412 + $0x440] sm:$0xff] %v685
          %v687 = vld [vmem:[%s411 + $0x448] sm:$0xff]
          %688 = vst [vmem:[%s412 + $0x448] sm:$0xff] %v687
          %v689 = vld [vmem:[%s411 + $0x450] sm:$0xff]
          %690 = vst [vmem:[%s412 + $0x450] sm:$0xff] %v689
          %v691 = vld [vmem:[%s411 + $0x458] sm:$0xff]
          %692 = vst [vmem:[%s412 + $0x458] sm:$0xff] %v691
          %v693 = vld [vmem:[%s411 + $0x460] sm:$0xff]
          %694 = vst [vmem:[%s412 + $0x460] sm:$0xff] %v693
          %v695 = vld [vmem:[%s411 + $0x468] sm:$0xff]
          %696 = vst [vmem:[%s412 + $0x468] sm:$0xff] %v695
          %v697 = vld [vmem:[%s411 + $0x470] sm:$0xff]
          %698 = vst [vmem:[%s412 + $0x470] sm:$0xff] %v697
          %v699 = vld [vmem:[%s411 + $0x478] sm:$0xff]
          %700 = vst [vmem:[%s412 + $0x478] sm:$0xff] %v699
          %v701 = vld [vmem:[%s411 + $0x480] sm:$0xff]
          %702 = vst [vmem:[%s412 + $0x480] sm:$0xff] %v701
          %v703 = vld [vmem:[%s411 + $0x488] sm:$0xff]
          %704 = vst [vmem:[%s412 + $0x488] sm:$0xff] %v703
          %v705 = vld [vmem:[%s411 + $0x490] sm:$0xff]
          %706 = vst [vmem:[%s412 + $0x490] sm:$0xff] %v705
          %v707 = vld [vmem:[%s411 + $0x498] sm:$0xff]
          %708 = vst [vmem:[%s412 + $0x498] sm:$0xff] %v707
          %v709 = vld [vmem:[%s411 + $0x4a0] sm:$0xff]
          %710 = vst [vmem:[%s412 + $0x4a0] sm:$0xff] %v709
          %v711 = vld [vmem:[%s411 + $0x4a8] sm:$0xff]
          %712 = vst [vmem:[%s412 + $0x4a8] sm:$0xff] %v711
          %v713 = vld [vmem:[%s411 + $0x4b0] sm:$0xff]
          %714 = vst [vmem:[%s412 + $0x4b0] sm:$0xff] %v713
          %v715 = vld [vmem:[%s411 + $0x4b8] sm:$0xff]
          %716 = vst [vmem:[%s412 + $0x4b8] sm:$0xff] %v715
          %v717 = vld [vmem:[%s411 + $0x4c0] sm:$0xff]
          %718 = vst [vmem:[%s412 + $0x4c0] sm:$0xff] %v717
          %v719 = vld [vmem:[%s411 + $0x4c8] sm:$0xff]
          %720 = vst [vmem:[%s412 + $0x4c8] sm:$0xff] %v719
          %v721 = vld [vmem:[%s411 + $0x4d0] sm:$0xff]
          %722 = vst [vmem:[%s412 + $0x4d0] sm:$0xff] %v721
          %v723 = vld [vmem:[%s411 + $0x4d8] sm:$0xff]
          %724 = vst [vmem:[%s412 + $0x4d8] sm:$0xff] %v723
          %v725 = vld [vmem:[%s411 + $0x4e0] sm:$0xff]
          %726 = vst [vmem:[%s412 + $0x4e0] sm:$0xff] %v725
          %v727 = vld [vmem:[%s411 + $0x4e8] sm:$0xff]
          %728 = vst [vmem:[%s412 + $0x4e8] sm:$0xff] %v727
          %v729 = vld [vmem:[%s411 + $0x4f0] sm:$0xff]
          %730 = vst [vmem:[%s412 + $0x4f0] sm:$0xff] %v729
          %v731 = vld [vmem:[%s411 + $0x4f8] sm:$0xff]
          %732 = vst [vmem:[%s412 + $0x4f8] sm:$0xff] %v731
          %v733 = vld [vmem:[%s411 + $0x500] sm:$0xff]
          %734 = vst [vmem:[%s412 + $0x500] sm:$0xff] %v733
          %v735 = vld [vmem:[%s411 + $0x508] sm:$0xff]
          %736 = vst [vmem:[%s412 + $0x508] sm:$0xff] %v735
          %v737 = vld [vmem:[%s411 + $0x510] sm:$0xff]
          %738 = vst [vmem:[%s412 + $0x510] sm:$0xff] %v737
          %v739 = vld [vmem:[%s411 + $0x518] sm:$0xff]
          %740 = vst [vmem:[%s412 + $0x518] sm:$0xff] %v739
          %v741 = vld [vmem:[%s411 + $0x520] sm:$0xff]
          %742 = vst [vmem:[%s412 + $0x520] sm:$0xff] %v741
          %v743 = vld [vmem:[%s411 + $0x528] sm:$0xff]
          %744 = vst [vmem:[%s412 + $0x528] sm:$0xff] %v743
          %v745 = vld [vmem:[%s411 + $0x530] sm:$0xff]
          %746 = vst [vmem:[%s412 + $0x530] sm:$0xff] %v745
          %v747 = vld [vmem:[%s411 + $0x538] sm:$0xff]
          %748 = vst [vmem:[%s412 + $0x538] sm:$0xff] %v747
          %v749 = vld [vmem:[%s411 + $0x540] sm:$0xff]
          %750 = vst [vmem:[%s412 + $0x540] sm:$0xff] %v749
          %v751 = vld [vmem:[%s411 + $0x548] sm:$0xff]
          %752 = vst [vmem:[%s412 + $0x548] sm:$0xff] %v751
          %v753 = vld [vmem:[%s411 + $0x550] sm:$0xff]
          %754 = vst [vmem:[%s412 + $0x550] sm:$0xff] %v753
          %v755 = vld [vmem:[%s411 + $0x558] sm:$0xff]
          %756 = vst [vmem:[%s412 + $0x558] sm:$0xff] %v755
          %v757 = vld [vmem:[%s411 + $0x560] sm:$0xff]
          %758 = vst [vmem:[%s412 + $0x560] sm:$0xff] %v757
          %v759 = vld [vmem:[%s411 + $0x568] sm:$0xff]
          %760 = vst [vmem:[%s412 + $0x568] sm:$0xff] %v759
          %v761 = vld [vmem:[%s411 + $0x570] sm:$0xff]
          %762 = vst [vmem:[%s412 + $0x570] sm:$0xff] %v761
          %v763 = vld [vmem:[%s411 + $0x578] sm:$0xff]
          %764 = vst [vmem:[%s412 + $0x578] sm:$0xff] %v763
          %v765 = vld [vmem:[%s411 + $0x580] sm:$0xff]
          %766 = vst [vmem:[%s412 + $0x580] sm:$0xff] %v765
          %v767 = vld [vmem:[%s411 + $0x588] sm:$0xff]
          %768 = vst [vmem:[%s412 + $0x588] sm:$0xff] %v767
          %v769 = vld [vmem:[%s411 + $0x590] sm:$0xff]
          %770 = vst [vmem:[%s412 + $0x590] sm:$0xff] %v769
          %v771 = vld [vmem:[%s411 + $0x598] sm:$0xff]
          %772 = vst [vmem:[%s412 + $0x598] sm:$0xff] %v771
          %v773 = vld [vmem:[%s411 + $0x5a0] sm:$0xff]
          %774 = vst [vmem:[%s412 + $0x5a0] sm:$0xff] %v773
          %v775 = vld [vmem:[%s411 + $0x5a8] sm:$0xff]
          %776 = vst [vmem:[%s412 + $0x5a8] sm:$0xff] %v775
          %v777 = vld [vmem:[%s411 + $0x5b0] sm:$0xff]
          %778 = vst [vmem:[%s412 + $0x5b0] sm:$0xff] %v777
          %v779 = vld [vmem:[%s411 + $0x5b8] sm:$0xff]
          %780 = vst [vmem:[%s412 + $0x5b8] sm:$0xff] %v779
          %v781 = vld [vmem:[%s411 + $0x5c0] sm:$0xff]
          %782 = vst [vmem:[%s412 + $0x5c0] sm:$0xff] %v781
          %v783 = vld [vmem:[%s411 + $0x5c8] sm:$0xff]
          %784 = vst [vmem:[%s412 + $0x5c8] sm:$0xff] %v783
          %v785 = vld [vmem:[%s411 + $0x5d0] sm:$0xff]
          %786 = vst [vmem:[%s412 + $0x5d0] sm:$0xff] %v785
          %v787 = vld [vmem:[%s411 + $0x5d8] sm:$0xff]
          %788 = vst [vmem:[%s412 + $0x5d8] sm:$0xff] %v787
          %v789 = vld [vmem:[%s411 + $0x5e0] sm:$0xff]
          %790 = vst [vmem:[%s412 + $0x5e0] sm:$0xff] %v789
          %v791 = vld [vmem:[%s411 + $0x5e8] sm:$0xff]
          %792 = vst [vmem:[%s412 + $0x5e8] sm:$0xff] %v791
          %v793 = vld [vmem:[%s411 + $0x5f0] sm:$0xff]
          %794 = vst [vmem:[%s412 + $0x5f0] sm:$0xff] %v793
          %v795 = vld [vmem:[%s411 + $0x5f8] sm:$0xff]
          %796 = vst [vmem:[%s412 + $0x5f8] sm:$0xff] %v795
          %v797 = vld [vmem:[%s411 + $0x600] sm:$0xff]
          %798 = vst [vmem:[%s412 + $0x600] sm:$0xff] %v797
          %v799 = vld [vmem:[%s411 + $0x608] sm:$0xff]
          %800 = vst [vmem:[%s412 + $0x608] sm:$0xff] %v799
          %v801 = vld [vmem:[%s411 + $0x610] sm:$0xff]
          %802 = vst [vmem:[%s412 + $0x610] sm:$0xff] %v801
          %v803 = vld [vmem:[%s411 + $0x618] sm:$0xff]
          %804 = vst [vmem:[%s412 + $0x618] sm:$0xff] %v803
          %v805 = vld [vmem:[%s411 + $0x620] sm:$0xff]
          %806 = vst [vmem:[%s412 + $0x620] sm:$0xff] %v805
          %v807 = vld [vmem:[%s411 + $0x628] sm:$0xff]
          %808 = vst [vmem:[%s412 + $0x628] sm:$0xff] %v807
        $region115: #{autoencoder_forward.1} parent=109 // loop_footer
          %s410 = sadd.s32 1, %s406
        $region116: #{autoencoder_forward.1} parent=109 // loop_footer_branch
          %405 = sbr.rel target = $region112
        $region117: #{autoencoder_forward.1} parent=109 // loop_exit
          _
      $region110: #{autoencoder_forward.1} parent=94 // pred_fallthru
        _
      %p809 = pneg %p401
      // Predicated region
      $region118: #{autoencoder_forward.1} parent=94 // pred_check
        _
      $region119: #{autoencoder_forward.1} parent=94 // pred_check_branch
        %811 = sbr.rel (%p401) target = $region121
      $region120: #{autoencoder_forward.1} parent=94 // pred_region
        %s812 = sand.u32 1584, 7
      $region121: #{autoencoder_forward.1} parent=94 // pred_fallthru
        _
    $region95: #{autoencoder_forward.1} parent=1 // pred_fallthru
      _
    // Predicated region
    $region96: #{autoencoder_forward.1} parent=1 // pred_check
      %p385 = pneg %p381
    $region97: #{autoencoder_forward.1} parent=1 // pred_check_branch
      %387 = sbr.rel (%p385) target = $region99
    $region98: #{autoencoder_forward.1} parent=1 // pred_region
      %s388 = sshll.u32 1, 1584
      %s389 = ssub.s32 %s388, 1
      loop: start=0, step=1, limit=1
      $region100: #{autoencoder_forward.1} parent=98 // loop_pre_header
        _
      $region101: #{autoencoder_forward.1} parent=98 // loop_header
        %s391 = sphi 0, %s395
        %p392 = scmp.ge.s32.totalorder %s391, 1
        %s396 = sphi %s15, %s15
        %s397 = sphi [#allocation3], [#allocation3]
      $region102: #{autoencoder_forward.1} parent=98 // loop_header_branch
        %394 = sbr.rel (%p392) target = $region106
      $region103: #{autoencoder_forward.1} parent=98 // loop_body
        %v398 = vld [vmem:[%s396] sm:%s389]
        %399 = vst [vmem:[%s397] sm:%s389] %v398
      $region104: #{autoencoder_forward.1} parent=98 // loop_footer
        %s395 = sadd.s32 1, %s391
      $region105: #{autoencoder_forward.1} parent=98 // loop_footer_branch
        %390 = sbr.rel target = $region101
      $region106: #{autoencoder_forward.1} parent=98 // loop_exit
        _
    $region99: #{autoencoder_forward.1} parent=1 // pred_fallthru
      _
    // Predicated region
    $region122: #{autoencoder_forward.1} parent=1 // pred_check
      _
    $region123: #{autoencoder_forward.1} parent=1 // pred_check_branch
      %815 = sbr.rel (0) target = $region125
    $region124: #{autoencoder_forward.1} parent=1 // pred_region
      %816 = vsyncadd %s379, 25344
    $region125: #{autoencoder_forward.1} parent=1 // pred_fallthru
      _
    %s817 = scalar_lea.sflag [#allocation8], 2
    %p819 = scmp.lt.u32.totalorder 936, 8
    %p820 = pneg %p819
    // Predicated region
    $region126: #{autoencoder_forward.1} parent=1 // pred_check
      _
    $region127: #{autoencoder_forward.1} parent=1 // pred_check_branch
      %822 = sbr.rel (%p819) target = $region129
    $region128: #{autoencoder_forward.1} parent=1 // pred_region
      %s838 = sand.u32 936, 7
      %p839 = scmp.eq.s32.totalorder %s838, 0
      // Predicated region
      $region141: #{autoencoder_forward.1} parent=128 // pred_check
        %p840 = pneg %p839
      $region142: #{autoencoder_forward.1} parent=128 // pred_check_branch
        %842 = sbr.rel (%p840) target = $region144
      $region143: #{autoencoder_forward.1} parent=128 // pred_region
        loop: start=0, step=1, limit=1
        $region145: #{autoencoder_forward.1} parent=143 // loop_pre_header
          _
        $region146: #{autoencoder_forward.1} parent=143 // loop_header
          %s844 = sphi 0, %s848
          %p845 = scmp.ge.s32.totalorder %s844, 1
          %s849 = sphi %s16, %s16
          %s850 = sphi [#allocation4], [#allocation4]
        $region147: #{autoencoder_forward.1} parent=143 // loop_header_branch
          %847 = sbr.rel (%p845) target = $region151
        $region148: #{autoencoder_forward.1} parent=143 // loop_body
          %v851 = vld [vmem:[%s849] sm:$0xff]
          %852 = vst [vmem:[%s850] sm:$0xff] %v851
          %v853 = vld [vmem:[%s849 + $0x8] sm:$0xff]
          %854 = vst [vmem:[%s850 + $0x8] sm:$0xff] %v853
          %v855 = vld [vmem:[%s849 + $0x10] sm:$0xff]
          %856 = vst [vmem:[%s850 + $0x10] sm:$0xff] %v855
          %v857 = vld [vmem:[%s849 + $0x18] sm:$0xff]
          %858 = vst [vmem:[%s850 + $0x18] sm:$0xff] %v857
          %v859 = vld [vmem:[%s849 + $0x20] sm:$0xff]
          %860 = vst [vmem:[%s850 + $0x20] sm:$0xff] %v859
          %v861 = vld [vmem:[%s849 + $0x28] sm:$0xff]
          %862 = vst [vmem:[%s850 + $0x28] sm:$0xff] %v861
          %v863 = vld [vmem:[%s849 + $0x30] sm:$0xff]
          %864 = vst [vmem:[%s850 + $0x30] sm:$0xff] %v863
          %v865 = vld [vmem:[%s849 + $0x38] sm:$0xff]
          %866 = vst [vmem:[%s850 + $0x38] sm:$0xff] %v865
          %v867 = vld [vmem:[%s849 + $0x40] sm:$0xff]
          %868 = vst [vmem:[%s850 + $0x40] sm:$0xff] %v867
          %v869 = vld [vmem:[%s849 + $0x48] sm:$0xff]
          %870 = vst [vmem:[%s850 + $0x48] sm:$0xff] %v869
          %v871 = vld [vmem:[%s849 + $0x50] sm:$0xff]
          %872 = vst [vmem:[%s850 + $0x50] sm:$0xff] %v871
          %v873 = vld [vmem:[%s849 + $0x58] sm:$0xff]
          %874 = vst [vmem:[%s850 + $0x58] sm:$0xff] %v873
          %v875 = vld [vmem:[%s849 + $0x60] sm:$0xff]
          %876 = vst [vmem:[%s850 + $0x60] sm:$0xff] %v875
          %v877 = vld [vmem:[%s849 + $0x68] sm:$0xff]
          %878 = vst [vmem:[%s850 + $0x68] sm:$0xff] %v877
          %v879 = vld [vmem:[%s849 + $0x70] sm:$0xff]
          %880 = vst [vmem:[%s850 + $0x70] sm:$0xff] %v879
          %v881 = vld [vmem:[%s849 + $0x78] sm:$0xff]
          %882 = vst [vmem:[%s850 + $0x78] sm:$0xff] %v881
          %v883 = vld [vmem:[%s849 + $0x80] sm:$0xff]
          %884 = vst [vmem:[%s850 + $0x80] sm:$0xff] %v883
          %v885 = vld [vmem:[%s849 + $0x88] sm:$0xff]
          %886 = vst [vmem:[%s850 + $0x88] sm:$0xff] %v885
          %v887 = vld [vmem:[%s849 + $0x90] sm:$0xff]
          %888 = vst [vmem:[%s850 + $0x90] sm:$0xff] %v887
          %v889 = vld [vmem:[%s849 + $0x98] sm:$0xff]
          %890 = vst [vmem:[%s850 + $0x98] sm:$0xff] %v889
          %v891 = vld [vmem:[%s849 + $0xa0] sm:$0xff]
          %892 = vst [vmem:[%s850 + $0xa0] sm:$0xff] %v891
          %v893 = vld [vmem:[%s849 + $0xa8] sm:$0xff]
          %894 = vst [vmem:[%s850 + $0xa8] sm:$0xff] %v893
          %v895 = vld [vmem:[%s849 + $0xb0] sm:$0xff]
          %896 = vst [vmem:[%s850 + $0xb0] sm:$0xff] %v895
          %v897 = vld [vmem:[%s849 + $0xb8] sm:$0xff]
          %898 = vst [vmem:[%s850 + $0xb8] sm:$0xff] %v897
          %v899 = vld [vmem:[%s849 + $0xc0] sm:$0xff]
          %900 = vst [vmem:[%s850 + $0xc0] sm:$0xff] %v899
          %v901 = vld [vmem:[%s849 + $0xc8] sm:$0xff]
          %902 = vst [vmem:[%s850 + $0xc8] sm:$0xff] %v901
          %v903 = vld [vmem:[%s849 + $0xd0] sm:$0xff]
          %904 = vst [vmem:[%s850 + $0xd0] sm:$0xff] %v903
          %v905 = vld [vmem:[%s849 + $0xd8] sm:$0xff]
          %906 = vst [vmem:[%s850 + $0xd8] sm:$0xff] %v905
          %v907 = vld [vmem:[%s849 + $0xe0] sm:$0xff]
          %908 = vst [vmem:[%s850 + $0xe0] sm:$0xff] %v907
          %v909 = vld [vmem:[%s849 + $0xe8] sm:$0xff]
          %910 = vst [vmem:[%s850 + $0xe8] sm:$0xff] %v909
          %v911 = vld [vmem:[%s849 + $0xf0] sm:$0xff]
          %912 = vst [vmem:[%s850 + $0xf0] sm:$0xff] %v911
          %v913 = vld [vmem:[%s849 + $0xf8] sm:$0xff]
          %914 = vst [vmem:[%s850 + $0xf8] sm:$0xff] %v913
          %v915 = vld [vmem:[%s849 + $0x100] sm:$0xff]
          %916 = vst [vmem:[%s850 + $0x100] sm:$0xff] %v915
          %v917 = vld [vmem:[%s849 + $0x108] sm:$0xff]
          %918 = vst [vmem:[%s850 + $0x108] sm:$0xff] %v917
          %v919 = vld [vmem:[%s849 + $0x110] sm:$0xff]
          %920 = vst [vmem:[%s850 + $0x110] sm:$0xff] %v919
          %v921 = vld [vmem:[%s849 + $0x118] sm:$0xff]
          %922 = vst [vmem:[%s850 + $0x118] sm:$0xff] %v921
          %v923 = vld [vmem:[%s849 + $0x120] sm:$0xff]
          %924 = vst [vmem:[%s850 + $0x120] sm:$0xff] %v923
          %v925 = vld [vmem:[%s849 + $0x128] sm:$0xff]
          %926 = vst [vmem:[%s850 + $0x128] sm:$0xff] %v925
          %v927 = vld [vmem:[%s849 + $0x130] sm:$0xff]
          %928 = vst [vmem:[%s850 + $0x130] sm:$0xff] %v927
          %v929 = vld [vmem:[%s849 + $0x138] sm:$0xff]
          %930 = vst [vmem:[%s850 + $0x138] sm:$0xff] %v929
          %v931 = vld [vmem:[%s849 + $0x140] sm:$0xff]
          %932 = vst [vmem:[%s850 + $0x140] sm:$0xff] %v931
          %v933 = vld [vmem:[%s849 + $0x148] sm:$0xff]
          %934 = vst [vmem:[%s850 + $0x148] sm:$0xff] %v933
          %v935 = vld [vmem:[%s849 + $0x150] sm:$0xff]
          %936 = vst [vmem:[%s850 + $0x150] sm:$0xff] %v935
          %v937 = vld [vmem:[%s849 + $0x158] sm:$0xff]
          %938 = vst [vmem:[%s850 + $0x158] sm:$0xff] %v937
          %v939 = vld [vmem:[%s849 + $0x160] sm:$0xff]
          %940 = vst [vmem:[%s850 + $0x160] sm:$0xff] %v939
          %v941 = vld [vmem:[%s849 + $0x168] sm:$0xff]
          %942 = vst [vmem:[%s850 + $0x168] sm:$0xff] %v941
          %v943 = vld [vmem:[%s849 + $0x170] sm:$0xff]
          %944 = vst [vmem:[%s850 + $0x170] sm:$0xff] %v943
          %v945 = vld [vmem:[%s849 + $0x178] sm:$0xff]
          %946 = vst [vmem:[%s850 + $0x178] sm:$0xff] %v945
          %v947 = vld [vmem:[%s849 + $0x180] sm:$0xff]
          %948 = vst [vmem:[%s850 + $0x180] sm:$0xff] %v947
          %v949 = vld [vmem:[%s849 + $0x188] sm:$0xff]
          %950 = vst [vmem:[%s850 + $0x188] sm:$0xff] %v949
          %v951 = vld [vmem:[%s849 + $0x190] sm:$0xff]
          %952 = vst [vmem:[%s850 + $0x190] sm:$0xff] %v951
          %v953 = vld [vmem:[%s849 + $0x198] sm:$0xff]
          %954 = vst [vmem:[%s850 + $0x198] sm:$0xff] %v953
          %v955 = vld [vmem:[%s849 + $0x1a0] sm:$0xff]
          %956 = vst [vmem:[%s850 + $0x1a0] sm:$0xff] %v955
          %v957 = vld [vmem:[%s849 + $0x1a8] sm:$0xff]
          %958 = vst [vmem:[%s850 + $0x1a8] sm:$0xff] %v957
          %v959 = vld [vmem:[%s849 + $0x1b0] sm:$0xff]
          %960 = vst [vmem:[%s850 + $0x1b0] sm:$0xff] %v959
          %v961 = vld [vmem:[%s849 + $0x1b8] sm:$0xff]
          %962 = vst [vmem:[%s850 + $0x1b8] sm:$0xff] %v961
          %v963 = vld [vmem:[%s849 + $0x1c0] sm:$0xff]
          %964 = vst [vmem:[%s850 + $0x1c0] sm:$0xff] %v963
          %v965 = vld [vmem:[%s849 + $0x1c8] sm:$0xff]
          %966 = vst [vmem:[%s850 + $0x1c8] sm:$0xff] %v965
          %v967 = vld [vmem:[%s849 + $0x1d0] sm:$0xff]
          %968 = vst [vmem:[%s850 + $0x1d0] sm:$0xff] %v967
          %v969 = vld [vmem:[%s849 + $0x1d8] sm:$0xff]
          %970 = vst [vmem:[%s850 + $0x1d8] sm:$0xff] %v969
          %v971 = vld [vmem:[%s849 + $0x1e0] sm:$0xff]
          %972 = vst [vmem:[%s850 + $0x1e0] sm:$0xff] %v971
          %v973 = vld [vmem:[%s849 + $0x1e8] sm:$0xff]
          %974 = vst [vmem:[%s850 + $0x1e8] sm:$0xff] %v973
          %v975 = vld [vmem:[%s849 + $0x1f0] sm:$0xff]
          %976 = vst [vmem:[%s850 + $0x1f0] sm:$0xff] %v975
          %v977 = vld [vmem:[%s849 + $0x1f8] sm:$0xff]
          %978 = vst [vmem:[%s850 + $0x1f8] sm:$0xff] %v977
          %v979 = vld [vmem:[%s849 + $0x200] sm:$0xff]
          %980 = vst [vmem:[%s850 + $0x200] sm:$0xff] %v979
          %v981 = vld [vmem:[%s849 + $0x208] sm:$0xff]
          %982 = vst [vmem:[%s850 + $0x208] sm:$0xff] %v981
          %v983 = vld [vmem:[%s849 + $0x210] sm:$0xff]
          %984 = vst [vmem:[%s850 + $0x210] sm:$0xff] %v983
          %v985 = vld [vmem:[%s849 + $0x218] sm:$0xff]
          %986 = vst [vmem:[%s850 + $0x218] sm:$0xff] %v985
          %v987 = vld [vmem:[%s849 + $0x220] sm:$0xff]
          %988 = vst [vmem:[%s850 + $0x220] sm:$0xff] %v987
          %v989 = vld [vmem:[%s849 + $0x228] sm:$0xff]
          %990 = vst [vmem:[%s850 + $0x228] sm:$0xff] %v989
          %v991 = vld [vmem:[%s849 + $0x230] sm:$0xff]
          %992 = vst [vmem:[%s850 + $0x230] sm:$0xff] %v991
          %v993 = vld [vmem:[%s849 + $0x238] sm:$0xff]
          %994 = vst [vmem:[%s850 + $0x238] sm:$0xff] %v993
          %v995 = vld [vmem:[%s849 + $0x240] sm:$0xff]
          %996 = vst [vmem:[%s850 + $0x240] sm:$0xff] %v995
          %v997 = vld [vmem:[%s849 + $0x248] sm:$0xff]
          %998 = vst [vmem:[%s850 + $0x248] sm:$0xff] %v997
          %v999 = vld [vmem:[%s849 + $0x250] sm:$0xff]
          %1000 = vst [vmem:[%s850 + $0x250] sm:$0xff] %v999
          %v1001 = vld [vmem:[%s849 + $0x258] sm:$0xff]
          %1002 = vst [vmem:[%s850 + $0x258] sm:$0xff] %v1001
          %v1003 = vld [vmem:[%s849 + $0x260] sm:$0xff]
          %1004 = vst [vmem:[%s850 + $0x260] sm:$0xff] %v1003
          %v1005 = vld [vmem:[%s849 + $0x268] sm:$0xff]
          %1006 = vst [vmem:[%s850 + $0x268] sm:$0xff] %v1005
          %v1007 = vld [vmem:[%s849 + $0x270] sm:$0xff]
          %1008 = vst [vmem:[%s850 + $0x270] sm:$0xff] %v1007
          %v1009 = vld [vmem:[%s849 + $0x278] sm:$0xff]
          %1010 = vst [vmem:[%s850 + $0x278] sm:$0xff] %v1009
          %v1011 = vld [vmem:[%s849 + $0x280] sm:$0xff]
          %1012 = vst [vmem:[%s850 + $0x280] sm:$0xff] %v1011
          %v1013 = vld [vmem:[%s849 + $0x288] sm:$0xff]
          %1014 = vst [vmem:[%s850 + $0x288] sm:$0xff] %v1013
          %v1015 = vld [vmem:[%s849 + $0x290] sm:$0xff]
          %1016 = vst [vmem:[%s850 + $0x290] sm:$0xff] %v1015
          %v1017 = vld [vmem:[%s849 + $0x298] sm:$0xff]
          %1018 = vst [vmem:[%s850 + $0x298] sm:$0xff] %v1017
          %v1019 = vld [vmem:[%s849 + $0x2a0] sm:$0xff]
          %1020 = vst [vmem:[%s850 + $0x2a0] sm:$0xff] %v1019
          %v1021 = vld [vmem:[%s849 + $0x2a8] sm:$0xff]
          %1022 = vst [vmem:[%s850 + $0x2a8] sm:$0xff] %v1021
          %v1023 = vld [vmem:[%s849 + $0x2b0] sm:$0xff]
          %1024 = vst [vmem:[%s850 + $0x2b0] sm:$0xff] %v1023
          %v1025 = vld [vmem:[%s849 + $0x2b8] sm:$0xff]
          %1026 = vst [vmem:[%s850 + $0x2b8] sm:$0xff] %v1025
          %v1027 = vld [vmem:[%s849 + $0x2c0] sm:$0xff]
          %1028 = vst [vmem:[%s850 + $0x2c0] sm:$0xff] %v1027
          %v1029 = vld [vmem:[%s849 + $0x2c8] sm:$0xff]
          %1030 = vst [vmem:[%s850 + $0x2c8] sm:$0xff] %v1029
          %v1031 = vld [vmem:[%s849 + $0x2d0] sm:$0xff]
          %1032 = vst [vmem:[%s850 + $0x2d0] sm:$0xff] %v1031
          %v1033 = vld [vmem:[%s849 + $0x2d8] sm:$0xff]
          %1034 = vst [vmem:[%s850 + $0x2d8] sm:$0xff] %v1033
          %v1035 = vld [vmem:[%s849 + $0x2e0] sm:$0xff]
          %1036 = vst [vmem:[%s850 + $0x2e0] sm:$0xff] %v1035
          %v1037 = vld [vmem:[%s849 + $0x2e8] sm:$0xff]
          %1038 = vst [vmem:[%s850 + $0x2e8] sm:$0xff] %v1037
          %v1039 = vld [vmem:[%s849 + $0x2f0] sm:$0xff]
          %1040 = vst [vmem:[%s850 + $0x2f0] sm:$0xff] %v1039
          %v1041 = vld [vmem:[%s849 + $0x2f8] sm:$0xff]
          %1042 = vst [vmem:[%s850 + $0x2f8] sm:$0xff] %v1041
          %v1043 = vld [vmem:[%s849 + $0x300] sm:$0xff]
          %1044 = vst [vmem:[%s850 + $0x300] sm:$0xff] %v1043
          %v1045 = vld [vmem:[%s849 + $0x308] sm:$0xff]
          %1046 = vst [vmem:[%s850 + $0x308] sm:$0xff] %v1045
          %v1047 = vld [vmem:[%s849 + $0x310] sm:$0xff]
          %1048 = vst [vmem:[%s850 + $0x310] sm:$0xff] %v1047
          %v1049 = vld [vmem:[%s849 + $0x318] sm:$0xff]
          %1050 = vst [vmem:[%s850 + $0x318] sm:$0xff] %v1049
          %v1051 = vld [vmem:[%s849 + $0x320] sm:$0xff]
          %1052 = vst [vmem:[%s850 + $0x320] sm:$0xff] %v1051
          %v1053 = vld [vmem:[%s849 + $0x328] sm:$0xff]
          %1054 = vst [vmem:[%s850 + $0x328] sm:$0xff] %v1053
          %v1055 = vld [vmem:[%s849 + $0x330] sm:$0xff]
          %1056 = vst [vmem:[%s850 + $0x330] sm:$0xff] %v1055
          %v1057 = vld [vmem:[%s849 + $0x338] sm:$0xff]
          %1058 = vst [vmem:[%s850 + $0x338] sm:$0xff] %v1057
          %v1059 = vld [vmem:[%s849 + $0x340] sm:$0xff]
          %1060 = vst [vmem:[%s850 + $0x340] sm:$0xff] %v1059
          %v1061 = vld [vmem:[%s849 + $0x348] sm:$0xff]
          %1062 = vst [vmem:[%s850 + $0x348] sm:$0xff] %v1061
          %v1063 = vld [vmem:[%s849 + $0x350] sm:$0xff]
          %1064 = vst [vmem:[%s850 + $0x350] sm:$0xff] %v1063
          %v1065 = vld [vmem:[%s849 + $0x358] sm:$0xff]
          %1066 = vst [vmem:[%s850 + $0x358] sm:$0xff] %v1065
          %v1067 = vld [vmem:[%s849 + $0x360] sm:$0xff]
          %1068 = vst [vmem:[%s850 + $0x360] sm:$0xff] %v1067
          %v1069 = vld [vmem:[%s849 + $0x368] sm:$0xff]
          %1070 = vst [vmem:[%s850 + $0x368] sm:$0xff] %v1069
          %v1071 = vld [vmem:[%s849 + $0x370] sm:$0xff]
          %1072 = vst [vmem:[%s850 + $0x370] sm:$0xff] %v1071
          %v1073 = vld [vmem:[%s849 + $0x378] sm:$0xff]
          %1074 = vst [vmem:[%s850 + $0x378] sm:$0xff] %v1073
          %v1075 = vld [vmem:[%s849 + $0x380] sm:$0xff]
          %1076 = vst [vmem:[%s850 + $0x380] sm:$0xff] %v1075
          %v1077 = vld [vmem:[%s849 + $0x388] sm:$0xff]
          %1078 = vst [vmem:[%s850 + $0x388] sm:$0xff] %v1077
          %v1079 = vld [vmem:[%s849 + $0x390] sm:$0xff]
          %1080 = vst [vmem:[%s850 + $0x390] sm:$0xff] %v1079
          %v1081 = vld [vmem:[%s849 + $0x398] sm:$0xff]
          %1082 = vst [vmem:[%s850 + $0x398] sm:$0xff] %v1081
          %v1083 = vld [vmem:[%s849 + $0x3a0] sm:$0xff]
          %1084 = vst [vmem:[%s850 + $0x3a0] sm:$0xff] %v1083
        $region149: #{autoencoder_forward.1} parent=143 // loop_footer
          %s848 = sadd.s32 1, %s844
        $region150: #{autoencoder_forward.1} parent=143 // loop_footer_branch
          %843 = sbr.rel target = $region146
        $region151: #{autoencoder_forward.1} parent=143 // loop_exit
          _
      $region144: #{autoencoder_forward.1} parent=128 // pred_fallthru
        _
      %p1085 = pneg %p839
      // Predicated region
      $region152: #{autoencoder_forward.1} parent=128 // pred_check
        _
      $region153: #{autoencoder_forward.1} parent=128 // pred_check_branch
        %1087 = sbr.rel (%p839) target = $region155
      $region154: #{autoencoder_forward.1} parent=128 // pred_region
        %s1088 = sand.u32 936, 7
      $region155: #{autoencoder_forward.1} parent=128 // pred_fallthru
        _
    $region129: #{autoencoder_forward.1} parent=1 // pred_fallthru
      _
    // Predicated region
    $region130: #{autoencoder_forward.1} parent=1 // pred_check
      %p823 = pneg %p819
    $region131: #{autoencoder_forward.1} parent=1 // pred_check_branch
      %825 = sbr.rel (%p823) target = $region133
    $region132: #{autoencoder_forward.1} parent=1 // pred_region
      %s826 = sshll.u32 1, 936
      %s827 = ssub.s32 %s826, 1
      loop: start=0, step=1, limit=1
      $region134: #{autoencoder_forward.1} parent=132 // loop_pre_header
        _
      $region135: #{autoencoder_forward.1} parent=132 // loop_header
        %s829 = sphi 0, %s833
        %p830 = scmp.ge.s32.totalorder %s829, 1
        %s834 = sphi %s16, %s16
        %s835 = sphi [#allocation4], [#allocation4]
      $region136: #{autoencoder_forward.1} parent=132 // loop_header_branch
        %832 = sbr.rel (%p830) target = $region140
      $region137: #{autoencoder_forward.1} parent=132 // loop_body
        %v836 = vld [vmem:[%s834] sm:%s827]
        %837 = vst [vmem:[%s835] sm:%s827] %v836
      $region138: #{autoencoder_forward.1} parent=132 // loop_footer
        %s833 = sadd.s32 1, %s829
      $region139: #{autoencoder_forward.1} parent=132 // loop_footer_branch
        %828 = sbr.rel target = $region135
      $region140: #{autoencoder_forward.1} parent=132 // loop_exit
        _
    $region133: #{autoencoder_forward.1} parent=1 // pred_fallthru
      _
    // Predicated region
    $region156: #{autoencoder_forward.1} parent=1 // pred_check
      _
    $region157: #{autoencoder_forward.1} parent=1 // pred_check_branch
      %1091 = sbr.rel (0) target = $region159
    $region158: #{autoencoder_forward.1} parent=1 // pred_region
      %1092 = vsyncadd %s817, 14976
    $region159: #{autoencoder_forward.1} parent=1 // pred_fallthru
      _
    %s1093 = scalar_lea.sflag [#allocation8], 3
    %p1095 = scmp.lt.u32.totalorder 1120, 8
    %p1096 = pneg %p1095
    // Predicated region
    $region160: #{autoencoder_forward.1} parent=1 // pred_check
      _
    $region161: #{autoencoder_forward.1} parent=1 // pred_check_branch
      %1098 = sbr.rel (%p1095) target = $region163
    $region162: #{autoencoder_forward.1} parent=1 // pred_region
      %s1114 = sand.u32 1120, 7
      %p1115 = scmp.eq.s32.totalorder %s1114, 0
      // Predicated region
      $region175: #{autoencoder_forward.1} parent=162 // pred_check
        %p1116 = pneg %p1115
      $region176: #{autoencoder_forward.1} parent=162 // pred_check_branch
        %1118 = sbr.rel (%p1116) target = $region178
      $region177: #{autoencoder_forward.1} parent=162 // pred_region
        loop: start=0, step=1, limit=1
        $region179: #{autoencoder_forward.1} parent=177 // loop_pre_header
          _
        $region180: #{autoencoder_forward.1} parent=177 // loop_header
          %s1120 = sphi 0, %s1124
          %p1121 = scmp.ge.s32.totalorder %s1120, 1
          %s1125 = sphi %s17, %s17
          %s1126 = sphi [#allocation5], [#allocation5]
        $region181: #{autoencoder_forward.1} parent=177 // loop_header_branch
          %1123 = sbr.rel (%p1121) target = $region185
        $region182: #{autoencoder_forward.1} parent=177 // loop_body
          %v1127 = vld [vmem:[%s1125] sm:$0xff]
          %1128 = vst [vmem:[%s1126] sm:$0xff] %v1127
          %v1129 = vld [vmem:[%s1125 + $0x8] sm:$0xff]
          %1130 = vst [vmem:[%s1126 + $0x8] sm:$0xff] %v1129
          %v1131 = vld [vmem:[%s1125 + $0x10] sm:$0xff]
          %1132 = vst [vmem:[%s1126 + $0x10] sm:$0xff] %v1131
          %v1133 = vld [vmem:[%s1125 + $0x18] sm:$0xff]
          %1134 = vst [vmem:[%s1126 + $0x18] sm:$0xff] %v1133
          %v1135 = vld [vmem:[%s1125 + $0x20] sm:$0xff]
          %1136 = vst [vmem:[%s1126 + $0x20] sm:$0xff] %v1135
          %v1137 = vld [vmem:[%s1125 + $0x28] sm:$0xff]
          %1138 = vst [vmem:[%s1126 + $0x28] sm:$0xff] %v1137
          %v1139 = vld [vmem:[%s1125 + $0x30] sm:$0xff]
          %1140 = vst [vmem:[%s1126 + $0x30] sm:$0xff] %v1139
          %v1141 = vld [vmem:[%s1125 + $0x38] sm:$0xff]
          %1142 = vst [vmem:[%s1126 + $0x38] sm:$0xff] %v1141
          %v1143 = vld [vmem:[%s1125 + $0x40] sm:$0xff]
          %1144 = vst [vmem:[%s1126 + $0x40] sm:$0xff] %v1143
          %v1145 = vld [vmem:[%s1125 + $0x48] sm:$0xff]
          %1146 = vst [vmem:[%s1126 + $0x48] sm:$0xff] %v1145
          %v1147 = vld [vmem:[%s1125 + $0x50] sm:$0xff]
          %1148 = vst [vmem:[%s1126 + $0x50] sm:$0xff] %v1147
          %v1149 = vld [vmem:[%s1125 + $0x58] sm:$0xff]
          %1150 = vst [vmem:[%s1126 + $0x58] sm:$0xff] %v1149
          %v1151 = vld [vmem:[%s1125 + $0x60] sm:$0xff]
          %1152 = vst [vmem:[%s1126 + $0x60] sm:$0xff] %v1151
          %v1153 = vld [vmem:[%s1125 + $0x68] sm:$0xff]
          %1154 = vst [vmem:[%s1126 + $0x68] sm:$0xff] %v1153
          %v1155 = vld [vmem:[%s1125 + $0x70] sm:$0xff]
          %1156 = vst [vmem:[%s1126 + $0x70] sm:$0xff] %v1155
          %v1157 = vld [vmem:[%s1125 + $0x78] sm:$0xff]
          %1158 = vst [vmem:[%s1126 + $0x78] sm:$0xff] %v1157
          %v1159 = vld [vmem:[%s1125 + $0x80] sm:$0xff]
          %1160 = vst [vmem:[%s1126 + $0x80] sm:$0xff] %v1159
          %v1161 = vld [vmem:[%s1125 + $0x88] sm:$0xff]
          %1162 = vst [vmem:[%s1126 + $0x88] sm:$0xff] %v1161
          %v1163 = vld [vmem:[%s1125 + $0x90] sm:$0xff]
          %1164 = vst [vmem:[%s1126 + $0x90] sm:$0xff] %v1163
          %v1165 = vld [vmem:[%s1125 + $0x98] sm:$0xff]
          %1166 = vst [vmem:[%s1126 + $0x98] sm:$0xff] %v1165
          %v1167 = vld [vmem:[%s1125 + $0xa0] sm:$0xff]
          %1168 = vst [vmem:[%s1126 + $0xa0] sm:$0xff] %v1167
          %v1169 = vld [vmem:[%s1125 + $0xa8] sm:$0xff]
          %1170 = vst [vmem:[%s1126 + $0xa8] sm:$0xff] %v1169
          %v1171 = vld [vmem:[%s1125 + $0xb0] sm:$0xff]
          %1172 = vst [vmem:[%s1126 + $0xb0] sm:$0xff] %v1171
          %v1173 = vld [vmem:[%s1125 + $0xb8] sm:$0xff]
          %1174 = vst [vmem:[%s1126 + $0xb8] sm:$0xff] %v1173
          %v1175 = vld [vmem:[%s1125 + $0xc0] sm:$0xff]
          %1176 = vst [vmem:[%s1126 + $0xc0] sm:$0xff] %v1175
          %v1177 = vld [vmem:[%s1125 + $0xc8] sm:$0xff]
          %1178 = vst [vmem:[%s1126 + $0xc8] sm:$0xff] %v1177
          %v1179 = vld [vmem:[%s1125 + $0xd0] sm:$0xff]
          %1180 = vst [vmem:[%s1126 + $0xd0] sm:$0xff] %v1179
          %v1181 = vld [vmem:[%s1125 + $0xd8] sm:$0xff]
          %1182 = vst [vmem:[%s1126 + $0xd8] sm:$0xff] %v1181
          %v1183 = vld [vmem:[%s1125 + $0xe0] sm:$0xff]
          %1184 = vst [vmem:[%s1126 + $0xe0] sm:$0xff] %v1183
          %v1185 = vld [vmem:[%s1125 + $0xe8] sm:$0xff]
          %1186 = vst [vmem:[%s1126 + $0xe8] sm:$0xff] %v1185
          %v1187 = vld [vmem:[%s1125 + $0xf0] sm:$0xff]
          %1188 = vst [vmem:[%s1126 + $0xf0] sm:$0xff] %v1187
          %v1189 = vld [vmem:[%s1125 + $0xf8] sm:$0xff]
          %1190 = vst [vmem:[%s1126 + $0xf8] sm:$0xff] %v1189
          %v1191 = vld [vmem:[%s1125 + $0x100] sm:$0xff]
          %1192 = vst [vmem:[%s1126 + $0x100] sm:$0xff] %v1191
          %v1193 = vld [vmem:[%s1125 + $0x108] sm:$0xff]
          %1194 = vst [vmem:[%s1126 + $0x108] sm:$0xff] %v1193
          %v1195 = vld [vmem:[%s1125 + $0x110] sm:$0xff]
          %1196 = vst [vmem:[%s1126 + $0x110] sm:$0xff] %v1195
          %v1197 = vld [vmem:[%s1125 + $0x118] sm:$0xff]
          %1198 = vst [vmem:[%s1126 + $0x118] sm:$0xff] %v1197
          %v1199 = vld [vmem:[%s1125 + $0x120] sm:$0xff]
          %1200 = vst [vmem:[%s1126 + $0x120] sm:$0xff] %v1199
          %v1201 = vld [vmem:[%s1125 + $0x128] sm:$0xff]
          %1202 = vst [vmem:[%s1126 + $0x128] sm:$0xff] %v1201
          %v1203 = vld [vmem:[%s1125 + $0x130] sm:$0xff]
          %1204 = vst [vmem:[%s1126 + $0x130] sm:$0xff] %v1203
          %v1205 = vld [vmem:[%s1125 + $0x138] sm:$0xff]
          %1206 = vst [vmem:[%s1126 + $0x138] sm:$0xff] %v1205
          %v1207 = vld [vmem:[%s1125 + $0x140] sm:$0xff]
          %1208 = vst [vmem:[%s1126 + $0x140] sm:$0xff] %v1207
          %v1209 = vld [vmem:[%s1125 + $0x148] sm:$0xff]
          %1210 = vst [vmem:[%s1126 + $0x148] sm:$0xff] %v1209
          %v1211 = vld [vmem:[%s1125 + $0x150] sm:$0xff]
          %1212 = vst [vmem:[%s1126 + $0x150] sm:$0xff] %v1211
          %v1213 = vld [vmem:[%s1125 + $0x158] sm:$0xff]
          %1214 = vst [vmem:[%s1126 + $0x158] sm:$0xff] %v1213
          %v1215 = vld [vmem:[%s1125 + $0x160] sm:$0xff]
          %1216 = vst [vmem:[%s1126 + $0x160] sm:$0xff] %v1215
          %v1217 = vld [vmem:[%s1125 + $0x168] sm:$0xff]
          %1218 = vst [vmem:[%s1126 + $0x168] sm:$0xff] %v1217
          %v1219 = vld [vmem:[%s1125 + $0x170] sm:$0xff]
          %1220 = vst [vmem:[%s1126 + $0x170] sm:$0xff] %v1219
          %v1221 = vld [vmem:[%s1125 + $0x178] sm:$0xff]
          %1222 = vst [vmem:[%s1126 + $0x178] sm:$0xff] %v1221
          %v1223 = vld [vmem:[%s1125 + $0x180] sm:$0xff]
          %1224 = vst [vmem:[%s1126 + $0x180] sm:$0xff] %v1223
          %v1225 = vld [vmem:[%s1125 + $0x188] sm:$0xff]
          %1226 = vst [vmem:[%s1126 + $0x188] sm:$0xff] %v1225
          %v1227 = vld [vmem:[%s1125 + $0x190] sm:$0xff]
          %1228 = vst [vmem:[%s1126 + $0x190] sm:$0xff] %v1227
          %v1229 = vld [vmem:[%s1125 + $0x198] sm:$0xff]
          %1230 = vst [vmem:[%s1126 + $0x198] sm:$0xff] %v1229
          %v1231 = vld [vmem:[%s1125 + $0x1a0] sm:$0xff]
          %1232 = vst [vmem:[%s1126 + $0x1a0] sm:$0xff] %v1231
          %v1233 = vld [vmem:[%s1125 + $0x1a8] sm:$0xff]
          %1234 = vst [vmem:[%s1126 + $0x1a8] sm:$0xff] %v1233
          %v1235 = vld [vmem:[%s1125 + $0x1b0] sm:$0xff]
          %1236 = vst [vmem:[%s1126 + $0x1b0] sm:$0xff] %v1235
          %v1237 = vld [vmem:[%s1125 + $0x1b8] sm:$0xff]
          %1238 = vst [vmem:[%s1126 + $0x1b8] sm:$0xff] %v1237
          %v1239 = vld [vmem:[%s1125 + $0x1c0] sm:$0xff]
          %1240 = vst [vmem:[%s1126 + $0x1c0] sm:$0xff] %v1239
          %v1241 = vld [vmem:[%s1125 + $0x1c8] sm:$0xff]
          %1242 = vst [vmem:[%s1126 + $0x1c8] sm:$0xff] %v1241
          %v1243 = vld [vmem:[%s1125 + $0x1d0] sm:$0xff]
          %1244 = vst [vmem:[%s1126 + $0x1d0] sm:$0xff] %v1243
          %v1245 = vld [vmem:[%s1125 + $0x1d8] sm:$0xff]
          %1246 = vst [vmem:[%s1126 + $0x1d8] sm:$0xff] %v1245
          %v1247 = vld [vmem:[%s1125 + $0x1e0] sm:$0xff]
          %1248 = vst [vmem:[%s1126 + $0x1e0] sm:$0xff] %v1247
          %v1249 = vld [vmem:[%s1125 + $0x1e8] sm:$0xff]
          %1250 = vst [vmem:[%s1126 + $0x1e8] sm:$0xff] %v1249
          %v1251 = vld [vmem:[%s1125 + $0x1f0] sm:$0xff]
          %1252 = vst [vmem:[%s1126 + $0x1f0] sm:$0xff] %v1251
          %v1253 = vld [vmem:[%s1125 + $0x1f8] sm:$0xff]
          %1254 = vst [vmem:[%s1126 + $0x1f8] sm:$0xff] %v1253
          %v1255 = vld [vmem:[%s1125 + $0x200] sm:$0xff]
          %1256 = vst [vmem:[%s1126 + $0x200] sm:$0xff] %v1255
          %v1257 = vld [vmem:[%s1125 + $0x208] sm:$0xff]
          %1258 = vst [vmem:[%s1126 + $0x208] sm:$0xff] %v1257
          %v1259 = vld [vmem:[%s1125 + $0x210] sm:$0xff]
          %1260 = vst [vmem:[%s1126 + $0x210] sm:$0xff] %v1259
          %v1261 = vld [vmem:[%s1125 + $0x218] sm:$0xff]
          %1262 = vst [vmem:[%s1126 + $0x218] sm:$0xff] %v1261
          %v1263 = vld [vmem:[%s1125 + $0x220] sm:$0xff]
          %1264 = vst [vmem:[%s1126 + $0x220] sm:$0xff] %v1263
          %v1265 = vld [vmem:[%s1125 + $0x228] sm:$0xff]
          %1266 = vst [vmem:[%s1126 + $0x228] sm:$0xff] %v1265
          %v1267 = vld [vmem:[%s1125 + $0x230] sm:$0xff]
          %1268 = vst [vmem:[%s1126 + $0x230] sm:$0xff] %v1267
          %v1269 = vld [vmem:[%s1125 + $0x238] sm:$0xff]
          %1270 = vst [vmem:[%s1126 + $0x238] sm:$0xff] %v1269
          %v1271 = vld [vmem:[%s1125 + $0x240] sm:$0xff]
          %1272 = vst [vmem:[%s1126 + $0x240] sm:$0xff] %v1271
          %v1273 = vld [vmem:[%s1125 + $0x248] sm:$0xff]
          %1274 = vst [vmem:[%s1126 + $0x248] sm:$0xff] %v1273
          %v1275 = vld [vmem:[%s1125 + $0x250] sm:$0xff]
          %1276 = vst [vmem:[%s1126 + $0x250] sm:$0xff] %v1275
          %v1277 = vld [vmem:[%s1125 + $0x258] sm:$0xff]
          %1278 = vst [vmem:[%s1126 + $0x258] sm:$0xff] %v1277
          %v1279 = vld [vmem:[%s1125 + $0x260] sm:$0xff]
          %1280 = vst [vmem:[%s1126 + $0x260] sm:$0xff] %v1279
          %v1281 = vld [vmem:[%s1125 + $0x268] sm:$0xff]
          %1282 = vst [vmem:[%s1126 + $0x268] sm:$0xff] %v1281
          %v1283 = vld [vmem:[%s1125 + $0x270] sm:$0xff]
          %1284 = vst [vmem:[%s1126 + $0x270] sm:$0xff] %v1283
          %v1285 = vld [vmem:[%s1125 + $0x278] sm:$0xff]
          %1286 = vst [vmem:[%s1126 + $0x278] sm:$0xff] %v1285
          %v1287 = vld [vmem:[%s1125 + $0x280] sm:$0xff]
          %1288 = vst [vmem:[%s1126 + $0x280] sm:$0xff] %v1287
          %v1289 = vld [vmem:[%s1125 + $0x288] sm:$0xff]
          %1290 = vst [vmem:[%s1126 + $0x288] sm:$0xff] %v1289
          %v1291 = vld [vmem:[%s1125 + $0x290] sm:$0xff]
          %1292 = vst [vmem:[%s1126 + $0x290] sm:$0xff] %v1291
          %v1293 = vld [vmem:[%s1125 + $0x298] sm:$0xff]
          %1294 = vst [vmem:[%s1126 + $0x298] sm:$0xff] %v1293
          %v1295 = vld [vmem:[%s1125 + $0x2a0] sm:$0xff]
          %1296 = vst [vmem:[%s1126 + $0x2a0] sm:$0xff] %v1295
          %v1297 = vld [vmem:[%s1125 + $0x2a8] sm:$0xff]
          %1298 = vst [vmem:[%s1126 + $0x2a8] sm:$0xff] %v1297
          %v1299 = vld [vmem:[%s1125 + $0x2b0] sm:$0xff]
          %1300 = vst [vmem:[%s1126 + $0x2b0] sm:$0xff] %v1299
          %v1301 = vld [vmem:[%s1125 + $0x2b8] sm:$0xff]
          %1302 = vst [vmem:[%s1126 + $0x2b8] sm:$0xff] %v1301
          %v1303 = vld [vmem:[%s1125 + $0x2c0] sm:$0xff]
          %1304 = vst [vmem:[%s1126 + $0x2c0] sm:$0xff] %v1303
          %v1305 = vld [vmem:[%s1125 + $0x2c8] sm:$0xff]
          %1306 = vst [vmem:[%s1126 + $0x2c8] sm:$0xff] %v1305
          %v1307 = vld [vmem:[%s1125 + $0x2d0] sm:$0xff]
          %1308 = vst [vmem:[%s1126 + $0x2d0] sm:$0xff] %v1307
          %v1309 = vld [vmem:[%s1125 + $0x2d8] sm:$0xff]
          %1310 = vst [vmem:[%s1126 + $0x2d8] sm:$0xff] %v1309
          %v1311 = vld [vmem:[%s1125 + $0x2e0] sm:$0xff]
          %1312 = vst [vmem:[%s1126 + $0x2e0] sm:$0xff] %v1311
          %v1313 = vld [vmem:[%s1125 + $0x2e8] sm:$0xff]
          %1314 = vst [vmem:[%s1126 + $0x2e8] sm:$0xff] %v1313
          %v1315 = vld [vmem:[%s1125 + $0x2f0] sm:$0xff]
          %1316 = vst [vmem:[%s1126 + $0x2f0] sm:$0xff] %v1315
          %v1317 = vld [vmem:[%s1125 + $0x2f8] sm:$0xff]
          %1318 = vst [vmem:[%s1126 + $0x2f8] sm:$0xff] %v1317
          %v1319 = vld [vmem:[%s1125 + $0x300] sm:$0xff]
          %1320 = vst [vmem:[%s1126 + $0x300] sm:$0xff] %v1319
          %v1321 = vld [vmem:[%s1125 + $0x308] sm:$0xff]
          %1322 = vst [vmem:[%s1126 + $0x308] sm:$0xff] %v1321
          %v1323 = vld [vmem:[%s1125 + $0x310] sm:$0xff]
          %1324 = vst [vmem:[%s1126 + $0x310] sm:$0xff] %v1323
          %v1325 = vld [vmem:[%s1125 + $0x318] sm:$0xff]
          %1326 = vst [vmem:[%s1126 + $0x318] sm:$0xff] %v1325
          %v1327 = vld [vmem:[%s1125 + $0x320] sm:$0xff]
          %1328 = vst [vmem:[%s1126 + $0x320] sm:$0xff] %v1327
          %v1329 = vld [vmem:[%s1125 + $0x328] sm:$0xff]
          %1330 = vst [vmem:[%s1126 + $0x328] sm:$0xff] %v1329
          %v1331 = vld [vmem:[%s1125 + $0x330] sm:$0xff]
          %1332 = vst [vmem:[%s1126 + $0x330] sm:$0xff] %v1331
          %v1333 = vld [vmem:[%s1125 + $0x338] sm:$0xff]
          %1334 = vst [vmem:[%s1126 + $0x338] sm:$0xff] %v1333
          %v1335 = vld [vmem:[%s1125 + $0x340] sm:$0xff]
          %1336 = vst [vmem:[%s1126 + $0x340] sm:$0xff] %v1335
          %v1337 = vld [vmem:[%s1125 + $0x348] sm:$0xff]
          %1338 = vst [vmem:[%s1126 + $0x348] sm:$0xff] %v1337
          %v1339 = vld [vmem:[%s1125 + $0x350] sm:$0xff]
          %1340 = vst [vmem:[%s1126 + $0x350] sm:$0xff] %v1339
          %v1341 = vld [vmem:[%s1125 + $0x358] sm:$0xff]
          %1342 = vst [vmem:[%s1126 + $0x358] sm:$0xff] %v1341
          %v1343 = vld [vmem:[%s1125 + $0x360] sm:$0xff]
          %1344 = vst [vmem:[%s1126 + $0x360] sm:$0xff] %v1343
          %v1345 = vld [vmem:[%s1125 + $0x368] sm:$0xff]
          %1346 = vst [vmem:[%s1126 + $0x368] sm:$0xff] %v1345
          %v1347 = vld [vmem:[%s1125 + $0x370] sm:$0xff]
          %1348 = vst [vmem:[%s1126 + $0x370] sm:$0xff] %v1347
          %v1349 = vld [vmem:[%s1125 + $0x378] sm:$0xff]
          %1350 = vst [vmem:[%s1126 + $0x378] sm:$0xff] %v1349
          %v1351 = vld [vmem:[%s1125 + $0x380] sm:$0xff]
          %1352 = vst [vmem:[%s1126 + $0x380] sm:$0xff] %v1351
          %v1353 = vld [vmem:[%s1125 + $0x388] sm:$0xff]
          %1354 = vst [vmem:[%s1126 + $0x388] sm:$0xff] %v1353
          %v1355 = vld [vmem:[%s1125 + $0x390] sm:$0xff]
          %1356 = vst [vmem:[%s1126 + $0x390] sm:$0xff] %v1355
          %v1357 = vld [vmem:[%s1125 + $0x398] sm:$0xff]
          %1358 = vst [vmem:[%s1126 + $0x398] sm:$0xff] %v1357
          %v1359 = vld [vmem:[%s1125 + $0x3a0] sm:$0xff]
          %1360 = vst [vmem:[%s1126 + $0x3a0] sm:$0xff] %v1359
          %v1361 = vld [vmem:[%s1125 + $0x3a8] sm:$0xff]
          %1362 = vst [vmem:[%s1126 + $0x3a8] sm:$0xff] %v1361
          %v1363 = vld [vmem:[%s1125 + $0x3b0] sm:$0xff]
          %1364 = vst [vmem:[%s1126 + $0x3b0] sm:$0xff] %v1363
          %v1365 = vld [vmem:[%s1125 + $0x3b8] sm:$0xff]
          %1366 = vst [vmem:[%s1126 + $0x3b8] sm:$0xff] %v1365
          %v1367 = vld [vmem:[%s1125 + $0x3c0] sm:$0xff]
          %1368 = vst [vmem:[%s1126 + $0x3c0] sm:$0xff] %v1367
          %v1369 = vld [vmem:[%s1125 + $0x3c8] sm:$0xff]
          %1370 = vst [vmem:[%s1126 + $0x3c8] sm:$0xff] %v1369
          %v1371 = vld [vmem:[%s1125 + $0x3d0] sm:$0xff]
          %1372 = vst [vmem:[%s1126 + $0x3d0] sm:$0xff] %v1371
          %v1373 = vld [vmem:[%s1125 + $0x3d8] sm:$0xff]
          %1374 = vst [vmem:[%s1126 + $0x3d8] sm:$0xff] %v1373
          %v1375 = vld [vmem:[%s1125 + $0x3e0] sm:$0xff]
          %1376 = vst [vmem:[%s1126 + $0x3e0] sm:$0xff] %v1375
          %v1377 = vld [vmem:[%s1125 + $0x3e8] sm:$0xff]
          %1378 = vst [vmem:[%s1126 + $0x3e8] sm:$0xff] %v1377
          %v1379 = vld [vmem:[%s1125 + $0x3f0] sm:$0xff]
          %1380 = vst [vmem:[%s1126 + $0x3f0] sm:$0xff] %v1379
          %v1381 = vld [vmem:[%s1125 + $0x3f8] sm:$0xff]
          %1382 = vst [vmem:[%s1126 + $0x3f8] sm:$0xff] %v1381
          %v1383 = vld [vmem:[%s1125 + $0x400] sm:$0xff]
          %1384 = vst [vmem:[%s1126 + $0x400] sm:$0xff] %v1383
          %v1385 = vld [vmem:[%s1125 + $0x408] sm:$0xff]
          %1386 = vst [vmem:[%s1126 + $0x408] sm:$0xff] %v1385
          %v1387 = vld [vmem:[%s1125 + $0x410] sm:$0xff]
          %1388 = vst [vmem:[%s1126 + $0x410] sm:$0xff] %v1387
          %v1389 = vld [vmem:[%s1125 + $0x418] sm:$0xff]
          %1390 = vst [vmem:[%s1126 + $0x418] sm:$0xff] %v1389
          %v1391 = vld [vmem:[%s1125 + $0x420] sm:$0xff]
          %1392 = vst [vmem:[%s1126 + $0x420] sm:$0xff] %v1391
          %v1393 = vld [vmem:[%s1125 + $0x428] sm:$0xff]
          %1394 = vst [vmem:[%s1126 + $0x428] sm:$0xff] %v1393
          %v1395 = vld [vmem:[%s1125 + $0x430] sm:$0xff]
          %1396 = vst [vmem:[%s1126 + $0x430] sm:$0xff] %v1395
          %v1397 = vld [vmem:[%s1125 + $0x438] sm:$0xff]
          %1398 = vst [vmem:[%s1126 + $0x438] sm:$0xff] %v1397
          %v1399 = vld [vmem:[%s1125 + $0x440] sm:$0xff]
          %1400 = vst [vmem:[%s1126 + $0x440] sm:$0xff] %v1399
          %v1401 = vld [vmem:[%s1125 + $0x448] sm:$0xff]
          %1402 = vst [vmem:[%s1126 + $0x448] sm:$0xff] %v1401
          %v1403 = vld [vmem:[%s1125 + $0x450] sm:$0xff]
          %1404 = vst [vmem:[%s1126 + $0x450] sm:$0xff] %v1403
          %v1405 = vld [vmem:[%s1125 + $0x458] sm:$0xff]
          %1406 = vst [vmem:[%s1126 + $0x458] sm:$0xff] %v1405
        $region183: #{autoencoder_forward.1} parent=177 // loop_footer
          %s1124 = sadd.s32 1, %s1120
        $region184: #{autoencoder_forward.1} parent=177 // loop_footer_branch
          %1119 = sbr.rel target = $region180
        $region185: #{autoencoder_forward.1} parent=177 // loop_exit
          _
      $region178: #{autoencoder_forward.1} parent=162 // pred_fallthru
        _
      %p1407 = pneg %p1115
      // Predicated region
      $region186: #{autoencoder_forward.1} parent=162 // pred_check
        _
      $region187: #{autoencoder_forward.1} parent=162 // pred_check_branch
        %1409 = sbr.rel (%p1115) target = $region189
      $region188: #{autoencoder_forward.1} parent=162 // pred_region
        %s1410 = sand.u32 1120, 7
      $region189: #{autoencoder_forward.1} parent=162 // pred_fallthru
        _
    $region163: #{autoencoder_forward.1} parent=1 // pred_fallthru
      _
    // Predicated region
    $region164: #{autoencoder_forward.1} parent=1 // pred_check
      %p1099 = pneg %p1095
    $region165: #{autoencoder_forward.1} parent=1 // pred_check_branch
      %1101 = sbr.rel (%p1099) target = $region167
    $region166: #{autoencoder_forward.1} parent=1 // pred_region
      %s1102 = sshll.u32 1, 1120
      %s1103 = ssub.s32 %s1102, 1
      loop: start=0, step=1, limit=1
      $region168: #{autoencoder_forward.1} parent=166 // loop_pre_header
        _
      $region169: #{autoencoder_forward.1} parent=166 // loop_header
        %s1105 = sphi 0, %s1109
        %p1106 = scmp.ge.s32.totalorder %s1105, 1
        %s1110 = sphi %s17, %s17
        %s1111 = sphi [#allocation5], [#allocation5]
      $region170: #{autoencoder_forward.1} parent=166 // loop_header_branch
        %1108 = sbr.rel (%p1106) target = $region174
      $region171: #{autoencoder_forward.1} parent=166 // loop_body
        %v1112 = vld [vmem:[%s1110] sm:%s1103]
        %1113 = vst [vmem:[%s1111] sm:%s1103] %v1112
      $region172: #{autoencoder_forward.1} parent=166 // loop_footer
        %s1109 = sadd.s32 1, %s1105
      $region173: #{autoencoder_forward.1} parent=166 // loop_footer_branch
        %1104 = sbr.rel target = $region169
      $region174: #{autoencoder_forward.1} parent=166 // loop_exit
        _
    $region167: #{autoencoder_forward.1} parent=1 // pred_fallthru
      _
    // Predicated region
    $region190: #{autoencoder_forward.1} parent=1 // pred_check
      _
    $region191: #{autoencoder_forward.1} parent=1 // pred_check_branch
      %1413 = sbr.rel (0) target = $region193
    $region192: #{autoencoder_forward.1} parent=1 // pred_region
      %1414 = vsyncadd %s1093, 17920
    $region193: #{autoencoder_forward.1} parent=1 // pred_fallthru
      _
    %s1415 = scalar_lea.sflag [#allocation8], 4
    %p1417 = scmp.lt.u32.totalorder 560, 8
    %p1418 = pneg %p1417
    // Predicated region
    $region194: #{autoencoder_forward.1} parent=1 // pred_check
      _
    $region195: #{autoencoder_forward.1} parent=1 // pred_check_branch
      %1420 = sbr.rel (%p1417) target = $region197
    $region196: #{autoencoder_forward.1} parent=1 // pred_region
      %s1436 = sand.u32 560, 7
      %p1437 = scmp.eq.s32.totalorder %s1436, 0
      // Predicated region
      $region209: #{autoencoder_forward.1} parent=196 // pred_check
        %p1438 = pneg %p1437
      $region210: #{autoencoder_forward.1} parent=196 // pred_check_branch
        %1440 = sbr.rel (%p1438) target = $region212
      $region211: #{autoencoder_forward.1} parent=196 // pred_region
        loop: start=0, step=1, limit=1
        $region213: #{autoencoder_forward.1} parent=211 // loop_pre_header
          _
        $region214: #{autoencoder_forward.1} parent=211 // loop_header
          %s1442 = sphi 0, %s1446
          %p1443 = scmp.ge.s32.totalorder %s1442, 1
          %s1447 = sphi %s18, %s18
          %s1448 = sphi [#allocation6], [#allocation6]
        $region215: #{autoencoder_forward.1} parent=211 // loop_header_branch
          %1445 = sbr.rel (%p1443) target = $region219
        $region216: #{autoencoder_forward.1} parent=211 // loop_body
          %v1449 = vld [vmem:[%s1447] sm:$0xff]
          %1450 = vst [vmem:[%s1448] sm:$0xff] %v1449
          %v1451 = vld [vmem:[%s1447 + $0x8] sm:$0xff]
          %1452 = vst [vmem:[%s1448 + $0x8] sm:$0xff] %v1451
          %v1453 = vld [vmem:[%s1447 + $0x10] sm:$0xff]
          %1454 = vst [vmem:[%s1448 + $0x10] sm:$0xff] %v1453
          %v1455 = vld [vmem:[%s1447 + $0x18] sm:$0xff]
          %1456 = vst [vmem:[%s1448 + $0x18] sm:$0xff] %v1455
          %v1457 = vld [vmem:[%s1447 + $0x20] sm:$0xff]
          %1458 = vst [vmem:[%s1448 + $0x20] sm:$0xff] %v1457
          %v1459 = vld [vmem:[%s1447 + $0x28] sm:$0xff]
          %1460 = vst [vmem:[%s1448 + $0x28] sm:$0xff] %v1459
          %v1461 = vld [vmem:[%s1447 + $0x30] sm:$0xff]
          %1462 = vst [vmem:[%s1448 + $0x30] sm:$0xff] %v1461
          %v1463 = vld [vmem:[%s1447 + $0x38] sm:$0xff]
          %1464 = vst [vmem:[%s1448 + $0x38] sm:$0xff] %v1463
          %v1465 = vld [vmem:[%s1447 + $0x40] sm:$0xff]
          %1466 = vst [vmem:[%s1448 + $0x40] sm:$0xff] %v1465
          %v1467 = vld [vmem:[%s1447 + $0x48] sm:$0xff]
          %1468 = vst [vmem:[%s1448 + $0x48] sm:$0xff] %v1467
          %v1469 = vld [vmem:[%s1447 + $0x50] sm:$0xff]
          %1470 = vst [vmem:[%s1448 + $0x50] sm:$0xff] %v1469
          %v1471 = vld [vmem:[%s1447 + $0x58] sm:$0xff]
          %1472 = vst [vmem:[%s1448 + $0x58] sm:$0xff] %v1471
          %v1473 = vld [vmem:[%s1447 + $0x60] sm:$0xff]
          %1474 = vst [vmem:[%s1448 + $0x60] sm:$0xff] %v1473
          %v1475 = vld [vmem:[%s1447 + $0x68] sm:$0xff]
          %1476 = vst [vmem:[%s1448 + $0x68] sm:$0xff] %v1475
          %v1477 = vld [vmem:[%s1447 + $0x70] sm:$0xff]
          %1478 = vst [vmem:[%s1448 + $0x70] sm:$0xff] %v1477
          %v1479 = vld [vmem:[%s1447 + $0x78] sm:$0xff]
          %1480 = vst [vmem:[%s1448 + $0x78] sm:$0xff] %v1479
          %v1481 = vld [vmem:[%s1447 + $0x80] sm:$0xff]
          %1482 = vst [vmem:[%s1448 + $0x80] sm:$0xff] %v1481
          %v1483 = vld [vmem:[%s1447 + $0x88] sm:$0xff]
          %1484 = vst [vmem:[%s1448 + $0x88] sm:$0xff] %v1483
          %v1485 = vld [vmem:[%s1447 + $0x90] sm:$0xff]
          %1486 = vst [vmem:[%s1448 + $0x90] sm:$0xff] %v1485
          %v1487 = vld [vmem:[%s1447 + $0x98] sm:$0xff]
          %1488 = vst [vmem:[%s1448 + $0x98] sm:$0xff] %v1487
          %v1489 = vld [vmem:[%s1447 + $0xa0] sm:$0xff]
          %1490 = vst [vmem:[%s1448 + $0xa0] sm:$0xff] %v1489
          %v1491 = vld [vmem:[%s1447 + $0xa8] sm:$0xff]
          %1492 = vst [vmem:[%s1448 + $0xa8] sm:$0xff] %v1491
          %v1493 = vld [vmem:[%s1447 + $0xb0] sm:$0xff]
          %1494 = vst [vmem:[%s1448 + $0xb0] sm:$0xff] %v1493
          %v1495 = vld [vmem:[%s1447 + $0xb8] sm:$0xff]
          %1496 = vst [vmem:[%s1448 + $0xb8] sm:$0xff] %v1495
          %v1497 = vld [vmem:[%s1447 + $0xc0] sm:$0xff]
          %1498 = vst [vmem:[%s1448 + $0xc0] sm:$0xff] %v1497
          %v1499 = vld [vmem:[%s1447 + $0xc8] sm:$0xff]
          %1500 = vst [vmem:[%s1448 + $0xc8] sm:$0xff] %v1499
          %v1501 = vld [vmem:[%s1447 + $0xd0] sm:$0xff]
          %1502 = vst [vmem:[%s1448 + $0xd0] sm:$0xff] %v1501
          %v1503 = vld [vmem:[%s1447 + $0xd8] sm:$0xff]
          %1504 = vst [vmem:[%s1448 + $0xd8] sm:$0xff] %v1503
          %v1505 = vld [vmem:[%s1447 + $0xe0] sm:$0xff]
          %1506 = vst [vmem:[%s1448 + $0xe0] sm:$0xff] %v1505
          %v1507 = vld [vmem:[%s1447 + $0xe8] sm:$0xff]
          %1508 = vst [vmem:[%s1448 + $0xe8] sm:$0xff] %v1507
          %v1509 = vld [vmem:[%s1447 + $0xf0] sm:$0xff]
          %1510 = vst [vmem:[%s1448 + $0xf0] sm:$0xff] %v1509
          %v1511 = vld [vmem:[%s1447 + $0xf8] sm:$0xff]
          %1512 = vst [vmem:[%s1448 + $0xf8] sm:$0xff] %v1511
          %v1513 = vld [vmem:[%s1447 + $0x100] sm:$0xff]
          %1514 = vst [vmem:[%s1448 + $0x100] sm:$0xff] %v1513
          %v1515 = vld [vmem:[%s1447 + $0x108] sm:$0xff]
          %1516 = vst [vmem:[%s1448 + $0x108] sm:$0xff] %v1515
          %v1517 = vld [vmem:[%s1447 + $0x110] sm:$0xff]
          %1518 = vst [vmem:[%s1448 + $0x110] sm:$0xff] %v1517
          %v1519 = vld [vmem:[%s1447 + $0x118] sm:$0xff]
          %1520 = vst [vmem:[%s1448 + $0x118] sm:$0xff] %v1519
          %v1521 = vld [vmem:[%s1447 + $0x120] sm:$0xff]
          %1522 = vst [vmem:[%s1448 + $0x120] sm:$0xff] %v1521
          %v1523 = vld [vmem:[%s1447 + $0x128] sm:$0xff]
          %1524 = vst [vmem:[%s1448 + $0x128] sm:$0xff] %v1523
          %v1525 = vld [vmem:[%s1447 + $0x130] sm:$0xff]
          %1526 = vst [vmem:[%s1448 + $0x130] sm:$0xff] %v1525
          %v1527 = vld [vmem:[%s1447 + $0x138] sm:$0xff]
          %1528 = vst [vmem:[%s1448 + $0x138] sm:$0xff] %v1527
          %v1529 = vld [vmem:[%s1447 + $0x140] sm:$0xff]
          %1530 = vst [vmem:[%s1448 + $0x140] sm:$0xff] %v1529
          %v1531 = vld [vmem:[%s1447 + $0x148] sm:$0xff]
          %1532 = vst [vmem:[%s1448 + $0x148] sm:$0xff] %v1531
          %v1533 = vld [vmem:[%s1447 + $0x150] sm:$0xff]
          %1534 = vst [vmem:[%s1448 + $0x150] sm:$0xff] %v1533
          %v1535 = vld [vmem:[%s1447 + $0x158] sm:$0xff]
          %1536 = vst [vmem:[%s1448 + $0x158] sm:$0xff] %v1535
          %v1537 = vld [vmem:[%s1447 + $0x160] sm:$0xff]
          %1538 = vst [vmem:[%s1448 + $0x160] sm:$0xff] %v1537
          %v1539 = vld [vmem:[%s1447 + $0x168] sm:$0xff]
          %1540 = vst [vmem:[%s1448 + $0x168] sm:$0xff] %v1539
          %v1541 = vld [vmem:[%s1447 + $0x170] sm:$0xff]
          %1542 = vst [vmem:[%s1448 + $0x170] sm:$0xff] %v1541
          %v1543 = vld [vmem:[%s1447 + $0x178] sm:$0xff]
          %1544 = vst [vmem:[%s1448 + $0x178] sm:$0xff] %v1543
          %v1545 = vld [vmem:[%s1447 + $0x180] sm:$0xff]
          %1546 = vst [vmem:[%s1448 + $0x180] sm:$0xff] %v1545
          %v1547 = vld [vmem:[%s1447 + $0x188] sm:$0xff]
          %1548 = vst [vmem:[%s1448 + $0x188] sm:$0xff] %v1547
          %v1549 = vld [vmem:[%s1447 + $0x190] sm:$0xff]
          %1550 = vst [vmem:[%s1448 + $0x190] sm:$0xff] %v1549
          %v1551 = vld [vmem:[%s1447 + $0x198] sm:$0xff]
          %1552 = vst [vmem:[%s1448 + $0x198] sm:$0xff] %v1551
          %v1553 = vld [vmem:[%s1447 + $0x1a0] sm:$0xff]
          %1554 = vst [vmem:[%s1448 + $0x1a0] sm:$0xff] %v1553
          %v1555 = vld [vmem:[%s1447 + $0x1a8] sm:$0xff]
          %1556 = vst [vmem:[%s1448 + $0x1a8] sm:$0xff] %v1555
          %v1557 = vld [vmem:[%s1447 + $0x1b0] sm:$0xff]
          %1558 = vst [vmem:[%s1448 + $0x1b0] sm:$0xff] %v1557
          %v1559 = vld [vmem:[%s1447 + $0x1b8] sm:$0xff]
          %1560 = vst [vmem:[%s1448 + $0x1b8] sm:$0xff] %v1559
          %v1561 = vld [vmem:[%s1447 + $0x1c0] sm:$0xff]
          %1562 = vst [vmem:[%s1448 + $0x1c0] sm:$0xff] %v1561
          %v1563 = vld [vmem:[%s1447 + $0x1c8] sm:$0xff]
          %1564 = vst [vmem:[%s1448 + $0x1c8] sm:$0xff] %v1563
          %v1565 = vld [vmem:[%s1447 + $0x1d0] sm:$0xff]
          %1566 = vst [vmem:[%s1448 + $0x1d0] sm:$0xff] %v1565
          %v1567 = vld [vmem:[%s1447 + $0x1d8] sm:$0xff]
          %1568 = vst [vmem:[%s1448 + $0x1d8] sm:$0xff] %v1567
          %v1569 = vld [vmem:[%s1447 + $0x1e0] sm:$0xff]
          %1570 = vst [vmem:[%s1448 + $0x1e0] sm:$0xff] %v1569
          %v1571 = vld [vmem:[%s1447 + $0x1e8] sm:$0xff]
          %1572 = vst [vmem:[%s1448 + $0x1e8] sm:$0xff] %v1571
          %v1573 = vld [vmem:[%s1447 + $0x1f0] sm:$0xff]
          %1574 = vst [vmem:[%s1448 + $0x1f0] sm:$0xff] %v1573
          %v1575 = vld [vmem:[%s1447 + $0x1f8] sm:$0xff]
          %1576 = vst [vmem:[%s1448 + $0x1f8] sm:$0xff] %v1575
          %v1577 = vld [vmem:[%s1447 + $0x200] sm:$0xff]
          %1578 = vst [vmem:[%s1448 + $0x200] sm:$0xff] %v1577
          %v1579 = vld [vmem:[%s1447 + $0x208] sm:$0xff]
          %1580 = vst [vmem:[%s1448 + $0x208] sm:$0xff] %v1579
          %v1581 = vld [vmem:[%s1447 + $0x210] sm:$0xff]
          %1582 = vst [vmem:[%s1448 + $0x210] sm:$0xff] %v1581
          %v1583 = vld [vmem:[%s1447 + $0x218] sm:$0xff]
          %1584 = vst [vmem:[%s1448 + $0x218] sm:$0xff] %v1583
          %v1585 = vld [vmem:[%s1447 + $0x220] sm:$0xff]
          %1586 = vst [vmem:[%s1448 + $0x220] sm:$0xff] %v1585
          %v1587 = vld [vmem:[%s1447 + $0x228] sm:$0xff]
          %1588 = vst [vmem:[%s1448 + $0x228] sm:$0xff] %v1587
        $region217: #{autoencoder_forward.1} parent=211 // loop_footer
          %s1446 = sadd.s32 1, %s1442
        $region218: #{autoencoder_forward.1} parent=211 // loop_footer_branch
          %1441 = sbr.rel target = $region214
        $region219: #{autoencoder_forward.1} parent=211 // loop_exit
          _
      $region212: #{autoencoder_forward.1} parent=196 // pred_fallthru
        _
      %p1589 = pneg %p1437
      // Predicated region
      $region220: #{autoencoder_forward.1} parent=196 // pred_check
        _
      $region221: #{autoencoder_forward.1} parent=196 // pred_check_branch
        %1591 = sbr.rel (%p1437) target = $region223
      $region222: #{autoencoder_forward.1} parent=196 // pred_region
        %s1592 = sand.u32 560, 7
      $region223: #{autoencoder_forward.1} parent=196 // pred_fallthru
        _
    $region197: #{autoencoder_forward.1} parent=1 // pred_fallthru
      _
    // Predicated region
    $region198: #{autoencoder_forward.1} parent=1 // pred_check
      %p1421 = pneg %p1417
    $region199: #{autoencoder_forward.1} parent=1 // pred_check_branch
      %1423 = sbr.rel (%p1421) target = $region201
    $region200: #{autoencoder_forward.1} parent=1 // pred_region
      %s1424 = sshll.u32 1, 560
      %s1425 = ssub.s32 %s1424, 1
      loop: start=0, step=1, limit=1
      $region202: #{autoencoder_forward.1} parent=200 // loop_pre_header
        _
      $region203: #{autoencoder_forward.1} parent=200 // loop_header
        %s1427 = sphi 0, %s1431
        %p1428 = scmp.ge.s32.totalorder %s1427, 1
        %s1432 = sphi %s18, %s18
        %s1433 = sphi [#allocation6], [#allocation6]
      $region204: #{autoencoder_forward.1} parent=200 // loop_header_branch
        %1430 = sbr.rel (%p1428) target = $region208
      $region205: #{autoencoder_forward.1} parent=200 // loop_body
        %v1434 = vld [vmem:[%s1432] sm:%s1425]
        %1435 = vst [vmem:[%s1433] sm:%s1425] %v1434
      $region206: #{autoencoder_forward.1} parent=200 // loop_footer
        %s1431 = sadd.s32 1, %s1427
      $region207: #{autoencoder_forward.1} parent=200 // loop_footer_branch
        %1426 = sbr.rel target = $region203
      $region208: #{autoencoder_forward.1} parent=200 // loop_exit
        _
    $region201: #{autoencoder_forward.1} parent=1 // pred_fallthru
      _
    // Predicated region
    $region224: #{autoencoder_forward.1} parent=1 // pred_check
      _
    $region225: #{autoencoder_forward.1} parent=1 // pred_check_branch
      %1595 = sbr.rel (0) target = $region227
    $region226: #{autoencoder_forward.1} parent=1 // pred_region
      %1596 = vsyncadd %s1415, 8960
    $region227: #{autoencoder_forward.1} parent=1 // pred_fallthru
      _
    %v1597 = vld [vmem:[%s1] sm:$0x1]
    %v1598 = vld [vmem:[%s0] sm:$0xff]
    %v1599 = vld [vmem:[%s0 + $0x8] sm:$0xff]
    %v1600 = vld [vmem:[%s0 + $0x10] sm:$0xff]
    %v1601 = vld [vmem:[%s0 + $0x18] sm:$0xff]
    %v1602 = vld [vmem:[%s0 + $0x20] sm:$0xff]
    %v1603 = vld [vmem:[%s0 + $0x28] sm:$0xff]
    %v1604 = vld [vmem:[%s0 + $0x30] sm:$0xff]
    %v1605 = vpack.c.bf16 %v1599, %v1598
    %v1606 = vpack.c.bf16 %v1601, %v1600
    %v1607 = vpack.c.bf16 %v1603, %v1602
    %v1608 = vpack.c.bf16 %v1604, %v1604
    %v1609 = vld [vmem:[%s3] sm:$0xf]
    %v1610 = vld [vmem:[%s3 + $0x4] sm:$0xf]
    %v1611 = vld [vmem:[%s3 + $0x8] sm:$0xf]
    %v1612 = vld [vmem:[%s3 + $0xc] sm:$0xf]
    %v1613 = vld [vmem:[%s3 + $0x10] sm:$0xf]
    %v1614 = vld [vmem:[%s3 + $0x14] sm:$0xf]
    %v1615 = vld [vmem:[%s3 + $0x18] sm:$0xf]
    %v1616 = vld [vmem:[%s3 + $0x1c] sm:$0xf]
    %v1617 = vld [vmem:[%s3 + $0x20] sm:$0xf]
    %v1618 = vld [vmem:[%s3 + $0x24] sm:$0xf]
    %v1619 = vld [vmem:[%s3 + $0x28] sm:$0xf]
    %v1620 = vld [vmem:[%s3 + $0x2c] sm:$0xf]
    %v1621 = vld [vmem:[%s3 + $0x30] sm:$0xf]
    %v1622 = vld [vmem:[%s3 + $0x34] sm:$0xf]
    %v1623 = vld [vmem:[%s3 + $0x38] sm:$0xf]
    %v1624 = vld [vmem:[%s3 + $0x3c] sm:$0xf]
    %v1625 = vld [vmem:[%s3 + $0x40] sm:$0xf]
    %v1626 = vld [vmem:[%s3 + $0x44] sm:$0xf]
    %v1627 = vld [vmem:[%s3 + $0x48] sm:$0xf]
    %v1628 = vld [vmem:[%s3 + $0x4c] sm:$0xf]
    %v1649 = vunpack.c.l.b16 %v1609
    %v1650 = vunpack.c.l.b16 %v1610
    %v1651 = vunpack.c.l.b16 %v1611
    %v1652 = vunpack.c.l.b16 %v1612
    %v1653 = vunpack.c.l.b16 %v1613
    %v1654 = vunpack.c.l.b16 %v1614
    %v1655 = vunpack.c.l.b16 %v1615
    %v1656 = vunpack.c.l.b16 %v1616
    %v1657 = vunpack.c.l.b16 %v1617
    %v1658 = vunpack.c.l.b16 %v1618
    %v1659 = vunpack.c.l.b16 %v1619
    %v1660 = vunpack.c.l.b16 %v1620
    %v1661 = vunpack.c.l.b16 %v1621
    %v1662 = vunpack.c.l.b16 %v1622
    %v1663 = vunpack.c.l.b16 %v1623
    %v1664 = vunpack.c.l.b16 %v1624
    %v1665 = vunpack.c.l.b16 %v1625
    %v1666 = vunpack.c.l.b16 %v1626
    %v1667 = vunpack.c.l.b16 %v1627
    %v1668 = vunpack.c.l.b16 %v1628
    %v1669 = vpack.c.b16 %v1650, %v1649
    %v1670 = vpack.c.b16 %v1652, %v1651
    %v1671 = vpack.c.b16 %v1654, %v1653
    %v1672 = vpack.c.b16 %v1656, %v1655
    %v1673 = vpack.c.b16 %v1658, %v1657
    %v1674 = vpack.c.b16 %v1660, %v1659
    %v1675 = vpack.c.b16 %v1662, %v1661
    %v1676 = vpack.c.b16 %v1664, %v1663
    %v1677 = vpack.c.b16 %v1666, %v1665
    %v1678 = vpack.c.b16 %v1668, %v1667
    %vm1679 = vcmask 457728
    %v1681 = vsel %vm1679, %v1669, 0
    %v1684 = vsel %vm1679, %v1670, 0
    %v1687 = vsel %vm1679, %v1671, 0
    %v1690 = vsel %vm1679, %v1672, 0
    %v1693 = vsel %vm1679, %v1673, 0
    %v1696 = vsel %vm1679, %v1674, 0
    %v1699 = vsel %vm1679, %v1675, 0
    %v1702 = vsel %vm1679, %v1676, 0
    %v1705 = vsel %vm1679, %v1677, 0
    %v1708 = vsel %vm1679, %v1678, 0
    %vm1710 = vcmask 1043456
    %v1712 = vsel %vm1710, %v1608, 0
    %1714 = vmatprep.subr.bf16.mxu0 0
    %1715 = vmatpush1.bf16.msra.mxu0 0
    %1716 = vmatprep.subr.bf16.mxu0 0
    %1717 = vmatpush1.bf16.msra.mxu0 0
    %1718 = vmatprep.subr.bf16.mxu0 0
    %1719 = vmatpush1.bf16.msra.mxu0 0
    %1720 = vmatprep.subr.bf16.mxu0 0
    %1721 = vmatpush1.bf16.msra.mxu0 0
    %1722 = vmatprep.subr.bf16.mxu0 0
    %1723 = vmatpush1.bf16.msra.mxu0 %v1712
    %1724 = vmatprep.subr.bf16.mxu0 0
    %1725 = vmatpush1.bf16.msra.mxu0 %v1607
    %1726 = vmatprep.subr.bf16.mxu0 0
    %1727 = vmatpush1.bf16.msra.mxu0 %v1606
    %1728 = vmatprep.subr.bf16.mxu0 0
    %1729 = vmatpush1.bf16.msra.mxu0 %v1605
    %1730 = vmatprep.subr.bf16.mxu0 0
    %1731 = vmatpush2.bf16.msra.mxu0 0
    %1732 = vmatprep.subr.bf16.mxu0 0
    %1733 = vmatpush2.bf16.msra.mxu0 0
    %1734 = vmatprep.subr.bf16.mxu0 0
    %1735 = vmatpush2.bf16.msra.mxu0 0
    %1736 = vmatprep.subr.bf16.mxu0 0
    %1737 = vmatpush2.bf16.msra.mxu0 0
    %1738 = vmatprep.subr.bf16.mxu0 0
    %1739 = vmatpush2.bf16.msra.mxu0 0
    %1740 = vmatprep.subr.bf16.mxu0 0
    %1741 = vmatpush2.bf16.msra.mxu0 0
    %1742 = vmatprep.subr.bf16.mxu0 0
    %1743 = vmatpush2.bf16.msra.mxu0 0
    %1744 = vmatprep.subr.bf16.mxu0 0
    %1745 = vmatpush2.bf16.msra.mxu0 0
    %1746 = vmatprep.mubr.bf16.mxu0 0
    %1747 = vmatmul.mubr.bf16.gmra.mxu0 %v1681
    %v1748 = vpop.f32.mrf.mxu0
    %v1749 = vadd.f32 0.0, %v1748
    %v1750 = vpop.f32.mrf.mxu0
    %v1751 = vpop.f32.mrf.mxu0
    %v1752 = vadd.f32 0.0, %v1751
    %v1753 = vpop.f32.mrf.mxu0
    %1754 = vmatprep.mubr.bf16.mxu0 0
    %1755 = vmatmul.mubr.bf16.gmra.mxu0 %v1684
    %v1756 = vpop.f32.mrf.mxu0
    %v1757 = vadd.f32 0.0, %v1756
    %v1758 = vpop.f32.mrf.mxu0
    %v1759 = vpop.f32.mrf.mxu0
    %v1760 = vadd.f32 0.0, %v1759
    %v1761 = vpop.f32.mrf.mxu0
    %1762 = vmatprep.mubr.bf16.mxu0 0
    %1763 = vmatmul.mubr.bf16.gmra.mxu0 %v1687
    %v1764 = vpop.f32.mrf.mxu0
    %v1765 = vadd.f32 0.0, %v1764
    %v1766 = vpop.f32.mrf.mxu0
    %v1767 = vpop.f32.mrf.mxu0
    %v1768 = vadd.f32 0.0, %v1767
    %v1769 = vpop.f32.mrf.mxu0
    %1770 = vmatprep.mubr.bf16.mxu0 0
    %1771 = vmatmul.mubr.bf16.gmra.mxu0 %v1690
    %v1772 = vpop.f32.mrf.mxu0
    %v1773 = vadd.f32 0.0, %v1772
    %v1774 = vpop.f32.mrf.mxu0
    %v1775 = vpop.f32.mrf.mxu0
    %v1776 = vadd.f32 0.0, %v1775
    %v1777 = vpop.f32.mrf.mxu0
    %1778 = vmatprep.mubr.bf16.mxu0 0
    %1779 = vmatmul.mubr.bf16.gmra.mxu0 %v1693
    %v1780 = vpop.f32.mrf.mxu0
    %v1781 = vadd.f32 0.0, %v1780
    %v1782 = vpop.f32.mrf.mxu0
    %v1783 = vpop.f32.mrf.mxu0
    %v1784 = vadd.f32 0.0, %v1783
    %v1785 = vpop.f32.mrf.mxu0
    %1786 = vmatprep.mubr.bf16.mxu0 0
    %1787 = vmatmul.mubr.bf16.gmra.mxu0 %v1696
    %v1788 = vpop.f32.mrf.mxu0
    %v1789 = vadd.f32 0.0, %v1788
    %v1790 = vpop.f32.mrf.mxu0
    %v1791 = vpop.f32.mrf.mxu0
    %v1792 = vadd.f32 0.0, %v1791
    %v1793 = vpop.f32.mrf.mxu0
    %1794 = vmatprep.mubr.bf16.mxu0 0
    %1795 = vmatmul.mubr.bf16.gmra.mxu0 %v1699
    %v1796 = vpop.f32.mrf.mxu0
    %v1797 = vadd.f32 0.0, %v1796
    %v1798 = vpop.f32.mrf.mxu0
    %v1799 = vpop.f32.mrf.mxu0
    %v1800 = vadd.f32 0.0, %v1799
    %v1801 = vpop.f32.mrf.mxu0
    %1802 = vmatprep.mubr.bf16.mxu0 0
    %1803 = vmatmul.mubr.bf16.gmra.mxu0 %v1702
    %v1804 = vpop.f32.mrf.mxu0
    %v1805 = vadd.f32 0.0, %v1804
    %v1806 = vpop.f32.mrf.mxu0
    %v1807 = vpop.f32.mrf.mxu0
    %v1808 = vadd.f32 0.0, %v1807
    %v1809 = vpop.f32.mrf.mxu0
    %1810 = vmatprep.mubr.bf16.mxu0 0
    %1811 = vmatmul.mubr.bf16.gmra.mxu0 %v1705
    %v1812 = vpop.f32.mrf.mxu0
    %v1813 = vadd.f32 0.0, %v1812
    %v1814 = vpop.f32.mrf.mxu0
    %v1815 = vpop.f32.mrf.mxu0
    %v1816 = vadd.f32 0.0, %v1815
    %v1817 = vpop.f32.mrf.mxu0
    %1818 = vmatprep.mubr.bf16.mxu0 0
    %1819 = vmatmul.mubr.bf16.gmra.mxu0 %v1708
    %v1820 = vpop.f32.mrf.mxu0
    %v1821 = vadd.f32 0.0, %v1820
    %v1822 = vpop.f32.mrf.mxu0
    %v1823 = vpop.f32.mrf.mxu0
    %v1824 = vadd.f32 0.0, %v1823
    %v1825 = vpop.f32.mrf.mxu0
    %1826 = vdwg.mxu0
    %v1827 = vpack.c.bf16 %v1752, %v1749
    %v1828 = vpack.c.bf16 %v1760, %v1757
    %v1829 = vpack.c.bf16 %v1768, %v1765
    %v1830 = vpack.c.bf16 %v1776, %v1773
    %v1831 = vpack.c.bf16 %v1784, %v1781
    %v1832 = vpack.c.bf16 %v1792, %v1789
    %v1833 = vpack.c.bf16 %v1800, %v1797
    %v1834 = vpack.c.bf16 %v1808, %v1805
    %v1835 = vpack.c.bf16 %v1816, %v1813
    %v1836 = vpack.c.bf16 %v1824, %v1821
    %1839 = vrot.lane.b32.xlu0 %v1829, 28
    %v1840 = vpop.permute.xlu0 %1839
    %1841 = vrot.lane.b32.xlu0 %v1830, 28
    %v1842 = vpop.permute.xlu0 %1841
    %1845 = vrot.lane.b32.xlu0 %v1831, 56
    %v1846 = vpop.permute.xlu0 %1845
    %1847 = vrot.lane.b32.xlu0 %v1832, 56
    %v1848 = vpop.permute.xlu0 %1847
    %1851 = vrot.lane.b32.xlu0 %v1833, 84
    %v1852 = vpop.permute.xlu0 %1851
    %1853 = vrot.lane.b32.xlu0 %v1834, 84
    %v1854 = vpop.permute.xlu0 %1853
    %1857 = vrot.lane.b32.xlu0 %v1835, 112
    %v1858 = vpop.permute.xlu0 %1857
    %1859 = vrot.lane.b32.xlu0 %v1836, 112
    %v1860 = vpop.permute.xlu0 %1859
    %vm1861 = vcmask 228352
    %v1864 = vsel %vm1861, %v1827, %v1840
    %v1867 = vsel %vm1861, %v1828, %v1842
    %v1869 = vsel %vm1679, %v1864, %v1846
    %v1871 = vsel %vm1679, %v1867, %v1848
    %vm1872 = vcmask 687104
    %v1874 = vsel %vm1872, %v1869, %v1852
    %v1876 = vsel %vm1872, %v1871, %v1854
    %vm1877 = vcmask 916480
    %v1879 = vsel %vm1877, %v1874, %v1858
    %v1882 = vsel %vm1877, %v1876, %v1860
    %v1884 = vld [vmem:[%s4] sm:$0xff]
    %v1885 = vld [vmem:[%s4 + $0x8] sm:$0xff]
    %v1886 = vld [vmem:[%s4 + $0x10] sm:$0xff]
    %v1887 = vld [vmem:[%s4 + $0x18] sm:$0xff]
    %v1888 = vld [vmem:[%s4 + $0x20] sm:$0xff]
    %v1889 = vld [vmem:[%s4 + $0x28] sm:$0xff]
    %v1890 = vld [vmem:[%s4 + $0x30] sm:$0xff]
    %v1891 = vld [vmem:[%s4 + $0x38] sm:$0xff]
    %v1892 = vld [vmem:[%s4 + $0x40] sm:$0xff]
    %v1893 = vld [vmem:[%s4 + $0x48] sm:$0xff]
    %v1894 = vld [vmem:[%s4 + $0x50] sm:$0xff]
    %v1895 = vld [vmem:[%s4 + $0x58] sm:$0xff]
    %v1896 = vld [vmem:[%s4 + $0x60] sm:$0xff]
    %v1897 = vld [vmem:[%s4 + $0x68] sm:$0xff]
    %v1898 = vld [vmem:[%s4 + $0x70] sm:$0xff]
    %v1899 = vld [vmem:[%s4 + $0x78] sm:$0xff]
    %v1900 = vld [vmem:[%s4 + $0x80] sm:$0xff]
    %v1901 = vld [vmem:[%s4 + $0x88] sm:$0x33]
    %v1902 = vld [vmem:[%s5] sm:$0x3]
    %v1904 = vlaneseq
    %v1905 = vshrl.u32 %v1904, 7
    %v1906 = vsub.s32 0, %v1905
    %v1907 = vrot.slane %v1902, %v1906
    %v1908 = vlaneseq
    %v1909 = vshrl.u32 %v1908, 7
    %v1910 = vsub.s32 1, %v1909
    %v1911 = vrot.slane %v1902, %v1910
    %v1932 = vunpack.c.l.b16 %v1884
    %v1933 = vunpack.c.h.b16 %v1884
    %v1934 = vunpack.c.l.b16 %v1885
    %v1935 = vunpack.c.h.b16 %v1885
    %v1936 = vunpack.c.l.b16 %v1886
    %v1937 = vunpack.c.h.b16 %v1886
    %v1938 = vunpack.c.l.b16 %v1887
    %v1939 = vunpack.c.h.b16 %v1887
    %v1940 = vunpack.c.l.b16 %v1888
    %v1941 = vunpack.c.h.b16 %v1888
    %v1942 = vunpack.c.l.b16 %v1889
    %v1943 = vunpack.c.h.b16 %v1889
    %v1944 = vunpack.c.l.b16 %v1890
    %v1945 = vunpack.c.h.b16 %v1890
    %v1946 = vunpack.c.l.b16 %v1891
    %v1947 = vunpack.c.h.b16 %v1891
    %v1948 = vunpack.c.l.b16 %v1892
    %v1949 = vunpack.c.h.b16 %v1892
    %v1950 = vunpack.c.l.b16 %v1893
    %v1951 = vunpack.c.h.b16 %v1893
    %v1952 = vunpack.c.l.b16 %v1894
    %v1953 = vunpack.c.h.b16 %v1894
    %v1954 = vunpack.c.l.b16 %v1895
    %v1955 = vunpack.c.h.b16 %v1895
    %v1956 = vunpack.c.l.b16 %v1896
    %v1957 = vunpack.c.h.b16 %v1896
    %v1958 = vunpack.c.l.b16 %v1897
    %v1959 = vunpack.c.h.b16 %v1897
    %v1960 = vunpack.c.l.b16 %v1898
    %v1961 = vunpack.c.h.b16 %v1898
    %v1962 = vunpack.c.l.b16 %v1899
    %v1963 = vunpack.c.h.b16 %v1899
    %v1964 = vunpack.c.l.b16 %v1900
    %v1965 = vunpack.c.h.b16 %v1900
    %v1966 = vunpack.c.l.b16 %v1901
    %v1967 = vunpack.c.h.b16 %v1901
    %v1968 = vpack.c.b16 %v1934, %v1932
    %v1969 = vpack.c.b16 %v1935, %v1933
    %v1970 = vpack.c.b16 %v1938, %v1936
    %v1971 = vpack.c.b16 %v1939, %v1937
    %v1972 = vpack.c.b16 %v1942, %v1940
    %v1973 = vpack.c.b16 %v1943, %v1941
    %v1974 = vpack.c.b16 %v1946, %v1944
    %v1975 = vpack.c.b16 %v1947, %v1945
    %v1976 = vpack.c.b16 %v1950, %v1948
    %v1977 = vpack.c.b16 %v1951, %v1949
    %v1978 = vpack.c.b16 %v1954, %v1952
    %v1979 = vpack.c.b16 %v1955, %v1953
    %v1980 = vpack.c.b16 %v1958, %v1956
    %v1981 = vpack.c.b16 %v1959, %v1957
    %v1982 = vpack.c.b16 %v1962, %v1960
    %v1983 = vpack.c.b16 %v1963, %v1961
    %v1984 = vpack.c.b16 %v1966, %v1964
    %v1985 = vpack.c.b16 %v1967, %v1965
    %vm2002 = vcmask 97280
    %v2003 = vsel %vm2002, %v1858, 0
    %v2005 = vsel %vm2002, %v1860, 0
    %vm2007 = vcmask 1045504
    %v2009 = vsel %vm2007, %v1984, 0
    %v2012 = vsel %vm2007, %v1985, 0
    %2014 = vmatprep.subr.bf16.mxu0 %v1983
    %2015 = vmatpush1.bf16.msra.mxu0 %v1982
    %2016 = vmatprep.subr.bf16.mxu0 %v1981
    %2017 = vmatpush1.bf16.msra.mxu0 %v1980
    %2018 = vmatprep.subr.bf16.mxu0 %v1979
    %2019 = vmatpush1.bf16.msra.mxu0 %v1978
    %2020 = vmatprep.subr.bf16.mxu0 %v1977
    %2021 = vmatpush1.bf16.msra.mxu0 %v1976
    %2022 = vmatprep.subr.bf16.mxu0 %v1975
    %2023 = vmatpush1.bf16.msra.mxu0 %v1974
    %2024 = vmatprep.subr.bf16.mxu0 %v1973
    %2025 = vmatpush1.bf16.msra.mxu0 %v1972
    %2026 = vmatprep.subr.bf16.mxu0 %v1971
    %2027 = vmatpush1.bf16.msra.mxu0 %v1970
    %2028 = vmatprep.subr.bf16.mxu0 %v1969
    %2029 = vmatpush1.bf16.msra.mxu0 %v1968
    %2030 = vmatprep.subr.bf16.mxu0 0
    %2031 = vmatpush2.bf16.msra.mxu0 0
    %2032 = vmatprep.subr.bf16.mxu0 0
    %2033 = vmatpush2.bf16.msra.mxu0 0
    %2034 = vmatprep.subr.bf16.mxu0 0
    %2035 = vmatpush2.bf16.msra.mxu0 0
    %2036 = vmatprep.subr.bf16.mxu0 0
    %2037 = vmatpush2.bf16.msra.mxu0 0
    %2038 = vmatprep.subr.bf16.mxu0 0
    %2039 = vmatpush2.bf16.msra.mxu0 0
    %2040 = vmatprep.subr.bf16.mxu0 0
    %2041 = vmatpush2.bf16.msra.mxu0 0
    %2042 = vmatprep.subr.bf16.mxu0 0
    %2043 = vmatpush2.bf16.msra.mxu0 0
    %2044 = vmatprep.subr.bf16.mxu0 %v2012
    %2045 = vmatpush2.bf16.msra.mxu0 %v2009
    %2046 = vmatprep.mubr.bf16.mxu0 %v2003
    %2047 = vmatmul.mubr.bf16.gmra.mxu0 %v1879
    %v2048 = vpop.f32.mrf.mxu0
    %v2049 = vadd.f32 %v1907, %v2048
    %v2050 = vpop.f32.mrf.mxu0
    %v2051 = vadd.f32 %v1911, %v2050
    %v2052 = vpop.f32.mrf.mxu0
    %v2053 = vadd.f32 %v1907, %v2052
    %v2054 = vpop.f32.mrf.mxu0
    %v2055 = vadd.f32 %v1911, %v2054
    %2056 = vmatprep.mubr.bf16.mxu0 %v2005
    %2057 = vmatmul.mubr.bf16.gmra.mxu0 %v1882
    %v2058 = vpop.f32.mrf.mxu0
    %v2059 = vadd.f32 %v1907, %v2058
    %v2060 = vpop.f32.mrf.mxu0
    %v2061 = vadd.f32 %v1911, %v2060
    %v2062 = vpop.f32.mrf.mxu0
    %v2063 = vadd.f32 %v1907, %v2062
    %v2064 = vpop.f32.mrf.mxu0
    %v2065 = vadd.f32 %v1911, %v2064
    %2066 = vdwg.mxu0
    %vm2067 = vcmp.gt.f32.partialorder %v2049, 0.0
    %vm2068 = vcmp.gt.f32.partialorder %v2051, 0.0
    %vm2069 = vcmp.gt.f32.partialorder %v2053, 0.0
    %vm2070 = vcmp.gt.f32.partialorder %v2055, 0.0
    %vm2071 = vcmp.gt.f32.partialorder %v2059, 0.0
    %vm2072 = vcmp.gt.f32.partialorder %v2061, 0.0
    %vm2073 = vcmp.gt.f32.partialorder %v2063, 0.0
    %vm2074 = vcmp.gt.f32.partialorder %v2065, 0.0
    %v2075 = vmul.f32 %v2049, 0.2
    %v2076 = vmul.f32 %v2051, 0.2
    %v2077 = vmul.f32 %v2053, 0.2
    %v2078 = vmul.f32 %v2055, 0.2
    %v2079 = vmul.f32 %v2059, 0.2
    %v2080 = vmul.f32 %v2061, 0.2
    %v2081 = vmul.f32 %v2063, 0.2
    %v2082 = vmul.f32 %v2065, 0.2
    %v2083 = vsel %vm2067, %v2049, %v2075
    %v2084 = vsel %vm2068, %v2051, %v2076
    %v2085 = vsel %vm2069, %v2053, %v2077
    %v2086 = vsel %vm2070, %v2055, %v2078
    %v2087 = vsel %vm2071, %v2059, %v2079
    %v2088 = vsel %vm2072, %v2061, %v2080
    %v2089 = vsel %vm2073, %v2063, %v2081
    %v2090 = vsel %vm2074, %v2065, %v2082
    %v2091 = vpack.c.bf16 %v2085, %v2083
    %v2092 = vpack.c.bf16 %v2086, %v2084
    %v2093 = vpack.c.bf16 %v2089, %v2087
    %v2094 = vpack.c.bf16 %v2090, %v2088
    %v2095 = vld [vmem:[%s6] sm:$0xf]
    %v2096 = vld [vmem:[%s6 + $0x4] sm:$0xf]
    %v2097 = vld [vmem:[%s6 + $0x8] sm:$0xf]
    %v2098 = vld [vmem:[%s6 + $0xc] sm:$0xf]
    %v2099 = vld [vmem:[%s6 + $0x10] sm:$0xf]
    %v2100 = vld [vmem:[%s6 + $0x14] sm:$0xf]
    %v2101 = vld [vmem:[%s6 + $0x18] sm:$0xf]
    %v2102 = vld [vmem:[%s6 + $0x1c] sm:$0xf]
    %v2103 = vld [vmem:[%s6 + $0x20] sm:$0xf]
    %v2104 = vld [vmem:[%s6 + $0x24] sm:$0xf]
    %v2115 = vunpack.c.l.b16 %v2095
    %v2116 = vunpack.c.l.b16 %v2096
    %v2117 = vunpack.c.l.b16 %v2097
    %v2118 = vunpack.c.l.b16 %v2098
    %v2119 = vunpack.c.l.b16 %v2099
    %v2120 = vunpack.c.l.b16 %v2100
    %v2121 = vunpack.c.l.b16 %v2101
    %v2122 = vunpack.c.l.b16 %v2102
    %v2123 = vunpack.c.l.b16 %v2103
    %v2124 = vunpack.c.l.b16 %v2104
    %v2125 = vpack.c.b16 %v2116, %v2115
    %v2126 = vpack.c.b16 %v2118, %v2117
    %v2127 = vpack.c.b16 %v2120, %v2119
    %v2128 = vpack.c.b16 %v2122, %v2121
    %v2129 = vpack.c.b16 %v2124, %v2123
    %v2131 = vsel %vm1861, %v2125, 0
    %v2134 = vsel %vm1861, %v2126, 0
    %v2137 = vsel %vm1861, %v2127, 0
    %v2140 = vsel %vm1861, %v2128, 0
    %v2143 = vsel %vm1861, %v2129, 0
    %v2146 = vsel %vm2007, %v2093, 0
    %v2149 = vsel %vm2007, %v2094, 0
    %2151 = vmatprep.subr.bf16.mxu0 0
    %2152 = vmatpush1.bf16.msra.mxu0 0
    %2153 = vmatprep.subr.bf16.mxu0 0
    %2154 = vmatpush1.bf16.msra.mxu0 0
    %2155 = vmatprep.subr.bf16.mxu0 0
    %2156 = vmatpush1.bf16.msra.mxu0 0
    %2157 = vmatprep.subr.bf16.mxu0 0
    %2158 = vmatpush1.bf16.msra.mxu0 0
    %2159 = vmatprep.subr.bf16.mxu0 0
    %2160 = vmatpush1.bf16.msra.mxu0 0
    %2161 = vmatprep.subr.bf16.mxu0 0
    %2162 = vmatpush1.bf16.msra.mxu0 0
    %2163 = vmatprep.subr.bf16.mxu0 %v2149
    %2164 = vmatpush1.bf16.msra.mxu0 %v2146
    %2165 = vmatprep.subr.bf16.mxu0 %v2092
    %2166 = vmatpush1.bf16.msra.mxu0 %v2091
    %2167 = vmatprep.subr.bf16.mxu0 0
    %2168 = vmatpush2.bf16.msra.mxu0 0
    %2169 = vmatprep.subr.bf16.mxu0 0
    %2170 = vmatpush2.bf16.msra.mxu0 0
    %2171 = vmatprep.subr.bf16.mxu0 0
    %2172 = vmatpush2.bf16.msra.mxu0 0
    %2173 = vmatprep.subr.bf16.mxu0 0
    %2174 = vmatpush2.bf16.msra.mxu0 0
    %2175 = vmatprep.subr.bf16.mxu0 0
    %2176 = vmatpush2.bf16.msra.mxu0 0
    %2177 = vmatprep.subr.bf16.mxu0 0
    %2178 = vmatpush2.bf16.msra.mxu0 0
    %2179 = vmatprep.subr.bf16.mxu0 0
    %2180 = vmatpush2.bf16.msra.mxu0 0
    %2181 = vmatprep.subr.bf16.mxu0 0
    %2182 = vmatpush2.bf16.msra.mxu0 0
    %2183 = vmatprep.mubr.bf16.mxu0 0
    %2184 = vmatmul.mubr.bf16.gmra.mxu0 %v2131
    %v2185 = vpop.f32.mrf.mxu0
    %v2186 = vadd.f32 0.0, %v2185
    %v2187 = vpop.f32.mrf.mxu0
    %v2188 = vadd.f32 0.0, %v2187
    %v2189 = vpop.f32.mrf.mxu0
    %v2190 = vadd.f32 0.0, %v2189
    %v2191 = vpop.f32.mrf.mxu0
    %v2192 = vadd.f32 0.0, %v2191
    %2193 = vmatprep.mubr.bf16.mxu0 0
    %2194 = vmatmul.mubr.bf16.gmra.mxu0 %v2134
    %v2195 = vpop.f32.mrf.mxu0
    %v2196 = vadd.f32 0.0, %v2195
    %v2197 = vpop.f32.mrf.mxu0
    %v2198 = vadd.f32 0.0, %v2197
    %v2199 = vpop.f32.mrf.mxu0
    %v2200 = vadd.f32 0.0, %v2199
    %v2201 = vpop.f32.mrf.mxu0
    %v2202 = vadd.f32 0.0, %v2201
    %2203 = vmatprep.mubr.bf16.mxu0 0
    %2204 = vmatmul.mubr.bf16.gmra.mxu0 %v2137
    %v2205 = vpop.f32.mrf.mxu0
    %v2206 = vadd.f32 0.0, %v2205
    %v2207 = vpop.f32.mrf.mxu0
    %v2208 = vadd.f32 0.0, %v2207
    %v2209 = vpop.f32.mrf.mxu0
    %v2210 = vadd.f32 0.0, %v2209
    %v2211 = vpop.f32.mrf.mxu0
    %v2212 = vadd.f32 0.0, %v2211
    %2213 = vmatprep.mubr.bf16.mxu0 0
    %2214 = vmatmul.mubr.bf16.gmra.mxu0 %v2140
    %v2215 = vpop.f32.mrf.mxu0
    %v2216 = vadd.f32 0.0, %v2215
    %v2217 = vpop.f32.mrf.mxu0
    %v2218 = vadd.f32 0.0, %v2217
    %v2219 = vpop.f32.mrf.mxu0
    %v2220 = vadd.f32 0.0, %v2219
    %v2221 = vpop.f32.mrf.mxu0
    %v2222 = vadd.f32 0.0, %v2221
    %2223 = vmatprep.mubr.bf16.mxu0 0
    %2224 = vmatmul.mubr.bf16.gmra.mxu0 %v2143
    %v2225 = vpop.f32.mrf.mxu0
    %v2226 = vadd.f32 0.0, %v2225
    %v2227 = vpop.f32.mrf.mxu0
    %v2228 = vadd.f32 0.0, %v2227
    %v2229 = vpop.f32.mrf.mxu0
    %v2230 = vadd.f32 0.0, %v2229
    %v2231 = vpop.f32.mrf.mxu0
    %v2232 = vadd.f32 0.0, %v2231
    %2233 = vdwg.mxu0
    %v2234 = vpack.c.bf16 %v2190, %v2186
    %v2235 = vpack.c.bf16 %v2192, %v2188
    %v2236 = vpack.c.bf16 %v2200, %v2196
    %v2237 = vpack.c.bf16 %v2202, %v2198
    %v2238 = vpack.c.bf16 %v2210, %v2206
    %v2239 = vpack.c.bf16 %v2212, %v2208
    %v2240 = vpack.c.bf16 %v2220, %v2216
    %v2241 = vpack.c.bf16 %v2222, %v2218
    %v2242 = vpack.c.bf16 %v2230, %v2226
    %v2243 = vpack.c.bf16 %v2232, %v2228
    %2246 = vrot.lane.b32.xlu0 %v2236, 96
    %v2247 = vpop.permute.xlu0 %2246
    %2248 = vrot.lane.b32.xlu0 %v2237, 96
    %v2249 = vpop.permute.xlu0 %2248
    %vm2250 = vcmask 785408
    %v2251 = vsel %vm2250, %v2247, %v2249
    %2255 = vrot.lane.b32.xlu0 %v2238, 64
    %v2256 = vpop.permute.xlu0 %2255
    %2257 = vrot.lane.b32.xlu0 %v2239, 64
    %v2258 = vpop.permute.xlu0 %2257
    %vm2259 = vcmask 523264
    %v2260 = vsel %vm2259, %v2256, %v2258
    %2264 = vrot.lane.b32.xlu0 %v2240, 32
    %v2265 = vpop.permute.xlu0 %2264
    %2266 = vrot.lane.b32.xlu0 %v2241, 32
    %v2267 = vpop.permute.xlu0 %2266
    %vm2268 = vcmask 261120
    %v2269 = vsel %vm2268, %v2265, %v2267
    %vm2271 = vcmask 785408
    %v2274 = vsel %vm2271, %v2235, %v2247
    %vm2276 = vcmask 523264
    %v2279 = vsel %vm2276, %v2249, %v2256
    %vm2281 = vcmask 261120
    %v2284 = vsel %vm2281, %v2258, %v2265
    %s2286 = smul.u32 4, 140
    %s2287 = smul.u32 %s2286, 2
    %s2288 = sshll.u32 %s2287, 4
    %2289 = dma.done [#allocation8], %s2288
    %v2290 = vld [vmem:[#allocation2] sm:$0xff]
    %v2291 = vld [vmem:[#allocation2 + $0x8] sm:$0xff]
    %v2292 = vld [vmem:[#allocation2 + $0x10] sm:$0xff]
    %v2293 = vld [vmem:[#allocation2 + $0x18] sm:$0xff]
    %v2294 = vld [vmem:[#allocation2 + $0x20] sm:$0xff]
    %v2295 = vld [vmem:[#allocation2 + $0x28] sm:$0xff]
    %v2296 = vld [vmem:[#allocation2 + $0x30] sm:$0xff]
    %v2297 = vld [vmem:[#allocation2 + $0x38] sm:$0xff]
    %v2298 = vld [vmem:[#allocation2 + $0x40] sm:$0xff]
    %v2299 = vld [vmem:[#allocation2 + $0x48] sm:$0xff]
    %v2300 = vld [vmem:[#allocation2 + $0x50] sm:$0xff]
    %v2301 = vld [vmem:[#allocation2 + $0x58] sm:$0xff]
    %v2302 = vld [vmem:[#allocation2 + $0x60] sm:$0xff]
    %v2303 = vld [vmem:[#allocation2 + $0x68] sm:$0xff]
    %v2304 = vld [vmem:[#allocation2 + $0x70] sm:$0xff]
    %v2305 = vld [vmem:[#allocation2 + $0x78] sm:$0xff]
    %v2306 = vld [vmem:[#allocation2 + $0x80] sm:$0xff]
    %v2307 = vld [vmem:[#allocation2 + $0x88] sm:$0xff]
    %v2308 = vld [vmem:[#allocation2 + $0x90] sm:$0xff]
    %v2309 = vld [vmem:[#allocation2 + $0x98] sm:$0xff]
    %v2310 = vld [vmem:[#allocation2 + $0xa0] sm:$0xff]
    %v2311 = vld [vmem:[#allocation2 + $0xa8] sm:$0xff]
    %v2312 = vld [vmem:[#allocation2 + $0xb0] sm:$0xff]
    %v2313 = vld [vmem:[#allocation2 + $0xb8] sm:$0xff]
    %v2314 = vld [vmem:[#allocation2 + $0xc0] sm:$0xff]
    %v2315 = vld [vmem:[#allocation2 + $0xc8] sm:$0xff]
    %v2316 = vld [vmem:[#allocation2 + $0xd0] sm:$0xff]
    %v2317 = vld [vmem:[#allocation2 + $0xd8] sm:$0xff]
    %v2318 = vld [vmem:[#allocation2 + $0xe0] sm:$0xff]
    %v2319 = vld [vmem:[#allocation2 + $0xe8] sm:$0xff]
    %v2320 = vld [vmem:[#allocation2 + $0xf0] sm:$0xff]
    %v2321 = vld [vmem:[#allocation2 + $0xf8] sm:$0xff]
    %v2322 = vld [vmem:[#allocation2 + $0x100] sm:$0xff]
    %v2323 = vld [vmem:[#allocation2 + $0x108] sm:$0xff]
    %v2324 = vld [vmem:[#allocation2 + $0x110] sm:$0xff]
    %v2325 = vld [vmem:[#allocation2 + $0x118] sm:$0xff]
    %v2326 = vld [vmem:[#allocation2 + $0x120] sm:$0xff]
    %v2327 = vld [vmem:[#allocation2 + $0x128] sm:$0xff]
    %v2328 = vld [vmem:[#allocation2 + $0x130] sm:$0xff]
    %v2329 = vld [vmem:[#allocation2 + $0x138] sm:$0xff]
    %v2330 = vld [vmem:[#allocation2 + $0x140] sm:$0xff]
    %v2331 = vld [vmem:[#allocation2 + $0x148] sm:$0xff]
    %v2332 = vld [vmem:[#allocation2 + $0x150] sm:$0xff]
    %v2333 = vld [vmem:[#allocation2 + $0x158] sm:$0xff]
    %v2334 = vld [vmem:[#allocation2 + $0x160] sm:$0xff]
    %v2335 = vld [vmem:[#allocation2 + $0x168] sm:$0xff]
    %v2336 = vld [vmem:[#allocation2 + $0x170] sm:$0xff]
    %v2337 = vld [vmem:[#allocation2 + $0x178] sm:$0xff]
    %v2338 = vld [vmem:[#allocation2 + $0x180] sm:$0xff]
    %v2339 = vld [vmem:[#allocation2 + $0x188] sm:$0xff]
    %v2340 = vld [vmem:[#allocation2 + $0x190] sm:$0xff]
    %v2341 = vld [vmem:[#allocation2 + $0x198] sm:$0xff]
    %v2342 = vld [vmem:[#allocation2 + $0x1a0] sm:$0xff]
    %v2343 = vld [vmem:[#allocation2 + $0x1a8] sm:$0xff]
    %v2344 = vld [vmem:[#allocation2 + $0x1b0] sm:$0xff]
    %v2345 = vld [vmem:[#allocation2 + $0x1b8] sm:$0xff]
    %v2346 = vld [vmem:[#allocation2 + $0x1c0] sm:$0xff]
    %v2347 = vld [vmem:[#allocation2 + $0x1c8] sm:$0xff]
    %v2348 = vld [vmem:[#allocation2 + $0x1d0] sm:$0xff]
    %v2349 = vld [vmem:[#allocation2 + $0x1d8] sm:$0xff]
    %v2350 = vld [vmem:[#allocation2 + $0x1e0] sm:$0xff]
    %v2351 = vld [vmem:[#allocation2 + $0x1e8] sm:$0xff]
    %v2352 = vld [vmem:[#allocation2 + $0x1f0] sm:$0xff]
    %v2353 = vld [vmem:[#allocation2 + $0x1f8] sm:$0xff]
    %v2354 = vld [vmem:[#allocation2 + $0x200] sm:$0xff]
    %v2355 = vld [vmem:[#allocation2 + $0x208] sm:$0xff]
    %v2356 = vld [vmem:[#allocation2 + $0x210] sm:$0xff]
    %v2357 = vld [vmem:[#allocation2 + $0x218] sm:$0xff]
    %v2358 = vld [vmem:[#allocation2 + $0x220] sm:$0xff]
    %v2359 = vld [vmem:[#allocation2 + $0x228] sm:$0xff]
    %v2360 = vld [vmem:[#allocation2 + $0x230] sm:$0xff]
    %v2361 = vld [vmem:[#allocation2 + $0x238] sm:$0xff]
    %v2362 = vld [vmem:[#allocation2 + $0x240] sm:$0xff]
    %v2363 = vld [vmem:[#allocation2 + $0x248] sm:$0xff]
    %v2364 = vld [vmem:[#allocation2 + $0x250] sm:$0xff]
    %v2365 = vld [vmem:[#allocation2 + $0x258] sm:$0xff]
    %v2366 = vld [vmem:[#allocation2 + $0x260] sm:$0xff]
    %v2367 = vld [vmem:[#allocation2 + $0x268] sm:$0xff]
    %v2368 = vld [vmem:[#allocation2 + $0x270] sm:$0xff]
    %v2369 = vld [vmem:[#allocation2 + $0x278] sm:$0xff]
    %v2370 = vld [vmem:[#allocation2 + $0x280] sm:$0xff]
    %v2371 = vld [vmem:[#allocation2 + $0x288] sm:$0xff]
    %v2372 = vld [vmem:[#allocation2 + $0x290] sm:$0xff]
    %v2373 = vld [vmem:[#allocation2 + $0x298] sm:$0xff]
    %v2374 = vld [vmem:[#allocation2 + $0x2a0] sm:$0xff]
    %v2375 = vld [vmem:[#allocation2 + $0x2a8] sm:$0xff]
    %v2376 = vld [vmem:[#allocation2 + $0x2b0] sm:$0xff]
    %v2377 = vld [vmem:[#allocation2 + $0x2b8] sm:$0xff]
    %v2378 = vld [vmem:[#allocation2 + $0x2c0] sm:$0xff]
    %v2379 = vld [vmem:[#allocation2 + $0x2c8] sm:$0xff]
    %v2380 = vld [vmem:[#allocation2 + $0x2d0] sm:$0xff]
    %v2381 = vld [vmem:[#allocation2 + $0x2d8] sm:$0xff]
    %v2382 = vld [vmem:[#allocation2 + $0x2e0] sm:$0xff]
    %v2383 = vld [vmem:[#allocation2 + $0x2e8] sm:$0xff]
    %v2384 = vld [vmem:[#allocation2 + $0x2f0] sm:$0xff]
    %v2385 = vld [vmem:[#allocation2 + $0x2f8] sm:$0xff]
    %v2386 = vld [vmem:[#allocation2 + $0x300] sm:$0xff]
    %v2387 = vld [vmem:[#allocation2 + $0x308] sm:$0xff]
    %v2388 = vld [vmem:[#allocation2 + $0x310] sm:$0xff]
    %v2389 = vld [vmem:[#allocation2 + $0x318] sm:$0xff]
    %v2390 = vld [vmem:[#allocation2 + $0x320] sm:$0xff]
    %v2391 = vld [vmem:[#allocation2 + $0x328] sm:$0xff]
    %v2392 = vld [vmem:[#allocation2 + $0x330] sm:$0xff]
    %v2393 = vld [vmem:[#allocation2 + $0x338] sm:$0xff]
    %v2394 = vld [vmem:[#allocation2 + $0x340] sm:$0xff]
    %v2395 = vld [vmem:[#allocation2 + $0x348] sm:$0xff]
    %v2396 = vld [vmem:[#allocation2 + $0x350] sm:$0xff]
    %v2397 = vld [vmem:[#allocation2 + $0x358] sm:$0xff]
    %v2398 = vld [vmem:[#allocation2 + $0x360] sm:$0xff]
    %v2399 = vld [vmem:[#allocation2 + $0x368] sm:$0xff]
    %v2400 = vld [vmem:[#allocation2 + $0x370] sm:$0xff]
    %v2401 = vld [vmem:[#allocation2 + $0x378] sm:$0xff]
    %v2402 = vld [vmem:[#allocation2 + $0x380] sm:$0xff]
    %v2403 = vld [vmem:[#allocation2 + $0x388] sm:$0xff]
    %v2404 = vld [vmem:[#allocation2 + $0x390] sm:$0xff]
    %v2405 = vld [vmem:[#allocation2 + $0x398] sm:$0xff]
    %v2406 = vld [vmem:[#allocation2 + $0x3a0] sm:$0xff]
    %v2407 = vld [vmem:[#allocation2 + $0x3a8] sm:$0xff]
    %v2408 = vld [vmem:[#allocation2 + $0x3b0] sm:$0xff]
    %v2409 = vld [vmem:[#allocation2 + $0x3b8] sm:$0xff]
    %v2410 = vld [vmem:[#allocation2 + $0x3c0] sm:$0xff]
    %v2411 = vld [vmem:[#allocation2 + $0x3c8] sm:$0xff]
    %v2412 = vld [vmem:[#allocation2 + $0x3d0] sm:$0xff]
    %v2413 = vld [vmem:[#allocation2 + $0x3d8] sm:$0xff]
    %v2414 = vld [vmem:[#allocation2 + $0x3e0] sm:$0xff]
    %v2415 = vld [vmem:[#allocation2 + $0x3e8] sm:$0xff]
    %v2416 = vld [vmem:[#allocation2 + $0x3f0] sm:$0xff]
    %v2417 = vld [vmem:[#allocation2 + $0x3f8] sm:$0xff]
    %v2418 = vld [vmem:[#allocation2 + $0x400] sm:$0xff]
    %v2419 = vld [vmem:[#allocation2 + $0x408] sm:$0xff]
    %v2420 = vld [vmem:[#allocation2 + $0x410] sm:$0xff]
    %v2421 = vld [vmem:[#allocation2 + $0x418] sm:$0xff]
    %v2422 = vld [vmem:[#allocation2 + $0x420] sm:$0xff]
    %v2423 = vld [vmem:[#allocation2 + $0x428] sm:$0xff]
    %v2424 = vld [vmem:[#allocation2 + $0x430] sm:$0xff]
    %v2425 = vld [vmem:[#allocation2 + $0x438] sm:$0xff]
    %v2426 = vld [vmem:[#allocation2 + $0x440] sm:$0xff]
    %v2427 = vld [vmem:[#allocation2 + $0x448] sm:$0xff]
    %v2428 = vld [vmem:[#allocation2 + $0x450] sm:$0xff]
    %v2429 = vld [vmem:[#allocation2 + $0x458] sm:$0xff]
    %v2430 = vld [vmem:[%s7] sm:$0x3]
    %v2432 = vlaneseq
    %v2433 = vshrl.u32 %v2432, 7
    %v2434 = vsub.s32 0, %v2433
    %v2435 = vrot.slane %v2430, %v2434
    %v2436 = vlaneseq
    %v2437 = vshrl.u32 %v2436, 7
    %v2438 = vsub.s32 1, %v2437
    %v2439 = vrot.slane %v2430, %v2438
    %v2582 = vunpack.c.l.b16 %v2290
    %v2583 = vunpack.c.h.b16 %v2290
    %v2584 = vunpack.c.l.b16 %v2291
    %v2585 = vunpack.c.h.b16 %v2291
    %v2586 = vunpack.c.l.b16 %v2292
    %v2587 = vunpack.c.h.b16 %v2292
    %v2588 = vunpack.c.l.b16 %v2293
    %v2589 = vunpack.c.h.b16 %v2293
    %v2590 = vunpack.c.l.b16 %v2294
    %v2591 = vunpack.c.h.b16 %v2294
    %v2592 = vunpack.c.l.b16 %v2295
    %v2593 = vunpack.c.h.b16 %v2295
    %v2594 = vunpack.c.l.b16 %v2296
    %v2595 = vunpack.c.h.b16 %v2296
    %v2596 = vunpack.c.l.b16 %v2297
    %v2597 = vunpack.c.h.b16 %v2297
    %v2598 = vunpack.c.l.b16 %v2298
    %v2599 = vunpack.c.h.b16 %v2298
    %v2600 = vunpack.c.l.b16 %v2299
    %v2601 = vunpack.c.h.b16 %v2299
    %v2602 = vunpack.c.l.b16 %v2300
    %v2603 = vunpack.c.h.b16 %v2300
    %v2604 = vunpack.c.l.b16 %v2301
    %v2605 = vunpack.c.h.b16 %v2301
    %v2606 = vunpack.c.l.b16 %v2302
    %v2607 = vunpack.c.h.b16 %v2302
    %v2608 = vunpack.c.l.b16 %v2303
    %v2609 = vunpack.c.h.b16 %v2303
    %v2610 = vunpack.c.l.b16 %v2304
    %v2611 = vunpack.c.h.b16 %v2304
    %v2612 = vunpack.c.l.b16 %v2305
    %v2613 = vunpack.c.h.b16 %v2305
    %v2614 = vunpack.c.l.b16 %v2306
    %v2615 = vunpack.c.h.b16 %v2306
    %v2616 = vunpack.c.l.b16 %v2307
    %v2617 = vunpack.c.h.b16 %v2307
    %v2618 = vunpack.c.l.b16 %v2308
    %v2619 = vunpack.c.h.b16 %v2308
    %v2620 = vunpack.c.l.b16 %v2309
    %v2621 = vunpack.c.h.b16 %v2309
    %v2622 = vunpack.c.l.b16 %v2310
    %v2623 = vunpack.c.h.b16 %v2310
    %v2624 = vunpack.c.l.b16 %v2311
    %v2625 = vunpack.c.h.b16 %v2311
    %v2626 = vunpack.c.l.b16 %v2312
    %v2627 = vunpack.c.h.b16 %v2312
    %v2628 = vunpack.c.l.b16 %v2313
    %v2629 = vunpack.c.h.b16 %v2313
    %v2630 = vunpack.c.l.b16 %v2314
    %v2631 = vunpack.c.h.b16 %v2314
    %v2632 = vunpack.c.l.b16 %v2315
    %v2633 = vunpack.c.h.b16 %v2315
    %v2634 = vunpack.c.l.b16 %v2316
    %v2635 = vunpack.c.h.b16 %v2316
    %v2636 = vunpack.c.l.b16 %v2317
    %v2637 = vunpack.c.h.b16 %v2317
    %v2638 = vunpack.c.l.b16 %v2318
    %v2639 = vunpack.c.h.b16 %v2318
    %v2640 = vunpack.c.l.b16 %v2319
    %v2641 = vunpack.c.h.b16 %v2319
    %v2642 = vunpack.c.l.b16 %v2320
    %v2643 = vunpack.c.h.b16 %v2320
    %v2644 = vunpack.c.l.b16 %v2321
    %v2645 = vunpack.c.h.b16 %v2321
    %v2646 = vunpack.c.l.b16 %v2322
    %v2647 = vunpack.c.h.b16 %v2322
    %v2648 = vunpack.c.l.b16 %v2323
    %v2649 = vunpack.c.h.b16 %v2323
    %v2650 = vunpack.c.l.b16 %v2324
    %v2651 = vunpack.c.h.b16 %v2324
    %v2652 = vunpack.c.l.b16 %v2325
    %v2653 = vunpack.c.h.b16 %v2325
    %v2654 = vunpack.c.l.b16 %v2326
    %v2655 = vunpack.c.h.b16 %v2326
    %v2656 = vunpack.c.l.b16 %v2327
    %v2657 = vunpack.c.h.b16 %v2327
    %v2658 = vunpack.c.l.b16 %v2328
    %v2659 = vunpack.c.h.b16 %v2328
    %v2660 = vunpack.c.l.b16 %v2329
    %v2661 = vunpack.c.h.b16 %v2329
    %v2662 = vunpack.c.l.b16 %v2330
    %v2663 = vunpack.c.h.b16 %v2330
    %v2664 = vunpack.c.l.b16 %v2331
    %v2665 = vunpack.c.h.b16 %v2331
    %v2666 = vunpack.c.l.b16 %v2332
    %v2667 = vunpack.c.h.b16 %v2332
    %v2668 = vunpack.c.l.b16 %v2333
    %v2669 = vunpack.c.h.b16 %v2333
    %v2670 = vunpack.c.l.b16 %v2334
    %v2671 = vunpack.c.h.b16 %v2334
    %v2672 = vunpack.c.l.b16 %v2335
    %v2673 = vunpack.c.h.b16 %v2335
    %v2674 = vunpack.c.l.b16 %v2336
    %v2675 = vunpack.c.h.b16 %v2336
    %v2676 = vunpack.c.l.b16 %v2337
    %v2677 = vunpack.c.h.b16 %v2337
    %v2678 = vunpack.c.l.b16 %v2338
    %v2679 = vunpack.c.h.b16 %v2338
    %v2680 = vunpack.c.l.b16 %v2339
    %v2681 = vunpack.c.h.b16 %v2339
    %v2682 = vunpack.c.l.b16 %v2340
    %v2683 = vunpack.c.h.b16 %v2340
    %v2684 = vunpack.c.l.b16 %v2341
    %v2685 = vunpack.c.h.b16 %v2341
    %v2686 = vunpack.c.l.b16 %v2342
    %v2687 = vunpack.c.h.b16 %v2342
    %v2688 = vunpack.c.l.b16 %v2343
    %v2689 = vunpack.c.h.b16 %v2343
    %v2690 = vunpack.c.l.b16 %v2344
    %v2691 = vunpack.c.h.b16 %v2344
    %v2692 = vunpack.c.l.b16 %v2345
    %v2693 = vunpack.c.h.b16 %v2345
    %v2694 = vunpack.c.l.b16 %v2346
    %v2695 = vunpack.c.h.b16 %v2346
    %v2696 = vunpack.c.l.b16 %v2347
    %v2697 = vunpack.c.h.b16 %v2347
    %v2698 = vunpack.c.l.b16 %v2348
    %v2699 = vunpack.c.h.b16 %v2348
    %v2700 = vunpack.c.l.b16 %v2349
    %v2701 = vunpack.c.h.b16 %v2349
    %v2702 = vunpack.c.l.b16 %v2350
    %v2703 = vunpack.c.h.b16 %v2350
    %v2704 = vunpack.c.l.b16 %v2351
    %v2705 = vunpack.c.h.b16 %v2351
    %v2706 = vunpack.c.l.b16 %v2352
    %v2707 = vunpack.c.h.b16 %v2352
    %v2708 = vunpack.c.l.b16 %v2353
    %v2709 = vunpack.c.h.b16 %v2353
    %v2710 = vunpack.c.l.b16 %v2354
    %v2711 = vunpack.c.h.b16 %v2354
    %v2712 = vunpack.c.l.b16 %v2355
    %v2713 = vunpack.c.h.b16 %v2355
    %v2714 = vunpack.c.l.b16 %v2356
    %v2715 = vunpack.c.h.b16 %v2356
    %v2716 = vunpack.c.l.b16 %v2357
    %v2717 = vunpack.c.h.b16 %v2357
    %v2718 = vunpack.c.l.b16 %v2358
    %v2719 = vunpack.c.h.b16 %v2358
    %v2720 = vunpack.c.l.b16 %v2359
    %v2721 = vunpack.c.h.b16 %v2359
    %v2722 = vunpack.c.l.b16 %v2360
    %v2723 = vunpack.c.h.b16 %v2360
    %v2724 = vunpack.c.l.b16 %v2361
    %v2725 = vunpack.c.h.b16 %v2361
    %v2726 = vunpack.c.l.b16 %v2362
    %v2727 = vunpack.c.h.b16 %v2362
    %v2728 = vunpack.c.l.b16 %v2363
    %v2729 = vunpack.c.h.b16 %v2363
    %v2730 = vunpack.c.l.b16 %v2364
    %v2731 = vunpack.c.h.b16 %v2364
    %v2732 = vunpack.c.l.b16 %v2365
    %v2733 = vunpack.c.h.b16 %v2365
    %v2734 = vunpack.c.l.b16 %v2366
    %v2735 = vunpack.c.h.b16 %v2366
    %v2736 = vunpack.c.l.b16 %v2367
    %v2737 = vunpack.c.h.b16 %v2367
    %v2738 = vunpack.c.l.b16 %v2368
    %v2739 = vunpack.c.h.b16 %v2368
    %v2740 = vunpack.c.l.b16 %v2369
    %v2741 = vunpack.c.h.b16 %v2369
    %v2742 = vunpack.c.l.b16 %v2370
    %v2743 = vunpack.c.h.b16 %v2370
    %v2744 = vunpack.c.l.b16 %v2371
    %v2745 = vunpack.c.h.b16 %v2371
    %v2746 = vunpack.c.l.b16 %v2372
    %v2747 = vunpack.c.h.b16 %v2372
    %v2748 = vunpack.c.l.b16 %v2373
    %v2749 = vunpack.c.h.b16 %v2373
    %v2750 = vunpack.c.l.b16 %v2374
    %v2751 = vunpack.c.h.b16 %v2374
    %v2752 = vunpack.c.l.b16 %v2375
    %v2753 = vunpack.c.h.b16 %v2375
    %v2754 = vunpack.c.l.b16 %v2376
    %v2755 = vunpack.c.h.b16 %v2376
    %v2756 = vunpack.c.l.b16 %v2377
    %v2757 = vunpack.c.h.b16 %v2377
    %v2758 = vunpack.c.l.b16 %v2378
    %v2759 = vunpack.c.h.b16 %v2378
    %v2760 = vunpack.c.l.b16 %v2379
    %v2761 = vunpack.c.h.b16 %v2379
    %v2762 = vunpack.c.l.b16 %v2380
    %v2763 = vunpack.c.h.b16 %v2380
    %v2764 = vunpack.c.l.b16 %v2381
    %v2765 = vunpack.c.h.b16 %v2381
    %v2766 = vunpack.c.l.b16 %v2382
    %v2767 = vunpack.c.h.b16 %v2382
    %v2768 = vunpack.c.l.b16 %v2383
    %v2769 = vunpack.c.h.b16 %v2383
    %v2770 = vunpack.c.l.b16 %v2384
    %v2771 = vunpack.c.h.b16 %v2384
    %v2772 = vunpack.c.l.b16 %v2385
    %v2773 = vunpack.c.h.b16 %v2385
    %v2774 = vunpack.c.l.b16 %v2386
    %v2775 = vunpack.c.h.b16 %v2386
    %v2776 = vunpack.c.l.b16 %v2387
    %v2777 = vunpack.c.h.b16 %v2387
    %v2778 = vunpack.c.l.b16 %v2388
    %v2779 = vunpack.c.h.b16 %v2388
    %v2780 = vunpack.c.l.b16 %v2389
    %v2781 = vunpack.c.h.b16 %v2389
    %v2782 = vunpack.c.l.b16 %v2390
    %v2783 = vunpack.c.h.b16 %v2390
    %v2784 = vunpack.c.l.b16 %v2391
    %v2785 = vunpack.c.h.b16 %v2391
    %v2786 = vunpack.c.l.b16 %v2392
    %v2787 = vunpack.c.h.b16 %v2392
    %v2788 = vunpack.c.l.b16 %v2393
    %v2789 = vunpack.c.h.b16 %v2393
    %v2790 = vunpack.c.l.b16 %v2394
    %v2791 = vunpack.c.h.b16 %v2394
    %v2792 = vunpack.c.l.b16 %v2395
    %v2793 = vunpack.c.h.b16 %v2395
    %v2794 = vunpack.c.l.b16 %v2396
    %v2795 = vunpack.c.h.b16 %v2396
    %v2796 = vunpack.c.l.b16 %v2397
    %v2797 = vunpack.c.h.b16 %v2397
    %v2798 = vunpack.c.l.b16 %v2398
    %v2799 = vunpack.c.h.b16 %v2398
    %v2800 = vunpack.c.l.b16 %v2399
    %v2801 = vunpack.c.h.b16 %v2399
    %v2802 = vunpack.c.l.b16 %v2400
    %v2803 = vunpack.c.h.b16 %v2400
    %v2804 = vunpack.c.l.b16 %v2401
    %v2805 = vunpack.c.h.b16 %v2401
    %v2806 = vunpack.c.l.b16 %v2402
    %v2807 = vunpack.c.h.b16 %v2402
    %v2808 = vunpack.c.l.b16 %v2403
    %v2809 = vunpack.c.h.b16 %v2403
    %v2810 = vunpack.c.l.b16 %v2404
    %v2811 = vunpack.c.h.b16 %v2404
    %v2812 = vunpack.c.l.b16 %v2405
    %v2813 = vunpack.c.h.b16 %v2405
    %v2814 = vunpack.c.l.b16 %v2406
    %v2815 = vunpack.c.h.b16 %v2406
    %v2816 = vunpack.c.l.b16 %v2407
    %v2817 = vunpack.c.h.b16 %v2407
    %v2818 = vunpack.c.l.b16 %v2408
    %v2819 = vunpack.c.h.b16 %v2408
    %v2820 = vunpack.c.l.b16 %v2409
    %v2821 = vunpack.c.h.b16 %v2409
    %v2822 = vunpack.c.l.b16 %v2410
    %v2823 = vunpack.c.h.b16 %v2410
    %v2824 = vunpack.c.l.b16 %v2411
    %v2825 = vunpack.c.h.b16 %v2411
    %v2826 = vunpack.c.l.b16 %v2412
    %v2827 = vunpack.c.h.b16 %v2412
    %v2828 = vunpack.c.l.b16 %v2413
    %v2829 = vunpack.c.h.b16 %v2413
    %v2830 = vunpack.c.l.b16 %v2414
    %v2831 = vunpack.c.h.b16 %v2414
    %v2832 = vunpack.c.l.b16 %v2415
    %v2833 = vunpack.c.h.b16 %v2415
    %v2834 = vunpack.c.l.b16 %v2416
    %v2835 = vunpack.c.h.b16 %v2416
    %v2836 = vunpack.c.l.b16 %v2417
    %v2837 = vunpack.c.h.b16 %v2417
    %v2838 = vunpack.c.l.b16 %v2418
    %v2839 = vunpack.c.h.b16 %v2418
    %v2840 = vunpack.c.l.b16 %v2419
    %v2841 = vunpack.c.h.b16 %v2419
    %v2842 = vunpack.c.l.b16 %v2420
    %v2843 = vunpack.c.h.b16 %v2420
    %v2844 = vunpack.c.l.b16 %v2421
    %v2845 = vunpack.c.h.b16 %v2421
    %v2846 = vunpack.c.l.b16 %v2422
    %v2847 = vunpack.c.h.b16 %v2422
    %v2848 = vunpack.c.l.b16 %v2423
    %v2849 = vunpack.c.h.b16 %v2423
    %v2850 = vunpack.c.l.b16 %v2424
    %v2851 = vunpack.c.h.b16 %v2424
    %v2852 = vunpack.c.l.b16 %v2425
    %v2853 = vunpack.c.h.b16 %v2425
    %v2854 = vunpack.c.l.b16 %v2426
    %v2855 = vunpack.c.h.b16 %v2426
    %v2856 = vunpack.c.l.b16 %v2427
    %v2857 = vunpack.c.h.b16 %v2427
    %v2858 = vunpack.c.l.b16 %v2428
    %v2859 = vunpack.c.h.b16 %v2428
    %v2860 = vunpack.c.l.b16 %v2429
    %v2861 = vunpack.c.h.b16 %v2429
    %v2862 = vpack.c.b16 %v2584, %v2582
    %v2863 = vpack.c.b16 %v2585, %v2583
    %v2864 = vpack.c.b16 %v2588, %v2586
    %v2865 = vpack.c.b16 %v2589, %v2587
    %v2866 = vpack.c.b16 %v2592, %v2590
    %v2867 = vpack.c.b16 %v2593, %v2591
    %v2868 = vpack.c.b16 %v2596, %v2594
    %v2869 = vpack.c.b16 %v2597, %v2595
    %v2870 = vpack.c.b16 %v2600, %v2598
    %v2871 = vpack.c.b16 %v2601, %v2599
    %v2872 = vpack.c.b16 %v2604, %v2602
    %v2873 = vpack.c.b16 %v2605, %v2603
    %v2874 = vpack.c.b16 %v2608, %v2606
    %v2875 = vpack.c.b16 %v2609, %v2607
    %v2876 = vpack.c.b16 %v2612, %v2610
    %v2877 = vpack.c.b16 %v2613, %v2611
    %v2878 = vpack.c.b16 %v2616, %v2614
    %v2879 = vpack.c.b16 %v2617, %v2615
    %v2880 = vpack.c.b16 %v2620, %v2618
    %v2881 = vpack.c.b16 %v2621, %v2619
    %v2882 = vpack.c.b16 %v2624, %v2622
    %v2883 = vpack.c.b16 %v2625, %v2623
    %v2884 = vpack.c.b16 %v2628, %v2626
    %v2885 = vpack.c.b16 %v2629, %v2627
    %v2886 = vpack.c.b16 %v2632, %v2630
    %v2887 = vpack.c.b16 %v2633, %v2631
    %v2888 = vpack.c.b16 %v2636, %v2634
    %v2889 = vpack.c.b16 %v2637, %v2635
    %v2890 = vpack.c.b16 %v2640, %v2638
    %v2891 = vpack.c.b16 %v2641, %v2639
    %v2892 = vpack.c.b16 %v2644, %v2642
    %v2893 = vpack.c.b16 %v2645, %v2643
    %v2894 = vpack.c.b16 %v2648, %v2646
    %v2895 = vpack.c.b16 %v2649, %v2647
    %v2896 = vpack.c.b16 %v2652, %v2650
    %v2897 = vpack.c.b16 %v2653, %v2651
    %v2898 = vpack.c.b16 %v2656, %v2654
    %v2899 = vpack.c.b16 %v2657, %v2655
    %v2900 = vpack.c.b16 %v2660, %v2658
    %v2901 = vpack.c.b16 %v2661, %v2659
    %v2902 = vpack.c.b16 %v2664, %v2662
    %v2903 = vpack.c.b16 %v2665, %v2663
    %v2904 = vpack.c.b16 %v2668, %v2666
    %v2905 = vpack.c.b16 %v2669, %v2667
    %v2906 = vpack.c.b16 %v2672, %v2670
    %v2907 = vpack.c.b16 %v2673, %v2671
    %v2908 = vpack.c.b16 %v2676, %v2674
    %v2909 = vpack.c.b16 %v2677, %v2675
    %v2910 = vpack.c.b16 %v2680, %v2678
    %v2911 = vpack.c.b16 %v2681, %v2679
    %v2912 = vpack.c.b16 %v2684, %v2682
    %v2913 = vpack.c.b16 %v2685, %v2683
    %v2914 = vpack.c.b16 %v2688, %v2686
    %v2915 = vpack.c.b16 %v2689, %v2687
    %v2916 = vpack.c.b16 %v2692, %v2690
    %v2917 = vpack.c.b16 %v2693, %v2691
    %v2918 = vpack.c.b16 %v2696, %v2694
    %v2919 = vpack.c.b16 %v2697, %v2695
    %v2920 = vpack.c.b16 %v2700, %v2698
    %v2921 = vpack.c.b16 %v2701, %v2699
    %v2922 = vpack.c.b16 %v2704, %v2702
    %v2923 = vpack.c.b16 %v2705, %v2703
    %v2924 = vpack.c.b16 %v2708, %v2706
    %v2925 = vpack.c.b16 %v2709, %v2707
    %v2926 = vpack.c.b16 %v2712, %v2710
    %v2927 = vpack.c.b16 %v2713, %v2711
    %v2928 = vpack.c.b16 %v2716, %v2714
    %v2929 = vpack.c.b16 %v2717, %v2715
    %v2930 = vpack.c.b16 %v2720, %v2718
    %v2931 = vpack.c.b16 %v2721, %v2719
    %v2932 = vpack.c.b16 %v2724, %v2722
    %v2933 = vpack.c.b16 %v2725, %v2723
    %v2934 = vpack.c.b16 %v2728, %v2726
    %v2935 = vpack.c.b16 %v2729, %v2727
    %v2936 = vpack.c.b16 %v2732, %v2730
    %v2937 = vpack.c.b16 %v2733, %v2731
    %v2938 = vpack.c.b16 %v2736, %v2734
    %v2939 = vpack.c.b16 %v2737, %v2735
    %v2940 = vpack.c.b16 %v2740, %v2738
    %v2941 = vpack.c.b16 %v2741, %v2739
    %v2942 = vpack.c.b16 %v2744, %v2742
    %v2943 = vpack.c.b16 %v2745, %v2743
    %v2944 = vpack.c.b16 %v2748, %v2746
    %v2945 = vpack.c.b16 %v2749, %v2747
    %v2946 = vpack.c.b16 %v2752, %v2750
    %v2947 = vpack.c.b16 %v2753, %v2751
    %v2948 = vpack.c.b16 %v2756, %v2754
    %v2949 = vpack.c.b16 %v2757, %v2755
    %v2950 = vpack.c.b16 %v2760, %v2758
    %v2951 = vpack.c.b16 %v2761, %v2759
    %v2952 = vpack.c.b16 %v2764, %v2762
    %v2953 = vpack.c.b16 %v2765, %v2763
    %v2954 = vpack.c.b16 %v2768, %v2766
    %v2955 = vpack.c.b16 %v2769, %v2767
    %v2956 = vpack.c.b16 %v2772, %v2770
    %v2957 = vpack.c.b16 %v2773, %v2771
    %v2958 = vpack.c.b16 %v2776, %v2774
    %v2959 = vpack.c.b16 %v2777, %v2775
    %v2960 = vpack.c.b16 %v2780, %v2778
    %v2961 = vpack.c.b16 %v2781, %v2779
    %v2962 = vpack.c.b16 %v2784, %v2782
    %v2963 = vpack.c.b16 %v2785, %v2783
    %v2964 = vpack.c.b16 %v2788, %v2786
    %v2965 = vpack.c.b16 %v2789, %v2787
    %v2966 = vpack.c.b16 %v2792, %v2790
    %v2967 = vpack.c.b16 %v2793, %v2791
    %v2968 = vpack.c.b16 %v2796, %v2794
    %v2969 = vpack.c.b16 %v2797, %v2795
    %v2970 = vpack.c.b16 %v2800, %v2798
    %v2971 = vpack.c.b16 %v2801, %v2799
    %v2972 = vpack.c.b16 %v2804, %v2802
    %v2973 = vpack.c.b16 %v2805, %v2803
    %v2974 = vpack.c.b16 %v2808, %v2806
    %v2975 = vpack.c.b16 %v2809, %v2807
    %v2976 = vpack.c.b16 %v2812, %v2810
    %v2977 = vpack.c.b16 %v2813, %v2811
    %v2978 = vpack.c.b16 %v2816, %v2814
    %v2979 = vpack.c.b16 %v2817, %v2815
    %v2980 = vpack.c.b16 %v2820, %v2818
    %v2981 = vpack.c.b16 %v2821, %v2819
    %v2982 = vpack.c.b16 %v2824, %v2822
    %v2983 = vpack.c.b16 %v2825, %v2823
    %v2984 = vpack.c.b16 %v2828, %v2826
    %v2985 = vpack.c.b16 %v2829, %v2827
    %v2986 = vpack.c.b16 %v2832, %v2830
    %v2987 = vpack.c.b16 %v2833, %v2831
    %v2988 = vpack.c.b16 %v2836, %v2834
    %v2989 = vpack.c.b16 %v2837, %v2835
    %v2990 = vpack.c.b16 %v2840, %v2838
    %v2991 = vpack.c.b16 %v2841, %v2839
    %v2992 = vpack.c.b16 %v2844, %v2842
    %v2993 = vpack.c.b16 %v2845, %v2843
    %v2994 = vpack.c.b16 %v2848, %v2846
    %v2995 = vpack.c.b16 %v2849, %v2847
    %v2996 = vpack.c.b16 %v2852, %v2850
    %v2997 = vpack.c.b16 %v2853, %v2851
    %v2998 = vpack.c.b16 %v2856, %v2854
    %v2999 = vpack.c.b16 %v2857, %v2855
    %v3000 = vpack.c.b16 %v2860, %v2858
    %v3001 = vpack.c.b16 %v2861, %v2859
    %v3143 = vsel %vm2271, %v2243, 0
    %3145 = vmatprep.subr.bf16.mxu0 %v2877
    %3146 = vmatpush1.bf16.msra.mxu0 %v2876
    %3147 = vmatprep.subr.bf16.mxu0 %v2875
    %3148 = vmatpush1.bf16.msra.mxu0 %v2874
    %3149 = vmatprep.subr.bf16.mxu0 %v2873
    %3150 = vmatpush1.bf16.msra.mxu0 %v2872
    %3151 = vmatprep.subr.bf16.mxu0 %v2871
    %3152 = vmatpush1.bf16.msra.mxu0 %v2870
    %3153 = vmatprep.subr.bf16.mxu0 %v2869
    %3154 = vmatpush1.bf16.msra.mxu0 %v2868
    %3155 = vmatprep.subr.bf16.mxu0 %v2867
    %3156 = vmatpush1.bf16.msra.mxu0 %v2866
    %3157 = vmatprep.subr.bf16.mxu0 %v2865
    %3158 = vmatpush1.bf16.msra.mxu0 %v2864
    %3159 = vmatprep.subr.bf16.mxu0 %v2863
    %3160 = vmatpush1.bf16.msra.mxu0 %v2862
    %3161 = vmatprep.subr.bf16.mxu0 %v2893
    %3162 = vmatpush2.bf16.msra.mxu0 %v2892
    %3163 = vmatprep.subr.bf16.mxu0 %v2891
    %3164 = vmatpush2.bf16.msra.mxu0 %v2890
    %3165 = vmatprep.subr.bf16.mxu0 %v2889
    %3166 = vmatpush2.bf16.msra.mxu0 %v2888
    %3167 = vmatprep.subr.bf16.mxu0 %v2887
    %3168 = vmatpush2.bf16.msra.mxu0 %v2886
    %3169 = vmatprep.subr.bf16.mxu0 %v2885
    %3170 = vmatpush2.bf16.msra.mxu0 %v2884
    %3171 = vmatprep.subr.bf16.mxu0 %v2883
    %3172 = vmatpush2.bf16.msra.mxu0 %v2882
    %3173 = vmatprep.subr.bf16.mxu0 %v2881
    %3174 = vmatpush2.bf16.msra.mxu0 %v2880
    %3175 = vmatprep.subr.bf16.mxu0 %v2879
    %3176 = vmatpush2.bf16.msra.mxu0 %v2878
    %3177 = vmatprep.mubr.bf16.mxu0 %v2274
    %3178 = vmatmul.mubr.bf16.gmra.mxu0 %v2234
    %v3179 = vpop.f32.mrf.mxu0
    %v3180 = vadd.f32 %v2435, %v3179
    %v3181 = vpop.f32.mrf.mxu0
    %v3182 = vadd.f32 %v2439, %v3181
    %v3183 = vpop.f32.mrf.mxu0
    %v3184 = vadd.f32 %v2435, %v3183
    %v3185 = vpop.f32.mrf.mxu0
    %v3186 = vadd.f32 %v2439, %v3185
    %3187 = vdwg.mxu0
    %3188 = vmatprep.subr.bf16.mxu0 %v2909
    %3189 = vmatpush1.bf16.msra.mxu0 %v2908
    %3190 = vmatprep.subr.bf16.mxu0 %v2907
    %3191 = vmatpush1.bf16.msra.mxu0 %v2906
    %3192 = vmatprep.subr.bf16.mxu0 %v2905
    %3193 = vmatpush1.bf16.msra.mxu0 %v2904
    %3194 = vmatprep.subr.bf16.mxu0 %v2903
    %3195 = vmatpush1.bf16.msra.mxu0 %v2902
    %3196 = vmatprep.subr.bf16.mxu0 %v2901
    %3197 = vmatpush1.bf16.msra.mxu0 %v2900
    %3198 = vmatprep.subr.bf16.mxu0 %v2899
    %3199 = vmatpush1.bf16.msra.mxu0 %v2898
    %3200 = vmatprep.subr.bf16.mxu0 %v2897
    %3201 = vmatpush1.bf16.msra.mxu0 %v2896
    %3202 = vmatprep.subr.bf16.mxu0 %v2895
    %3203 = vmatpush1.bf16.msra.mxu0 %v2894
    %3204 = vmatprep.subr.bf16.mxu0 %v2925
    %3205 = vmatpush2.bf16.msra.mxu0 %v2924
    %3206 = vmatprep.subr.bf16.mxu0 %v2923
    %3207 = vmatpush2.bf16.msra.mxu0 %v2922
    %3208 = vmatprep.subr.bf16.mxu0 %v2921
    %3209 = vmatpush2.bf16.msra.mxu0 %v2920
    %3210 = vmatprep.subr.bf16.mxu0 %v2919
    %3211 = vmatpush2.bf16.msra.mxu0 %v2918
    %3212 = vmatprep.subr.bf16.mxu0 %v2917
    %3213 = vmatpush2.bf16.msra.mxu0 %v2916
    %3214 = vmatprep.subr.bf16.mxu0 %v2915
    %3215 = vmatpush2.bf16.msra.mxu0 %v2914
    %3216 = vmatprep.subr.bf16.mxu0 %v2913
    %3217 = vmatpush2.bf16.msra.mxu0 %v2912
    %3218 = vmatprep.subr.bf16.mxu0 %v2911
    %3219 = vmatpush2.bf16.msra.mxu0 %v2910
    %3220 = vmatprep.mubr.bf16.mxu0 %v2279
    %3221 = vmatmul.mubr.bf16.gmra.mxu0 %v2251
    %v3222 = vpop.f32.mrf.mxu0
    %v3223 = vadd.f32 %v3180, %v3222
    %v3224 = vpop.f32.mrf.mxu0
    %v3225 = vadd.f32 %v3182, %v3224
    %v3226 = vpop.f32.mrf.mxu0
    %v3227 = vadd.f32 %v3184, %v3226
    %v3228 = vpop.f32.mrf.mxu0
    %v3229 = vadd.f32 %v3186, %v3228
    %3230 = vdwg.mxu0
    %3231 = vmatprep.subr.bf16.mxu0 %v2941
    %3232 = vmatpush1.bf16.msra.mxu0 %v2940
    %3233 = vmatprep.subr.bf16.mxu0 %v2939
    %3234 = vmatpush1.bf16.msra.mxu0 %v2938
    %3235 = vmatprep.subr.bf16.mxu0 %v2937
    %3236 = vmatpush1.bf16.msra.mxu0 %v2936
    %3237 = vmatprep.subr.bf16.mxu0 %v2935
    %3238 = vmatpush1.bf16.msra.mxu0 %v2934
    %3239 = vmatprep.subr.bf16.mxu0 %v2933
    %3240 = vmatpush1.bf16.msra.mxu0 %v2932
    %3241 = vmatprep.subr.bf16.mxu0 %v2931
    %3242 = vmatpush1.bf16.msra.mxu0 %v2930
    %3243 = vmatprep.subr.bf16.mxu0 %v2929
    %3244 = vmatpush1.bf16.msra.mxu0 %v2928
    %3245 = vmatprep.subr.bf16.mxu0 %v2927
    %3246 = vmatpush1.bf16.msra.mxu0 %v2926
    %3247 = vmatprep.subr.bf16.mxu0 %v2957
    %3248 = vmatpush2.bf16.msra.mxu0 %v2956
    %3249 = vmatprep.subr.bf16.mxu0 %v2955
    %3250 = vmatpush2.bf16.msra.mxu0 %v2954
    %3251 = vmatprep.subr.bf16.mxu0 %v2953
    %3252 = vmatpush2.bf16.msra.mxu0 %v2952
    %3253 = vmatprep.subr.bf16.mxu0 %v2951
    %3254 = vmatpush2.bf16.msra.mxu0 %v2950
    %3255 = vmatprep.subr.bf16.mxu0 %v2949
    %3256 = vmatpush2.bf16.msra.mxu0 %v2948
    %3257 = vmatprep.subr.bf16.mxu0 %v2947
    %3258 = vmatpush2.bf16.msra.mxu0 %v2946
    %3259 = vmatprep.subr.bf16.mxu0 %v2945
    %3260 = vmatpush2.bf16.msra.mxu0 %v2944
    %3261 = vmatprep.subr.bf16.mxu0 %v2943
    %3262 = vmatpush2.bf16.msra.mxu0 %v2942
    %3263 = vmatprep.mubr.bf16.mxu0 %v2284
    %3264 = vmatmul.mubr.bf16.gmra.mxu0 %v2260
    %v3265 = vpop.f32.mrf.mxu0
    %v3266 = vadd.f32 %v3223, %v3265
    %v3267 = vpop.f32.mrf.mxu0
    %v3268 = vadd.f32 %v3225, %v3267
    %v3269 = vpop.f32.mrf.mxu0
    %v3270 = vadd.f32 %v3227, %v3269
    %v3271 = vpop.f32.mrf.mxu0
    %v3272 = vadd.f32 %v3229, %v3271
    %3273 = vdwg.mxu0
    %3274 = vmatprep.subr.bf16.mxu0 %v2973
    %3275 = vmatpush1.bf16.msra.mxu0 %v2972
    %3276 = vmatprep.subr.bf16.mxu0 %v2971
    %3277 = vmatpush1.bf16.msra.mxu0 %v2970
    %3278 = vmatprep.subr.bf16.mxu0 %v2969
    %3279 = vmatpush1.bf16.msra.mxu0 %v2968
    %3280 = vmatprep.subr.bf16.mxu0 %v2967
    %3281 = vmatpush1.bf16.msra.mxu0 %v2966
    %3282 = vmatprep.subr.bf16.mxu0 %v2965
    %3283 = vmatpush1.bf16.msra.mxu0 %v2964
    %3284 = vmatprep.subr.bf16.mxu0 %v2963
    %3285 = vmatpush1.bf16.msra.mxu0 %v2962
    %3286 = vmatprep.subr.bf16.mxu0 %v2961
    %3287 = vmatpush1.bf16.msra.mxu0 %v2960
    %3288 = vmatprep.subr.bf16.mxu0 %v2959
    %3289 = vmatpush1.bf16.msra.mxu0 %v2958
    %3290 = vmatprep.subr.bf16.mxu0 %v2989
    %3291 = vmatpush2.bf16.msra.mxu0 %v2988
    %3292 = vmatprep.subr.bf16.mxu0 %v2987
    %3293 = vmatpush2.bf16.msra.mxu0 %v2986
    %3294 = vmatprep.subr.bf16.mxu0 %v2985
    %3295 = vmatpush2.bf16.msra.mxu0 %v2984
    %3296 = vmatprep.subr.bf16.mxu0 %v2983
    %3297 = vmatpush2.bf16.msra.mxu0 %v2982
    %3298 = vmatprep.subr.bf16.mxu0 %v2981
    %3299 = vmatpush2.bf16.msra.mxu0 %v2980
    %3300 = vmatprep.subr.bf16.mxu0 %v2979
    %3301 = vmatpush2.bf16.msra.mxu0 %v2978
    %3302 = vmatprep.subr.bf16.mxu0 %v2977
    %3303 = vmatpush2.bf16.msra.mxu0 %v2976
    %3304 = vmatprep.subr.bf16.mxu0 %v2975
    %3305 = vmatpush2.bf16.msra.mxu0 %v2974
    %3306 = vmatprep.mubr.bf16.mxu0 %v2242
    %3307 = vmatmul.mubr.bf16.gmra.mxu0 %v2269
    %v3308 = vpop.f32.mrf.mxu0
    %v3309 = vadd.f32 %v3266, %v3308
    %v3310 = vpop.f32.mrf.mxu0
    %v3311 = vadd.f32 %v3268, %v3310
    %v3312 = vpop.f32.mrf.mxu0
    %v3313 = vadd.f32 %v3270, %v3312
    %v3314 = vpop.f32.mrf.mxu0
    %v3315 = vadd.f32 %v3272, %v3314
    %3316 = vdwg.mxu0
    %3317 = vmatprep.subr.bf16.mxu0 0
    %3318 = vmatpush1.bf16.msra.mxu0 0
    %3319 = vmatprep.subr.bf16.mxu0 0
    %3320 = vmatpush1.bf16.msra.mxu0 0
    %3321 = vmatprep.subr.bf16.mxu0 %v3001
    %3322 = vmatpush1.bf16.msra.mxu0 %v3000
    %3323 = vmatprep.subr.bf16.mxu0 %v2999
    %3324 = vmatpush1.bf16.msra.mxu0 %v2998
    %3325 = vmatprep.subr.bf16.mxu0 %v2997
    %3326 = vmatpush1.bf16.msra.mxu0 %v2996
    %3327 = vmatprep.subr.bf16.mxu0 %v2995
    %3328 = vmatpush1.bf16.msra.mxu0 %v2994
    %3329 = vmatprep.subr.bf16.mxu0 %v2993
    %3330 = vmatpush1.bf16.msra.mxu0 %v2992
    %3331 = vmatprep.subr.bf16.mxu0 %v2991
    %3332 = vmatpush1.bf16.msra.mxu0 %v2990
    %3333 = vmatprep.subr.bf16.mxu0 0
    %3334 = vmatpush2.bf16.msra.mxu0 0
    %3335 = vmatprep.subr.bf16.mxu0 0
    %3336 = vmatpush2.bf16.msra.mxu0 0
    %3337 = vmatprep.subr.bf16.mxu0 0
    %3338 = vmatpush2.bf16.msra.mxu0 0
    %3339 = vmatprep.subr.bf16.mxu0 0
    %3340 = vmatpush2.bf16.msra.mxu0 0
    %3341 = vmatprep.subr.bf16.mxu0 0
    %3342 = vmatpush2.bf16.msra.mxu0 0
    %3343 = vmatprep.subr.bf16.mxu0 0
    %3344 = vmatpush2.bf16.msra.mxu0 0
    %3345 = vmatprep.subr.bf16.mxu0 0
    %3346 = vmatpush2.bf16.msra.mxu0 0
    %3347 = vmatprep.subr.bf16.mxu0 0
    %3348 = vmatpush2.bf16.msra.mxu0 0
    %3349 = vmatprep.mubr.bf16.mxu0 0
    %3350 = vmatmul.mubr.bf16.gmra.mxu0 %v3143
    %v3351 = vpop.f32.mrf.mxu0
    %v3352 = vadd.f32 %v3309, %v3351
    %v3353 = vpop.f32.mrf.mxu0
    %v3354 = vadd.f32 %v3311, %v3353
    %v3355 = vpop.f32.mrf.mxu0
    %v3356 = vadd.f32 %v3313, %v3355
    %v3357 = vpop.f32.mrf.mxu0
    %v3358 = vadd.f32 %v3315, %v3357
    %3359 = vdwg.mxu0
    %vm3360 = vcmp.gt.f32.partialorder %v3352, 0.0
    %vm3361 = vcmp.gt.f32.partialorder %v3354, 0.0
    %vm3362 = vcmp.gt.f32.partialorder %v3356, 0.0
    %vm3363 = vcmp.gt.f32.partialorder %v3358, 0.0
    %v3364 = vmul.f32 %v3352, 0.2
    %v3365 = vmul.f32 %v3354, 0.2
    %v3366 = vmul.f32 %v3356, 0.2
    %v3367 = vmul.f32 %v3358, 0.2
    %v3368 = vsel %vm3360, %v3352, %v3364
    %v3369 = vsel %vm3361, %v3354, %v3365
    %v3370 = vsel %vm3362, %v3356, %v3366
    %v3371 = vsel %vm3363, %v3358, %v3367
    %v3372 = vpack.c.bf16 %v3370, %v3368
    %v3373 = vpack.c.bf16 %v3371, %v3369
    %v3376 = vrot.slane %v3372, 1
    %v3377 = vrot.slane %v3373, 1
    %3378 = vrot.lane.b32.xlu0 %v3376, 96
    %v3379 = vpop.permute.xlu0 %3378
    %3380 = vrot.lane.b32.xlu0 %v3377, 96
    %v3381 = vpop.permute.xlu0 %3380
    %v3382 = vsel %vm2250, %v3379, %v3381
    %v3384 = vrot.slane %v3372, 2
    %v3385 = vrot.slane %v3373, 2
    %3386 = vrot.lane.b32.xlu0 %v3384, 64
    %v3387 = vpop.permute.xlu0 %3386
    %3388 = vrot.lane.b32.xlu0 %v3385, 64
    %v3389 = vpop.permute.xlu0 %3388
    %v3390 = vsel %vm2259, %v3387, %v3389
    %v3392 = vrot.slane %v3372, 3
    %v3393 = vrot.slane %v3373, 3
    %3394 = vrot.lane.b32.xlu0 %v3392, 32
    %v3395 = vpop.permute.xlu0 %3394
    %3396 = vrot.lane.b32.xlu0 %v3393, 32
    %v3397 = vpop.permute.xlu0 %3396
    %v3398 = vsel %vm2268, %v3395, %v3397
    %v3400 = vrot.slane %v3372, 4
    %v3401 = vrot.slane %v3373, 4
    %v3403 = vrot.slane %v3372, 5
    %v3404 = vrot.slane %v3373, 5
    %3405 = vrot.lane.b32.xlu0 %v3403, 96
    %v3406 = vpop.permute.xlu0 %3405
    %3407 = vrot.lane.b32.xlu0 %v3404, 96
    %v3408 = vpop.permute.xlu0 %3407
    %v3409 = vsel %vm2250, %v3406, %v3408
    %v3411 = vrot.slane %v3372, 6
    %v3412 = vrot.slane %v3373, 6
    %3413 = vrot.lane.b32.xlu0 %v3411, 64
    %v3414 = vpop.permute.xlu0 %3413
    %3415 = vrot.lane.b32.xlu0 %v3412, 64
    %v3416 = vpop.permute.xlu0 %3415
    %v3417 = vsel %vm2259, %v3414, %v3416
    %v3421 = vunpack.c.l.s4 1966171168
    %v3422 = vunpack.c.0.s8 %v3421
    %v3423 = vlaneseq
    %v3424 = vshrl.u32 %v3423, 7
    %v3425 = vsub.s32 %v3422, %v3424
    %v3426 = vrot.slane %v1597, %v3425
    %v3428 = vunpack.c.l.s4 1966171168
    %v3429 = vunpack.c.0.s8 %v3428
    %v3430 = vlaneseq
    %v3431 = vshrl.u32 %v3430, 7
    %v3432 = vsub.s32 %v3429, %v3431
    %v3433 = vrot.slane %v3426, %v3432
    %3434 = vrot.lane.b32.xlu0 %v3433, 32
    %v3435 = vpop.permute.xlu0 %3434
    %v3438 = vsel %vm2271, %v3373, %v3379
    %v3442 = vsel %vm2276, %v3381, %v3387
    %v3446 = vsel %vm2281, %v3389, %v3395
    %v3450 = vsel %vm2271, %v3401, %v3406
    %v3454 = vsel %vm2276, %v3408, %v3414
    %v3458 = vsel %vm2281, %v3416, %v3435
    %s3459 = smul.u32 4, 198
    %s3460 = smul.u32 %s3459, 2
    %s3461 = sshll.u32 %s3460, 4
    %3462 = dma.done %s379, %s3461
    %v3463 = vld [vmem:[#allocation3] sm:$0xff]
    %v3464 = vld [vmem:[#allocation3 + $0x8] sm:$0xff]
    %v3465 = vld [vmem:[#allocation3 + $0x10] sm:$0xff]
    %v3466 = vld [vmem:[#allocation3 + $0x18] sm:$0xff]
    %v3467 = vld [vmem:[#allocation3 + $0x20] sm:$0xff]
    %v3468 = vld [vmem:[#allocation3 + $0x28] sm:$0xff]
    %v3469 = vld [vmem:[#allocation3 + $0x30] sm:$0xff]
    %v3470 = vld [vmem:[#allocation3 + $0x38] sm:$0xff]
    %v3471 = vld [vmem:[#allocation3 + $0x40] sm:$0xff]
    %v3472 = vld [vmem:[#allocation3 + $0x48] sm:$0xff]
    %v3473 = vld [vmem:[#allocation3 + $0x50] sm:$0xff]
    %v3474 = vld [vmem:[#allocation3 + $0x58] sm:$0xff]
    %v3475 = vld [vmem:[#allocation3 + $0x60] sm:$0xff]
    %v3476 = vld [vmem:[#allocation3 + $0x68] sm:$0xff]
    %v3477 = vld [vmem:[#allocation3 + $0x70] sm:$0xff]
    %v3478 = vld [vmem:[#allocation3 + $0x78] sm:$0xff]
    %v3479 = vld [vmem:[#allocation3 + $0x80] sm:$0xff]
    %v3480 = vld [vmem:[#allocation3 + $0x88] sm:$0xff]
    %v3481 = vld [vmem:[#allocation3 + $0x90] sm:$0xff]
    %v3482 = vld [vmem:[#allocation3 + $0x98] sm:$0xff]
    %v3483 = vld [vmem:[#allocation3 + $0xa0] sm:$0xff]
    %v3484 = vld [vmem:[#allocation3 + $0xa8] sm:$0xff]
    %v3485 = vld [vmem:[#allocation3 + $0xb0] sm:$0xff]
    %v3486 = vld [vmem:[#allocation3 + $0xb8] sm:$0xff]
    %v3487 = vld [vmem:[#allocation3 + $0xc0] sm:$0xff]
    %v3488 = vld [vmem:[#allocation3 + $0xc8] sm:$0xff]
    %v3489 = vld [vmem:[#allocation3 + $0xd0] sm:$0xff]
    %v3490 = vld [vmem:[#allocation3 + $0xd8] sm:$0xff]
    %v3491 = vld [vmem:[#allocation3 + $0xe0] sm:$0xff]
    %v3492 = vld [vmem:[#allocation3 + $0xe8] sm:$0xff]
    %v3493 = vld [vmem:[#allocation3 + $0xf0] sm:$0xff]
    %v3494 = vld [vmem:[#allocation3 + $0xf8] sm:$0xff]
    %v3495 = vld [vmem:[#allocation3 + $0x100] sm:$0xff]
    %v3496 = vld [vmem:[#allocation3 + $0x108] sm:$0xff]
    %v3497 = vld [vmem:[#allocation3 + $0x110] sm:$0xff]
    %v3498 = vld [vmem:[#allocation3 + $0x118] sm:$0xff]
    %v3499 = vld [vmem:[#allocation3 + $0x120] sm:$0xff]
    %v3500 = vld [vmem:[#allocation3 + $0x128] sm:$0xff]
    %v3501 = vld [vmem:[#allocation3 + $0x130] sm:$0xff]
    %v3502 = vld [vmem:[#allocation3 + $0x138] sm:$0xff]
    %v3503 = vld [vmem:[#allocation3 + $0x140] sm:$0xff]
    %v3504 = vld [vmem:[#allocation3 + $0x148] sm:$0xff]
    %v3505 = vld [vmem:[#allocation3 + $0x150] sm:$0xff]
    %v3506 = vld [vmem:[#allocation3 + $0x158] sm:$0xff]
    %v3507 = vld [vmem:[#allocation3 + $0x160] sm:$0xff]
    %v3508 = vld [vmem:[#allocation3 + $0x168] sm:$0xff]
    %v3509 = vld [vmem:[#allocation3 + $0x170] sm:$0xff]
    %v3510 = vld [vmem:[#allocation3 + $0x178] sm:$0xff]
    %v3511 = vld [vmem:[#allocation3 + $0x180] sm:$0xff]
    %v3512 = vld [vmem:[#allocation3 + $0x188] sm:$0xff]
    %v3513 = vld [vmem:[#allocation3 + $0x190] sm:$0xff]
    %v3514 = vld [vmem:[#allocation3 + $0x198] sm:$0xff]
    %v3515 = vld [vmem:[#allocation3 + $0x1a0] sm:$0xff]
    %v3516 = vld [vmem:[#allocation3 + $0x1a8] sm:$0xff]
    %v3517 = vld [vmem:[#allocation3 + $0x1b0] sm:$0xff]
    %v3518 = vld [vmem:[#allocation3 + $0x1b8] sm:$0xff]
    %v3519 = vld [vmem:[#allocation3 + $0x1c0] sm:$0xff]
    %v3520 = vld [vmem:[#allocation3 + $0x1c8] sm:$0xff]
    %v3521 = vld [vmem:[#allocation3 + $0x1d0] sm:$0xff]
    %v3522 = vld [vmem:[#allocation3 + $0x1d8] sm:$0xff]
    %v3523 = vld [vmem:[#allocation3 + $0x1e0] sm:$0xff]
    %v3524 = vld [vmem:[#allocation3 + $0x1e8] sm:$0xff]
    %v3525 = vld [vmem:[#allocation3 + $0x1f0] sm:$0xff]
    %v3526 = vld [vmem:[#allocation3 + $0x1f8] sm:$0xff]
    %v3527 = vld [vmem:[#allocation3 + $0x200] sm:$0xff]
    %v3528 = vld [vmem:[#allocation3 + $0x208] sm:$0xff]
    %v3529 = vld [vmem:[#allocation3 + $0x210] sm:$0xff]
    %v3530 = vld [vmem:[#allocation3 + $0x218] sm:$0xff]
    %v3531 = vld [vmem:[#allocation3 + $0x220] sm:$0xff]
    %v3532 = vld [vmem:[#allocation3 + $0x228] sm:$0xff]
    %v3533 = vld [vmem:[#allocation3 + $0x230] sm:$0xff]
    %v3534 = vld [vmem:[#allocation3 + $0x238] sm:$0xff]
    %v3535 = vld [vmem:[#allocation3 + $0x240] sm:$0xff]
    %v3536 = vld [vmem:[#allocation3 + $0x248] sm:$0xff]
    %v3537 = vld [vmem:[#allocation3 + $0x250] sm:$0xff]
    %v3538 = vld [vmem:[#allocation3 + $0x258] sm:$0xff]
    %v3539 = vld [vmem:[#allocation3 + $0x260] sm:$0xff]
    %v3540 = vld [vmem:[#allocation3 + $0x268] sm:$0xff]
    %v3541 = vld [vmem:[#allocation3 + $0x270] sm:$0xff]
    %v3542 = vld [vmem:[#allocation3 + $0x278] sm:$0xff]
    %v3543 = vld [vmem:[#allocation3 + $0x280] sm:$0xff]
    %v3544 = vld [vmem:[#allocation3 + $0x288] sm:$0xff]
    %v3545 = vld [vmem:[#allocation3 + $0x290] sm:$0xff]
    %v3546 = vld [vmem:[#allocation3 + $0x298] sm:$0xff]
    %v3547 = vld [vmem:[#allocation3 + $0x2a0] sm:$0xff]
    %v3548 = vld [vmem:[#allocation3 + $0x2a8] sm:$0xff]
    %v3549 = vld [vmem:[#allocation3 + $0x2b0] sm:$0xff]
    %v3550 = vld [vmem:[#allocation3 + $0x2b8] sm:$0xff]
    %v3551 = vld [vmem:[#allocation3 + $0x2c0] sm:$0xff]
    %v3552 = vld [vmem:[#allocation3 + $0x2c8] sm:$0xff]
    %v3553 = vld [vmem:[#allocation3 + $0x2d0] sm:$0xff]
    %v3554 = vld [vmem:[#allocation3 + $0x2d8] sm:$0xff]
    %v3555 = vld [vmem:[#allocation3 + $0x2e0] sm:$0xff]
    %v3556 = vld [vmem:[#allocation3 + $0x2e8] sm:$0xff]
    %v3557 = vld [vmem:[#allocation3 + $0x2f0] sm:$0xff]
    %v3558 = vld [vmem:[#allocation3 + $0x2f8] sm:$0xff]
    %v3559 = vld [vmem:[#allocation3 + $0x300] sm:$0xff]
    %v3560 = vld [vmem:[#allocation3 + $0x308] sm:$0xff]
    %v3561 = vld [vmem:[#allocation3 + $0x310] sm:$0xff]
    %v3562 = vld [vmem:[#allocation3 + $0x318] sm:$0xff]
    %v3563 = vld [vmem:[#allocation3 + $0x320] sm:$0xff]
    %v3564 = vld [vmem:[#allocation3 + $0x328] sm:$0xff]
    %v3565 = vld [vmem:[#allocation3 + $0x330] sm:$0xff]
    %v3566 = vld [vmem:[#allocation3 + $0x338] sm:$0xff]
    %v3567 = vld [vmem:[#allocation3 + $0x340] sm:$0xff]
    %v3568 = vld [vmem:[#allocation3 + $0x348] sm:$0xff]
    %v3569 = vld [vmem:[#allocation3 + $0x350] sm:$0xff]
    %v3570 = vld [vmem:[#allocation3 + $0x358] sm:$0xff]
    %v3571 = vld [vmem:[#allocation3 + $0x360] sm:$0xff]
    %v3572 = vld [vmem:[#allocation3 + $0x368] sm:$0xff]
    %v3573 = vld [vmem:[#allocation3 + $0x370] sm:$0xff]
    %v3574 = vld [vmem:[#allocation3 + $0x378] sm:$0xff]
    %v3575 = vld [vmem:[#allocation3 + $0x380] sm:$0xff]
    %v3576 = vld [vmem:[#allocation3 + $0x388] sm:$0xff]
    %v3577 = vld [vmem:[#allocation3 + $0x390] sm:$0xff]
    %v3578 = vld [vmem:[#allocation3 + $0x398] sm:$0xff]
    %v3579 = vld [vmem:[#allocation3 + $0x3a0] sm:$0xff]
    %v3580 = vld [vmem:[#allocation3 + $0x3a8] sm:$0xff]
    %v3581 = vld [vmem:[#allocation3 + $0x3b0] sm:$0xff]
    %v3582 = vld [vmem:[#allocation3 + $0x3b8] sm:$0xff]
    %v3583 = vld [vmem:[#allocation3 + $0x3c0] sm:$0xff]
    %v3584 = vld [vmem:[#allocation3 + $0x3c8] sm:$0xff]
    %v3585 = vld [vmem:[#allocation3 + $0x3d0] sm:$0xff]
    %v3586 = vld [vmem:[#allocation3 + $0x3d8] sm:$0xff]
    %v3587 = vld [vmem:[#allocation3 + $0x3e0] sm:$0xff]
    %v3588 = vld [vmem:[#allocation3 + $0x3e8] sm:$0xff]
    %v3589 = vld [vmem:[#allocation3 + $0x3f0] sm:$0xff]
    %v3590 = vld [vmem:[#allocation3 + $0x3f8] sm:$0xff]
    %v3591 = vld [vmem:[#allocation3 + $0x400] sm:$0xff]
    %v3592 = vld [vmem:[#allocation3 + $0x408] sm:$0xff]
    %v3593 = vld [vmem:[#allocation3 + $0x410] sm:$0xff]
    %v3594 = vld [vmem:[#allocation3 + $0x418] sm:$0xff]
    %v3595 = vld [vmem:[#allocation3 + $0x420] sm:$0xff]
    %v3596 = vld [vmem:[#allocation3 + $0x428] sm:$0xff]
    %v3597 = vld [vmem:[#allocation3 + $0x430] sm:$0xff]
    %v3598 = vld [vmem:[#allocation3 + $0x438] sm:$0xff]
    %v3599 = vld [vmem:[#allocation3 + $0x440] sm:$0xff]
    %v3600 = vld [vmem:[#allocation3 + $0x448] sm:$0xff]
    %v3601 = vld [vmem:[#allocation3 + $0x450] sm:$0xff]
    %v3602 = vld [vmem:[#allocation3 + $0x458] sm:$0xff]
    %v3603 = vld [vmem:[#allocation3 + $0x460] sm:$0xff]
    %v3604 = vld [vmem:[#allocation3 + $0x468] sm:$0xff]
    %v3605 = vld [vmem:[#allocation3 + $0x470] sm:$0xff]
    %v3606 = vld [vmem:[#allocation3 + $0x478] sm:$0xff]
    %v3607 = vld [vmem:[#allocation3 + $0x480] sm:$0xff]
    %v3608 = vld [vmem:[#allocation3 + $0x488] sm:$0xff]
    %v3609 = vld [vmem:[#allocation3 + $0x490] sm:$0xff]
    %v3610 = vld [vmem:[#allocation3 + $0x498] sm:$0xff]
    %v3611 = vld [vmem:[#allocation3 + $0x4a0] sm:$0xff]
    %v3612 = vld [vmem:[#allocation3 + $0x4a8] sm:$0xff]
    %v3613 = vld [vmem:[#allocation3 + $0x4b0] sm:$0xff]
    %v3614 = vld [vmem:[#allocation3 + $0x4b8] sm:$0xff]
    %v3615 = vld [vmem:[#allocation3 + $0x4c0] sm:$0xff]
    %v3616 = vld [vmem:[#allocation3 + $0x4c8] sm:$0xff]
    %v3617 = vld [vmem:[#allocation3 + $0x4d0] sm:$0xff]
    %v3618 = vld [vmem:[#allocation3 + $0x4d8] sm:$0xff]
    %v3619 = vld [vmem:[#allocation3 + $0x4e0] sm:$0xff]
    %v3620 = vld [vmem:[#allocation3 + $0x4e8] sm:$0xff]
    %v3621 = vld [vmem:[#allocation3 + $0x4f0] sm:$0xff]
    %v3622 = vld [vmem:[#allocation3 + $0x4f8] sm:$0xff]
    %v3623 = vld [vmem:[#allocation3 + $0x500] sm:$0xff]
    %v3624 = vld [vmem:[#allocation3 + $0x508] sm:$0xff]
    %v3625 = vld [vmem:[#allocation3 + $0x510] sm:$0xff]
    %v3626 = vld [vmem:[#allocation3 + $0x518] sm:$0xff]
    %v3627 = vld [vmem:[#allocation3 + $0x520] sm:$0xff]
    %v3628 = vld [vmem:[#allocation3 + $0x528] sm:$0xff]
    %v3629 = vld [vmem:[#allocation3 + $0x530] sm:$0xff]
    %v3630 = vld [vmem:[#allocation3 + $0x538] sm:$0xff]
    %v3631 = vld [vmem:[#allocation3 + $0x540] sm:$0xff]
    %v3632 = vld [vmem:[#allocation3 + $0x548] sm:$0xff]
    %v3633 = vld [vmem:[#allocation3 + $0x550] sm:$0xff]
    %v3634 = vld [vmem:[#allocation3 + $0x558] sm:$0xff]
    %v3635 = vld [vmem:[#allocation3 + $0x560] sm:$0xff]
    %v3636 = vld [vmem:[#allocation3 + $0x568] sm:$0xff]
    %v3637 = vld [vmem:[#allocation3 + $0x570] sm:$0xff]
    %v3638 = vld [vmem:[#allocation3 + $0x578] sm:$0xff]
    %v3639 = vld [vmem:[#allocation3 + $0x580] sm:$0xff]
    %v3640 = vld [vmem:[#allocation3 + $0x588] sm:$0xff]
    %v3641 = vld [vmem:[#allocation3 + $0x590] sm:$0xff]
    %v3642 = vld [vmem:[#allocation3 + $0x598] sm:$0xff]
    %v3643 = vld [vmem:[#allocation3 + $0x5a0] sm:$0xff]
    %v3644 = vld [vmem:[#allocation3 + $0x5a8] sm:$0xff]
    %v3645 = vld [vmem:[#allocation3 + $0x5b0] sm:$0xff]
    %v3646 = vld [vmem:[#allocation3 + $0x5b8] sm:$0xff]
    %v3647 = vld [vmem:[#allocation3 + $0x5c0] sm:$0xff]
    %v3648 = vld [vmem:[#allocation3 + $0x5c8] sm:$0xff]
    %v3649 = vld [vmem:[#allocation3 + $0x5d0] sm:$0xff]
    %v3650 = vld [vmem:[#allocation3 + $0x5d8] sm:$0xff]
    %v3651 = vld [vmem:[#allocation3 + $0x5e0] sm:$0xff]
    %v3652 = vld [vmem:[#allocation3 + $0x5e8] sm:$0xff]
    %v3653 = vld [vmem:[#allocation3 + $0x5f0] sm:$0xff]
    %v3654 = vld [vmem:[#allocation3 + $0x5f8] sm:$0xff]
    %v3655 = vld [vmem:[#allocation3 + $0x600] sm:$0xff]
    %v3656 = vld [vmem:[#allocation3 + $0x608] sm:$0xff]
    %v3657 = vld [vmem:[#allocation3 + $0x610] sm:$0xff]
    %v3658 = vld [vmem:[#allocation3 + $0x618] sm:$0xff]
    %v3659 = vld [vmem:[#allocation3 + $0x620] sm:$0xff]
    %v3660 = vld [vmem:[#allocation3 + $0x628] sm:$0xff]
    %v3661 = vld [vmem:[%s8] sm:$0x3]
    %v3663 = vlaneseq
    %v3664 = vshrl.u32 %v3663, 7
    %v3665 = vsub.s32 0, %v3664
    %v3666 = vrot.slane %v3661, %v3665
    %v3667 = vlaneseq
    %v3668 = vshrl.u32 %v3667, 7
    %v3669 = vsub.s32 1, %v3668
    %v3670 = vrot.slane %v3661, %v3669
    %v3871 = vunpack.c.l.b16 %v3463
    %v3872 = vunpack.c.h.b16 %v3463
    %v3873 = vunpack.c.l.b16 %v3464
    %v3874 = vunpack.c.h.b16 %v3464
    %v3875 = vunpack.c.l.b16 %v3465
    %v3876 = vunpack.c.h.b16 %v3465
    %v3877 = vunpack.c.l.b16 %v3466
    %v3878 = vunpack.c.h.b16 %v3466
    %v3879 = vunpack.c.l.b16 %v3467
    %v3880 = vunpack.c.h.b16 %v3467
    %v3881 = vunpack.c.l.b16 %v3468
    %v3882 = vunpack.c.h.b16 %v3468
    %v3883 = vunpack.c.l.b16 %v3469
    %v3884 = vunpack.c.h.b16 %v3469
    %v3885 = vunpack.c.l.b16 %v3470
    %v3886 = vunpack.c.h.b16 %v3470
    %v3887 = vunpack.c.l.b16 %v3471
    %v3888 = vunpack.c.h.b16 %v3471
    %v3889 = vunpack.c.l.b16 %v3472
    %v3890 = vunpack.c.h.b16 %v3472
    %v3891 = vunpack.c.l.b16 %v3473
    %v3892 = vunpack.c.h.b16 %v3473
    %v3893 = vunpack.c.l.b16 %v3474
    %v3894 = vunpack.c.h.b16 %v3474
    %v3895 = vunpack.c.l.b16 %v3475
    %v3896 = vunpack.c.h.b16 %v3475
    %v3897 = vunpack.c.l.b16 %v3476
    %v3898 = vunpack.c.h.b16 %v3476
    %v3899 = vunpack.c.l.b16 %v3477
    %v3900 = vunpack.c.h.b16 %v3477
    %v3901 = vunpack.c.l.b16 %v3478
    %v3902 = vunpack.c.h.b16 %v3478
    %v3903 = vunpack.c.l.b16 %v3479
    %v3904 = vunpack.c.h.b16 %v3479
    %v3905 = vunpack.c.l.b16 %v3480
    %v3906 = vunpack.c.h.b16 %v3480
    %v3907 = vunpack.c.l.b16 %v3481
    %v3908 = vunpack.c.h.b16 %v3481
    %v3909 = vunpack.c.l.b16 %v3482
    %v3910 = vunpack.c.h.b16 %v3482
    %v3911 = vunpack.c.l.b16 %v3483
    %v3912 = vunpack.c.h.b16 %v3483
    %v3913 = vunpack.c.l.b16 %v3484
    %v3914 = vunpack.c.h.b16 %v3484
    %v3915 = vunpack.c.l.b16 %v3485
    %v3916 = vunpack.c.h.b16 %v3485
    %v3917 = vunpack.c.l.b16 %v3486
    %v3918 = vunpack.c.h.b16 %v3486
    %v3919 = vunpack.c.l.b16 %v3487
    %v3920 = vunpack.c.h.b16 %v3487
    %v3921 = vunpack.c.l.b16 %v3488
    %v3922 = vunpack.c.h.b16 %v3488
    %v3923 = vunpack.c.l.b16 %v3489
    %v3924 = vunpack.c.h.b16 %v3489
    %v3925 = vunpack.c.l.b16 %v3490
    %v3926 = vunpack.c.h.b16 %v3490
    %v3927 = vunpack.c.l.b16 %v3491
    %v3928 = vunpack.c.h.b16 %v3491
    %v3929 = vunpack.c.l.b16 %v3492
    %v3930 = vunpack.c.h.b16 %v3492
    %v3931 = vunpack.c.l.b16 %v3493
    %v3932 = vunpack.c.h.b16 %v3493
    %v3933 = vunpack.c.l.b16 %v3494
    %v3934 = vunpack.c.h.b16 %v3494
    %v3935 = vunpack.c.l.b16 %v3495
    %v3936 = vunpack.c.h.b16 %v3495
    %v3937 = vunpack.c.l.b16 %v3496
    %v3938 = vunpack.c.h.b16 %v3496
    %v3939 = vunpack.c.l.b16 %v3497
    %v3940 = vunpack.c.h.b16 %v3497
    %v3941 = vunpack.c.l.b16 %v3498
    %v3942 = vunpack.c.h.b16 %v3498
    %v3943 = vunpack.c.l.b16 %v3499
    %v3944 = vunpack.c.h.b16 %v3499
    %v3945 = vunpack.c.l.b16 %v3500
    %v3946 = vunpack.c.h.b16 %v3500
    %v3947 = vunpack.c.l.b16 %v3501
    %v3948 = vunpack.c.h.b16 %v3501
    %v3949 = vunpack.c.l.b16 %v3502
    %v3950 = vunpack.c.h.b16 %v3502
    %v3951 = vunpack.c.l.b16 %v3503
    %v3952 = vunpack.c.h.b16 %v3503
    %v3953 = vunpack.c.l.b16 %v3504
    %v3954 = vunpack.c.h.b16 %v3504
    %v3955 = vunpack.c.l.b16 %v3505
    %v3956 = vunpack.c.h.b16 %v3505
    %v3957 = vunpack.c.l.b16 %v3506
    %v3958 = vunpack.c.h.b16 %v3506
    %v3959 = vunpack.c.l.b16 %v3507
    %v3960 = vunpack.c.h.b16 %v3507
    %v3961 = vunpack.c.l.b16 %v3508
    %v3962 = vunpack.c.h.b16 %v3508
    %v3963 = vunpack.c.l.b16 %v3509
    %v3964 = vunpack.c.h.b16 %v3509
    %v3965 = vunpack.c.l.b16 %v3510
    %v3966 = vunpack.c.h.b16 %v3510
    %v3967 = vunpack.c.l.b16 %v3511
    %v3968 = vunpack.c.h.b16 %v3511
    %v3969 = vunpack.c.l.b16 %v3512
    %v3970 = vunpack.c.h.b16 %v3512
    %v3971 = vunpack.c.l.b16 %v3513
    %v3972 = vunpack.c.h.b16 %v3513
    %v3973 = vunpack.c.l.b16 %v3514
    %v3974 = vunpack.c.h.b16 %v3514
    %v3975 = vunpack.c.l.b16 %v3515
    %v3976 = vunpack.c.h.b16 %v3515
    %v3977 = vunpack.c.l.b16 %v3516
    %v3978 = vunpack.c.h.b16 %v3516
    %v3979 = vunpack.c.l.b16 %v3517
    %v3980 = vunpack.c.h.b16 %v3517
    %v3981 = vunpack.c.l.b16 %v3518
    %v3982 = vunpack.c.h.b16 %v3518
    %v3983 = vunpack.c.l.b16 %v3519
    %v3984 = vunpack.c.h.b16 %v3519
    %v3985 = vunpack.c.l.b16 %v3520
    %v3986 = vunpack.c.h.b16 %v3520
    %v3987 = vunpack.c.l.b16 %v3521
    %v3988 = vunpack.c.h.b16 %v3521
    %v3989 = vunpack.c.l.b16 %v3522
    %v3990 = vunpack.c.h.b16 %v3522
    %v3991 = vunpack.c.l.b16 %v3523
    %v3992 = vunpack.c.h.b16 %v3523
    %v3993 = vunpack.c.l.b16 %v3524
    %v3994 = vunpack.c.h.b16 %v3524
    %v3995 = vunpack.c.l.b16 %v3525
    %v3996 = vunpack.c.h.b16 %v3525
    %v3997 = vunpack.c.l.b16 %v3526
    %v3998 = vunpack.c.h.b16 %v3526
    %v3999 = vunpack.c.l.b16 %v3527
    %v4000 = vunpack.c.h.b16 %v3527
    %v4001 = vunpack.c.l.b16 %v3528
    %v4002 = vunpack.c.h.b16 %v3528
    %v4003 = vunpack.c.l.b16 %v3529
    %v4004 = vunpack.c.h.b16 %v3529
    %v4005 = vunpack.c.l.b16 %v3530
    %v4006 = vunpack.c.h.b16 %v3530
    %v4007 = vunpack.c.l.b16 %v3531
    %v4008 = vunpack.c.h.b16 %v3531
    %v4009 = vunpack.c.l.b16 %v3532
    %v4010 = vunpack.c.h.b16 %v3532
    %v4011 = vunpack.c.l.b16 %v3533
    %v4012 = vunpack.c.h.b16 %v3533
    %v4013 = vunpack.c.l.b16 %v3534
    %v4014 = vunpack.c.h.b16 %v3534
    %v4015 = vunpack.c.l.b16 %v3535
    %v4016 = vunpack.c.h.b16 %v3535
    %v4017 = vunpack.c.l.b16 %v3536
    %v4018 = vunpack.c.h.b16 %v3536
    %v4019 = vunpack.c.l.b16 %v3537
    %v4020 = vunpack.c.h.b16 %v3537
    %v4021 = vunpack.c.l.b16 %v3538
    %v4022 = vunpack.c.h.b16 %v3538
    %v4023 = vunpack.c.l.b16 %v3539
    %v4024 = vunpack.c.h.b16 %v3539
    %v4025 = vunpack.c.l.b16 %v3540
    %v4026 = vunpack.c.h.b16 %v3540
    %v4027 = vunpack.c.l.b16 %v3541
    %v4028 = vunpack.c.h.b16 %v3541
    %v4029 = vunpack.c.l.b16 %v3542
    %v4030 = vunpack.c.h.b16 %v3542
    %v4031 = vunpack.c.l.b16 %v3543
    %v4032 = vunpack.c.h.b16 %v3543
    %v4033 = vunpack.c.l.b16 %v3544
    %v4034 = vunpack.c.h.b16 %v3544
    %v4035 = vunpack.c.l.b16 %v3545
    %v4036 = vunpack.c.h.b16 %v3545
    %v4037 = vunpack.c.l.b16 %v3546
    %v4038 = vunpack.c.h.b16 %v3546
    %v4039 = vunpack.c.l.b16 %v3547
    %v4040 = vunpack.c.h.b16 %v3547
    %v4041 = vunpack.c.l.b16 %v3548
    %v4042 = vunpack.c.h.b16 %v3548
    %v4043 = vunpack.c.l.b16 %v3549
    %v4044 = vunpack.c.h.b16 %v3549
    %v4045 = vunpack.c.l.b16 %v3550
    %v4046 = vunpack.c.h.b16 %v3550
    %v4047 = vunpack.c.l.b16 %v3551
    %v4048 = vunpack.c.h.b16 %v3551
    %v4049 = vunpack.c.l.b16 %v3552
    %v4050 = vunpack.c.h.b16 %v3552
    %v4051 = vunpack.c.l.b16 %v3553
    %v4052 = vunpack.c.h.b16 %v3553
    %v4053 = vunpack.c.l.b16 %v3554
    %v4054 = vunpack.c.h.b16 %v3554
    %v4055 = vunpack.c.l.b16 %v3555
    %v4056 = vunpack.c.h.b16 %v3555
    %v4057 = vunpack.c.l.b16 %v3556
    %v4058 = vunpack.c.h.b16 %v3556
    %v4059 = vunpack.c.l.b16 %v3557
    %v4060 = vunpack.c.h.b16 %v3557
    %v4061 = vunpack.c.l.b16 %v3558
    %v4062 = vunpack.c.h.b16 %v3558
    %v4063 = vunpack.c.l.b16 %v3559
    %v4064 = vunpack.c.h.b16 %v3559
    %v4065 = vunpack.c.l.b16 %v3560
    %v4066 = vunpack.c.h.b16 %v3560
    %v4067 = vunpack.c.l.b16 %v3561
    %v4068 = vunpack.c.h.b16 %v3561
    %v4069 = vunpack.c.l.b16 %v3562
    %v4070 = vunpack.c.h.b16 %v3562
    %v4071 = vunpack.c.l.b16 %v3563
    %v4072 = vunpack.c.h.b16 %v3563
    %v4073 = vunpack.c.l.b16 %v3564
    %v4074 = vunpack.c.h.b16 %v3564
    %v4075 = vunpack.c.l.b16 %v3565
    %v4076 = vunpack.c.h.b16 %v3565
    %v4077 = vunpack.c.l.b16 %v3566
    %v4078 = vunpack.c.h.b16 %v3566
    %v4079 = vunpack.c.l.b16 %v3567
    %v4080 = vunpack.c.h.b16 %v3567
    %v4081 = vunpack.c.l.b16 %v3568
    %v4082 = vunpack.c.h.b16 %v3568
    %v4083 = vunpack.c.l.b16 %v3569
    %v4084 = vunpack.c.h.b16 %v3569
    %v4085 = vunpack.c.l.b16 %v3570
    %v4086 = vunpack.c.h.b16 %v3570
    %v4087 = vunpack.c.l.b16 %v3571
    %v4088 = vunpack.c.h.b16 %v3571
    %v4089 = vunpack.c.l.b16 %v3572
    %v4090 = vunpack.c.h.b16 %v3572
    %v4091 = vunpack.c.l.b16 %v3573
    %v4092 = vunpack.c.h.b16 %v3573
    %v4093 = vunpack.c.l.b16 %v3574
    %v4094 = vunpack.c.h.b16 %v3574
    %v4095 = vunpack.c.l.b16 %v3575
    %v4096 = vunpack.c.h.b16 %v3575
    %v4097 = vunpack.c.l.b16 %v3576
    %v4098 = vunpack.c.h.b16 %v3576
    %v4099 = vunpack.c.l.b16 %v3577
    %v4100 = vunpack.c.h.b16 %v3577
    %v4101 = vunpack.c.l.b16 %v3578
    %v4102 = vunpack.c.h.b16 %v3578
    %v4103 = vunpack.c.l.b16 %v3579
    %v4104 = vunpack.c.h.b16 %v3579
    %v4105 = vunpack.c.l.b16 %v3580
    %v4106 = vunpack.c.h.b16 %v3580
    %v4107 = vunpack.c.l.b16 %v3581
    %v4108 = vunpack.c.h.b16 %v3581
    %v4109 = vunpack.c.l.b16 %v3582
    %v4110 = vunpack.c.h.b16 %v3582
    %v4111 = vunpack.c.l.b16 %v3583
    %v4112 = vunpack.c.h.b16 %v3583
    %v4113 = vunpack.c.l.b16 %v3584
    %v4114 = vunpack.c.h.b16 %v3584
    %v4115 = vunpack.c.l.b16 %v3585
    %v4116 = vunpack.c.h.b16 %v3585
    %v4117 = vunpack.c.l.b16 %v3586
    %v4118 = vunpack.c.h.b16 %v3586
    %v4119 = vunpack.c.l.b16 %v3587
    %v4120 = vunpack.c.h.b16 %v3587
    %v4121 = vunpack.c.l.b16 %v3588
    %v4122 = vunpack.c.h.b16 %v3588
    %v4123 = vunpack.c.l.b16 %v3589
    %v4124 = vunpack.c.h.b16 %v3589
    %v4125 = vunpack.c.l.b16 %v3590
    %v4126 = vunpack.c.h.b16 %v3590
    %v4127 = vunpack.c.l.b16 %v3591
    %v4128 = vunpack.c.h.b16 %v3591
    %v4129 = vunpack.c.l.b16 %v3592
    %v4130 = vunpack.c.h.b16 %v3592
    %v4131 = vunpack.c.l.b16 %v3593
    %v4132 = vunpack.c.h.b16 %v3593
    %v4133 = vunpack.c.l.b16 %v3594
    %v4134 = vunpack.c.h.b16 %v3594
    %v4135 = vunpack.c.l.b16 %v3595
    %v4136 = vunpack.c.h.b16 %v3595
    %v4137 = vunpack.c.l.b16 %v3596
    %v4138 = vunpack.c.h.b16 %v3596
    %v4139 = vunpack.c.l.b16 %v3597
    %v4140 = vunpack.c.h.b16 %v3597
    %v4141 = vunpack.c.l.b16 %v3598
    %v4142 = vunpack.c.h.b16 %v3598
    %v4143 = vunpack.c.l.b16 %v3599
    %v4144 = vunpack.c.h.b16 %v3599
    %v4145 = vunpack.c.l.b16 %v3600
    %v4146 = vunpack.c.h.b16 %v3600
    %v4147 = vunpack.c.l.b16 %v3601
    %v4148 = vunpack.c.h.b16 %v3601
    %v4149 = vunpack.c.l.b16 %v3602
    %v4150 = vunpack.c.h.b16 %v3602
    %v4151 = vunpack.c.l.b16 %v3603
    %v4152 = vunpack.c.h.b16 %v3603
    %v4153 = vunpack.c.l.b16 %v3604
    %v4154 = vunpack.c.h.b16 %v3604
    %v4155 = vunpack.c.l.b16 %v3605
    %v4156 = vunpack.c.h.b16 %v3605
    %v4157 = vunpack.c.l.b16 %v3606
    %v4158 = vunpack.c.h.b16 %v3606
    %v4159 = vunpack.c.l.b16 %v3607
    %v4160 = vunpack.c.h.b16 %v3607
    %v4161 = vunpack.c.l.b16 %v3608
    %v4162 = vunpack.c.h.b16 %v3608
    %v4163 = vunpack.c.l.b16 %v3609
    %v4164 = vunpack.c.h.b16 %v3609
    %v4165 = vunpack.c.l.b16 %v3610
    %v4166 = vunpack.c.h.b16 %v3610
    %v4167 = vunpack.c.l.b16 %v3611
    %v4168 = vunpack.c.h.b16 %v3611
    %v4169 = vunpack.c.l.b16 %v3612
    %v4170 = vunpack.c.h.b16 %v3612
    %v4171 = vunpack.c.l.b16 %v3613
    %v4172 = vunpack.c.h.b16 %v3613
    %v4173 = vunpack.c.l.b16 %v3614
    %v4174 = vunpack.c.h.b16 %v3614
    %v4175 = vunpack.c.l.b16 %v3615
    %v4176 = vunpack.c.h.b16 %v3615
    %v4177 = vunpack.c.l.b16 %v3616
    %v4178 = vunpack.c.h.b16 %v3616
    %v4179 = vunpack.c.l.b16 %v3617
    %v4180 = vunpack.c.h.b16 %v3617
    %v4181 = vunpack.c.l.b16 %v3618
    %v4182 = vunpack.c.h.b16 %v3618
    %v4183 = vunpack.c.l.b16 %v3619
    %v4184 = vunpack.c.h.b16 %v3619
    %v4185 = vunpack.c.l.b16 %v3620
    %v4186 = vunpack.c.h.b16 %v3620
    %v4187 = vunpack.c.l.b16 %v3621
    %v4188 = vunpack.c.h.b16 %v3621
    %v4189 = vunpack.c.l.b16 %v3622
    %v4190 = vunpack.c.h.b16 %v3622
    %v4191 = vunpack.c.l.b16 %v3623
    %v4192 = vunpack.c.h.b16 %v3623
    %v4193 = vunpack.c.l.b16 %v3624
    %v4194 = vunpack.c.h.b16 %v3624
    %v4195 = vunpack.c.l.b16 %v3625
    %v4196 = vunpack.c.h.b16 %v3625
    %v4197 = vunpack.c.l.b16 %v3626
    %v4198 = vunpack.c.h.b16 %v3626
    %v4199 = vunpack.c.l.b16 %v3627
    %v4200 = vunpack.c.h.b16 %v3627
    %v4201 = vunpack.c.l.b16 %v3628
    %v4202 = vunpack.c.h.b16 %v3628
    %v4203 = vunpack.c.l.b16 %v3629
    %v4204 = vunpack.c.h.b16 %v3629
    %v4205 = vunpack.c.l.b16 %v3630
    %v4206 = vunpack.c.h.b16 %v3630
    %v4207 = vunpack.c.l.b16 %v3631
    %v4208 = vunpack.c.h.b16 %v3631
    %v4209 = vunpack.c.l.b16 %v3632
    %v4210 = vunpack.c.h.b16 %v3632
    %v4211 = vunpack.c.l.b16 %v3633
    %v4212 = vunpack.c.h.b16 %v3633
    %v4213 = vunpack.c.l.b16 %v3634
    %v4214 = vunpack.c.h.b16 %v3634
    %v4215 = vunpack.c.l.b16 %v3635
    %v4216 = vunpack.c.h.b16 %v3635
    %v4217 = vunpack.c.l.b16 %v3636
    %v4218 = vunpack.c.h.b16 %v3636
    %v4219 = vunpack.c.l.b16 %v3637
    %v4220 = vunpack.c.h.b16 %v3637
    %v4221 = vunpack.c.l.b16 %v3638
    %v4222 = vunpack.c.h.b16 %v3638
    %v4223 = vunpack.c.l.b16 %v3639
    %v4224 = vunpack.c.h.b16 %v3639
    %v4225 = vunpack.c.l.b16 %v3640
    %v4226 = vunpack.c.h.b16 %v3640
    %v4227 = vunpack.c.l.b16 %v3641
    %v4228 = vunpack.c.h.b16 %v3641
    %v4229 = vunpack.c.l.b16 %v3642
    %v4230 = vunpack.c.h.b16 %v3642
    %v4231 = vunpack.c.l.b16 %v3643
    %v4232 = vunpack.c.h.b16 %v3643
    %v4233 = vunpack.c.l.b16 %v3644
    %v4234 = vunpack.c.h.b16 %v3644
    %v4235 = vunpack.c.l.b16 %v3645
    %v4236 = vunpack.c.h.b16 %v3645
    %v4237 = vunpack.c.l.b16 %v3646
    %v4238 = vunpack.c.h.b16 %v3646
    %v4239 = vunpack.c.l.b16 %v3647
    %v4240 = vunpack.c.h.b16 %v3647
    %v4241 = vunpack.c.l.b16 %v3648
    %v4242 = vunpack.c.h.b16 %v3648
    %v4243 = vunpack.c.l.b16 %v3649
    %v4244 = vunpack.c.h.b16 %v3649
    %v4245 = vunpack.c.l.b16 %v3650
    %v4246 = vunpack.c.h.b16 %v3650
    %v4247 = vunpack.c.l.b16 %v3651
    %v4248 = vunpack.c.h.b16 %v3651
    %v4249 = vunpack.c.l.b16 %v3652
    %v4250 = vunpack.c.h.b16 %v3652
    %v4251 = vunpack.c.l.b16 %v3653
    %v4252 = vunpack.c.h.b16 %v3653
    %v4253 = vunpack.c.l.b16 %v3654
    %v4254 = vunpack.c.h.b16 %v3654
    %v4255 = vunpack.c.l.b16 %v3655
    %v4256 = vunpack.c.h.b16 %v3655
    %v4257 = vunpack.c.l.b16 %v3656
    %v4258 = vunpack.c.h.b16 %v3656
    %v4259 = vunpack.c.l.b16 %v3657
    %v4260 = vunpack.c.h.b16 %v3657
    %v4261 = vunpack.c.l.b16 %v3658
    %v4262 = vunpack.c.h.b16 %v3658
    %v4263 = vunpack.c.l.b16 %v3659
    %v4264 = vunpack.c.h.b16 %v3659
    %v4265 = vunpack.c.l.b16 %v3660
    %v4266 = vunpack.c.h.b16 %v3660
    %v4267 = vpack.c.b16 %v3873, %v3871
    %v4268 = vpack.c.b16 %v3874, %v3872
    %v4269 = vpack.c.b16 %v3877, %v3875
    %v4270 = vpack.c.b16 %v3878, %v3876
    %v4271 = vpack.c.b16 %v3881, %v3879
    %v4272 = vpack.c.b16 %v3882, %v3880
    %v4273 = vpack.c.b16 %v3885, %v3883
    %v4274 = vpack.c.b16 %v3886, %v3884
    %v4275 = vpack.c.b16 %v3889, %v3887
    %v4276 = vpack.c.b16 %v3890, %v3888
    %v4277 = vpack.c.b16 %v3893, %v3891
    %v4278 = vpack.c.b16 %v3894, %v3892
    %v4279 = vpack.c.b16 %v3897, %v3895
    %v4280 = vpack.c.b16 %v3898, %v3896
    %v4281 = vpack.c.b16 %v3901, %v3899
    %v4282 = vpack.c.b16 %v3902, %v3900
    %v4283 = vpack.c.b16 %v3905, %v3903
    %v4284 = vpack.c.b16 %v3906, %v3904
    %v4285 = vpack.c.b16 %v3909, %v3907
    %v4286 = vpack.c.b16 %v3910, %v3908
    %v4287 = vpack.c.b16 %v3913, %v3911
    %v4288 = vpack.c.b16 %v3914, %v3912
    %v4289 = vpack.c.b16 %v3917, %v3915
    %v4290 = vpack.c.b16 %v3918, %v3916
    %v4291 = vpack.c.b16 %v3921, %v3919
    %v4292 = vpack.c.b16 %v3922, %v3920
    %v4293 = vpack.c.b16 %v3925, %v3923
    %v4294 = vpack.c.b16 %v3926, %v3924
    %v4295 = vpack.c.b16 %v3929, %v3927
    %v4296 = vpack.c.b16 %v3930, %v3928
    %v4297 = vpack.c.b16 %v3933, %v3931
    %v4298 = vpack.c.b16 %v3934, %v3932
    %v4299 = vpack.c.b16 %v3937, %v3935
    %v4300 = vpack.c.b16 %v3938, %v3936
    %v4301 = vpack.c.b16 %v3941, %v3939
    %v4302 = vpack.c.b16 %v3942, %v3940
    %v4303 = vpack.c.b16 %v3945, %v3943
    %v4304 = vpack.c.b16 %v3946, %v3944
    %v4305 = vpack.c.b16 %v3949, %v3947
    %v4306 = vpack.c.b16 %v3950, %v3948
    %v4307 = vpack.c.b16 %v3953, %v3951
    %v4308 = vpack.c.b16 %v3954, %v3952
    %v4309 = vpack.c.b16 %v3957, %v3955
    %v4310 = vpack.c.b16 %v3958, %v3956
    %v4311 = vpack.c.b16 %v3961, %v3959
    %v4312 = vpack.c.b16 %v3962, %v3960
    %v4313 = vpack.c.b16 %v3965, %v3963
    %v4314 = vpack.c.b16 %v3966, %v3964
    %v4315 = vpack.c.b16 %v3969, %v3967
    %v4316 = vpack.c.b16 %v3970, %v3968
    %v4317 = vpack.c.b16 %v3973, %v3971
    %v4318 = vpack.c.b16 %v3974, %v3972
    %v4319 = vpack.c.b16 %v3977, %v3975
    %v4320 = vpack.c.b16 %v3978, %v3976
    %v4321 = vpack.c.b16 %v3981, %v3979
    %v4322 = vpack.c.b16 %v3982, %v3980
    %v4323 = vpack.c.b16 %v3985, %v3983
    %v4324 = vpack.c.b16 %v3986, %v3984
    %v4325 = vpack.c.b16 %v3989, %v3987
    %v4326 = vpack.c.b16 %v3990, %v3988
    %v4327 = vpack.c.b16 %v3993, %v3991
    %v4328 = vpack.c.b16 %v3994, %v3992
    %v4329 = vpack.c.b16 %v3997, %v3995
    %v4330 = vpack.c.b16 %v3998, %v3996
    %v4331 = vpack.c.b16 %v4001, %v3999
    %v4332 = vpack.c.b16 %v4002, %v4000
    %v4333 = vpack.c.b16 %v4005, %v4003
    %v4334 = vpack.c.b16 %v4006, %v4004
    %v4335 = vpack.c.b16 %v4009, %v4007
    %v4336 = vpack.c.b16 %v4010, %v4008
    %v4337 = vpack.c.b16 %v4013, %v4011
    %v4338 = vpack.c.b16 %v4014, %v4012
    %v4339 = vpack.c.b16 %v4017, %v4015
    %v4340 = vpack.c.b16 %v4018, %v4016
    %v4341 = vpack.c.b16 %v4021, %v4019
    %v4342 = vpack.c.b16 %v4022, %v4020
    %v4343 = vpack.c.b16 %v4025, %v4023
    %v4344 = vpack.c.b16 %v4026, %v4024
    %v4345 = vpack.c.b16 %v4029, %v4027
    %v4346 = vpack.c.b16 %v4030, %v4028
    %v4347 = vpack.c.b16 %v4033, %v4031
    %v4348 = vpack.c.b16 %v4034, %v4032
    %v4349 = vpack.c.b16 %v4037, %v4035
    %v4350 = vpack.c.b16 %v4038, %v4036
    %v4351 = vpack.c.b16 %v4041, %v4039
    %v4352 = vpack.c.b16 %v4042, %v4040
    %v4353 = vpack.c.b16 %v4045, %v4043
    %v4354 = vpack.c.b16 %v4046, %v4044
    %v4355 = vpack.c.b16 %v4049, %v4047
    %v4356 = vpack.c.b16 %v4050, %v4048
    %v4357 = vpack.c.b16 %v4053, %v4051
    %v4358 = vpack.c.b16 %v4054, %v4052
    %v4359 = vpack.c.b16 %v4057, %v4055
    %v4360 = vpack.c.b16 %v4058, %v4056
    %v4361 = vpack.c.b16 %v4061, %v4059
    %v4362 = vpack.c.b16 %v4062, %v4060
    %v4363 = vpack.c.b16 %v4065, %v4063
    %v4364 = vpack.c.b16 %v4066, %v4064
    %v4365 = vpack.c.b16 %v4069, %v4067
    %v4366 = vpack.c.b16 %v4070, %v4068
    %v4367 = vpack.c.b16 %v4073, %v4071
    %v4368 = vpack.c.b16 %v4074, %v4072
    %v4369 = vpack.c.b16 %v4077, %v4075
    %v4370 = vpack.c.b16 %v4078, %v4076
    %v4371 = vpack.c.b16 %v4081, %v4079
    %v4372 = vpack.c.b16 %v4082, %v4080
    %v4373 = vpack.c.b16 %v4085, %v4083
    %v4374 = vpack.c.b16 %v4086, %v4084
    %v4375 = vpack.c.b16 %v4089, %v4087
    %v4376 = vpack.c.b16 %v4090, %v4088
    %v4377 = vpack.c.b16 %v4093, %v4091
    %v4378 = vpack.c.b16 %v4094, %v4092
    %v4379 = vpack.c.b16 %v4097, %v4095
    %v4380 = vpack.c.b16 %v4098, %v4096
    %v4381 = vpack.c.b16 %v4101, %v4099
    %v4382 = vpack.c.b16 %v4102, %v4100
    %v4383 = vpack.c.b16 %v4105, %v4103
    %v4384 = vpack.c.b16 %v4106, %v4104
    %v4385 = vpack.c.b16 %v4109, %v4107
    %v4386 = vpack.c.b16 %v4110, %v4108
    %v4387 = vpack.c.b16 %v4113, %v4111
    %v4388 = vpack.c.b16 %v4114, %v4112
    %v4389 = vpack.c.b16 %v4117, %v4115
    %v4390 = vpack.c.b16 %v4118, %v4116
    %v4391 = vpack.c.b16 %v4121, %v4119
    %v4392 = vpack.c.b16 %v4122, %v4120
    %v4393 = vpack.c.b16 %v4125, %v4123
    %v4394 = vpack.c.b16 %v4126, %v4124
    %v4395 = vpack.c.b16 %v4129, %v4127
    %v4396 = vpack.c.b16 %v4130, %v4128
    %v4397 = vpack.c.b16 %v4133, %v4131
    %v4398 = vpack.c.b16 %v4134, %v4132
    %v4399 = vpack.c.b16 %v4137, %v4135
    %v4400 = vpack.c.b16 %v4138, %v4136
    %v4401 = vpack.c.b16 %v4141, %v4139
    %v4402 = vpack.c.b16 %v4142, %v4140
    %v4403 = vpack.c.b16 %v4145, %v4143
    %v4404 = vpack.c.b16 %v4146, %v4144
    %v4405 = vpack.c.b16 %v4149, %v4147
    %v4406 = vpack.c.b16 %v4150, %v4148
    %v4407 = vpack.c.b16 %v4153, %v4151
    %v4408 = vpack.c.b16 %v4154, %v4152
    %v4409 = vpack.c.b16 %v4157, %v4155
    %v4410 = vpack.c.b16 %v4158, %v4156
    %v4411 = vpack.c.b16 %v4161, %v4159
    %v4412 = vpack.c.b16 %v4162, %v4160
    %v4413 = vpack.c.b16 %v4165, %v4163
    %v4414 = vpack.c.b16 %v4166, %v4164
    %v4415 = vpack.c.b16 %v4169, %v4167
    %v4416 = vpack.c.b16 %v4170, %v4168
    %v4417 = vpack.c.b16 %v4173, %v4171
    %v4418 = vpack.c.b16 %v4174, %v4172
    %v4419 = vpack.c.b16 %v4177, %v4175
    %v4420 = vpack.c.b16 %v4178, %v4176
    %v4421 = vpack.c.b16 %v4181, %v4179
    %v4422 = vpack.c.b16 %v4182, %v4180
    %v4423 = vpack.c.b16 %v4185, %v4183
    %v4424 = vpack.c.b16 %v4186, %v4184
    %v4425 = vpack.c.b16 %v4189, %v4187
    %v4426 = vpack.c.b16 %v4190, %v4188
    %v4427 = vpack.c.b16 %v4193, %v4191
    %v4428 = vpack.c.b16 %v4194, %v4192
    %v4429 = vpack.c.b16 %v4197, %v4195
    %v4430 = vpack.c.b16 %v4198, %v4196
    %v4431 = vpack.c.b16 %v4201, %v4199
    %v4432 = vpack.c.b16 %v4202, %v4200
    %v4433 = vpack.c.b16 %v4205, %v4203
    %v4434 = vpack.c.b16 %v4206, %v4204
    %v4435 = vpack.c.b16 %v4209, %v4207
    %v4436 = vpack.c.b16 %v4210, %v4208
    %v4437 = vpack.c.b16 %v4213, %v4211
    %v4438 = vpack.c.b16 %v4214, %v4212
    %v4439 = vpack.c.b16 %v4217, %v4215
    %v4440 = vpack.c.b16 %v4218, %v4216
    %v4441 = vpack.c.b16 %v4221, %v4219
    %v4442 = vpack.c.b16 %v4222, %v4220
    %v4443 = vpack.c.b16 %v4225, %v4223
    %v4444 = vpack.c.b16 %v4226, %v4224
    %v4445 = vpack.c.b16 %v4229, %v4227
    %v4446 = vpack.c.b16 %v4230, %v4228
    %v4447 = vpack.c.b16 %v4233, %v4231
    %v4448 = vpack.c.b16 %v4234, %v4232
    %v4449 = vpack.c.b16 %v4237, %v4235
    %v4450 = vpack.c.b16 %v4238, %v4236
    %v4451 = vpack.c.b16 %v4241, %v4239
    %v4452 = vpack.c.b16 %v4242, %v4240
    %v4453 = vpack.c.b16 %v4245, %v4243
    %v4454 = vpack.c.b16 %v4246, %v4244
    %v4455 = vpack.c.b16 %v4249, %v4247
    %v4456 = vpack.c.b16 %v4250, %v4248
    %v4457 = vpack.c.b16 %v4253, %v4251
    %v4458 = vpack.c.b16 %v4254, %v4252
    %v4459 = vpack.c.b16 %v4257, %v4255
    %v4460 = vpack.c.b16 %v4258, %v4256
    %v4461 = vpack.c.b16 %v4261, %v4259
    %v4462 = vpack.c.b16 %v4262, %v4260
    %v4463 = vpack.c.b16 %v4265, %v4263
    %v4464 = vpack.c.b16 %v4266, %v4264
    %vm4663 = vcmask 392192
    %v4664 = vsel %vm4663, %v3458, 0
    %4666 = vmatprep.subr.bf16.mxu0 %v4282
    %4667 = vmatpush1.bf16.msra.mxu0 %v4281
    %4668 = vmatprep.subr.bf16.mxu0 %v4280
    %4669 = vmatpush1.bf16.msra.mxu0 %v4279
    %4670 = vmatprep.subr.bf16.mxu0 %v4278
    %4671 = vmatpush1.bf16.msra.mxu0 %v4277
    %4672 = vmatprep.subr.bf16.mxu0 %v4276
    %4673 = vmatpush1.bf16.msra.mxu0 %v4275
    %4674 = vmatprep.subr.bf16.mxu0 %v4274
    %4675 = vmatpush1.bf16.msra.mxu0 %v4273
    %4676 = vmatprep.subr.bf16.mxu0 %v4272
    %4677 = vmatpush1.bf16.msra.mxu0 %v4271
    %4678 = vmatprep.subr.bf16.mxu0 %v4270
    %4679 = vmatpush1.bf16.msra.mxu0 %v4269
    %4680 = vmatprep.subr.bf16.mxu0 %v4268
    %4681 = vmatpush1.bf16.msra.mxu0 %v4267
    %4682 = vmatprep.subr.bf16.mxu0 %v4298
    %4683 = vmatpush2.bf16.msra.mxu0 %v4297
    %4684 = vmatprep.subr.bf16.mxu0 %v4296
    %4685 = vmatpush2.bf16.msra.mxu0 %v4295
    %4686 = vmatprep.subr.bf16.mxu0 %v4294
    %4687 = vmatpush2.bf16.msra.mxu0 %v4293
    %4688 = vmatprep.subr.bf16.mxu0 %v4292
    %4689 = vmatpush2.bf16.msra.mxu0 %v4291
    %4690 = vmatprep.subr.bf16.mxu0 %v4290
    %4691 = vmatpush2.bf16.msra.mxu0 %v4289
    %4692 = vmatprep.subr.bf16.mxu0 %v4288
    %4693 = vmatpush2.bf16.msra.mxu0 %v4287
    %4694 = vmatprep.subr.bf16.mxu0 %v4286
    %4695 = vmatpush2.bf16.msra.mxu0 %v4285
    %4696 = vmatprep.subr.bf16.mxu0 %v4284
    %4697 = vmatpush2.bf16.msra.mxu0 %v4283
    %4698 = vmatprep.mubr.bf16.mxu0 %v3438
    %4699 = vmatmul.mubr.bf16.gmra.mxu0 %v3372
    %v4700 = vpop.f32.mrf.mxu0
    %v4701 = vadd.f32 %v3666, %v4700
    %v4702 = vpop.f32.mrf.mxu0
    %v4703 = vadd.f32 %v3670, %v4702
    %v4704 = vpop.f32.mrf.mxu0
    %v4705 = vpop.f32.mrf.mxu0
    %4706 = vdwg.mxu0
    %4707 = vmatprep.subr.bf16.mxu0 %v4314
    %4708 = vmatpush1.bf16.msra.mxu0 %v4313
    %4709 = vmatprep.subr.bf16.mxu0 %v4312
    %4710 = vmatpush1.bf16.msra.mxu0 %v4311
    %4711 = vmatprep.subr.bf16.mxu0 %v4310
    %4712 = vmatpush1.bf16.msra.mxu0 %v4309
    %4713 = vmatprep.subr.bf16.mxu0 %v4308
    %4714 = vmatpush1.bf16.msra.mxu0 %v4307
    %4715 = vmatprep.subr.bf16.mxu0 %v4306
    %4716 = vmatpush1.bf16.msra.mxu0 %v4305
    %4717 = vmatprep.subr.bf16.mxu0 %v4304
    %4718 = vmatpush1.bf16.msra.mxu0 %v4303
    %4719 = vmatprep.subr.bf16.mxu0 %v4302
    %4720 = vmatpush1.bf16.msra.mxu0 %v4301
    %4721 = vmatprep.subr.bf16.mxu0 %v4300
    %4722 = vmatpush1.bf16.msra.mxu0 %v4299
    %4723 = vmatprep.subr.bf16.mxu0 %v4330
    %4724 = vmatpush2.bf16.msra.mxu0 %v4329
    %4725 = vmatprep.subr.bf16.mxu0 %v4328
    %4726 = vmatpush2.bf16.msra.mxu0 %v4327
    %4727 = vmatprep.subr.bf16.mxu0 %v4326
    %4728 = vmatpush2.bf16.msra.mxu0 %v4325
    %4729 = vmatprep.subr.bf16.mxu0 %v4324
    %4730 = vmatpush2.bf16.msra.mxu0 %v4323
    %4731 = vmatprep.subr.bf16.mxu0 %v4322
    %4732 = vmatpush2.bf16.msra.mxu0 %v4321
    %4733 = vmatprep.subr.bf16.mxu0 %v4320
    %4734 = vmatpush2.bf16.msra.mxu0 %v4319
    %4735 = vmatprep.subr.bf16.mxu0 %v4318
    %4736 = vmatpush2.bf16.msra.mxu0 %v4317
    %4737 = vmatprep.subr.bf16.mxu0 %v4316
    %4738 = vmatpush2.bf16.msra.mxu0 %v4315
    %4739 = vmatprep.mubr.bf16.mxu0 %v3442
    %4740 = vmatmul.mubr.bf16.gmra.mxu0 %v3382
    %v4741 = vpop.f32.mrf.mxu0
    %v4742 = vadd.f32 %v4701, %v4741
    %v4743 = vpop.f32.mrf.mxu0
    %v4744 = vadd.f32 %v4703, %v4743
    %v4745 = vpop.f32.mrf.mxu0
    %v4746 = vpop.f32.mrf.mxu0
    %4747 = vdwg.mxu0
    %4748 = vmatprep.subr.bf16.mxu0 %v4346
    %4749 = vmatpush1.bf16.msra.mxu0 %v4345
    %4750 = vmatprep.subr.bf16.mxu0 %v4344
    %4751 = vmatpush1.bf16.msra.mxu0 %v4343
    %4752 = vmatprep.subr.bf16.mxu0 %v4342
    %4753 = vmatpush1.bf16.msra.mxu0 %v4341
    %4754 = vmatprep.subr.bf16.mxu0 %v4340
    %4755 = vmatpush1.bf16.msra.mxu0 %v4339
    %4756 = vmatprep.subr.bf16.mxu0 %v4338
    %4757 = vmatpush1.bf16.msra.mxu0 %v4337
    %4758 = vmatprep.subr.bf16.mxu0 %v4336
    %4759 = vmatpush1.bf16.msra.mxu0 %v4335
    %4760 = vmatprep.subr.bf16.mxu0 %v4334
    %4761 = vmatpush1.bf16.msra.mxu0 %v4333
    %4762 = vmatprep.subr.bf16.mxu0 %v4332
    %4763 = vmatpush1.bf16.msra.mxu0 %v4331
    %4764 = vmatprep.subr.bf16.mxu0 %v4362
    %4765 = vmatpush2.bf16.msra.mxu0 %v4361
    %4766 = vmatprep.subr.bf16.mxu0 %v4360
    %4767 = vmatpush2.bf16.msra.mxu0 %v4359
    %4768 = vmatprep.subr.bf16.mxu0 %v4358
    %4769 = vmatpush2.bf16.msra.mxu0 %v4357
    %4770 = vmatprep.subr.bf16.mxu0 %v4356
    %4771 = vmatpush2.bf16.msra.mxu0 %v4355
    %4772 = vmatprep.subr.bf16.mxu0 %v4354
    %4773 = vmatpush2.bf16.msra.mxu0 %v4353
    %4774 = vmatprep.subr.bf16.mxu0 %v4352
    %4775 = vmatpush2.bf16.msra.mxu0 %v4351
    %4776 = vmatprep.subr.bf16.mxu0 %v4350
    %4777 = vmatpush2.bf16.msra.mxu0 %v4349
    %4778 = vmatprep.subr.bf16.mxu0 %v4348
    %4779 = vmatpush2.bf16.msra.mxu0 %v4347
    %4780 = vmatprep.mubr.bf16.mxu0 %v3446
    %4781 = vmatmul.mubr.bf16.gmra.mxu0 %v3390
    %v4782 = vpop.f32.mrf.mxu0
    %v4783 = vadd.f32 %v4742, %v4782
    %v4784 = vpop.f32.mrf.mxu0
    %v4785 = vadd.f32 %v4744, %v4784
    %v4786 = vpop.f32.mrf.mxu0
    %v4787 = vpop.f32.mrf.mxu0
    %4788 = vdwg.mxu0
    %4789 = vmatprep.subr.bf16.mxu0 %v4378
    %4790 = vmatpush1.bf16.msra.mxu0 %v4377
    %4791 = vmatprep.subr.bf16.mxu0 %v4376
    %4792 = vmatpush1.bf16.msra.mxu0 %v4375
    %4793 = vmatprep.subr.bf16.mxu0 %v4374
    %4794 = vmatpush1.bf16.msra.mxu0 %v4373
    %4795 = vmatprep.subr.bf16.mxu0 %v4372
    %4796 = vmatpush1.bf16.msra.mxu0 %v4371
    %4797 = vmatprep.subr.bf16.mxu0 %v4370
    %4798 = vmatpush1.bf16.msra.mxu0 %v4369
    %4799 = vmatprep.subr.bf16.mxu0 %v4368
    %4800 = vmatpush1.bf16.msra.mxu0 %v4367
    %4801 = vmatprep.subr.bf16.mxu0 %v4366
    %4802 = vmatpush1.bf16.msra.mxu0 %v4365
    %4803 = vmatprep.subr.bf16.mxu0 %v4364
    %4804 = vmatpush1.bf16.msra.mxu0 %v4363
    %4805 = vmatprep.subr.bf16.mxu0 %v4394
    %4806 = vmatpush2.bf16.msra.mxu0 %v4393
    %4807 = vmatprep.subr.bf16.mxu0 %v4392
    %4808 = vmatpush2.bf16.msra.mxu0 %v4391
    %4809 = vmatprep.subr.bf16.mxu0 %v4390
    %4810 = vmatpush2.bf16.msra.mxu0 %v4389
    %4811 = vmatprep.subr.bf16.mxu0 %v4388
    %4812 = vmatpush2.bf16.msra.mxu0 %v4387
    %4813 = vmatprep.subr.bf16.mxu0 %v4386
    %4814 = vmatpush2.bf16.msra.mxu0 %v4385
    %4815 = vmatprep.subr.bf16.mxu0 %v4384
    %4816 = vmatpush2.bf16.msra.mxu0 %v4383
    %4817 = vmatprep.subr.bf16.mxu0 %v4382
    %4818 = vmatpush2.bf16.msra.mxu0 %v4381
    %4819 = vmatprep.subr.bf16.mxu0 %v4380
    %4820 = vmatpush2.bf16.msra.mxu0 %v4379
    %4821 = vmatprep.mubr.bf16.mxu0 %v3400
    %4822 = vmatmul.mubr.bf16.gmra.mxu0 %v3398
    %v4823 = vpop.f32.mrf.mxu0
    %v4824 = vadd.f32 %v4783, %v4823
    %v4825 = vpop.f32.mrf.mxu0
    %v4826 = vadd.f32 %v4785, %v4825
    %v4827 = vpop.f32.mrf.mxu0
    %v4828 = vpop.f32.mrf.mxu0
    %4829 = vdwg.mxu0
    %4830 = vmatprep.subr.bf16.mxu0 %v4410
    %4831 = vmatpush1.bf16.msra.mxu0 %v4409
    %4832 = vmatprep.subr.bf16.mxu0 %v4408
    %4833 = vmatpush1.bf16.msra.mxu0 %v4407
    %4834 = vmatprep.subr.bf16.mxu0 %v4406
    %4835 = vmatpush1.bf16.msra.mxu0 %v4405
    %4836 = vmatprep.subr.bf16.mxu0 %v4404
    %4837 = vmatpush1.bf16.msra.mxu0 %v4403
    %4838 = vmatprep.subr.bf16.mxu0 %v4402
    %4839 = vmatpush1.bf16.msra.mxu0 %v4401
    %4840 = vmatprep.subr.bf16.mxu0 %v4400
    %4841 = vmatpush1.bf16.msra.mxu0 %v4399
    %4842 = vmatprep.subr.bf16.mxu0 %v4398
    %4843 = vmatpush1.bf16.msra.mxu0 %v4397
    %4844 = vmatprep.subr.bf16.mxu0 %v4396
    %4845 = vmatpush1.bf16.msra.mxu0 %v4395
    %4846 = vmatprep.subr.bf16.mxu0 %v4426
    %4847 = vmatpush2.bf16.msra.mxu0 %v4425
    %4848 = vmatprep.subr.bf16.mxu0 %v4424
    %4849 = vmatpush2.bf16.msra.mxu0 %v4423
    %4850 = vmatprep.subr.bf16.mxu0 %v4422
    %4851 = vmatpush2.bf16.msra.mxu0 %v4421
    %4852 = vmatprep.subr.bf16.mxu0 %v4420
    %4853 = vmatpush2.bf16.msra.mxu0 %v4419
    %4854 = vmatprep.subr.bf16.mxu0 %v4418
    %4855 = vmatpush2.bf16.msra.mxu0 %v4417
    %4856 = vmatprep.subr.bf16.mxu0 %v4416
    %4857 = vmatpush2.bf16.msra.mxu0 %v4415
    %4858 = vmatprep.subr.bf16.mxu0 %v4414
    %4859 = vmatpush2.bf16.msra.mxu0 %v4413
    %4860 = vmatprep.subr.bf16.mxu0 %v4412
    %4861 = vmatpush2.bf16.msra.mxu0 %v4411
    %4862 = vmatprep.mubr.bf16.mxu0 %v3409
    %4863 = vmatmul.mubr.bf16.gmra.mxu0 %v3450
    %v4864 = vpop.f32.mrf.mxu0
    %v4865 = vadd.f32 %v4824, %v4864
    %v4866 = vpop.f32.mrf.mxu0
    %v4867 = vadd.f32 %v4826, %v4866
    %v4868 = vpop.f32.mrf.mxu0
    %v4869 = vpop.f32.mrf.mxu0
    %4870 = vdwg.mxu0
    %4871 = vmatprep.subr.bf16.mxu0 %v4442
    %4872 = vmatpush1.bf16.msra.mxu0 %v4441
    %4873 = vmatprep.subr.bf16.mxu0 %v4440
    %4874 = vmatpush1.bf16.msra.mxu0 %v4439
    %4875 = vmatprep.subr.bf16.mxu0 %v4438
    %4876 = vmatpush1.bf16.msra.mxu0 %v4437
    %4877 = vmatprep.subr.bf16.mxu0 %v4436
    %4878 = vmatpush1.bf16.msra.mxu0 %v4435
    %4879 = vmatprep.subr.bf16.mxu0 %v4434
    %4880 = vmatpush1.bf16.msra.mxu0 %v4433
    %4881 = vmatprep.subr.bf16.mxu0 %v4432
    %4882 = vmatpush1.bf16.msra.mxu0 %v4431
    %4883 = vmatprep.subr.bf16.mxu0 %v4430
    %4884 = vmatpush1.bf16.msra.mxu0 %v4429
    %4885 = vmatprep.subr.bf16.mxu0 %v4428
    %4886 = vmatpush1.bf16.msra.mxu0 %v4427
    %4887 = vmatprep.subr.bf16.mxu0 %v4458
    %4888 = vmatpush2.bf16.msra.mxu0 %v4457
    %4889 = vmatprep.subr.bf16.mxu0 %v4456
    %4890 = vmatpush2.bf16.msra.mxu0 %v4455
    %4891 = vmatprep.subr.bf16.mxu0 %v4454
    %4892 = vmatpush2.bf16.msra.mxu0 %v4453
    %4893 = vmatprep.subr.bf16.mxu0 %v4452
    %4894 = vmatpush2.bf16.msra.mxu0 %v4451
    %4895 = vmatprep.subr.bf16.mxu0 %v4450
    %4896 = vmatpush2.bf16.msra.mxu0 %v4449
    %4897 = vmatprep.subr.bf16.mxu0 %v4448
    %4898 = vmatpush2.bf16.msra.mxu0 %v4447
    %4899 = vmatprep.subr.bf16.mxu0 %v4446
    %4900 = vmatpush2.bf16.msra.mxu0 %v4445
    %4901 = vmatprep.subr.bf16.mxu0 %v4444
    %4902 = vmatpush2.bf16.msra.mxu0 %v4443
    %4903 = vmatprep.mubr.bf16.mxu0 %v3417
    %4904 = vmatmul.mubr.bf16.gmra.mxu0 %v3454
    %v4905 = vpop.f32.mrf.mxu0
    %v4906 = vadd.f32 %v4865, %v4905
    %v4907 = vpop.f32.mrf.mxu0
    %v4908 = vadd.f32 %v4867, %v4907
    %v4909 = vpop.f32.mrf.mxu0
    %v4910 = vpop.f32.mrf.mxu0
    %4911 = vdwg.mxu0
    %4912 = vmatprep.subr.bf16.mxu0 0
    %4913 = vmatpush1.bf16.msra.mxu0 0
    %4914 = vmatprep.subr.bf16.mxu0 0
    %4915 = vmatpush1.bf16.msra.mxu0 0
    %4916 = vmatprep.subr.bf16.mxu0 0
    %4917 = vmatpush1.bf16.msra.mxu0 0
    %4918 = vmatprep.subr.bf16.mxu0 0
    %4919 = vmatpush1.bf16.msra.mxu0 0
    %4920 = vmatprep.subr.bf16.mxu0 0
    %4921 = vmatpush1.bf16.msra.mxu0 0
    %4922 = vmatprep.subr.bf16.mxu0 %v4464
    %4923 = vmatpush1.bf16.msra.mxu0 %v4463
    %4924 = vmatprep.subr.bf16.mxu0 %v4462
    %4925 = vmatpush1.bf16.msra.mxu0 %v4461
    %4926 = vmatprep.subr.bf16.mxu0 %v4460
    %4927 = vmatpush1.bf16.msra.mxu0 %v4459
    %4928 = vmatprep.subr.bf16.mxu0 0
    %4929 = vmatpush2.bf16.msra.mxu0 0
    %4930 = vmatprep.subr.bf16.mxu0 0
    %4931 = vmatpush2.bf16.msra.mxu0 0
    %4932 = vmatprep.subr.bf16.mxu0 0
    %4933 = vmatpush2.bf16.msra.mxu0 0
    %4934 = vmatprep.subr.bf16.mxu0 0
    %4935 = vmatpush2.bf16.msra.mxu0 0
    %4936 = vmatprep.subr.bf16.mxu0 0
    %4937 = vmatpush2.bf16.msra.mxu0 0
    %4938 = vmatprep.subr.bf16.mxu0 0
    %4939 = vmatpush2.bf16.msra.mxu0 0
    %4940 = vmatprep.subr.bf16.mxu0 0
    %4941 = vmatpush2.bf16.msra.mxu0 0
    %4942 = vmatprep.subr.bf16.mxu0 0
    %4943 = vmatpush2.bf16.msra.mxu0 0
    %4944 = vmatprep.mubr.bf16.mxu0 0
    %4945 = vmatmul.mubr.bf16.gmra.mxu0 %v4664
    %v4946 = vpop.f32.mrf.mxu0
    %v4947 = vadd.f32 %v4906, %v4946
    %v4948 = vpop.f32.mrf.mxu0
    %v4949 = vadd.f32 %v4908, %v4948
    %v4950 = vpop.f32.mrf.mxu0
    %v4951 = vpop.f32.mrf.mxu0
    %4952 = vdwg.mxu0
    %v4953 = vld [vmem:[%s2] sm:$0x3]
    %v4954 = vmul.f32 %v4949, 0.5
    %v4955 = vmul.f32 %v4954, 1.442695
    %v4956 = vpow.pop %v4955
    %v4957 = vmul.f32 %v4953, %v4956
    %v4958 = vadd.f32 %v4957, %v4947
    %v4959 = vpack.c.bf16 %v4958, %v4958
    %s4960 = smul.u32 4, 18
    %s4961 = smul.u32 %s4960, 13
    %s4962 = sshll.u32 %s4961, 4
    %4963 = dma.done %s817, %s4962
    %v4964 = vld [vmem:[#allocation4] sm:$0xff]
    %v4965 = vld [vmem:[#allocation4 + $0x8] sm:$0xff]
    %v4966 = vld [vmem:[#allocation4 + $0x10] sm:$0xff]
    %v4967 = vld [vmem:[#allocation4 + $0x18] sm:$0xff]
    %v4968 = vld [vmem:[#allocation4 + $0x20] sm:$0xff]
    %v4969 = vld [vmem:[#allocation4 + $0x28] sm:$0xff]
    %v4970 = vld [vmem:[#allocation4 + $0x30] sm:$0xf]
    %v4971 = vld [vmem:[#allocation4 + $0x34] sm:$0xff]
    %v4972 = vld [vmem:[#allocation4 + $0x3c] sm:$0xff]
    %v4973 = vld [vmem:[#allocation4 + $0x44] sm:$0xff]
    %v4974 = vld [vmem:[#allocation4 + $0x4c] sm:$0xff]
    %v4975 = vld [vmem:[#allocation4 + $0x54] sm:$0xff]
    %v4976 = vld [vmem:[#allocation4 + $0x5c] sm:$0xff]
    %v4977 = vld [vmem:[#allocation4 + $0x64] sm:$0xf]
    %v4978 = vld [vmem:[#allocation4 + $0x68] sm:$0xff]
    %v4979 = vld [vmem:[#allocation4 + $0x70] sm:$0xff]
    %v4980 = vld [vmem:[#allocation4 + $0x78] sm:$0xff]
    %v4981 = vld [vmem:[#allocation4 + $0x80] sm:$0xff]
    %v4982 = vld [vmem:[#allocation4 + $0x88] sm:$0xff]
    %v4983 = vld [vmem:[#allocation4 + $0x90] sm:$0xff]
    %v4984 = vld [vmem:[#allocation4 + $0x98] sm:$0xf]
    %v4985 = vld [vmem:[#allocation4 + $0x9c] sm:$0xff]
    %v4986 = vld [vmem:[#allocation4 + $0xa4] sm:$0xff]
    %v4987 = vld [vmem:[#allocation4 + $0xac] sm:$0xff]
    %v4988 = vld [vmem:[#allocation4 + $0xb4] sm:$0xff]
    %v4989 = vld [vmem:[#allocation4 + $0xbc] sm:$0xff]
    %v4990 = vld [vmem:[#allocation4 + $0xc4] sm:$0xff]
    %v4991 = vld [vmem:[#allocation4 + $0xcc] sm:$0xf]
    %v4992 = vld [vmem:[#allocation4 + $0xd0] sm:$0xff]
    %v4993 = vld [vmem:[#allocation4 + $0xd8] sm:$0xff]
    %v4994 = vld [vmem:[#allocation4 + $0xe0] sm:$0xff]
    %v4995 = vld [vmem:[#allocation4 + $0xe8] sm:$0xff]
    %v4996 = vld [vmem:[#allocation4 + $0xf0] sm:$0xff]
    %v4997 = vld [vmem:[#allocation4 + $0xf8] sm:$0xff]
    %v4998 = vld [vmem:[#allocation4 + $0x100] sm:$0xf]
    %v4999 = vld [vmem:[#allocation4 + $0x104] sm:$0xff]
    %v5000 = vld [vmem:[#allocation4 + $0x10c] sm:$0xff]
    %v5001 = vld [vmem:[#allocation4 + $0x114] sm:$0xff]
    %v5002 = vld [vmem:[#allocation4 + $0x11c] sm:$0xff]
    %v5003 = vld [vmem:[#allocation4 + $0x124] sm:$0xff]
    %v5004 = vld [vmem:[#allocation4 + $0x12c] sm:$0xff]
    %v5005 = vld [vmem:[#allocation4 + $0x134] sm:$0xf]
    %v5006 = vld [vmem:[#allocation4 + $0x138] sm:$0xff]
    %v5007 = vld [vmem:[#allocation4 + $0x140] sm:$0xff]
    %v5008 = vld [vmem:[#allocation4 + $0x148] sm:$0xff]
    %v5009 = vld [vmem:[#allocation4 + $0x150] sm:$0xff]
    %v5010 = vld [vmem:[#allocation4 + $0x158] sm:$0xff]
    %v5011 = vld [vmem:[#allocation4 + $0x160] sm:$0xff]
    %v5012 = vld [vmem:[#allocation4 + $0x168] sm:$0xf]
    %v5013 = vld [vmem:[#allocation4 + $0x16c] sm:$0xff]
    %v5014 = vld [vmem:[#allocation4 + $0x174] sm:$0xff]
    %v5015 = vld [vmem:[#allocation4 + $0x17c] sm:$0xff]
    %v5016 = vld [vmem:[#allocation4 + $0x184] sm:$0xff]
    %v5017 = vld [vmem:[#allocation4 + $0x18c] sm:$0xff]
    %v5018 = vld [vmem:[#allocation4 + $0x194] sm:$0xff]
    %v5019 = vld [vmem:[#allocation4 + $0x19c] sm:$0xf]
    %v5020 = vld [vmem:[#allocation4 + $0x1a0] sm:$0xff]
    %v5021 = vld [vmem:[#allocation4 + $0x1a8] sm:$0xff]
    %v5022 = vld [vmem:[#allocation4 + $0x1b0] sm:$0xff]
    %v5023 = vld [vmem:[#allocation4 + $0x1b8] sm:$0xff]
    %v5024 = vld [vmem:[#allocation4 + $0x1c0] sm:$0xff]
    %v5025 = vld [vmem:[#allocation4 + $0x1c8] sm:$0xff]
    %v5026 = vld [vmem:[#allocation4 + $0x1d0] sm:$0xf]
    %v5027 = vld [vmem:[#allocation4 + $0x1d4] sm:$0xff]
    %v5028 = vld [vmem:[#allocation4 + $0x1dc] sm:$0xff]
    %v5029 = vld [vmem:[#allocation4 + $0x1e4] sm:$0xff]
    %v5030 = vld [vmem:[#allocation4 + $0x1ec] sm:$0xff]
    %v5031 = vld [vmem:[#allocation4 + $0x1f4] sm:$0xff]
    %v5032 = vld [vmem:[#allocation4 + $0x1fc] sm:$0xff]
    %v5033 = vld [vmem:[#allocation4 + $0x204] sm:$0xf]
    %v5034 = vld [vmem:[#allocation4 + $0x208] sm:$0xff]
    %v5035 = vld [vmem:[#allocation4 + $0x210] sm:$0xff]
    %v5036 = vld [vmem:[#allocation4 + $0x218] sm:$0xff]
    %v5037 = vld [vmem:[#allocation4 + $0x220] sm:$0xff]
    %v5038 = vld [vmem:[#allocation4 + $0x228] sm:$0xff]
    %v5039 = vld [vmem:[#allocation4 + $0x230] sm:$0xff]
    %v5040 = vld [vmem:[#allocation4 + $0x238] sm:$0xf]
    %v5041 = vld [vmem:[#allocation4 + $0x23c] sm:$0xff]
    %v5042 = vld [vmem:[#allocation4 + $0x244] sm:$0xff]
    %v5043 = vld [vmem:[#allocation4 + $0x24c] sm:$0xff]
    %v5044 = vld [vmem:[#allocation4 + $0x254] sm:$0xff]
    %v5045 = vld [vmem:[#allocation4 + $0x25c] sm:$0xff]
    %v5046 = vld [vmem:[#allocation4 + $0x264] sm:$0xff]
    %v5047 = vld [vmem:[#allocation4 + $0x26c] sm:$0xf]
    %v5048 = vld [vmem:[#allocation4 + $0x270] sm:$0xff]
    %v5049 = vld [vmem:[#allocation4 + $0x278] sm:$0xff]
    %v5050 = vld [vmem:[#allocation4 + $0x280] sm:$0xff]
    %v5051 = vld [vmem:[#allocation4 + $0x288] sm:$0xff]
    %v5052 = vld [vmem:[#allocation4 + $0x290] sm:$0xff]
    %v5053 = vld [vmem:[#allocation4 + $0x298] sm:$0xff]
    %v5054 = vld [vmem:[#allocation4 + $0x2a0] sm:$0xf]
    %v5055 = vld [vmem:[#allocation4 + $0x2a4] sm:$0xff]
    %v5056 = vld [vmem:[#allocation4 + $0x2ac] sm:$0xff]
    %v5057 = vld [vmem:[#allocation4 + $0x2b4] sm:$0xff]
    %v5058 = vld [vmem:[#allocation4 + $0x2bc] sm:$0xff]
    %v5059 = vld [vmem:[#allocation4 + $0x2c4] sm:$0xff]
    %v5060 = vld [vmem:[#allocation4 + $0x2cc] sm:$0xff]
    %v5061 = vld [vmem:[#allocation4 + $0x2d4] sm:$0xf]
    %v5062 = vld [vmem:[#allocation4 + $0x2d8] sm:$0xff]
    %v5063 = vld [vmem:[#allocation4 + $0x2e0] sm:$0xff]
    %v5064 = vld [vmem:[#allocation4 + $0x2e8] sm:$0xff]
    %v5065 = vld [vmem:[#allocation4 + $0x2f0] sm:$0xff]
    %v5066 = vld [vmem:[#allocation4 + $0x2f8] sm:$0xff]
    %v5067 = vld [vmem:[#allocation4 + $0x300] sm:$0xff]
    %v5068 = vld [vmem:[#allocation4 + $0x308] sm:$0xf]
    %v5069 = vld [vmem:[#allocation4 + $0x30c] sm:$0xff]
    %v5070 = vld [vmem:[#allocation4 + $0x314] sm:$0xff]
    %v5071 = vld [vmem:[#allocation4 + $0x31c] sm:$0xff]
    %v5072 = vld [vmem:[#allocation4 + $0x324] sm:$0xff]
    %v5073 = vld [vmem:[#allocation4 + $0x32c] sm:$0xff]
    %v5074 = vld [vmem:[#allocation4 + $0x334] sm:$0xff]
    %v5075 = vld [vmem:[#allocation4 + $0x33c] sm:$0xf]
    %v5076 = vld [vmem:[#allocation4 + $0x340] sm:$0xff]
    %v5077 = vld [vmem:[#allocation4 + $0x348] sm:$0xff]
    %v5078 = vld [vmem:[#allocation4 + $0x350] sm:$0xff]
    %v5079 = vld [vmem:[#allocation4 + $0x358] sm:$0xff]
    %v5080 = vld [vmem:[#allocation4 + $0x360] sm:$0xff]
    %v5081 = vld [vmem:[#allocation4 + $0x368] sm:$0xff]
    %v5082 = vld [vmem:[#allocation4 + $0x370] sm:$0xf]
    %v5083 = vld [vmem:[#allocation4 + $0x374] sm:$0xff]
    %v5084 = vld [vmem:[#allocation4 + $0x37c] sm:$0xff]
    %v5085 = vld [vmem:[#allocation4 + $0x384] sm:$0xff]
    %v5086 = vld [vmem:[#allocation4 + $0x38c] sm:$0xff]
    %v5087 = vld [vmem:[#allocation4 + $0x394] sm:$0xff]
    %v5088 = vld [vmem:[#allocation4 + $0x39c] sm:$0xff]
    %v5089 = vld [vmem:[#allocation4 + $0x3a4] sm:$0xf]
    %v5090 = vld [vmem:[%s9] sm:$0xff]
    %v5091 = vld [vmem:[%s9 + $0x8] sm:$0x1f]
    %v5094 = vlaneseq
    %v5095 = vshrl.u32 %v5094, 7
    %v5096 = vsub.s32 0, %v5095
    %v5097 = vrot.slane %v5090, %v5096
    %v5098 = vlaneseq
    %v5099 = vshrl.u32 %v5098, 7
    %v5100 = vsub.s32 1, %v5099
    %v5101 = vrot.slane %v5090, %v5100
    %v5102 = vlaneseq
    %v5103 = vshrl.u32 %v5102, 7
    %v5104 = vsub.s32 2, %v5103
    %v5105 = vrot.slane %v5090, %v5104
    %v5106 = vlaneseq
    %v5107 = vshrl.u32 %v5106, 7
    %v5108 = vsub.s32 3, %v5107
    %v5109 = vrot.slane %v5090, %v5108
    %v5110 = vlaneseq
    %v5111 = vshrl.u32 %v5110, 7
    %v5112 = vsub.s32 4, %v5111
    %v5113 = vrot.slane %v5090, %v5112
    %v5114 = vlaneseq
    %v5115 = vshrl.u32 %v5114, 7
    %v5116 = vsub.s32 5, %v5115
    %v5117 = vrot.slane %v5090, %v5116
    %v5118 = vlaneseq
    %v5119 = vshrl.u32 %v5118, 7
    %v5120 = vsub.s32 6, %v5119
    %v5121 = vrot.slane %v5090, %v5120
    %v5122 = vlaneseq
    %v5123 = vshrl.u32 %v5122, 7
    %v5124 = vsub.s32 7, %v5123
    %v5125 = vrot.slane %v5090, %v5124
    %v5126 = vlaneseq
    %v5127 = vshrl.u32 %v5126, 7
    %v5128 = vsub.s32 0, %v5127
    %v5129 = vrot.slane %v5091, %v5128
    %v5130 = vlaneseq
    %v5131 = vshrl.u32 %v5130, 7
    %v5132 = vsub.s32 1, %v5131
    %v5133 = vrot.slane %v5091, %v5132
    %v5134 = vlaneseq
    %v5135 = vshrl.u32 %v5134, 7
    %v5136 = vsub.s32 2, %v5135
    %v5137 = vrot.slane %v5091, %v5136
    %v5138 = vlaneseq
    %v5139 = vshrl.u32 %v5138, 7
    %v5140 = vsub.s32 3, %v5139
    %v5141 = vrot.slane %v5091, %v5140
    %v5142 = vlaneseq
    %v5143 = vshrl.u32 %v5142, 7
    %v5144 = vsub.s32 4, %v5143
    %v5145 = vrot.slane %v5091, %v5144
    %v5285 = vunpack.c.l.b16 %v4964
    %v5286 = vunpack.c.h.b16 %v4964
    %v5287 = vunpack.c.l.b16 %v4965
    %v5288 = vunpack.c.h.b16 %v4965
    %v5289 = vunpack.c.l.b16 %v4966
    %v5290 = vunpack.c.h.b16 %v4966
    %v5291 = vunpack.c.l.b16 %v4967
    %v5292 = vunpack.c.h.b16 %v4967
    %v5293 = vunpack.c.l.b16 %v4968
    %v5294 = vunpack.c.h.b16 %v4968
    %v5295 = vunpack.c.l.b16 %v4969
    %v5296 = vunpack.c.h.b16 %v4969
    %v5297 = vunpack.c.l.b16 %v4970
    %v5298 = vunpack.c.l.b16 %v4971
    %v5299 = vunpack.c.h.b16 %v4971
    %v5300 = vunpack.c.l.b16 %v4972
    %v5301 = vunpack.c.h.b16 %v4972
    %v5302 = vunpack.c.l.b16 %v4973
    %v5303 = vunpack.c.h.b16 %v4973
    %v5304 = vunpack.c.l.b16 %v4974
    %v5305 = vunpack.c.h.b16 %v4974
    %v5306 = vunpack.c.l.b16 %v4975
    %v5307 = vunpack.c.h.b16 %v4975
    %v5308 = vunpack.c.l.b16 %v4976
    %v5309 = vunpack.c.h.b16 %v4976
    %v5310 = vunpack.c.l.b16 %v4977
    %v5311 = vunpack.c.l.b16 %v4978
    %v5312 = vunpack.c.h.b16 %v4978
    %v5313 = vunpack.c.l.b16 %v4979
    %v5314 = vunpack.c.h.b16 %v4979
    %v5315 = vunpack.c.l.b16 %v4980
    %v5316 = vunpack.c.h.b16 %v4980
    %v5317 = vunpack.c.l.b16 %v4981
    %v5318 = vunpack.c.h.b16 %v4981
    %v5319 = vunpack.c.l.b16 %v4982
    %v5320 = vunpack.c.h.b16 %v4982
    %v5321 = vunpack.c.l.b16 %v4983
    %v5322 = vunpack.c.h.b16 %v4983
    %v5323 = vunpack.c.l.b16 %v4984
    %v5324 = vunpack.c.l.b16 %v4985
    %v5325 = vunpack.c.h.b16 %v4985
    %v5326 = vunpack.c.l.b16 %v4986
    %v5327 = vunpack.c.h.b16 %v4986
    %v5328 = vunpack.c.l.b16 %v4987
    %v5329 = vunpack.c.h.b16 %v4987
    %v5330 = vunpack.c.l.b16 %v4988
    %v5331 = vunpack.c.h.b16 %v4988
    %v5332 = vunpack.c.l.b16 %v4989
    %v5333 = vunpack.c.h.b16 %v4989
    %v5334 = vunpack.c.l.b16 %v4990
    %v5335 = vunpack.c.h.b16 %v4990
    %v5336 = vunpack.c.l.b16 %v4991
    %v5337 = vunpack.c.l.b16 %v4992
    %v5338 = vunpack.c.h.b16 %v4992
    %v5339 = vunpack.c.l.b16 %v4993
    %v5340 = vunpack.c.h.b16 %v4993
    %v5341 = vunpack.c.l.b16 %v4994
    %v5342 = vunpack.c.h.b16 %v4994
    %v5343 = vunpack.c.l.b16 %v4995
    %v5344 = vunpack.c.h.b16 %v4995
    %v5345 = vunpack.c.l.b16 %v4996
    %v5346 = vunpack.c.h.b16 %v4996
    %v5347 = vunpack.c.l.b16 %v4997
    %v5348 = vunpack.c.h.b16 %v4997
    %v5349 = vunpack.c.l.b16 %v4998
    %v5350 = vunpack.c.l.b16 %v4999
    %v5351 = vunpack.c.h.b16 %v4999
    %v5352 = vunpack.c.l.b16 %v5000
    %v5353 = vunpack.c.h.b16 %v5000
    %v5354 = vunpack.c.l.b16 %v5001
    %v5355 = vunpack.c.h.b16 %v5001
    %v5356 = vunpack.c.l.b16 %v5002
    %v5357 = vunpack.c.h.b16 %v5002
    %v5358 = vunpack.c.l.b16 %v5003
    %v5359 = vunpack.c.h.b16 %v5003
    %v5360 = vunpack.c.l.b16 %v5004
    %v5361 = vunpack.c.h.b16 %v5004
    %v5362 = vunpack.c.l.b16 %v5005
    %v5363 = vunpack.c.l.b16 %v5006
    %v5364 = vunpack.c.h.b16 %v5006
    %v5365 = vunpack.c.l.b16 %v5007
    %v5366 = vunpack.c.h.b16 %v5007
    %v5367 = vunpack.c.l.b16 %v5008
    %v5368 = vunpack.c.h.b16 %v5008
    %v5369 = vunpack.c.l.b16 %v5009
    %v5370 = vunpack.c.h.b16 %v5009
    %v5371 = vunpack.c.l.b16 %v5010
    %v5372 = vunpack.c.h.b16 %v5010
    %v5373 = vunpack.c.l.b16 %v5011
    %v5374 = vunpack.c.h.b16 %v5011
    %v5375 = vunpack.c.l.b16 %v5012
    %v5376 = vunpack.c.l.b16 %v5013
    %v5377 = vunpack.c.h.b16 %v5013
    %v5378 = vunpack.c.l.b16 %v5014
    %v5379 = vunpack.c.h.b16 %v5014
    %v5380 = vunpack.c.l.b16 %v5015
    %v5381 = vunpack.c.h.b16 %v5015
    %v5382 = vunpack.c.l.b16 %v5016
    %v5383 = vunpack.c.h.b16 %v5016
    %v5384 = vunpack.c.l.b16 %v5017
    %v5385 = vunpack.c.h.b16 %v5017
    %v5386 = vunpack.c.l.b16 %v5018
    %v5387 = vunpack.c.h.b16 %v5018
    %v5388 = vunpack.c.l.b16 %v5019
    %v5389 = vunpack.c.l.b16 %v5020
    %v5390 = vunpack.c.h.b16 %v5020
    %v5391 = vunpack.c.l.b16 %v5021
    %v5392 = vunpack.c.h.b16 %v5021
    %v5393 = vunpack.c.l.b16 %v5022
    %v5394 = vunpack.c.h.b16 %v5022
    %v5395 = vunpack.c.l.b16 %v5023
    %v5396 = vunpack.c.h.b16 %v5023
    %v5397 = vunpack.c.l.b16 %v5024
    %v5398 = vunpack.c.h.b16 %v5024
    %v5399 = vunpack.c.l.b16 %v5025
    %v5400 = vunpack.c.h.b16 %v5025
    %v5401 = vunpack.c.l.b16 %v5026
    %v5402 = vunpack.c.l.b16 %v5027
    %v5403 = vunpack.c.h.b16 %v5027
    %v5404 = vunpack.c.l.b16 %v5028
    %v5405 = vunpack.c.h.b16 %v5028
    %v5406 = vunpack.c.l.b16 %v5029
    %v5407 = vunpack.c.h.b16 %v5029
    %v5408 = vunpack.c.l.b16 %v5030
    %v5409 = vunpack.c.h.b16 %v5030
    %v5410 = vunpack.c.l.b16 %v5031
    %v5411 = vunpack.c.h.b16 %v5031
    %v5412 = vunpack.c.l.b16 %v5032
    %v5413 = vunpack.c.h.b16 %v5032
    %v5414 = vunpack.c.l.b16 %v5033
    %v5415 = vunpack.c.l.b16 %v5034
    %v5416 = vunpack.c.h.b16 %v5034
    %v5417 = vunpack.c.l.b16 %v5035
    %v5418 = vunpack.c.h.b16 %v5035
    %v5419 = vunpack.c.l.b16 %v5036
    %v5420 = vunpack.c.h.b16 %v5036
    %v5421 = vunpack.c.l.b16 %v5037
    %v5422 = vunpack.c.h.b16 %v5037
    %v5423 = vunpack.c.l.b16 %v5038
    %v5424 = vunpack.c.h.b16 %v5038
    %v5425 = vunpack.c.l.b16 %v5039
    %v5426 = vunpack.c.h.b16 %v5039
    %v5427 = vunpack.c.l.b16 %v5040
    %v5428 = vunpack.c.l.b16 %v5041
    %v5429 = vunpack.c.h.b16 %v5041
    %v5430 = vunpack.c.l.b16 %v5042
    %v5431 = vunpack.c.h.b16 %v5042
    %v5432 = vunpack.c.l.b16 %v5043
    %v5433 = vunpack.c.h.b16 %v5043
    %v5434 = vunpack.c.l.b16 %v5044
    %v5435 = vunpack.c.h.b16 %v5044
    %v5436 = vunpack.c.l.b16 %v5045
    %v5437 = vunpack.c.h.b16 %v5045
    %v5438 = vunpack.c.l.b16 %v5046
    %v5439 = vunpack.c.h.b16 %v5046
    %v5440 = vunpack.c.l.b16 %v5047
    %v5441 = vunpack.c.l.b16 %v5048
    %v5442 = vunpack.c.h.b16 %v5048
    %v5443 = vunpack.c.l.b16 %v5049
    %v5444 = vunpack.c.h.b16 %v5049
    %v5445 = vunpack.c.l.b16 %v5050
    %v5446 = vunpack.c.h.b16 %v5050
    %v5447 = vunpack.c.l.b16 %v5051
    %v5448 = vunpack.c.h.b16 %v5051
    %v5449 = vunpack.c.l.b16 %v5052
    %v5450 = vunpack.c.h.b16 %v5052
    %v5451 = vunpack.c.l.b16 %v5053
    %v5452 = vunpack.c.h.b16 %v5053
    %v5453 = vunpack.c.l.b16 %v5054
    %v5454 = vunpack.c.l.b16 %v5055
    %v5455 = vunpack.c.h.b16 %v5055
    %v5456 = vunpack.c.l.b16 %v5056
    %v5457 = vunpack.c.h.b16 %v5056
    %v5458 = vunpack.c.l.b16 %v5057
    %v5459 = vunpack.c.h.b16 %v5057
    %v5460 = vunpack.c.l.b16 %v5058
    %v5461 = vunpack.c.h.b16 %v5058
    %v5462 = vunpack.c.l.b16 %v5059
    %v5463 = vunpack.c.h.b16 %v5059
    %v5464 = vunpack.c.l.b16 %v5060
    %v5465 = vunpack.c.h.b16 %v5060
    %v5466 = vunpack.c.l.b16 %v5061
    %v5467 = vunpack.c.l.b16 %v5062
    %v5468 = vunpack.c.h.b16 %v5062
    %v5469 = vunpack.c.l.b16 %v5063
    %v5470 = vunpack.c.h.b16 %v5063
    %v5471 = vunpack.c.l.b16 %v5064
    %v5472 = vunpack.c.h.b16 %v5064
    %v5473 = vunpack.c.l.b16 %v5065
    %v5474 = vunpack.c.h.b16 %v5065
    %v5475 = vunpack.c.l.b16 %v5066
    %v5476 = vunpack.c.h.b16 %v5066
    %v5477 = vunpack.c.l.b16 %v5067
    %v5478 = vunpack.c.h.b16 %v5067
    %v5479 = vunpack.c.l.b16 %v5068
    %v5480 = vunpack.c.l.b16 %v5069
    %v5481 = vunpack.c.h.b16 %v5069
    %v5482 = vunpack.c.l.b16 %v5070
    %v5483 = vunpack.c.h.b16 %v5070
    %v5484 = vunpack.c.l.b16 %v5071
    %v5485 = vunpack.c.h.b16 %v5071
    %v5486 = vunpack.c.l.b16 %v5072
    %v5487 = vunpack.c.h.b16 %v5072
    %v5488 = vunpack.c.l.b16 %v5073
    %v5489 = vunpack.c.h.b16 %v5073
    %v5490 = vunpack.c.l.b16 %v5074
    %v5491 = vunpack.c.h.b16 %v5074
    %v5492 = vunpack.c.l.b16 %v5075
    %v5493 = vunpack.c.l.b16 %v5076
    %v5494 = vunpack.c.h.b16 %v5076
    %v5495 = vunpack.c.l.b16 %v5077
    %v5496 = vunpack.c.h.b16 %v5077
    %v5497 = vunpack.c.l.b16 %v5078
    %v5498 = vunpack.c.h.b16 %v5078
    %v5499 = vunpack.c.l.b16 %v5079
    %v5500 = vunpack.c.h.b16 %v5079
    %v5501 = vunpack.c.l.b16 %v5080
    %v5502 = vunpack.c.h.b16 %v5080
    %v5503 = vunpack.c.l.b16 %v5081
    %v5504 = vunpack.c.h.b16 %v5081
    %v5505 = vunpack.c.l.b16 %v5082
    %v5506 = vunpack.c.l.b16 %v5083
    %v5507 = vunpack.c.h.b16 %v5083
    %v5508 = vunpack.c.l.b16 %v5084
    %v5509 = vunpack.c.h.b16 %v5084
    %v5510 = vunpack.c.l.b16 %v5085
    %v5511 = vunpack.c.h.b16 %v5085
    %v5512 = vunpack.c.l.b16 %v5086
    %v5513 = vunpack.c.h.b16 %v5086
    %v5514 = vunpack.c.l.b16 %v5087
    %v5515 = vunpack.c.h.b16 %v5087
    %v5516 = vunpack.c.l.b16 %v5088
    %v5517 = vunpack.c.h.b16 %v5088
    %v5518 = vunpack.c.l.b16 %v5089
    %v5519 = vpack.c.b16 %v5298, %v5285
    %v5520 = vpack.c.b16 %v5299, %v5286
    %v5521 = vpack.c.b16 %v5300, %v5287
    %v5522 = vpack.c.b16 %v5301, %v5288
    %v5523 = vpack.c.b16 %v5302, %v5289
    %v5524 = vpack.c.b16 %v5303, %v5290
    %v5525 = vpack.c.b16 %v5304, %v5291
    %v5526 = vpack.c.b16 %v5305, %v5292
    %v5527 = vpack.c.b16 %v5306, %v5293
    %v5528 = vpack.c.b16 %v5307, %v5294
    %v5529 = vpack.c.b16 %v5308, %v5295
    %v5530 = vpack.c.b16 %v5309, %v5296
    %v5531 = vpack.c.b16 %v5310, %v5297
    %v5532 = vpack.c.b16 %v5324, %v5311
    %v5533 = vpack.c.b16 %v5325, %v5312
    %v5534 = vpack.c.b16 %v5326, %v5313
    %v5535 = vpack.c.b16 %v5327, %v5314
    %v5536 = vpack.c.b16 %v5328, %v5315
    %v5537 = vpack.c.b16 %v5329, %v5316
    %v5538 = vpack.c.b16 %v5330, %v5317
    %v5539 = vpack.c.b16 %v5331, %v5318
    %v5540 = vpack.c.b16 %v5332, %v5319
    %v5541 = vpack.c.b16 %v5333, %v5320
    %v5542 = vpack.c.b16 %v5334, %v5321
    %v5543 = vpack.c.b16 %v5335, %v5322
    %v5544 = vpack.c.b16 %v5336, %v5323
    %v5545 = vpack.c.b16 %v5350, %v5337
    %v5546 = vpack.c.b16 %v5351, %v5338
    %v5547 = vpack.c.b16 %v5352, %v5339
    %v5548 = vpack.c.b16 %v5353, %v5340
    %v5549 = vpack.c.b16 %v5354, %v5341
    %v5550 = vpack.c.b16 %v5355, %v5342
    %v5551 = vpack.c.b16 %v5356, %v5343
    %v5552 = vpack.c.b16 %v5357, %v5344
    %v5553 = vpack.c.b16 %v5358, %v5345
    %v5554 = vpack.c.b16 %v5359, %v5346
    %v5555 = vpack.c.b16 %v5360, %v5347
    %v5556 = vpack.c.b16 %v5361, %v5348
    %v5557 = vpack.c.b16 %v5362, %v5349
    %v5558 = vpack.c.b16 %v5376, %v5363
    %v5559 = vpack.c.b16 %v5377, %v5364
    %v5560 = vpack.c.b16 %v5378, %v5365
    %v5561 = vpack.c.b16 %v5379, %v5366
    %v5562 = vpack.c.b16 %v5380, %v5367
    %v5563 = vpack.c.b16 %v5381, %v5368
    %v5564 = vpack.c.b16 %v5382, %v5369
    %v5565 = vpack.c.b16 %v5383, %v5370
    %v5566 = vpack.c.b16 %v5384, %v5371
    %v5567 = vpack.c.b16 %v5385, %v5372
    %v5568 = vpack.c.b16 %v5386, %v5373
    %v5569 = vpack.c.b16 %v5387, %v5374
    %v5570 = vpack.c.b16 %v5388, %v5375
    %v5571 = vpack.c.b16 %v5402, %v5389
    %v5572 = vpack.c.b16 %v5403, %v5390
    %v5573 = vpack.c.b16 %v5404, %v5391
    %v5574 = vpack.c.b16 %v5405, %v5392
    %v5575 = vpack.c.b16 %v5406, %v5393
    %v5576 = vpack.c.b16 %v5407, %v5394
    %v5577 = vpack.c.b16 %v5408, %v5395
    %v5578 = vpack.c.b16 %v5409, %v5396
    %v5579 = vpack.c.b16 %v5410, %v5397
    %v5580 = vpack.c.b16 %v5411, %v5398
    %v5581 = vpack.c.b16 %v5412, %v5399
    %v5582 = vpack.c.b16 %v5413, %v5400
    %v5583 = vpack.c.b16 %v5414, %v5401
    %v5584 = vpack.c.b16 %v5428, %v5415
    %v5585 = vpack.c.b16 %v5429, %v5416
    %v5586 = vpack.c.b16 %v5430, %v5417
    %v5587 = vpack.c.b16 %v5431, %v5418
    %v5588 = vpack.c.b16 %v5432, %v5419
    %v5589 = vpack.c.b16 %v5433, %v5420
    %v5590 = vpack.c.b16 %v5434, %v5421
    %v5591 = vpack.c.b16 %v5435, %v5422
    %v5592 = vpack.c.b16 %v5436, %v5423
    %v5593 = vpack.c.b16 %v5437, %v5424
    %v5594 = vpack.c.b16 %v5438, %v5425
    %v5595 = vpack.c.b16 %v5439, %v5426
    %v5596 = vpack.c.b16 %v5440, %v5427
    %v5597 = vpack.c.b16 %v5454, %v5441
    %v5598 = vpack.c.b16 %v5455, %v5442
    %v5599 = vpack.c.b16 %v5456, %v5443
    %v5600 = vpack.c.b16 %v5457, %v5444
    %v5601 = vpack.c.b16 %v5458, %v5445
    %v5602 = vpack.c.b16 %v5459, %v5446
    %v5603 = vpack.c.b16 %v5460, %v5447
    %v5604 = vpack.c.b16 %v5461, %v5448
    %v5605 = vpack.c.b16 %v5462, %v5449
    %v5606 = vpack.c.b16 %v5463, %v5450
    %v5607 = vpack.c.b16 %v5464, %v5451
    %v5608 = vpack.c.b16 %v5465, %v5452
    %v5609 = vpack.c.b16 %v5466, %v5453
    %v5610 = vpack.c.b16 %v5480, %v5467
    %v5611 = vpack.c.b16 %v5481, %v5468
    %v5612 = vpack.c.b16 %v5482, %v5469
    %v5613 = vpack.c.b16 %v5483, %v5470
    %v5614 = vpack.c.b16 %v5484, %v5471
    %v5615 = vpack.c.b16 %v5485, %v5472
    %v5616 = vpack.c.b16 %v5486, %v5473
    %v5617 = vpack.c.b16 %v5487, %v5474
    %v5618 = vpack.c.b16 %v5488, %v5475
    %v5619 = vpack.c.b16 %v5489, %v5476
    %v5620 = vpack.c.b16 %v5490, %v5477
    %v5621 = vpack.c.b16 %v5491, %v5478
    %v5622 = vpack.c.b16 %v5492, %v5479
    %v5623 = vpack.c.b16 %v5506, %v5493
    %v5624 = vpack.c.b16 %v5507, %v5494
    %v5625 = vpack.c.b16 %v5508, %v5495
    %v5626 = vpack.c.b16 %v5509, %v5496
    %v5627 = vpack.c.b16 %v5510, %v5497
    %v5628 = vpack.c.b16 %v5511, %v5498
    %v5629 = vpack.c.b16 %v5512, %v5499
    %v5630 = vpack.c.b16 %v5513, %v5500
    %v5631 = vpack.c.b16 %v5514, %v5501
    %v5632 = vpack.c.b16 %v5515, %v5502
    %v5633 = vpack.c.b16 %v5516, %v5503
    %v5634 = vpack.c.b16 %v5517, %v5504
    %v5635 = vpack.c.b16 %v5518, %v5505
    %vm5753 = vcmask 130048
    %v5755 = vsel %vm5753, %v1597, 0
    %5757 = vmatprep.subr.bf16.mxu0 %v5611
    %5758 = vmatpush1.bf16.msra.mxu0 %v5610
    %5759 = vmatprep.subr.bf16.mxu0 %v5598
    %5760 = vmatpush1.bf16.msra.mxu0 %v5597
    %5761 = vmatprep.subr.bf16.mxu0 %v5585
    %5762 = vmatpush1.bf16.msra.mxu0 %v5584
    %5763 = vmatprep.subr.bf16.mxu0 %v5572
    %5764 = vmatpush1.bf16.msra.mxu0 %v5571
    %5765 = vmatprep.subr.bf16.mxu0 %v5559
    %5766 = vmatpush1.bf16.msra.mxu0 %v5558
    %5767 = vmatprep.subr.bf16.mxu0 %v5546
    %5768 = vmatpush1.bf16.msra.mxu0 %v5545
    %5769 = vmatprep.subr.bf16.mxu0 %v5533
    %5770 = vmatpush1.bf16.msra.mxu0 %v5532
    %5771 = vmatprep.subr.bf16.mxu0 %v5520
    %5772 = vmatpush1.bf16.msra.mxu0 %v5519
    %5773 = vmatprep.subr.bf16.mxu0 0
    %5774 = vmatpush2.bf16.msra.mxu0 0
    %5775 = vmatprep.subr.bf16.mxu0 0
    %5776 = vmatpush2.bf16.msra.mxu0 0
    %5777 = vmatprep.subr.bf16.mxu0 0
    %5778 = vmatpush2.bf16.msra.mxu0 0
    %5779 = vmatprep.subr.bf16.mxu0 0
    %5780 = vmatpush2.bf16.msra.mxu0 0
    %5781 = vmatprep.subr.bf16.mxu0 0
    %5782 = vmatpush2.bf16.msra.mxu0 0
    %5783 = vmatprep.subr.bf16.mxu0 0
    %5784 = vmatpush2.bf16.msra.mxu0 0
    %5785 = vmatprep.subr.bf16.mxu0 0
    %5786 = vmatpush2.bf16.msra.mxu0 0
    %5787 = vmatprep.subr.bf16.mxu0 %v5624
    %5788 = vmatpush2.bf16.msra.mxu0 %v5623
    %5789 = vmatprep.mubr.bf16.mxu0 %v5755
    %5790 = vmatmul.mubr.bf16.gmra.mxu0 %v4959
    %v5791 = vpop.f32.mrf.mxu0
    %v5792 = vadd.f32 %v5097, %v5791
    %v5793 = vpop.f32.mrf.mxu0
    %v5794 = vadd.f32 %v5101, %v5793
    %v5795 = vpop.f32.mrf.mxu0
    %v5796 = vpop.f32.mrf.mxu0
    %5797 = vdwg.mxu0
    %5798 = vmatprep.subr.bf16.mxu0 %v5613
    %5799 = vmatpush1.bf16.msra.mxu0 %v5612
    %5800 = vmatprep.subr.bf16.mxu0 %v5600
    %5801 = vmatpush1.bf16.msra.mxu0 %v5599
    %5802 = vmatprep.subr.bf16.mxu0 %v5587
    %5803 = vmatpush1.bf16.msra.mxu0 %v5586
    %5804 = vmatprep.subr.bf16.mxu0 %v5574
    %5805 = vmatpush1.bf16.msra.mxu0 %v5573
    %5806 = vmatprep.subr.bf16.mxu0 %v5561
    %5807 = vmatpush1.bf16.msra.mxu0 %v5560
    %5808 = vmatprep.subr.bf16.mxu0 %v5548
    %5809 = vmatpush1.bf16.msra.mxu0 %v5547
    %5810 = vmatprep.subr.bf16.mxu0 %v5535
    %5811 = vmatpush1.bf16.msra.mxu0 %v5534
    %5812 = vmatprep.subr.bf16.mxu0 %v5522
    %5813 = vmatpush1.bf16.msra.mxu0 %v5521
    %5814 = vmatprep.subr.bf16.mxu0 0
    %5815 = vmatpush2.bf16.msra.mxu0 0
    %5816 = vmatprep.subr.bf16.mxu0 0
    %5817 = vmatpush2.bf16.msra.mxu0 0
    %5818 = vmatprep.subr.bf16.mxu0 0
    %5819 = vmatpush2.bf16.msra.mxu0 0
    %5820 = vmatprep.subr.bf16.mxu0 0
    %5821 = vmatpush2.bf16.msra.mxu0 0
    %5822 = vmatprep.subr.bf16.mxu0 0
    %5823 = vmatpush2.bf16.msra.mxu0 0
    %5824 = vmatprep.subr.bf16.mxu0 0
    %5825 = vmatpush2.bf16.msra.mxu0 0
    %5826 = vmatprep.subr.bf16.mxu0 0
    %5827 = vmatpush2.bf16.msra.mxu0 0
    %5828 = vmatprep.subr.bf16.mxu0 %v5626
    %5829 = vmatpush2.bf16.msra.mxu0 %v5625
    %5830 = vmatprep.mubr.bf16.mxu0 %v5755
    %5831 = vmatmul.mubr.bf16.gmra.mxu0 %v4959
    %v5832 = vpop.f32.mrf.mxu0
    %v5833 = vadd.f32 %v5105, %v5832
    %v5834 = vpop.f32.mrf.mxu0
    %v5835 = vadd.f32 %v5109, %v5834
    %v5836 = vpop.f32.mrf.mxu0
    %v5837 = vpop.f32.mrf.mxu0
    %5838 = vdwg.mxu0
    %5839 = vmatprep.subr.bf16.mxu0 %v5615
    %5840 = vmatpush1.bf16.msra.mxu0 %v5614
    %5841 = vmatprep.subr.bf16.mxu0 %v5602
    %5842 = vmatpush1.bf16.msra.mxu0 %v5601
    %5843 = vmatprep.subr.bf16.mxu0 %v5589
    %5844 = vmatpush1.bf16.msra.mxu0 %v5588
    %5845 = vmatprep.subr.bf16.mxu0 %v5576
    %5846 = vmatpush1.bf16.msra.mxu0 %v5575
    %5847 = vmatprep.subr.bf16.mxu0 %v5563
    %5848 = vmatpush1.bf16.msra.mxu0 %v5562
    %5849 = vmatprep.subr.bf16.mxu0 %v5550
    %5850 = vmatpush1.bf16.msra.mxu0 %v5549
    %5851 = vmatprep.subr.bf16.mxu0 %v5537
    %5852 = vmatpush1.bf16.msra.mxu0 %v5536
    %5853 = vmatprep.subr.bf16.mxu0 %v5524
    %5854 = vmatpush1.bf16.msra.mxu0 %v5523
    %5855 = vmatprep.subr.bf16.mxu0 0
    %5856 = vmatpush2.bf16.msra.mxu0 0
    %5857 = vmatprep.subr.bf16.mxu0 0
    %5858 = vmatpush2.bf16.msra.mxu0 0
    %5859 = vmatprep.subr.bf16.mxu0 0
    %5860 = vmatpush2.bf16.msra.mxu0 0
    %5861 = vmatprep.subr.bf16.mxu0 0
    %5862 = vmatpush2.bf16.msra.mxu0 0
    %5863 = vmatprep.subr.bf16.mxu0 0
    %5864 = vmatpush2.bf16.msra.mxu0 0
    %5865 = vmatprep.subr.bf16.mxu0 0
    %5866 = vmatpush2.bf16.msra.mxu0 0
    %5867 = vmatprep.subr.bf16.mxu0 0
    %5868 = vmatpush2.bf16.msra.mxu0 0
    %5869 = vmatprep.subr.bf16.mxu0 %v5628
    %5870 = vmatpush2.bf16.msra.mxu0 %v5627
    %5871 = vmatprep.mubr.bf16.mxu0 %v5755
    %5872 = vmatmul.mubr.bf16.gmra.mxu0 %v4959
    %v5873 = vpop.f32.mrf.mxu0
    %v5874 = vadd.f32 %v5113, %v5873
    %v5875 = vpop.f32.mrf.mxu0
    %v5876 = vadd.f32 %v5117, %v5875
    %v5877 = vpop.f32.mrf.mxu0
    %v5878 = vpop.f32.mrf.mxu0
    %5879 = vdwg.mxu0
    %5880 = vmatprep.subr.bf16.mxu0 %v5617
    %5881 = vmatpush1.bf16.msra.mxu0 %v5616
    %5882 = vmatprep.subr.bf16.mxu0 %v5604
    %5883 = vmatpush1.bf16.msra.mxu0 %v5603
    %5884 = vmatprep.subr.bf16.mxu0 %v5591
    %5885 = vmatpush1.bf16.msra.mxu0 %v5590
    %5886 = vmatprep.subr.bf16.mxu0 %v5578
    %5887 = vmatpush1.bf16.msra.mxu0 %v5577
    %5888 = vmatprep.subr.bf16.mxu0 %v5565
    %5889 = vmatpush1.bf16.msra.mxu0 %v5564
    %5890 = vmatprep.subr.bf16.mxu0 %v5552
    %5891 = vmatpush1.bf16.msra.mxu0 %v5551
    %5892 = vmatprep.subr.bf16.mxu0 %v5539
    %5893 = vmatpush1.bf16.msra.mxu0 %v5538
    %5894 = vmatprep.subr.bf16.mxu0 %v5526
    %5895 = vmatpush1.bf16.msra.mxu0 %v5525
    %5896 = vmatprep.subr.bf16.mxu0 0
    %5897 = vmatpush2.bf16.msra.mxu0 0
    %5898 = vmatprep.subr.bf16.mxu0 0
    %5899 = vmatpush2.bf16.msra.mxu0 0
    %5900 = vmatprep.subr.bf16.mxu0 0
    %5901 = vmatpush2.bf16.msra.mxu0 0
    %5902 = vmatprep.subr.bf16.mxu0 0
    %5903 = vmatpush2.bf16.msra.mxu0 0
    %5904 = vmatprep.subr.bf16.mxu0 0
    %5905 = vmatpush2.bf16.msra.mxu0 0
    %5906 = vmatprep.subr.bf16.mxu0 0
    %5907 = vmatpush2.bf16.msra.mxu0 0
    %5908 = vmatprep.subr.bf16.mxu0 0
    %5909 = vmatpush2.bf16.msra.mxu0 0
    %5910 = vmatprep.subr.bf16.mxu0 %v5630
    %5911 = vmatpush2.bf16.msra.mxu0 %v5629
    %5912 = vmatprep.mubr.bf16.mxu0 %v5755
    %5913 = vmatmul.mubr.bf16.gmra.mxu0 %v4959
    %v5914 = vpop.f32.mrf.mxu0
    %v5915 = vadd.f32 %v5121, %v5914
    %v5916 = vpop.f32.mrf.mxu0
    %v5917 = vadd.f32 %v5125, %v5916
    %v5918 = vpop.f32.mrf.mxu0
    %v5919 = vpop.f32.mrf.mxu0
    %5920 = vdwg.mxu0
    %5921 = vmatprep.subr.bf16.mxu0 %v5619
    %5922 = vmatpush1.bf16.msra.mxu0 %v5618
    %5923 = vmatprep.subr.bf16.mxu0 %v5606
    %5924 = vmatpush1.bf16.msra.mxu0 %v5605
    %5925 = vmatprep.subr.bf16.mxu0 %v5593
    %5926 = vmatpush1.bf16.msra.mxu0 %v5592
    %5927 = vmatprep.subr.bf16.mxu0 %v5580
    %5928 = vmatpush1.bf16.msra.mxu0 %v5579
    %5929 = vmatprep.subr.bf16.mxu0 %v5567
    %5930 = vmatpush1.bf16.msra.mxu0 %v5566
    %5931 = vmatprep.subr.bf16.mxu0 %v5554
    %5932 = vmatpush1.bf16.msra.mxu0 %v5553
    %5933 = vmatprep.subr.bf16.mxu0 %v5541
    %5934 = vmatpush1.bf16.msra.mxu0 %v5540
    %5935 = vmatprep.subr.bf16.mxu0 %v5528
    %5936 = vmatpush1.bf16.msra.mxu0 %v5527
    %5937 = vmatprep.subr.bf16.mxu0 0
    %5938 = vmatpush2.bf16.msra.mxu0 0
    %5939 = vmatprep.subr.bf16.mxu0 0
    %5940 = vmatpush2.bf16.msra.mxu0 0
    %5941 = vmatprep.subr.bf16.mxu0 0
    %5942 = vmatpush2.bf16.msra.mxu0 0
    %5943 = vmatprep.subr.bf16.mxu0 0
    %5944 = vmatpush2.bf16.msra.mxu0 0
    %5945 = vmatprep.subr.bf16.mxu0 0
    %5946 = vmatpush2.bf16.msra.mxu0 0
    %5947 = vmatprep.subr.bf16.mxu0 0
    %5948 = vmatpush2.bf16.msra.mxu0 0
    %5949 = vmatprep.subr.bf16.mxu0 0
    %5950 = vmatpush2.bf16.msra.mxu0 0
    %5951 = vmatprep.subr.bf16.mxu0 %v5632
    %5952 = vmatpush2.bf16.msra.mxu0 %v5631
    %5953 = vmatprep.mubr.bf16.mxu0 %v5755
    %5954 = vmatmul.mubr.bf16.gmra.mxu0 %v4959
    %v5955 = vpop.f32.mrf.mxu0
    %v5956 = vadd.f32 %v5129, %v5955
    %v5957 = vpop.f32.mrf.mxu0
    %v5958 = vadd.f32 %v5133, %v5957
    %v5959 = vpop.f32.mrf.mxu0
    %v5960 = vpop.f32.mrf.mxu0
    %5961 = vdwg.mxu0
    %5962 = vmatprep.subr.bf16.mxu0 %v5621
    %5963 = vmatpush1.bf16.msra.mxu0 %v5620
    %5964 = vmatprep.subr.bf16.mxu0 %v5608
    %5965 = vmatpush1.bf16.msra.mxu0 %v5607
    %5966 = vmatprep.subr.bf16.mxu0 %v5595
    %5967 = vmatpush1.bf16.msra.mxu0 %v5594
    %5968 = vmatprep.subr.bf16.mxu0 %v5582
    %5969 = vmatpush1.bf16.msra.mxu0 %v5581
    %5970 = vmatprep.subr.bf16.mxu0 %v5569
    %5971 = vmatpush1.bf16.msra.mxu0 %v5568
    %5972 = vmatprep.subr.bf16.mxu0 %v5556
    %5973 = vmatpush1.bf16.msra.mxu0 %v5555
    %5974 = vmatprep.subr.bf16.mxu0 %v5543
    %5975 = vmatpush1.bf16.msra.mxu0 %v5542
    %5976 = vmatprep.subr.bf16.mxu0 %v5530
    %5977 = vmatpush1.bf16.msra.mxu0 %v5529
    %5978 = vmatprep.subr.bf16.mxu0 0
    %5979 = vmatpush2.bf16.msra.mxu0 0
    %5980 = vmatprep.subr.bf16.mxu0 0
    %5981 = vmatpush2.bf16.msra.mxu0 0
    %5982 = vmatprep.subr.bf16.mxu0 0
    %5983 = vmatpush2.bf16.msra.mxu0 0
    %5984 = vmatprep.subr.bf16.mxu0 0
    %5985 = vmatpush2.bf16.msra.mxu0 0
    %5986 = vmatprep.subr.bf16.mxu0 0
    %5987 = vmatpush2.bf16.msra.mxu0 0
    %5988 = vmatprep.subr.bf16.mxu0 0
    %5989 = vmatpush2.bf16.msra.mxu0 0
    %5990 = vmatprep.subr.bf16.mxu0 0
    %5991 = vmatpush2.bf16.msra.mxu0 0
    %5992 = vmatprep.subr.bf16.mxu0 %v5634
    %5993 = vmatpush2.bf16.msra.mxu0 %v5633
    %5994 = vmatprep.mubr.bf16.mxu0 %v5755
    %5995 = vmatmul.mubr.bf16.gmra.mxu0 %v4959
    %v5996 = vpop.f32.mrf.mxu0
    %v5997 = vadd.f32 %v5137, %v5996
    %v5998 = vpop.f32.mrf.mxu0
    %v5999 = vadd.f32 %v5141, %v5998
    %v6000 = vpop.f32.mrf.mxu0
    %v6001 = vpop.f32.mrf.mxu0
    %6002 = vdwg.mxu0
    %6003 = vmatprep.subr.bf16.mxu0 0
    %6004 = vmatpush1.bf16.msra.mxu0 %v5622
    %6005 = vmatprep.subr.bf16.mxu0 0
    %6006 = vmatpush1.bf16.msra.mxu0 %v5609
    %6007 = vmatprep.subr.bf16.mxu0 0
    %6008 = vmatpush1.bf16.msra.mxu0 %v5596
    %6009 = vmatprep.subr.bf16.mxu0 0
    %6010 = vmatpush1.bf16.msra.mxu0 %v5583
    %6011 = vmatprep.subr.bf16.mxu0 0
    %6012 = vmatpush1.bf16.msra.mxu0 %v5570
    %6013 = vmatprep.subr.bf16.mxu0 0
    %6014 = vmatpush1.bf16.msra.mxu0 %v5557
    %6015 = vmatprep.subr.bf16.mxu0 0
    %6016 = vmatpush1.bf16.msra.mxu0 %v5544
    %6017 = vmatprep.subr.bf16.mxu0 0
    %6018 = vmatpush1.bf16.msra.mxu0 %v5531
    %6019 = vmatprep.subr.bf16.mxu0 0
    %6020 = vmatpush2.bf16.msra.mxu0 0
    %6021 = vmatprep.subr.bf16.mxu0 0
    %6022 = vmatpush2.bf16.msra.mxu0 0
    %6023 = vmatprep.subr.bf16.mxu0 0
    %6024 = vmatpush2.bf16.msra.mxu0 0
    %6025 = vmatprep.subr.bf16.mxu0 0
    %6026 = vmatpush2.bf16.msra.mxu0 0
    %6027 = vmatprep.subr.bf16.mxu0 0
    %6028 = vmatpush2.bf16.msra.mxu0 0
    %6029 = vmatprep.subr.bf16.mxu0 0
    %6030 = vmatpush2.bf16.msra.mxu0 0
    %6031 = vmatprep.subr.bf16.mxu0 0
    %6032 = vmatpush2.bf16.msra.mxu0 0
    %6033 = vmatprep.subr.bf16.mxu0 0
    %6034 = vmatpush2.bf16.msra.mxu0 %v5635
    %6035 = vmatprep.mubr.bf16.mxu0 %v5755
    %6036 = vmatmul.mubr.bf16.gmra.mxu0 %v4959
    %v6037 = vpop.f32.mrf.mxu0
    %v6038 = vadd.f32 %v5145, %v6037
    %v6039 = vpop.f32.mrf.mxu0
    %v6040 = vpop.f32.mrf.mxu0
    %v6041 = vpop.f32.mrf.mxu0
    %6042 = vdwg.mxu0
    %v6043 = vmax.f32 %v5792, 0.0
    %v6044 = vmax.f32 %v5794, 0.0
    %v6045 = vmax.f32 %v5833, 0.0
    %v6046 = vmax.f32 %v5835, 0.0
    %v6047 = vmax.f32 %v5874, 0.0
    %v6048 = vmax.f32 %v5876, 0.0
    %v6049 = vmax.f32 %v5915, 0.0
    %v6050 = vmax.f32 %v5917, 0.0
    %v6051 = vmax.f32 %v5956, 0.0
    %v6052 = vmax.f32 %v5958, 0.0
    %v6053 = vmax.f32 %v5997, 0.0
    %v6054 = vmax.f32 %v5999, 0.0
    %v6055 = vmax.f32 %v6038, 0.0
    %6056 = vst [vmem:[#allocation7] sm:$0x3] %v6043
    %vm6057 = vcmask 779264
    %6058 = vst.msk [vmem:[#allocation7 + $0x8] sm:$0x3] %vm6057, %v6044
    %v6062 = vrot.slane %v6044, 6
    %v6063 = vrot.slane %v6045, 6
    %v6064 = vrot.slane %v6046, 6
    %6065 = vrot.lane.b32.xlu0 %v6062, 32
    %v6066 = vpop.permute.xlu0 %6065
    %6067 = vrot.lane.b32.xlu0 %v6063, 32
    %v6068 = vpop.permute.xlu0 %6067
    %6069 = vrot.lane.b32.xlu0 %v6064, 32
    %v6070 = vpop.permute.xlu0 %6069
    %v6071 = vsel %vm2281, %v6066, %v6068
    %v6072 = vsel %vm2281, %v6068, %v6070
    %6075 = vst [vmem:[#allocation7] sm:$0xc] %v6071
    %vm6076 = vcmask 781314
    %6077 = vst.msk [vmem:[#allocation7 + $0x8] sm:$0xc] %vm6076, %v6072
    %v6080 = vrot.slane %v6046, 4
    %v6081 = vrot.slane %v6047, 4
    %v6082 = vrot.slane %v6048, 4
    %6083 = vrot.lane.b32.xlu0 %v6080, 64
    %v6084 = vpop.permute.xlu0 %6083
    %6085 = vrot.lane.b32.xlu0 %v6081, 64
    %v6086 = vpop.permute.xlu0 %6085
    %6087 = vrot.lane.b32.xlu0 %v6082, 64
    %v6088 = vpop.permute.xlu0 %6087
    %v6089 = vsel %vm2276, %v6084, %v6086
    %v6090 = vsel %vm2276, %v6086, %v6088
    %6093 = vst [vmem:[#allocation7] sm:$0x30] %v6089
    %vm6094 = vcmask 783364
    %6095 = vst.msk [vmem:[#allocation7 + $0x8] sm:$0x30] %vm6094, %v6090
    %v6097 = vrot.slane %v6048, 2
    %v6098 = vrot.slane %v6049, 2
    %6099 = vrot.lane.b32.xlu0 %v6097, 96
    %v6100 = vpop.permute.xlu0 %6099
    %6101 = vrot.lane.b32.xlu0 %v6098, 96
    %v6102 = vpop.permute.xlu0 %6101
    %v6103 = vsel %vm2271, %v6100, %v6102
    %6106 = vst [vmem:[#allocation7] sm:$0xc0] %v6103
    %vm6107 = vcmask 785414
    %6108 = vst.msk [vmem:[#allocation7 + $0x8] sm:$0xc0] %vm6107, %v6102
    %6109 = vst [vmem:[#allocation7 + $0x10] sm:$0x3] %v6050
    %6110 = vst.msk [vmem:[#allocation7 + $0x18] sm:$0x3] %vm6057, %v6051
    %v6114 = vrot.slane %v6051, 6
    %v6115 = vrot.slane %v6052, 6
    %v6116 = vrot.slane %v6053, 6
    %6117 = vrot.lane.b32.xlu0 %v6114, 32
    %v6118 = vpop.permute.xlu0 %6117
    %6119 = vrot.lane.b32.xlu0 %v6115, 32
    %v6120 = vpop.permute.xlu0 %6119
    %6121 = vrot.lane.b32.xlu0 %v6116, 32
    %v6122 = vpop.permute.xlu0 %6121
    %v6123 = vsel %vm2281, %v6118, %v6120
    %v6124 = vsel %vm2281, %v6120, %v6122
    %6127 = vst [vmem:[#allocation7 + $0x10] sm:$0xc] %v6123
    %6128 = vst.msk [vmem:[#allocation7 + $0x18] sm:$0xc] %vm6076, %v6124
    %v6131 = vrot.slane %v6053, 4
    %v6132 = vrot.slane %v6054, 4
    %v6133 = vrot.slane %v6055, 4
    %6134 = vrot.lane.b32.xlu0 %v6131, 64
    %v6135 = vpop.permute.xlu0 %6134
    %6136 = vrot.lane.b32.xlu0 %v6132, 64
    %v6137 = vpop.permute.xlu0 %6136
    %6138 = vrot.lane.b32.xlu0 %v6133, 64
    %v6139 = vpop.permute.xlu0 %6138
    %v6140 = vsel %vm2276, %v6135, %v6137
    %v6141 = vsel %vm2276, %v6137, %v6139
    %6144 = vst [vmem:[#allocation7 + $0x10] sm:$0x30] %v6140
    %6145 = vst.msk [vmem:[#allocation7 + $0x18] sm:$0x30] %vm6094, %v6141
    %v6146 = vld [vmem:[#allocation7] sm:$0xff]
    %v6147 = vld [vmem:[#allocation7 + $0x8] sm:$0xff]
    %v6148 = vld [vmem:[#allocation7 + $0x10] sm:$0x3f]
    %v6149 = vld [vmem:[#allocation7 + $0x18] sm:$0x3f]
    %v6150 = vpack.c.bf16 %v6148, %v6146
    %v6151 = vpack.c.bf16 %v6149, %v6147
    %v6152 = vld [vmem:[%s10] sm:$0xf]
    %v6153 = vld [vmem:[%s10 + $0x4] sm:$0xf]
    %v6154 = vld [vmem:[%s10 + $0x8] sm:$0xf]
    %v6155 = vld [vmem:[%s10 + $0xc] sm:$0xf]
    %v6156 = vld [vmem:[%s10 + $0x10] sm:$0xf]
    %v6157 = vld [vmem:[%s10 + $0x14] sm:$0xf]
    %v6158 = vld [vmem:[%s10 + $0x18] sm:$0xf]
    %v6159 = vld [vmem:[%s10 + $0x1c] sm:$0xf]
    %v6160 = vld [vmem:[%s10 + $0x20] sm:$0xf]
    %v6161 = vld [vmem:[%s10 + $0x24] sm:$0xf]
    %v6162 = vld [vmem:[%s10 + $0x28] sm:$0xf]
    %v6163 = vld [vmem:[%s10 + $0x2c] sm:$0xf]
    %v6164 = vld [vmem:[%s10 + $0x30] sm:$0xf]
    %v6165 = vld [vmem:[%s10 + $0x34] sm:$0xf]
    %v6166 = vld [vmem:[%s10 + $0x38] sm:$0xf]
    %v6167 = vld [vmem:[%s10 + $0x3c] sm:$0xf]
    %v6168 = vld [vmem:[%s10 + $0x40] sm:$0xf]
    %v6169 = vld [vmem:[%s10 + $0x44] sm:$0xf]
    %v6170 = vld [vmem:[%s10 + $0x48] sm:$0xf]
    %v6171 = vld [vmem:[%s10 + $0x4c] sm:$0xf]
    %v6192 = vunpack.c.l.b16 %v6152
    %v6193 = vunpack.c.l.b16 %v6153
    %v6194 = vunpack.c.l.b16 %v6154
    %v6195 = vunpack.c.l.b16 %v6155
    %v6196 = vunpack.c.l.b16 %v6156
    %v6197 = vunpack.c.l.b16 %v6157
    %v6198 = vunpack.c.l.b16 %v6158
    %v6199 = vunpack.c.l.b16 %v6159
    %v6200 = vunpack.c.l.b16 %v6160
    %v6201 = vunpack.c.l.b16 %v6161
    %v6202 = vunpack.c.l.b16 %v6162
    %v6203 = vunpack.c.l.b16 %v6163
    %v6204 = vunpack.c.l.b16 %v6164
    %v6205 = vunpack.c.l.b16 %v6165
    %v6206 = vunpack.c.l.b16 %v6166
    %v6207 = vunpack.c.l.b16 %v6167
    %v6208 = vunpack.c.l.b16 %v6168
    %v6209 = vunpack.c.l.b16 %v6169
    %v6210 = vunpack.c.l.b16 %v6170
    %v6211 = vunpack.c.l.b16 %v6171
    %v6212 = vpack.c.b16 %v6193, %v6192
    %v6213 = vpack.c.b16 %v6195, %v6194
    %v6214 = vpack.c.b16 %v6197, %v6196
    %v6215 = vpack.c.b16 %v6199, %v6198
    %v6216 = vpack.c.b16 %v6201, %v6200
    %v6217 = vpack.c.b16 %v6203, %v6202
    %v6218 = vpack.c.b16 %v6205, %v6204
    %v6219 = vpack.c.b16 %v6207, %v6206
    %v6220 = vpack.c.b16 %v6209, %v6208
    %v6221 = vpack.c.b16 %v6211, %v6210
    %vm6222 = vcmask 113664
    %v6224 = vsel %vm6222, %v6212, 0
    %v6227 = vsel %vm6222, %v6213, 0
    %v6230 = vsel %vm6222, %v6214, 0
    %v6233 = vsel %vm6222, %v6215, 0
    %v6236 = vsel %vm6222, %v6216, 0
    %v6239 = vsel %vm6222, %v6217, 0
    %v6242 = vsel %vm6222, %v6218, 0
    %v6245 = vsel %vm6222, %v6219, 0
    %v6248 = vsel %vm6222, %v6220, 0
    %v6251 = vsel %vm6222, %v6221, 0
    %vm6253 = vcmask 1046528
    %v6255 = vsel %vm6253, %v6150, 0
    %v6258 = vsel %vm6253, %v6151, 0
    %6260 = vmatprep.subr.bf16.mxu0 0
    %6261 = vmatpush1.bf16.msra.mxu0 0
    %6262 = vmatprep.subr.bf16.mxu0 0
    %6263 = vmatpush1.bf16.msra.mxu0 0
    %6264 = vmatprep.subr.bf16.mxu0 0
    %6265 = vmatpush1.bf16.msra.mxu0 0
    %6266 = vmatprep.subr.bf16.mxu0 0
    %6267 = vmatpush1.bf16.msra.mxu0 0
    %6268 = vmatprep.subr.bf16.mxu0 0
    %6269 = vmatpush1.bf16.msra.mxu0 0
    %6270 = vmatprep.subr.bf16.mxu0 0
    %6271 = vmatpush1.bf16.msra.mxu0 0
    %6272 = vmatprep.subr.bf16.mxu0 0
    %6273 = vmatpush1.bf16.msra.mxu0 0
    %6274 = vmatprep.subr.bf16.mxu0 %v6258
    %6275 = vmatpush1.bf16.msra.mxu0 %v6255
    %6276 = vmatprep.subr.bf16.mxu0 0
    %6277 = vmatpush2.bf16.msra.mxu0 0
    %6278 = vmatprep.subr.bf16.mxu0 0
    %6279 = vmatpush2.bf16.msra.mxu0 0
    %6280 = vmatprep.subr.bf16.mxu0 0
    %6281 = vmatpush2.bf16.msra.mxu0 0
    %6282 = vmatprep.subr.bf16.mxu0 0
    %6283 = vmatpush2.bf16.msra.mxu0 0
    %6284 = vmatprep.subr.bf16.mxu0 0
    %6285 = vmatpush2.bf16.msra.mxu0 0
    %6286 = vmatprep.subr.bf16.mxu0 0
    %6287 = vmatpush2.bf16.msra.mxu0 0
    %6288 = vmatprep.subr.bf16.mxu0 0
    %6289 = vmatpush2.bf16.msra.mxu0 0
    %6290 = vmatprep.subr.bf16.mxu0 0
    %6291 = vmatpush2.bf16.msra.mxu0 0
    %6292 = vmatprep.mubr.bf16.mxu0 0
    %6293 = vmatmul.mubr.bf16.gmra.mxu0 %v6224
    %v6294 = vpop.f32.mrf.mxu0
    %v6295 = vadd.f32 0.0, %v6294
    %v6296 = vpop.f32.mrf.mxu0
    %v6297 = vadd.f32 0.0, %v6296
    %v6298 = vpop.f32.mrf.mxu0
    %v6299 = vadd.f32 0.0, %v6298
    %v6300 = vpop.f32.mrf.mxu0
    %v6301 = vadd.f32 0.0, %v6300
    %6302 = vmatprep.mubr.bf16.mxu0 0
    %6303 = vmatmul.mubr.bf16.gmra.mxu0 %v6227
    %v6304 = vpop.f32.mrf.mxu0
    %v6305 = vadd.f32 0.0, %v6304
    %v6306 = vpop.f32.mrf.mxu0
    %v6307 = vadd.f32 0.0, %v6306
    %v6308 = vpop.f32.mrf.mxu0
    %v6309 = vadd.f32 0.0, %v6308
    %v6310 = vpop.f32.mrf.mxu0
    %v6311 = vadd.f32 0.0, %v6310
    %6312 = vmatprep.mubr.bf16.mxu0 0
    %6313 = vmatmul.mubr.bf16.gmra.mxu0 %v6230
    %v6314 = vpop.f32.mrf.mxu0
    %v6315 = vadd.f32 0.0, %v6314
    %v6316 = vpop.f32.mrf.mxu0
    %v6317 = vadd.f32 0.0, %v6316
    %v6318 = vpop.f32.mrf.mxu0
    %v6319 = vadd.f32 0.0, %v6318
    %v6320 = vpop.f32.mrf.mxu0
    %v6321 = vadd.f32 0.0, %v6320
    %6322 = vmatprep.mubr.bf16.mxu0 0
    %6323 = vmatmul.mubr.bf16.gmra.mxu0 %v6233
    %v6324 = vpop.f32.mrf.mxu0
    %v6325 = vadd.f32 0.0, %v6324
    %v6326 = vpop.f32.mrf.mxu0
    %v6327 = vadd.f32 0.0, %v6326
    %v6328 = vpop.f32.mrf.mxu0
    %v6329 = vadd.f32 0.0, %v6328
    %v6330 = vpop.f32.mrf.mxu0
    %v6331 = vadd.f32 0.0, %v6330
    %6332 = vmatprep.mubr.bf16.mxu0 0
    %6333 = vmatmul.mubr.bf16.gmra.mxu0 %v6236
    %v6334 = vpop.f32.mrf.mxu0
    %v6335 = vadd.f32 0.0, %v6334
    %v6336 = vpop.f32.mrf.mxu0
    %v6337 = vadd.f32 0.0, %v6336
    %v6338 = vpop.f32.mrf.mxu0
    %v6339 = vadd.f32 0.0, %v6338
    %v6340 = vpop.f32.mrf.mxu0
    %v6341 = vadd.f32 0.0, %v6340
    %6342 = vmatprep.mubr.bf16.mxu0 0
    %6343 = vmatmul.mubr.bf16.gmra.mxu0 %v6239
    %v6344 = vpop.f32.mrf.mxu0
    %v6345 = vadd.f32 0.0, %v6344
    %v6346 = vpop.f32.mrf.mxu0
    %v6347 = vadd.f32 0.0, %v6346
    %v6348 = vpop.f32.mrf.mxu0
    %v6349 = vadd.f32 0.0, %v6348
    %v6350 = vpop.f32.mrf.mxu0
    %v6351 = vadd.f32 0.0, %v6350
    %6352 = vmatprep.mubr.bf16.mxu0 0
    %6353 = vmatmul.mubr.bf16.gmra.mxu0 %v6242
    %v6354 = vpop.f32.mrf.mxu0
    %v6355 = vadd.f32 0.0, %v6354
    %v6356 = vpop.f32.mrf.mxu0
    %v6357 = vadd.f32 0.0, %v6356
    %v6358 = vpop.f32.mrf.mxu0
    %v6359 = vadd.f32 0.0, %v6358
    %v6360 = vpop.f32.mrf.mxu0
    %v6361 = vadd.f32 0.0, %v6360
    %6362 = vmatprep.mubr.bf16.mxu0 0
    %6363 = vmatmul.mubr.bf16.gmra.mxu0 %v6245
    %v6364 = vpop.f32.mrf.mxu0
    %v6365 = vadd.f32 0.0, %v6364
    %v6366 = vpop.f32.mrf.mxu0
    %v6367 = vadd.f32 0.0, %v6366
    %v6368 = vpop.f32.mrf.mxu0
    %v6369 = vadd.f32 0.0, %v6368
    %v6370 = vpop.f32.mrf.mxu0
    %v6371 = vadd.f32 0.0, %v6370
    %6372 = vmatprep.mubr.bf16.mxu0 0
    %6373 = vmatmul.mubr.bf16.gmra.mxu0 %v6248
    %v6374 = vpop.f32.mrf.mxu0
    %v6375 = vadd.f32 0.0, %v6374
    %v6376 = vpop.f32.mrf.mxu0
    %v6377 = vadd.f32 0.0, %v6376
    %v6378 = vpop.f32.mrf.mxu0
    %v6379 = vadd.f32 0.0, %v6378
    %v6380 = vpop.f32.mrf.mxu0
    %v6381 = vadd.f32 0.0, %v6380
    %6382 = vmatprep.mubr.bf16.mxu0 0
    %6383 = vmatmul.mubr.bf16.gmra.mxu0 %v6251
    %v6384 = vpop.f32.mrf.mxu0
    %v6385 = vadd.f32 0.0, %v6384
    %v6386 = vpop.f32.mrf.mxu0
    %v6387 = vadd.f32 0.0, %v6386
    %v6388 = vpop.f32.mrf.mxu0
    %v6389 = vadd.f32 0.0, %v6388
    %v6390 = vpop.f32.mrf.mxu0
    %v6391 = vadd.f32 0.0, %v6390
    %6392 = vdwg.mxu0
    %v6393 = vpack.c.bf16 %v6299, %v6295
    %v6394 = vpack.c.bf16 %v6301, %v6297
    %v6395 = vpack.c.bf16 %v6309, %v6305
    %v6396 = vpack.c.bf16 %v6311, %v6307
    %v6397 = vpack.c.bf16 %v6319, %v6315
    %v6398 = vpack.c.bf16 %v6321, %v6317
    %v6399 = vpack.c.bf16 %v6329, %v6325
    %v6400 = vpack.c.bf16 %v6331, %v6327
    %v6401 = vpack.c.bf16 %v6339, %v6335
    %v6402 = vpack.c.bf16 %v6341, %v6337
    %v6403 = vpack.c.bf16 %v6349, %v6345
    %v6404 = vpack.c.bf16 %v6351, %v6347
    %v6405 = vpack.c.bf16 %v6359, %v6355
    %v6406 = vpack.c.bf16 %v6361, %v6357
    %v6407 = vpack.c.bf16 %v6369, %v6365
    %v6408 = vpack.c.bf16 %v6371, %v6367
    %v6409 = vpack.c.bf16 %v6379, %v6375
    %v6410 = vpack.c.bf16 %v6381, %v6377
    %v6411 = vpack.c.bf16 %v6389, %v6385
    %v6412 = vpack.c.bf16 %v6391, %v6387
    %6417 = vrot.lane.b32.xlu0 %v6397, 96
    %v6418 = vpop.permute.xlu0 %6417
    %6419 = vrot.lane.b32.xlu0 %v6398, 96
    %v6420 = vpop.permute.xlu0 %6419
    %6421 = vrot.lane.b32.xlu0 %v6399, 96
    %v6422 = vpop.permute.xlu0 %6421
    %6423 = vrot.lane.b32.xlu0 %v6400, 96
    %v6424 = vpop.permute.xlu0 %6423
    %v6425 = vsel %vm2250, %v6418, %v6420
    %v6426 = vsel %vm2250, %v6422, %v6424
    %6433 = vrot.lane.b32.xlu0 %v6401, 64
    %v6434 = vpop.permute.xlu0 %6433
    %6435 = vrot.lane.b32.xlu0 %v6402, 64
    %v6436 = vpop.permute.xlu0 %6435
    %6437 = vrot.lane.b32.xlu0 %v6403, 64
    %v6438 = vpop.permute.xlu0 %6437
    %6439 = vrot.lane.b32.xlu0 %v6404, 64
    %v6440 = vpop.permute.xlu0 %6439
    %v6441 = vsel %vm2259, %v6434, %v6436
    %v6442 = vsel %vm2259, %v6438, %v6440
    %6449 = vrot.lane.b32.xlu0 %v6405, 32
    %v6450 = vpop.permute.xlu0 %6449
    %6451 = vrot.lane.b32.xlu0 %v6406, 32
    %v6452 = vpop.permute.xlu0 %6451
    %6453 = vrot.lane.b32.xlu0 %v6407, 32
    %v6454 = vpop.permute.xlu0 %6453
    %6455 = vrot.lane.b32.xlu0 %v6408, 32
    %v6456 = vpop.permute.xlu0 %6455
    %v6457 = vsel %vm2268, %v6450, %v6452
    %v6458 = vsel %vm2268, %v6454, %v6456
    %v6463 = vsel %vm2271, %v6394, %v6418
    %v6467 = vsel %vm2271, %v6396, %v6422
    %v6471 = vsel %vm2276, %v6420, %v6434
    %v6475 = vsel %vm2276, %v6424, %v6438
    %v6479 = vsel %vm2281, %v6436, %v6450
    %v6483 = vsel %vm2281, %v6440, %v6454
    %s6485 = sshll.u32 %s2287, 4
    %6486 = dma.done %s1093, %s6485
    %v6487 = vld [vmem:[#allocation5] sm:$0xff]
    %v6488 = vld [vmem:[#allocation5 + $0x8] sm:$0xff]
    %v6489 = vld [vmem:[#allocation5 + $0x10] sm:$0xff]
    %v6490 = vld [vmem:[#allocation5 + $0x18] sm:$0xff]
    %v6491 = vld [vmem:[#allocation5 + $0x20] sm:$0xff]
    %v6492 = vld [vmem:[#allocation5 + $0x28] sm:$0xff]
    %v6493 = vld [vmem:[#allocation5 + $0x30] sm:$0xff]
    %v6494 = vld [vmem:[#allocation5 + $0x38] sm:$0xff]
    %v6495 = vld [vmem:[#allocation5 + $0x40] sm:$0xff]
    %v6496 = vld [vmem:[#allocation5 + $0x48] sm:$0xff]
    %v6497 = vld [vmem:[#allocation5 + $0x50] sm:$0xff]
    %v6498 = vld [vmem:[#allocation5 + $0x58] sm:$0xff]
    %v6499 = vld [vmem:[#allocation5 + $0x60] sm:$0xff]
    %v6500 = vld [vmem:[#allocation5 + $0x68] sm:$0xff]
    %v6501 = vld [vmem:[#allocation5 + $0x70] sm:$0xff]
    %v6502 = vld [vmem:[#allocation5 + $0x78] sm:$0xff]
    %v6503 = vld [vmem:[#allocation5 + $0x80] sm:$0xff]
    %v6504 = vld [vmem:[#allocation5 + $0x88] sm:$0xff]
    %v6505 = vld [vmem:[#allocation5 + $0x90] sm:$0xff]
    %v6506 = vld [vmem:[#allocation5 + $0x98] sm:$0xff]
    %v6507 = vld [vmem:[#allocation5 + $0xa0] sm:$0xff]
    %v6508 = vld [vmem:[#allocation5 + $0xa8] sm:$0xff]
    %v6509 = vld [vmem:[#allocation5 + $0xb0] sm:$0xff]
    %v6510 = vld [vmem:[#allocation5 + $0xb8] sm:$0xff]
    %v6511 = vld [vmem:[#allocation5 + $0xc0] sm:$0xff]
    %v6512 = vld [vmem:[#allocation5 + $0xc8] sm:$0xff]
    %v6513 = vld [vmem:[#allocation5 + $0xd0] sm:$0xff]
    %v6514 = vld [vmem:[#allocation5 + $0xd8] sm:$0xff]
    %v6515 = vld [vmem:[#allocation5 + $0xe0] sm:$0xff]
    %v6516 = vld [vmem:[#allocation5 + $0xe8] sm:$0xff]
    %v6517 = vld [vmem:[#allocation5 + $0xf0] sm:$0xff]
    %v6518 = vld [vmem:[#allocation5 + $0xf8] sm:$0xff]
    %v6519 = vld [vmem:[#allocation5 + $0x100] sm:$0xff]
    %v6520 = vld [vmem:[#allocation5 + $0x108] sm:$0xff]
    %v6521 = vld [vmem:[#allocation5 + $0x110] sm:$0xff]
    %v6522 = vld [vmem:[#allocation5 + $0x118] sm:$0xff]
    %v6523 = vld [vmem:[#allocation5 + $0x120] sm:$0xff]
    %v6524 = vld [vmem:[#allocation5 + $0x128] sm:$0xff]
    %v6525 = vld [vmem:[#allocation5 + $0x130] sm:$0xff]
    %v6526 = vld [vmem:[#allocation5 + $0x138] sm:$0xff]
    %v6527 = vld [vmem:[#allocation5 + $0x140] sm:$0xff]
    %v6528 = vld [vmem:[#allocation5 + $0x148] sm:$0xff]
    %v6529 = vld [vmem:[#allocation5 + $0x150] sm:$0xff]
    %v6530 = vld [vmem:[#allocation5 + $0x158] sm:$0xff]
    %v6531 = vld [vmem:[#allocation5 + $0x160] sm:$0xff]
    %v6532 = vld [vmem:[#allocation5 + $0x168] sm:$0xff]
    %v6533 = vld [vmem:[#allocation5 + $0x170] sm:$0xff]
    %v6534 = vld [vmem:[#allocation5 + $0x178] sm:$0xff]
    %v6535 = vld [vmem:[#allocation5 + $0x180] sm:$0xff]
    %v6536 = vld [vmem:[#allocation5 + $0x188] sm:$0xff]
    %v6537 = vld [vmem:[#allocation5 + $0x190] sm:$0xff]
    %v6538 = vld [vmem:[#allocation5 + $0x198] sm:$0xff]
    %v6539 = vld [vmem:[#allocation5 + $0x1a0] sm:$0xff]
    %v6540 = vld [vmem:[#allocation5 + $0x1a8] sm:$0xff]
    %v6541 = vld [vmem:[#allocation5 + $0x1b0] sm:$0xff]
    %v6542 = vld [vmem:[#allocation5 + $0x1b8] sm:$0xff]
    %v6543 = vld [vmem:[#allocation5 + $0x1c0] sm:$0xff]
    %v6544 = vld [vmem:[#allocation5 + $0x1c8] sm:$0xff]
    %v6545 = vld [vmem:[#allocation5 + $0x1d0] sm:$0xff]
    %v6546 = vld [vmem:[#allocation5 + $0x1d8] sm:$0xff]
    %v6547 = vld [vmem:[#allocation5 + $0x1e0] sm:$0xff]
    %v6548 = vld [vmem:[#allocation5 + $0x1e8] sm:$0xff]
    %v6549 = vld [vmem:[#allocation5 + $0x1f0] sm:$0xff]
    %v6550 = vld [vmem:[#allocation5 + $0x1f8] sm:$0xff]
    %v6551 = vld [vmem:[#allocation5 + $0x200] sm:$0xff]
    %v6552 = vld [vmem:[#allocation5 + $0x208] sm:$0xff]
    %v6553 = vld [vmem:[#allocation5 + $0x210] sm:$0xff]
    %v6554 = vld [vmem:[#allocation5 + $0x218] sm:$0xff]
    %v6555 = vld [vmem:[#allocation5 + $0x220] sm:$0xff]
    %v6556 = vld [vmem:[#allocation5 + $0x228] sm:$0xff]
    %v6557 = vld [vmem:[#allocation5 + $0x230] sm:$0xff]
    %v6558 = vld [vmem:[#allocation5 + $0x238] sm:$0xff]
    %v6559 = vld [vmem:[#allocation5 + $0x240] sm:$0xff]
    %v6560 = vld [vmem:[#allocation5 + $0x248] sm:$0xff]
    %v6561 = vld [vmem:[#allocation5 + $0x250] sm:$0xff]
    %v6562 = vld [vmem:[#allocation5 + $0x258] sm:$0xff]
    %v6563 = vld [vmem:[#allocation5 + $0x260] sm:$0xff]
    %v6564 = vld [vmem:[#allocation5 + $0x268] sm:$0xff]
    %v6565 = vld [vmem:[#allocation5 + $0x270] sm:$0xff]
    %v6566 = vld [vmem:[#allocation5 + $0x278] sm:$0xff]
    %v6567 = vld [vmem:[#allocation5 + $0x280] sm:$0xff]
    %v6568 = vld [vmem:[#allocation5 + $0x288] sm:$0xff]
    %v6569 = vld [vmem:[#allocation5 + $0x290] sm:$0xff]
    %v6570 = vld [vmem:[#allocation5 + $0x298] sm:$0xff]
    %v6571 = vld [vmem:[#allocation5 + $0x2a0] sm:$0xff]
    %v6572 = vld [vmem:[#allocation5 + $0x2a8] sm:$0xff]
    %v6573 = vld [vmem:[#allocation5 + $0x2b0] sm:$0xff]
    %v6574 = vld [vmem:[#allocation5 + $0x2b8] sm:$0xff]
    %v6575 = vld [vmem:[#allocation5 + $0x2c0] sm:$0xff]
    %v6576 = vld [vmem:[#allocation5 + $0x2c8] sm:$0xff]
    %v6577 = vld [vmem:[#allocation5 + $0x2d0] sm:$0xff]
    %v6578 = vld [vmem:[#allocation5 + $0x2d8] sm:$0xff]
    %v6579 = vld [vmem:[#allocation5 + $0x2e0] sm:$0xff]
    %v6580 = vld [vmem:[#allocation5 + $0x2e8] sm:$0xff]
    %v6581 = vld [vmem:[#allocation5 + $0x2f0] sm:$0xff]
    %v6582 = vld [vmem:[#allocation5 + $0x2f8] sm:$0xff]
    %v6583 = vld [vmem:[#allocation5 + $0x300] sm:$0xff]
    %v6584 = vld [vmem:[#allocation5 + $0x308] sm:$0xff]
    %v6585 = vld [vmem:[#allocation5 + $0x310] sm:$0xff]
    %v6586 = vld [vmem:[#allocation5 + $0x318] sm:$0xff]
    %v6587 = vld [vmem:[#allocation5 + $0x320] sm:$0xff]
    %v6588 = vld [vmem:[#allocation5 + $0x328] sm:$0xff]
    %v6589 = vld [vmem:[#allocation5 + $0x330] sm:$0xff]
    %v6590 = vld [vmem:[#allocation5 + $0x338] sm:$0xff]
    %v6591 = vld [vmem:[#allocation5 + $0x340] sm:$0xff]
    %v6592 = vld [vmem:[#allocation5 + $0x348] sm:$0xff]
    %v6593 = vld [vmem:[#allocation5 + $0x350] sm:$0xff]
    %v6594 = vld [vmem:[#allocation5 + $0x358] sm:$0xff]
    %v6595 = vld [vmem:[#allocation5 + $0x360] sm:$0xff]
    %v6596 = vld [vmem:[#allocation5 + $0x368] sm:$0xff]
    %v6597 = vld [vmem:[#allocation5 + $0x370] sm:$0xff]
    %v6598 = vld [vmem:[#allocation5 + $0x378] sm:$0xff]
    %v6599 = vld [vmem:[#allocation5 + $0x380] sm:$0xff]
    %v6600 = vld [vmem:[#allocation5 + $0x388] sm:$0xff]
    %v6601 = vld [vmem:[#allocation5 + $0x390] sm:$0xff]
    %v6602 = vld [vmem:[#allocation5 + $0x398] sm:$0xff]
    %v6603 = vld [vmem:[#allocation5 + $0x3a0] sm:$0xff]
    %v6604 = vld [vmem:[#allocation5 + $0x3a8] sm:$0xff]
    %v6605 = vld [vmem:[#allocation5 + $0x3b0] sm:$0xff]
    %v6606 = vld [vmem:[#allocation5 + $0x3b8] sm:$0xff]
    %v6607 = vld [vmem:[#allocation5 + $0x3c0] sm:$0xff]
    %v6608 = vld [vmem:[#allocation5 + $0x3c8] sm:$0xff]
    %v6609 = vld [vmem:[#allocation5 + $0x3d0] sm:$0xff]
    %v6610 = vld [vmem:[#allocation5 + $0x3d8] sm:$0xff]
    %v6611 = vld [vmem:[#allocation5 + $0x3e0] sm:$0xff]
    %v6612 = vld [vmem:[#allocation5 + $0x3e8] sm:$0xff]
    %v6613 = vld [vmem:[#allocation5 + $0x3f0] sm:$0xff]
    %v6614 = vld [vmem:[#allocation5 + $0x3f8] sm:$0xff]
    %v6615 = vld [vmem:[#allocation5 + $0x400] sm:$0xff]
    %v6616 = vld [vmem:[#allocation5 + $0x408] sm:$0xff]
    %v6617 = vld [vmem:[#allocation5 + $0x410] sm:$0xff]
    %v6618 = vld [vmem:[#allocation5 + $0x418] sm:$0xff]
    %v6619 = vld [vmem:[#allocation5 + $0x420] sm:$0xff]
    %v6620 = vld [vmem:[#allocation5 + $0x428] sm:$0xff]
    %v6621 = vld [vmem:[#allocation5 + $0x430] sm:$0xff]
    %v6622 = vld [vmem:[#allocation5 + $0x438] sm:$0xff]
    %v6623 = vld [vmem:[#allocation5 + $0x440] sm:$0xff]
    %v6624 = vld [vmem:[#allocation5 + $0x448] sm:$0xff]
    %v6625 = vld [vmem:[#allocation5 + $0x450] sm:$0xff]
    %v6626 = vld [vmem:[#allocation5 + $0x458] sm:$0xff]
    %v6627 = vld [vmem:[%s11] sm:$0x3]
    %v6629 = vlaneseq
    %v6630 = vshrl.u32 %v6629, 7
    %v6631 = vsub.s32 0, %v6630
    %v6632 = vrot.slane %v6627, %v6631
    %v6633 = vlaneseq
    %v6634 = vshrl.u32 %v6633, 7
    %v6635 = vsub.s32 1, %v6634
    %v6636 = vrot.slane %v6627, %v6635
    %v6779 = vunpack.c.l.b16 %v6487
    %v6780 = vunpack.c.h.b16 %v6487
    %v6781 = vunpack.c.l.b16 %v6488
    %v6782 = vunpack.c.h.b16 %v6488
    %v6783 = vunpack.c.l.b16 %v6489
    %v6784 = vunpack.c.h.b16 %v6489
    %v6785 = vunpack.c.l.b16 %v6490
    %v6786 = vunpack.c.h.b16 %v6490
    %v6787 = vunpack.c.l.b16 %v6491
    %v6788 = vunpack.c.h.b16 %v6491
    %v6789 = vunpack.c.l.b16 %v6492
    %v6790 = vunpack.c.h.b16 %v6492
    %v6791 = vunpack.c.l.b16 %v6493
    %v6792 = vunpack.c.h.b16 %v6493
    %v6793 = vunpack.c.l.b16 %v6494
    %v6794 = vunpack.c.h.b16 %v6494
    %v6795 = vunpack.c.l.b16 %v6495
    %v6796 = vunpack.c.h.b16 %v6495
    %v6797 = vunpack.c.l.b16 %v6496
    %v6798 = vunpack.c.h.b16 %v6496
    %v6799 = vunpack.c.l.b16 %v6497
    %v6800 = vunpack.c.h.b16 %v6497
    %v6801 = vunpack.c.l.b16 %v6498
    %v6802 = vunpack.c.h.b16 %v6498
    %v6803 = vunpack.c.l.b16 %v6499
    %v6804 = vunpack.c.h.b16 %v6499
    %v6805 = vunpack.c.l.b16 %v6500
    %v6806 = vunpack.c.h.b16 %v6500
    %v6807 = vunpack.c.l.b16 %v6501
    %v6808 = vunpack.c.h.b16 %v6501
    %v6809 = vunpack.c.l.b16 %v6502
    %v6810 = vunpack.c.h.b16 %v6502
    %v6811 = vunpack.c.l.b16 %v6503
    %v6812 = vunpack.c.h.b16 %v6503
    %v6813 = vunpack.c.l.b16 %v6504
    %v6814 = vunpack.c.h.b16 %v6504
    %v6815 = vunpack.c.l.b16 %v6505
    %v6816 = vunpack.c.h.b16 %v6505
    %v6817 = vunpack.c.l.b16 %v6506
    %v6818 = vunpack.c.h.b16 %v6506
    %v6819 = vunpack.c.l.b16 %v6507
    %v6820 = vunpack.c.h.b16 %v6507
    %v6821 = vunpack.c.l.b16 %v6508
    %v6822 = vunpack.c.h.b16 %v6508
    %v6823 = vunpack.c.l.b16 %v6509
    %v6824 = vunpack.c.h.b16 %v6509
    %v6825 = vunpack.c.l.b16 %v6510
    %v6826 = vunpack.c.h.b16 %v6510
    %v6827 = vunpack.c.l.b16 %v6511
    %v6828 = vunpack.c.h.b16 %v6511
    %v6829 = vunpack.c.l.b16 %v6512
    %v6830 = vunpack.c.h.b16 %v6512
    %v6831 = vunpack.c.l.b16 %v6513
    %v6832 = vunpack.c.h.b16 %v6513
    %v6833 = vunpack.c.l.b16 %v6514
    %v6834 = vunpack.c.h.b16 %v6514
    %v6835 = vunpack.c.l.b16 %v6515
    %v6836 = vunpack.c.h.b16 %v6515
    %v6837 = vunpack.c.l.b16 %v6516
    %v6838 = vunpack.c.h.b16 %v6516
    %v6839 = vunpack.c.l.b16 %v6517
    %v6840 = vunpack.c.h.b16 %v6517
    %v6841 = vunpack.c.l.b16 %v6518
    %v6842 = vunpack.c.h.b16 %v6518
    %v6843 = vunpack.c.l.b16 %v6519
    %v6844 = vunpack.c.h.b16 %v6519
    %v6845 = vunpack.c.l.b16 %v6520
    %v6846 = vunpack.c.h.b16 %v6520
    %v6847 = vunpack.c.l.b16 %v6521
    %v6848 = vunpack.c.h.b16 %v6521
    %v6849 = vunpack.c.l.b16 %v6522
    %v6850 = vunpack.c.h.b16 %v6522
    %v6851 = vunpack.c.l.b16 %v6523
    %v6852 = vunpack.c.h.b16 %v6523
    %v6853 = vunpack.c.l.b16 %v6524
    %v6854 = vunpack.c.h.b16 %v6524
    %v6855 = vunpack.c.l.b16 %v6525
    %v6856 = vunpack.c.h.b16 %v6525
    %v6857 = vunpack.c.l.b16 %v6526
    %v6858 = vunpack.c.h.b16 %v6526
    %v6859 = vunpack.c.l.b16 %v6527
    %v6860 = vunpack.c.h.b16 %v6527
    %v6861 = vunpack.c.l.b16 %v6528
    %v6862 = vunpack.c.h.b16 %v6528
    %v6863 = vunpack.c.l.b16 %v6529
    %v6864 = vunpack.c.h.b16 %v6529
    %v6865 = vunpack.c.l.b16 %v6530
    %v6866 = vunpack.c.h.b16 %v6530
    %v6867 = vunpack.c.l.b16 %v6531
    %v6868 = vunpack.c.h.b16 %v6531
    %v6869 = vunpack.c.l.b16 %v6532
    %v6870 = vunpack.c.h.b16 %v6532
    %v6871 = vunpack.c.l.b16 %v6533
    %v6872 = vunpack.c.h.b16 %v6533
    %v6873 = vunpack.c.l.b16 %v6534
    %v6874 = vunpack.c.h.b16 %v6534
    %v6875 = vunpack.c.l.b16 %v6535
    %v6876 = vunpack.c.h.b16 %v6535
    %v6877 = vunpack.c.l.b16 %v6536
    %v6878 = vunpack.c.h.b16 %v6536
    %v6879 = vunpack.c.l.b16 %v6537
    %v6880 = vunpack.c.h.b16 %v6537
    %v6881 = vunpack.c.l.b16 %v6538
    %v6882 = vunpack.c.h.b16 %v6538
    %v6883 = vunpack.c.l.b16 %v6539
    %v6884 = vunpack.c.h.b16 %v6539
    %v6885 = vunpack.c.l.b16 %v6540
    %v6886 = vunpack.c.h.b16 %v6540
    %v6887 = vunpack.c.l.b16 %v6541
    %v6888 = vunpack.c.h.b16 %v6541
    %v6889 = vunpack.c.l.b16 %v6542
    %v6890 = vunpack.c.h.b16 %v6542
    %v6891 = vunpack.c.l.b16 %v6543
    %v6892 = vunpack.c.h.b16 %v6543
    %v6893 = vunpack.c.l.b16 %v6544
    %v6894 = vunpack.c.h.b16 %v6544
    %v6895 = vunpack.c.l.b16 %v6545
    %v6896 = vunpack.c.h.b16 %v6545
    %v6897 = vunpack.c.l.b16 %v6546
    %v6898 = vunpack.c.h.b16 %v6546
    %v6899 = vunpack.c.l.b16 %v6547
    %v6900 = vunpack.c.h.b16 %v6547
    %v6901 = vunpack.c.l.b16 %v6548
    %v6902 = vunpack.c.h.b16 %v6548
    %v6903 = vunpack.c.l.b16 %v6549
    %v6904 = vunpack.c.h.b16 %v6549
    %v6905 = vunpack.c.l.b16 %v6550
    %v6906 = vunpack.c.h.b16 %v6550
    %v6907 = vunpack.c.l.b16 %v6551
    %v6908 = vunpack.c.h.b16 %v6551
    %v6909 = vunpack.c.l.b16 %v6552
    %v6910 = vunpack.c.h.b16 %v6552
    %v6911 = vunpack.c.l.b16 %v6553
    %v6912 = vunpack.c.h.b16 %v6553
    %v6913 = vunpack.c.l.b16 %v6554
    %v6914 = vunpack.c.h.b16 %v6554
    %v6915 = vunpack.c.l.b16 %v6555
    %v6916 = vunpack.c.h.b16 %v6555
    %v6917 = vunpack.c.l.b16 %v6556
    %v6918 = vunpack.c.h.b16 %v6556
    %v6919 = vunpack.c.l.b16 %v6557
    %v6920 = vunpack.c.h.b16 %v6557
    %v6921 = vunpack.c.l.b16 %v6558
    %v6922 = vunpack.c.h.b16 %v6558
    %v6923 = vunpack.c.l.b16 %v6559
    %v6924 = vunpack.c.h.b16 %v6559
    %v6925 = vunpack.c.l.b16 %v6560
    %v6926 = vunpack.c.h.b16 %v6560
    %v6927 = vunpack.c.l.b16 %v6561
    %v6928 = vunpack.c.h.b16 %v6561
    %v6929 = vunpack.c.l.b16 %v6562
    %v6930 = vunpack.c.h.b16 %v6562
    %v6931 = vunpack.c.l.b16 %v6563
    %v6932 = vunpack.c.h.b16 %v6563
    %v6933 = vunpack.c.l.b16 %v6564
    %v6934 = vunpack.c.h.b16 %v6564
    %v6935 = vunpack.c.l.b16 %v6565
    %v6936 = vunpack.c.h.b16 %v6565
    %v6937 = vunpack.c.l.b16 %v6566
    %v6938 = vunpack.c.h.b16 %v6566
    %v6939 = vunpack.c.l.b16 %v6567
    %v6940 = vunpack.c.h.b16 %v6567
    %v6941 = vunpack.c.l.b16 %v6568
    %v6942 = vunpack.c.h.b16 %v6568
    %v6943 = vunpack.c.l.b16 %v6569
    %v6944 = vunpack.c.h.b16 %v6569
    %v6945 = vunpack.c.l.b16 %v6570
    %v6946 = vunpack.c.h.b16 %v6570
    %v6947 = vunpack.c.l.b16 %v6571
    %v6948 = vunpack.c.h.b16 %v6571
    %v6949 = vunpack.c.l.b16 %v6572
    %v6950 = vunpack.c.h.b16 %v6572
    %v6951 = vunpack.c.l.b16 %v6573
    %v6952 = vunpack.c.h.b16 %v6573
    %v6953 = vunpack.c.l.b16 %v6574
    %v6954 = vunpack.c.h.b16 %v6574
    %v6955 = vunpack.c.l.b16 %v6575
    %v6956 = vunpack.c.h.b16 %v6575
    %v6957 = vunpack.c.l.b16 %v6576
    %v6958 = vunpack.c.h.b16 %v6576
    %v6959 = vunpack.c.l.b16 %v6577
    %v6960 = vunpack.c.h.b16 %v6577
    %v6961 = vunpack.c.l.b16 %v6578
    %v6962 = vunpack.c.h.b16 %v6578
    %v6963 = vunpack.c.l.b16 %v6579
    %v6964 = vunpack.c.h.b16 %v6579
    %v6965 = vunpack.c.l.b16 %v6580
    %v6966 = vunpack.c.h.b16 %v6580
    %v6967 = vunpack.c.l.b16 %v6581
    %v6968 = vunpack.c.h.b16 %v6581
    %v6969 = vunpack.c.l.b16 %v6582
    %v6970 = vunpack.c.h.b16 %v6582
    %v6971 = vunpack.c.l.b16 %v6583
    %v6972 = vunpack.c.h.b16 %v6583
    %v6973 = vunpack.c.l.b16 %v6584
    %v6974 = vunpack.c.h.b16 %v6584
    %v6975 = vunpack.c.l.b16 %v6585
    %v6976 = vunpack.c.h.b16 %v6585
    %v6977 = vunpack.c.l.b16 %v6586
    %v6978 = vunpack.c.h.b16 %v6586
    %v6979 = vunpack.c.l.b16 %v6587
    %v6980 = vunpack.c.h.b16 %v6587
    %v6981 = vunpack.c.l.b16 %v6588
    %v6982 = vunpack.c.h.b16 %v6588
    %v6983 = vunpack.c.l.b16 %v6589
    %v6984 = vunpack.c.h.b16 %v6589
    %v6985 = vunpack.c.l.b16 %v6590
    %v6986 = vunpack.c.h.b16 %v6590
    %v6987 = vunpack.c.l.b16 %v6591
    %v6988 = vunpack.c.h.b16 %v6591
    %v6989 = vunpack.c.l.b16 %v6592
    %v6990 = vunpack.c.h.b16 %v6592
    %v6991 = vunpack.c.l.b16 %v6593
    %v6992 = vunpack.c.h.b16 %v6593
    %v6993 = vunpack.c.l.b16 %v6594
    %v6994 = vunpack.c.h.b16 %v6594
    %v6995 = vunpack.c.l.b16 %v6595
    %v6996 = vunpack.c.h.b16 %v6595
    %v6997 = vunpack.c.l.b16 %v6596
    %v6998 = vunpack.c.h.b16 %v6596
    %v6999 = vunpack.c.l.b16 %v6597
    %v7000 = vunpack.c.h.b16 %v6597
    %v7001 = vunpack.c.l.b16 %v6598
    %v7002 = vunpack.c.h.b16 %v6598
    %v7003 = vunpack.c.l.b16 %v6599
    %v7004 = vunpack.c.h.b16 %v6599
    %v7005 = vunpack.c.l.b16 %v6600
    %v7006 = vunpack.c.h.b16 %v6600
    %v7007 = vunpack.c.l.b16 %v6601
    %v7008 = vunpack.c.h.b16 %v6601
    %v7009 = vunpack.c.l.b16 %v6602
    %v7010 = vunpack.c.h.b16 %v6602
    %v7011 = vunpack.c.l.b16 %v6603
    %v7012 = vunpack.c.h.b16 %v6603
    %v7013 = vunpack.c.l.b16 %v6604
    %v7014 = vunpack.c.h.b16 %v6604
    %v7015 = vunpack.c.l.b16 %v6605
    %v7016 = vunpack.c.h.b16 %v6605
    %v7017 = vunpack.c.l.b16 %v6606
    %v7018 = vunpack.c.h.b16 %v6606
    %v7019 = vunpack.c.l.b16 %v6607
    %v7020 = vunpack.c.h.b16 %v6607
    %v7021 = vunpack.c.l.b16 %v6608
    %v7022 = vunpack.c.h.b16 %v6608
    %v7023 = vunpack.c.l.b16 %v6609
    %v7024 = vunpack.c.h.b16 %v6609
    %v7025 = vunpack.c.l.b16 %v6610
    %v7026 = vunpack.c.h.b16 %v6610
    %v7027 = vunpack.c.l.b16 %v6611
    %v7028 = vunpack.c.h.b16 %v6611
    %v7029 = vunpack.c.l.b16 %v6612
    %v7030 = vunpack.c.h.b16 %v6612
    %v7031 = vunpack.c.l.b16 %v6613
    %v7032 = vunpack.c.h.b16 %v6613
    %v7033 = vunpack.c.l.b16 %v6614
    %v7034 = vunpack.c.h.b16 %v6614
    %v7035 = vunpack.c.l.b16 %v6615
    %v7036 = vunpack.c.h.b16 %v6615
    %v7037 = vunpack.c.l.b16 %v6616
    %v7038 = vunpack.c.h.b16 %v6616
    %v7039 = vunpack.c.l.b16 %v6617
    %v7040 = vunpack.c.h.b16 %v6617
    %v7041 = vunpack.c.l.b16 %v6618
    %v7042 = vunpack.c.h.b16 %v6618
    %v7043 = vunpack.c.l.b16 %v6619
    %v7044 = vunpack.c.h.b16 %v6619
    %v7045 = vunpack.c.l.b16 %v6620
    %v7046 = vunpack.c.h.b16 %v6620
    %v7047 = vunpack.c.l.b16 %v6621
    %v7048 = vunpack.c.h.b16 %v6621
    %v7049 = vunpack.c.l.b16 %v6622
    %v7050 = vunpack.c.h.b16 %v6622
    %v7051 = vunpack.c.l.b16 %v6623
    %v7052 = vunpack.c.h.b16 %v6623
    %v7053 = vunpack.c.l.b16 %v6624
    %v7054 = vunpack.c.h.b16 %v6624
    %v7055 = vunpack.c.l.b16 %v6625
    %v7056 = vunpack.c.h.b16 %v6625
    %v7057 = vunpack.c.l.b16 %v6626
    %v7058 = vunpack.c.h.b16 %v6626
    %v7059 = vpack.c.b16 %v6781, %v6779
    %v7060 = vpack.c.b16 %v6782, %v6780
    %v7061 = vpack.c.b16 %v6785, %v6783
    %v7062 = vpack.c.b16 %v6786, %v6784
    %v7063 = vpack.c.b16 %v6789, %v6787
    %v7064 = vpack.c.b16 %v6790, %v6788
    %v7065 = vpack.c.b16 %v6793, %v6791
    %v7066 = vpack.c.b16 %v6794, %v6792
    %v7067 = vpack.c.b16 %v6797, %v6795
    %v7068 = vpack.c.b16 %v6798, %v6796
    %v7069 = vpack.c.b16 %v6801, %v6799
    %v7070 = vpack.c.b16 %v6802, %v6800
    %v7071 = vpack.c.b16 %v6805, %v6803
    %v7072 = vpack.c.b16 %v6806, %v6804
    %v7073 = vpack.c.b16 %v6809, %v6807
    %v7074 = vpack.c.b16 %v6810, %v6808
    %v7075 = vpack.c.b16 %v6813, %v6811
    %v7076 = vpack.c.b16 %v6814, %v6812
    %v7077 = vpack.c.b16 %v6817, %v6815
    %v7078 = vpack.c.b16 %v6818, %v6816
    %v7079 = vpack.c.b16 %v6821, %v6819
    %v7080 = vpack.c.b16 %v6822, %v6820
    %v7081 = vpack.c.b16 %v6825, %v6823
    %v7082 = vpack.c.b16 %v6826, %v6824
    %v7083 = vpack.c.b16 %v6829, %v6827
    %v7084 = vpack.c.b16 %v6830, %v6828
    %v7085 = vpack.c.b16 %v6833, %v6831
    %v7086 = vpack.c.b16 %v6834, %v6832
    %v7087 = vpack.c.b16 %v6837, %v6835
    %v7088 = vpack.c.b16 %v6838, %v6836
    %v7089 = vpack.c.b16 %v6841, %v6839
    %v7090 = vpack.c.b16 %v6842, %v6840
    %v7091 = vpack.c.b16 %v6845, %v6843
    %v7092 = vpack.c.b16 %v6846, %v6844
    %v7093 = vpack.c.b16 %v6849, %v6847
    %v7094 = vpack.c.b16 %v6850, %v6848
    %v7095 = vpack.c.b16 %v6853, %v6851
    %v7096 = vpack.c.b16 %v6854, %v6852
    %v7097 = vpack.c.b16 %v6857, %v6855
    %v7098 = vpack.c.b16 %v6858, %v6856
    %v7099 = vpack.c.b16 %v6861, %v6859
    %v7100 = vpack.c.b16 %v6862, %v6860
    %v7101 = vpack.c.b16 %v6865, %v6863
    %v7102 = vpack.c.b16 %v6866, %v6864
    %v7103 = vpack.c.b16 %v6869, %v6867
    %v7104 = vpack.c.b16 %v6870, %v6868
    %v7105 = vpack.c.b16 %v6873, %v6871
    %v7106 = vpack.c.b16 %v6874, %v6872
    %v7107 = vpack.c.b16 %v6877, %v6875
    %v7108 = vpack.c.b16 %v6878, %v6876
    %v7109 = vpack.c.b16 %v6881, %v6879
    %v7110 = vpack.c.b16 %v6882, %v6880
    %v7111 = vpack.c.b16 %v6885, %v6883
    %v7112 = vpack.c.b16 %v6886, %v6884
    %v7113 = vpack.c.b16 %v6889, %v6887
    %v7114 = vpack.c.b16 %v6890, %v6888
    %v7115 = vpack.c.b16 %v6893, %v6891
    %v7116 = vpack.c.b16 %v6894, %v6892
    %v7117 = vpack.c.b16 %v6897, %v6895
    %v7118 = vpack.c.b16 %v6898, %v6896
    %v7119 = vpack.c.b16 %v6901, %v6899
    %v7120 = vpack.c.b16 %v6902, %v6900
    %v7121 = vpack.c.b16 %v6905, %v6903
    %v7122 = vpack.c.b16 %v6906, %v6904
    %v7123 = vpack.c.b16 %v6909, %v6907
    %v7124 = vpack.c.b16 %v6910, %v6908
    %v7125 = vpack.c.b16 %v6913, %v6911
    %v7126 = vpack.c.b16 %v6914, %v6912
    %v7127 = vpack.c.b16 %v6917, %v6915
    %v7128 = vpack.c.b16 %v6918, %v6916
    %v7129 = vpack.c.b16 %v6921, %v6919
    %v7130 = vpack.c.b16 %v6922, %v6920
    %v7131 = vpack.c.b16 %v6925, %v6923
    %v7132 = vpack.c.b16 %v6926, %v6924
    %v7133 = vpack.c.b16 %v6929, %v6927
    %v7134 = vpack.c.b16 %v6930, %v6928
    %v7135 = vpack.c.b16 %v6933, %v6931
    %v7136 = vpack.c.b16 %v6934, %v6932
    %v7137 = vpack.c.b16 %v6937, %v6935
    %v7138 = vpack.c.b16 %v6938, %v6936
    %v7139 = vpack.c.b16 %v6941, %v6939
    %v7140 = vpack.c.b16 %v6942, %v6940
    %v7141 = vpack.c.b16 %v6945, %v6943
    %v7142 = vpack.c.b16 %v6946, %v6944
    %v7143 = vpack.c.b16 %v6949, %v6947
    %v7144 = vpack.c.b16 %v6950, %v6948
    %v7145 = vpack.c.b16 %v6953, %v6951
    %v7146 = vpack.c.b16 %v6954, %v6952
    %v7147 = vpack.c.b16 %v6957, %v6955
    %v7148 = vpack.c.b16 %v6958, %v6956
    %v7149 = vpack.c.b16 %v6961, %v6959
    %v7150 = vpack.c.b16 %v6962, %v6960
    %v7151 = vpack.c.b16 %v6965, %v6963
    %v7152 = vpack.c.b16 %v6966, %v6964
    %v7153 = vpack.c.b16 %v6969, %v6967
    %v7154 = vpack.c.b16 %v6970, %v6968
    %v7155 = vpack.c.b16 %v6973, %v6971
    %v7156 = vpack.c.b16 %v6974, %v6972
    %v7157 = vpack.c.b16 %v6977, %v6975
    %v7158 = vpack.c.b16 %v6978, %v6976
    %v7159 = vpack.c.b16 %v6981, %v6979
    %v7160 = vpack.c.b16 %v6982, %v6980
    %v7161 = vpack.c.b16 %v6985, %v6983
    %v7162 = vpack.c.b16 %v6986, %v6984
    %v7163 = vpack.c.b16 %v6989, %v6987
    %v7164 = vpack.c.b16 %v6990, %v6988
    %v7165 = vpack.c.b16 %v6993, %v6991
    %v7166 = vpack.c.b16 %v6994, %v6992
    %v7167 = vpack.c.b16 %v6997, %v6995
    %v7168 = vpack.c.b16 %v6998, %v6996
    %v7169 = vpack.c.b16 %v7001, %v6999
    %v7170 = vpack.c.b16 %v7002, %v7000
    %v7171 = vpack.c.b16 %v7005, %v7003
    %v7172 = vpack.c.b16 %v7006, %v7004
    %v7173 = vpack.c.b16 %v7009, %v7007
    %v7174 = vpack.c.b16 %v7010, %v7008
    %v7175 = vpack.c.b16 %v7013, %v7011
    %v7176 = vpack.c.b16 %v7014, %v7012
    %v7177 = vpack.c.b16 %v7017, %v7015
    %v7178 = vpack.c.b16 %v7018, %v7016
    %v7179 = vpack.c.b16 %v7021, %v7019
    %v7180 = vpack.c.b16 %v7022, %v7020
    %v7181 = vpack.c.b16 %v7025, %v7023
    %v7182 = vpack.c.b16 %v7026, %v7024
    %v7183 = vpack.c.b16 %v7029, %v7027
    %v7184 = vpack.c.b16 %v7030, %v7028
    %v7185 = vpack.c.b16 %v7033, %v7031
    %v7186 = vpack.c.b16 %v7034, %v7032
    %v7187 = vpack.c.b16 %v7037, %v7035
    %v7188 = vpack.c.b16 %v7038, %v7036
    %v7189 = vpack.c.b16 %v7041, %v7039
    %v7190 = vpack.c.b16 %v7042, %v7040
    %v7191 = vpack.c.b16 %v7045, %v7043
    %v7192 = vpack.c.b16 %v7046, %v7044
    %v7193 = vpack.c.b16 %v7049, %v7047
    %v7194 = vpack.c.b16 %v7050, %v7048
    %v7195 = vpack.c.b16 %v7053, %v7051
    %v7196 = vpack.c.b16 %v7054, %v7052
    %v7197 = vpack.c.b16 %v7057, %v7055
    %v7198 = vpack.c.b16 %v7058, %v7056
    %v7340 = vsel %vm2271, %v6410, 0
    %v7343 = vsel %vm2271, %v6412, 0
    %7345 = vmatprep.subr.bf16.mxu0 %v7074
    %7346 = vmatpush1.bf16.msra.mxu0 %v7073
    %7347 = vmatprep.subr.bf16.mxu0 %v7072
    %7348 = vmatpush1.bf16.msra.mxu0 %v7071
    %7349 = vmatprep.subr.bf16.mxu0 %v7070
    %7350 = vmatpush1.bf16.msra.mxu0 %v7069
    %7351 = vmatprep.subr.bf16.mxu0 %v7068
    %7352 = vmatpush1.bf16.msra.mxu0 %v7067
    %7353 = vmatprep.subr.bf16.mxu0 %v7066
    %7354 = vmatpush1.bf16.msra.mxu0 %v7065
    %7355 = vmatprep.subr.bf16.mxu0 %v7064
    %7356 = vmatpush1.bf16.msra.mxu0 %v7063
    %7357 = vmatprep.subr.bf16.mxu0 %v7062
    %7358 = vmatpush1.bf16.msra.mxu0 %v7061
    %7359 = vmatprep.subr.bf16.mxu0 %v7060
    %7360 = vmatpush1.bf16.msra.mxu0 %v7059
    %7361 = vmatprep.subr.bf16.mxu0 %v7090
    %7362 = vmatpush2.bf16.msra.mxu0 %v7089
    %7363 = vmatprep.subr.bf16.mxu0 %v7088
    %7364 = vmatpush2.bf16.msra.mxu0 %v7087
    %7365 = vmatprep.subr.bf16.mxu0 %v7086
    %7366 = vmatpush2.bf16.msra.mxu0 %v7085
    %7367 = vmatprep.subr.bf16.mxu0 %v7084
    %7368 = vmatpush2.bf16.msra.mxu0 %v7083
    %7369 = vmatprep.subr.bf16.mxu0 %v7082
    %7370 = vmatpush2.bf16.msra.mxu0 %v7081
    %7371 = vmatprep.subr.bf16.mxu0 %v7080
    %7372 = vmatpush2.bf16.msra.mxu0 %v7079
    %7373 = vmatprep.subr.bf16.mxu0 %v7078
    %7374 = vmatpush2.bf16.msra.mxu0 %v7077
    %7375 = vmatprep.subr.bf16.mxu0 %v7076
    %7376 = vmatpush2.bf16.msra.mxu0 %v7075
    %7377 = vmatprep.mubr.bf16.mxu0 %v6463
    %7378 = vmatmul.mubr.bf16.gmra.mxu0 %v6393
    %v7379 = vpop.f32.mrf.mxu0
    %v7380 = vadd.f32 %v6632, %v7379
    %v7381 = vpop.f32.mrf.mxu0
    %v7382 = vadd.f32 %v6636, %v7381
    %v7383 = vpop.f32.mrf.mxu0
    %v7384 = vadd.f32 %v6632, %v7383
    %v7385 = vpop.f32.mrf.mxu0
    %v7386 = vadd.f32 %v6636, %v7385
    %7387 = vmatprep.mubr.bf16.mxu0 %v6467
    %7388 = vmatmul.mubr.bf16.gmra.mxu0 %v6395
    %v7389 = vpop.f32.mrf.mxu0
    %v7390 = vadd.f32 %v6632, %v7389
    %v7391 = vpop.f32.mrf.mxu0
    %v7392 = vadd.f32 %v6636, %v7391
    %v7393 = vpop.f32.mrf.mxu0
    %v7394 = vadd.f32 %v6632, %v7393
    %v7395 = vpop.f32.mrf.mxu0
    %v7396 = vadd.f32 %v6636, %v7395
    %7397 = vdwg.mxu0
    %7398 = vmatprep.subr.bf16.mxu0 %v7106
    %7399 = vmatpush1.bf16.msra.mxu0 %v7105
    %7400 = vmatprep.subr.bf16.mxu0 %v7104
    %7401 = vmatpush1.bf16.msra.mxu0 %v7103
    %7402 = vmatprep.subr.bf16.mxu0 %v7102
    %7403 = vmatpush1.bf16.msra.mxu0 %v7101
    %7404 = vmatprep.subr.bf16.mxu0 %v7100
    %7405 = vmatpush1.bf16.msra.mxu0 %v7099
    %7406 = vmatprep.subr.bf16.mxu0 %v7098
    %7407 = vmatpush1.bf16.msra.mxu0 %v7097
    %7408 = vmatprep.subr.bf16.mxu0 %v7096
    %7409 = vmatpush1.bf16.msra.mxu0 %v7095
    %7410 = vmatprep.subr.bf16.mxu0 %v7094
    %7411 = vmatpush1.bf16.msra.mxu0 %v7093
    %7412 = vmatprep.subr.bf16.mxu0 %v7092
    %7413 = vmatpush1.bf16.msra.mxu0 %v7091
    %7414 = vmatprep.subr.bf16.mxu0 %v7122
    %7415 = vmatpush2.bf16.msra.mxu0 %v7121
    %7416 = vmatprep.subr.bf16.mxu0 %v7120
    %7417 = vmatpush2.bf16.msra.mxu0 %v7119
    %7418 = vmatprep.subr.bf16.mxu0 %v7118
    %7419 = vmatpush2.bf16.msra.mxu0 %v7117
    %7420 = vmatprep.subr.bf16.mxu0 %v7116
    %7421 = vmatpush2.bf16.msra.mxu0 %v7115
    %7422 = vmatprep.subr.bf16.mxu0 %v7114
    %7423 = vmatpush2.bf16.msra.mxu0 %v7113
    %7424 = vmatprep.subr.bf16.mxu0 %v7112
    %7425 = vmatpush2.bf16.msra.mxu0 %v7111
    %7426 = vmatprep.subr.bf16.mxu0 %v7110
    %7427 = vmatpush2.bf16.msra.mxu0 %v7109
    %7428 = vmatprep.subr.bf16.mxu0 %v7108
    %7429 = vmatpush2.bf16.msra.mxu0 %v7107
    %7430 = vmatprep.mubr.bf16.mxu0 %v6471
    %7431 = vmatmul.mubr.bf16.gmra.mxu0 %v6425
    %v7432 = vpop.f32.mrf.mxu0
    %v7433 = vadd.f32 %v7380, %v7432
    %v7434 = vpop.f32.mrf.mxu0
    %v7435 = vadd.f32 %v7382, %v7434
    %v7436 = vpop.f32.mrf.mxu0
    %v7437 = vadd.f32 %v7384, %v7436
    %v7438 = vpop.f32.mrf.mxu0
    %v7439 = vadd.f32 %v7386, %v7438
    %7440 = vmatprep.mubr.bf16.mxu0 %v6475
    %7441 = vmatmul.mubr.bf16.gmra.mxu0 %v6426
    %v7442 = vpop.f32.mrf.mxu0
    %v7443 = vadd.f32 %v7390, %v7442
    %v7444 = vpop.f32.mrf.mxu0
    %v7445 = vadd.f32 %v7392, %v7444
    %v7446 = vpop.f32.mrf.mxu0
    %v7447 = vadd.f32 %v7394, %v7446
    %v7448 = vpop.f32.mrf.mxu0
    %v7449 = vadd.f32 %v7396, %v7448
    %7450 = vdwg.mxu0
    %7451 = vmatprep.subr.bf16.mxu0 %v7138
    %7452 = vmatpush1.bf16.msra.mxu0 %v7137
    %7453 = vmatprep.subr.bf16.mxu0 %v7136
    %7454 = vmatpush1.bf16.msra.mxu0 %v7135
    %7455 = vmatprep.subr.bf16.mxu0 %v7134
    %7456 = vmatpush1.bf16.msra.mxu0 %v7133
    %7457 = vmatprep.subr.bf16.mxu0 %v7132
    %7458 = vmatpush1.bf16.msra.mxu0 %v7131
    %7459 = vmatprep.subr.bf16.mxu0 %v7130
    %7460 = vmatpush1.bf16.msra.mxu0 %v7129
    %7461 = vmatprep.subr.bf16.mxu0 %v7128
    %7462 = vmatpush1.bf16.msra.mxu0 %v7127
    %7463 = vmatprep.subr.bf16.mxu0 %v7126
    %7464 = vmatpush1.bf16.msra.mxu0 %v7125
    %7465 = vmatprep.subr.bf16.mxu0 %v7124
    %7466 = vmatpush1.bf16.msra.mxu0 %v7123
    %7467 = vmatprep.subr.bf16.mxu0 %v7154
    %7468 = vmatpush2.bf16.msra.mxu0 %v7153
    %7469 = vmatprep.subr.bf16.mxu0 %v7152
    %7470 = vmatpush2.bf16.msra.mxu0 %v7151
    %7471 = vmatprep.subr.bf16.mxu0 %v7150
    %7472 = vmatpush2.bf16.msra.mxu0 %v7149
    %7473 = vmatprep.subr.bf16.mxu0 %v7148
    %7474 = vmatpush2.bf16.msra.mxu0 %v7147
    %7475 = vmatprep.subr.bf16.mxu0 %v7146
    %7476 = vmatpush2.bf16.msra.mxu0 %v7145
    %7477 = vmatprep.subr.bf16.mxu0 %v7144
    %7478 = vmatpush2.bf16.msra.mxu0 %v7143
    %7479 = vmatprep.subr.bf16.mxu0 %v7142
    %7480 = vmatpush2.bf16.msra.mxu0 %v7141
    %7481 = vmatprep.subr.bf16.mxu0 %v7140
    %7482 = vmatpush2.bf16.msra.mxu0 %v7139
    %7483 = vmatprep.mubr.bf16.mxu0 %v6479
    %7484 = vmatmul.mubr.bf16.gmra.mxu0 %v6441
    %v7485 = vpop.f32.mrf.mxu0
    %v7486 = vadd.f32 %v7433, %v7485
    %v7487 = vpop.f32.mrf.mxu0
    %v7488 = vadd.f32 %v7435, %v7487
    %v7489 = vpop.f32.mrf.mxu0
    %v7490 = vadd.f32 %v7437, %v7489
    %v7491 = vpop.f32.mrf.mxu0
    %v7492 = vadd.f32 %v7439, %v7491
    %7493 = vmatprep.mubr.bf16.mxu0 %v6483
    %7494 = vmatmul.mubr.bf16.gmra.mxu0 %v6442
    %v7495 = vpop.f32.mrf.mxu0
    %v7496 = vadd.f32 %v7443, %v7495
    %v7497 = vpop.f32.mrf.mxu0
    %v7498 = vadd.f32 %v7445, %v7497
    %v7499 = vpop.f32.mrf.mxu0
    %v7500 = vadd.f32 %v7447, %v7499
    %v7501 = vpop.f32.mrf.mxu0
    %v7502 = vadd.f32 %v7449, %v7501
    %7503 = vdwg.mxu0
    %7504 = vmatprep.subr.bf16.mxu0 %v7170
    %7505 = vmatpush1.bf16.msra.mxu0 %v7169
    %7506 = vmatprep.subr.bf16.mxu0 %v7168
    %7507 = vmatpush1.bf16.msra.mxu0 %v7167
    %7508 = vmatprep.subr.bf16.mxu0 %v7166
    %7509 = vmatpush1.bf16.msra.mxu0 %v7165
    %7510 = vmatprep.subr.bf16.mxu0 %v7164
    %7511 = vmatpush1.bf16.msra.mxu0 %v7163
    %7512 = vmatprep.subr.bf16.mxu0 %v7162
    %7513 = vmatpush1.bf16.msra.mxu0 %v7161
    %7514 = vmatprep.subr.bf16.mxu0 %v7160
    %7515 = vmatpush1.bf16.msra.mxu0 %v7159
    %7516 = vmatprep.subr.bf16.mxu0 %v7158
    %7517 = vmatpush1.bf16.msra.mxu0 %v7157
    %7518 = vmatprep.subr.bf16.mxu0 %v7156
    %7519 = vmatpush1.bf16.msra.mxu0 %v7155
    %7520 = vmatprep.subr.bf16.mxu0 %v7186
    %7521 = vmatpush2.bf16.msra.mxu0 %v7185
    %7522 = vmatprep.subr.bf16.mxu0 %v7184
    %7523 = vmatpush2.bf16.msra.mxu0 %v7183
    %7524 = vmatprep.subr.bf16.mxu0 %v7182
    %7525 = vmatpush2.bf16.msra.mxu0 %v7181
    %7526 = vmatprep.subr.bf16.mxu0 %v7180
    %7527 = vmatpush2.bf16.msra.mxu0 %v7179
    %7528 = vmatprep.subr.bf16.mxu0 %v7178
    %7529 = vmatpush2.bf16.msra.mxu0 %v7177
    %7530 = vmatprep.subr.bf16.mxu0 %v7176
    %7531 = vmatpush2.bf16.msra.mxu0 %v7175
    %7532 = vmatprep.subr.bf16.mxu0 %v7174
    %7533 = vmatpush2.bf16.msra.mxu0 %v7173
    %7534 = vmatprep.subr.bf16.mxu0 %v7172
    %7535 = vmatpush2.bf16.msra.mxu0 %v7171
    %7536 = vmatprep.mubr.bf16.mxu0 %v6409
    %7537 = vmatmul.mubr.bf16.gmra.mxu0 %v6457
    %v7538 = vpop.f32.mrf.mxu0
    %v7539 = vadd.f32 %v7486, %v7538
    %v7540 = vpop.f32.mrf.mxu0
    %v7541 = vadd.f32 %v7488, %v7540
    %v7542 = vpop.f32.mrf.mxu0
    %v7543 = vadd.f32 %v7490, %v7542
    %v7544 = vpop.f32.mrf.mxu0
    %v7545 = vadd.f32 %v7492, %v7544
    %7546 = vmatprep.mubr.bf16.mxu0 %v6411
    %7547 = vmatmul.mubr.bf16.gmra.mxu0 %v6458
    %v7548 = vpop.f32.mrf.mxu0
    %v7549 = vadd.f32 %v7496, %v7548
    %v7550 = vpop.f32.mrf.mxu0
    %v7551 = vadd.f32 %v7498, %v7550
    %v7552 = vpop.f32.mrf.mxu0
    %v7553 = vadd.f32 %v7500, %v7552
    %v7554 = vpop.f32.mrf.mxu0
    %v7555 = vadd.f32 %v7502, %v7554
    %7556 = vdwg.mxu0
    %7557 = vmatprep.subr.bf16.mxu0 0
    %7558 = vmatpush1.bf16.msra.mxu0 0
    %7559 = vmatprep.subr.bf16.mxu0 0
    %7560 = vmatpush1.bf16.msra.mxu0 0
    %7561 = vmatprep.subr.bf16.mxu0 %v7198
    %7562 = vmatpush1.bf16.msra.mxu0 %v7197
    %7563 = vmatprep.subr.bf16.mxu0 %v7196
    %7564 = vmatpush1.bf16.msra.mxu0 %v7195
    %7565 = vmatprep.subr.bf16.mxu0 %v7194
    %7566 = vmatpush1.bf16.msra.mxu0 %v7193
    %7567 = vmatprep.subr.bf16.mxu0 %v7192
    %7568 = vmatpush1.bf16.msra.mxu0 %v7191
    %7569 = vmatprep.subr.bf16.mxu0 %v7190
    %7570 = vmatpush1.bf16.msra.mxu0 %v7189
    %7571 = vmatprep.subr.bf16.mxu0 %v7188
    %7572 = vmatpush1.bf16.msra.mxu0 %v7187
    %7573 = vmatprep.subr.bf16.mxu0 0
    %7574 = vmatpush2.bf16.msra.mxu0 0
    %7575 = vmatprep.subr.bf16.mxu0 0
    %7576 = vmatpush2.bf16.msra.mxu0 0
    %7577 = vmatprep.subr.bf16.mxu0 0
    %7578 = vmatpush2.bf16.msra.mxu0 0
    %7579 = vmatprep.subr.bf16.mxu0 0
    %7580 = vmatpush2.bf16.msra.mxu0 0
    %7581 = vmatprep.subr.bf16.mxu0 0
    %7582 = vmatpush2.bf16.msra.mxu0 0
    %7583 = vmatprep.subr.bf16.mxu0 0
    %7584 = vmatpush2.bf16.msra.mxu0 0
    %7585 = vmatprep.subr.bf16.mxu0 0
    %7586 = vmatpush2.bf16.msra.mxu0 0
    %7587 = vmatprep.subr.bf16.mxu0 0
    %7588 = vmatpush2.bf16.msra.mxu0 0
    %7589 = vmatprep.mubr.bf16.mxu0 0
    %7590 = vmatmul.mubr.bf16.gmra.mxu0 %v7340
    %v7591 = vpop.f32.mrf.mxu0
    %v7592 = vadd.f32 %v7539, %v7591
    %v7593 = vpop.f32.mrf.mxu0
    %v7594 = vadd.f32 %v7541, %v7593
    %v7595 = vpop.f32.mrf.mxu0
    %v7596 = vadd.f32 %v7543, %v7595
    %v7597 = vpop.f32.mrf.mxu0
    %v7598 = vadd.f32 %v7545, %v7597
    %7599 = vmatprep.mubr.bf16.mxu0 0
    %7600 = vmatmul.mubr.bf16.gmra.mxu0 %v7343
    %v7601 = vpop.f32.mrf.mxu0
    %v7602 = vadd.f32 %v7549, %v7601
    %v7603 = vpop.f32.mrf.mxu0
    %v7604 = vadd.f32 %v7551, %v7603
    %v7605 = vpop.f32.mrf.mxu0
    %v7606 = vadd.f32 %v7553, %v7605
    %v7607 = vpop.f32.mrf.mxu0
    %v7608 = vadd.f32 %v7555, %v7607
    %7609 = vdwg.mxu0
    %v7610 = vmax.f32 %v7592, 0.0
    %v7611 = vmax.f32 %v7594, 0.0
    %v7612 = vmax.f32 %v7596, 0.0
    %v7613 = vmax.f32 %v7598, 0.0
    %v7614 = vmax.f32 %v7602, 0.0
    %v7615 = vmax.f32 %v7604, 0.0
    %v7616 = vmax.f32 %v7606, 0.0
    %v7617 = vmax.f32 %v7608, 0.0
    %v7618 = vpack.c.bf16 %v7612, %v7610
    %v7619 = vpack.c.bf16 %v7613, %v7611
    %v7620 = vpack.c.bf16 %v7616, %v7614
    %v7621 = vpack.c.bf16 %v7617, %v7615
    %v7622 = vld [vmem:[%s12] sm:$0xf]
    %v7623 = vld [vmem:[%s12 + $0x4] sm:$0xf]
    %v7624 = vld [vmem:[%s12 + $0x8] sm:$0xf]
    %v7625 = vld [vmem:[%s12 + $0xc] sm:$0xf]
    %v7626 = vld [vmem:[%s12 + $0x10] sm:$0xf]
    %v7627 = vld [vmem:[%s12 + $0x14] sm:$0xf]
    %v7628 = vld [vmem:[%s12 + $0x18] sm:$0xf]
    %v7629 = vld [vmem:[%s12 + $0x1c] sm:$0xf]
    %v7630 = vld [vmem:[%s12 + $0x20] sm:$0xf]
    %v7631 = vld [vmem:[%s12 + $0x24] sm:$0xf]
    %v7632 = vld [vmem:[%s12 + $0x28] sm:$0xf]
    %v7633 = vld [vmem:[%s12 + $0x2c] sm:$0xf]
    %v7634 = vld [vmem:[%s12 + $0x30] sm:$0xf]
    %v7635 = vld [vmem:[%s12 + $0x34] sm:$0xf]
    %v7636 = vld [vmem:[%s12 + $0x38] sm:$0xf]
    %v7637 = vld [vmem:[%s12 + $0x3c] sm:$0xf]
    %v7638 = vld [vmem:[%s12 + $0x40] sm:$0xf]
    %v7639 = vld [vmem:[%s12 + $0x44] sm:$0xf]
    %v7640 = vld [vmem:[%s12 + $0x48] sm:$0xf]
    %v7641 = vld [vmem:[%s12 + $0x4c] sm:$0xf]
    %v7642 = vld [vmem:[%s12 + $0x50] sm:$0xf]
    %v7643 = vld [vmem:[%s12 + $0x54] sm:$0xf]
    %v7644 = vld [vmem:[%s12 + $0x58] sm:$0xf]
    %v7645 = vld [vmem:[%s12 + $0x5c] sm:$0xf]
    %v7646 = vld [vmem:[%s12 + $0x60] sm:$0xf]
    %v7647 = vld [vmem:[%s12 + $0x64] sm:$0xf]
    %v7648 = vld [vmem:[%s12 + $0x68] sm:$0xf]
    %v7649 = vld [vmem:[%s12 + $0x6c] sm:$0xf]
    %v7650 = vld [vmem:[%s12 + $0x70] sm:$0xf]
    %v7651 = vld [vmem:[%s12 + $0x74] sm:$0xf]
    %v7652 = vld [vmem:[%s12 + $0x78] sm:$0xf]
    %v7653 = vld [vmem:[%s12 + $0x7c] sm:$0xf]
    %v7654 = vld [vmem:[%s12 + $0x80] sm:$0xf]
    %v7655 = vld [vmem:[%s12 + $0x84] sm:$0xf]
    %v7656 = vld [vmem:[%s12 + $0x88] sm:$0xf]
    %v7692 = vunpack.c.l.b16 %v7622
    %v7693 = vunpack.c.l.b16 %v7623
    %v7694 = vunpack.c.l.b16 %v7624
    %v7695 = vunpack.c.l.b16 %v7625
    %v7696 = vunpack.c.l.b16 %v7626
    %v7697 = vunpack.c.l.b16 %v7627
    %v7698 = vunpack.c.l.b16 %v7628
    %v7699 = vunpack.c.l.b16 %v7629
    %v7700 = vunpack.c.l.b16 %v7630
    %v7701 = vunpack.c.l.b16 %v7631
    %v7702 = vunpack.c.l.b16 %v7632
    %v7703 = vunpack.c.l.b16 %v7633
    %v7704 = vunpack.c.l.b16 %v7634
    %v7705 = vunpack.c.l.b16 %v7635
    %v7706 = vunpack.c.l.b16 %v7636
    %v7707 = vunpack.c.l.b16 %v7637
    %v7708 = vunpack.c.l.b16 %v7638
    %v7709 = vunpack.c.l.b16 %v7639
    %v7710 = vunpack.c.l.b16 %v7640
    %v7711 = vunpack.c.l.b16 %v7641
    %v7712 = vunpack.c.l.b16 %v7642
    %v7713 = vunpack.c.l.b16 %v7643
    %v7714 = vunpack.c.l.b16 %v7644
    %v7715 = vunpack.c.l.b16 %v7645
    %v7716 = vunpack.c.l.b16 %v7646
    %v7717 = vunpack.c.l.b16 %v7647
    %v7718 = vunpack.c.l.b16 %v7648
    %v7719 = vunpack.c.l.b16 %v7649
    %v7720 = vunpack.c.l.b16 %v7650
    %v7721 = vunpack.c.l.b16 %v7651
    %v7722 = vunpack.c.l.b16 %v7652
    %v7723 = vunpack.c.l.b16 %v7653
    %v7724 = vunpack.c.l.b16 %v7654
    %v7725 = vunpack.c.l.b16 %v7655
    %v7726 = vunpack.c.l.b16 %v7656
    %v7727 = vpack.c.b16 %v7693, %v7692
    %v7728 = vpack.c.b16 %v7695, %v7694
    %v7729 = vpack.c.b16 %v7697, %v7696
    %v7730 = vpack.c.b16 %v7699, %v7698
    %v7731 = vpack.c.b16 %v7701, %v7700
    %v7732 = vpack.c.b16 %v7703, %v7702
    %v7733 = vpack.c.b16 %v7705, %v7704
    %v7734 = vpack.c.b16 %v7707, %v7706
    %v7735 = vpack.c.b16 %v7709, %v7708
    %v7736 = vpack.c.b16 %v7711, %v7710
    %v7737 = vpack.c.b16 %v7713, %v7712
    %v7738 = vpack.c.b16 %v7715, %v7714
    %v7739 = vpack.c.b16 %v7717, %v7716
    %v7740 = vpack.c.b16 %v7719, %v7718
    %v7741 = vpack.c.b16 %v7721, %v7720
    %v7742 = vpack.c.b16 %v7723, %v7722
    %v7743 = vpack.c.b16 %v7725, %v7724
    %v7744 = vpack.c.b16 %v7726, %v7726
    %v7746 = vsel %vm1861, %v7727, 0
    %v7749 = vsel %vm1861, %v7728, 0
    %v7752 = vsel %vm1861, %v7729, 0
    %v7755 = vsel %vm1861, %v7730, 0
    %v7758 = vsel %vm1861, %v7731, 0
    %v7761 = vsel %vm1861, %v7732, 0
    %v7764 = vsel %vm1861, %v7733, 0
    %v7767 = vsel %vm1861, %v7734, 0
    %v7770 = vsel %vm1861, %v7735, 0
    %v7773 = vsel %vm1861, %v7736, 0
    %v7776 = vsel %vm1861, %v7737, 0
    %v7779 = vsel %vm1861, %v7738, 0
    %v7782 = vsel %vm1861, %v7739, 0
    %v7785 = vsel %vm1861, %v7740, 0
    %v7788 = vsel %vm1861, %v7741, 0
    %v7791 = vsel %vm1861, %v7742, 0
    %v7794 = vsel %vm1861, %v7743, 0
    %v7797 = vsel %vm1861, %v7744, 0
    %v7800 = vsel %vm2007, %v7620, 0
    %v7803 = vsel %vm2007, %v7621, 0
    %7805 = vmatprep.subr.bf16.mxu0 0
    %7806 = vmatpush1.bf16.msra.mxu0 0
    %7807 = vmatprep.subr.bf16.mxu0 0
    %7808 = vmatpush1.bf16.msra.mxu0 0
    %7809 = vmatprep.subr.bf16.mxu0 0
    %7810 = vmatpush1.bf16.msra.mxu0 0
    %7811 = vmatprep.subr.bf16.mxu0 0
    %7812 = vmatpush1.bf16.msra.mxu0 0
    %7813 = vmatprep.subr.bf16.mxu0 0
    %7814 = vmatpush1.bf16.msra.mxu0 0
    %7815 = vmatprep.subr.bf16.mxu0 0
    %7816 = vmatpush1.bf16.msra.mxu0 0
    %7817 = vmatprep.subr.bf16.mxu0 %v7803
    %7818 = vmatpush1.bf16.msra.mxu0 %v7800
    %7819 = vmatprep.subr.bf16.mxu0 %v7619
    %7820 = vmatpush1.bf16.msra.mxu0 %v7618
    %7821 = vmatprep.subr.bf16.mxu0 0
    %7822 = vmatpush2.bf16.msra.mxu0 0
    %7823 = vmatprep.subr.bf16.mxu0 0
    %7824 = vmatpush2.bf16.msra.mxu0 0
    %7825 = vmatprep.subr.bf16.mxu0 0
    %7826 = vmatpush2.bf16.msra.mxu0 0
    %7827 = vmatprep.subr.bf16.mxu0 0
    %7828 = vmatpush2.bf16.msra.mxu0 0
    %7829 = vmatprep.subr.bf16.mxu0 0
    %7830 = vmatpush2.bf16.msra.mxu0 0
    %7831 = vmatprep.subr.bf16.mxu0 0
    %7832 = vmatpush2.bf16.msra.mxu0 0
    %7833 = vmatprep.subr.bf16.mxu0 0
    %7834 = vmatpush2.bf16.msra.mxu0 0
    %7835 = vmatprep.subr.bf16.mxu0 0
    %7836 = vmatpush2.bf16.msra.mxu0 0
    %7837 = vmatprep.mubr.bf16.mxu0 0
    %7838 = vmatmul.mubr.bf16.gmra.mxu0 %v7746
    %v7839 = vpop.f32.mrf.mxu0
    %v7840 = vadd.f32 0.0, %v7839
    %v7841 = vpop.f32.mrf.mxu0
    %v7842 = vadd.f32 0.0, %v7841
    %v7843 = vpop.f32.mrf.mxu0
    %v7844 = vadd.f32 0.0, %v7843
    %v7845 = vpop.f32.mrf.mxu0
    %v7846 = vadd.f32 0.0, %v7845
    %7847 = vmatprep.mubr.bf16.mxu0 0
    %7848 = vmatmul.mubr.bf16.gmra.mxu0 %v7749
    %v7849 = vpop.f32.mrf.mxu0
    %v7850 = vadd.f32 0.0, %v7849
    %v7851 = vpop.f32.mrf.mxu0
    %v7852 = vadd.f32 0.0, %v7851
    %v7853 = vpop.f32.mrf.mxu0
    %v7854 = vadd.f32 0.0, %v7853
    %v7855 = vpop.f32.mrf.mxu0
    %v7856 = vadd.f32 0.0, %v7855
    %7857 = vmatprep.mubr.bf16.mxu0 0
    %7858 = vmatmul.mubr.bf16.gmra.mxu0 %v7752
    %v7859 = vpop.f32.mrf.mxu0
    %v7860 = vadd.f32 0.0, %v7859
    %v7861 = vpop.f32.mrf.mxu0
    %v7862 = vadd.f32 0.0, %v7861
    %v7863 = vpop.f32.mrf.mxu0
    %v7864 = vadd.f32 0.0, %v7863
    %v7865 = vpop.f32.mrf.mxu0
    %v7866 = vadd.f32 0.0, %v7865
    %7867 = vmatprep.mubr.bf16.mxu0 0
    %7868 = vmatmul.mubr.bf16.gmra.mxu0 %v7755
    %v7869 = vpop.f32.mrf.mxu0
    %v7870 = vadd.f32 0.0, %v7869
    %v7871 = vpop.f32.mrf.mxu0
    %v7872 = vadd.f32 0.0, %v7871
    %v7873 = vpop.f32.mrf.mxu0
    %v7874 = vadd.f32 0.0, %v7873
    %v7875 = vpop.f32.mrf.mxu0
    %v7876 = vadd.f32 0.0, %v7875
    %7877 = vmatprep.mubr.bf16.mxu0 0
    %7878 = vmatmul.mubr.bf16.gmra.mxu0 %v7758
    %v7879 = vpop.f32.mrf.mxu0
    %v7880 = vadd.f32 0.0, %v7879
    %v7881 = vpop.f32.mrf.mxu0
    %v7882 = vadd.f32 0.0, %v7881
    %v7883 = vpop.f32.mrf.mxu0
    %v7884 = vadd.f32 0.0, %v7883
    %v7885 = vpop.f32.mrf.mxu0
    %v7886 = vadd.f32 0.0, %v7885
    %7887 = vmatprep.mubr.bf16.mxu0 0
    %7888 = vmatmul.mubr.bf16.gmra.mxu0 %v7761
    %v7889 = vpop.f32.mrf.mxu0
    %v7890 = vadd.f32 0.0, %v7889
    %v7891 = vpop.f32.mrf.mxu0
    %v7892 = vadd.f32 0.0, %v7891
    %v7893 = vpop.f32.mrf.mxu0
    %v7894 = vadd.f32 0.0, %v7893
    %v7895 = vpop.f32.mrf.mxu0
    %v7896 = vadd.f32 0.0, %v7895
    %7897 = vmatprep.mubr.bf16.mxu0 0
    %7898 = vmatmul.mubr.bf16.gmra.mxu0 %v7764
    %v7899 = vpop.f32.mrf.mxu0
    %v7900 = vadd.f32 0.0, %v7899
    %v7901 = vpop.f32.mrf.mxu0
    %v7902 = vadd.f32 0.0, %v7901
    %v7903 = vpop.f32.mrf.mxu0
    %v7904 = vadd.f32 0.0, %v7903
    %v7905 = vpop.f32.mrf.mxu0
    %v7906 = vadd.f32 0.0, %v7905
    %7907 = vmatprep.mubr.bf16.mxu0 0
    %7908 = vmatmul.mubr.bf16.gmra.mxu0 %v7767
    %v7909 = vpop.f32.mrf.mxu0
    %v7910 = vadd.f32 0.0, %v7909
    %v7911 = vpop.f32.mrf.mxu0
    %v7912 = vadd.f32 0.0, %v7911
    %v7913 = vpop.f32.mrf.mxu0
    %v7914 = vadd.f32 0.0, %v7913
    %v7915 = vpop.f32.mrf.mxu0
    %v7916 = vadd.f32 0.0, %v7915
    %7917 = vmatprep.mubr.bf16.mxu0 0
    %7918 = vmatmul.mubr.bf16.gmra.mxu0 %v7770
    %v7919 = vpop.f32.mrf.mxu0
    %v7920 = vadd.f32 0.0, %v7919
    %v7921 = vpop.f32.mrf.mxu0
    %v7922 = vadd.f32 0.0, %v7921
    %v7923 = vpop.f32.mrf.mxu0
    %v7924 = vadd.f32 0.0, %v7923
    %v7925 = vpop.f32.mrf.mxu0
    %v7926 = vadd.f32 0.0, %v7925
    %7927 = vmatprep.mubr.bf16.mxu0 0
    %7928 = vmatmul.mubr.bf16.gmra.mxu0 %v7773
    %v7929 = vpop.f32.mrf.mxu0
    %v7930 = vadd.f32 0.0, %v7929
    %v7931 = vpop.f32.mrf.mxu0
    %v7932 = vadd.f32 0.0, %v7931
    %v7933 = vpop.f32.mrf.mxu0
    %v7934 = vadd.f32 0.0, %v7933
    %v7935 = vpop.f32.mrf.mxu0
    %v7936 = vadd.f32 0.0, %v7935
    %7937 = vmatprep.mubr.bf16.mxu0 0
    %7938 = vmatmul.mubr.bf16.gmra.mxu0 %v7776
    %v7939 = vpop.f32.mrf.mxu0
    %v7940 = vadd.f32 0.0, %v7939
    %v7941 = vpop.f32.mrf.mxu0
    %v7942 = vadd.f32 0.0, %v7941
    %v7943 = vpop.f32.mrf.mxu0
    %v7944 = vadd.f32 0.0, %v7943
    %v7945 = vpop.f32.mrf.mxu0
    %v7946 = vadd.f32 0.0, %v7945
    %7947 = vmatprep.mubr.bf16.mxu0 0
    %7948 = vmatmul.mubr.bf16.gmra.mxu0 %v7779
    %v7949 = vpop.f32.mrf.mxu0
    %v7950 = vadd.f32 0.0, %v7949
    %v7951 = vpop.f32.mrf.mxu0
    %v7952 = vadd.f32 0.0, %v7951
    %v7953 = vpop.f32.mrf.mxu0
    %v7954 = vadd.f32 0.0, %v7953
    %v7955 = vpop.f32.mrf.mxu0
    %v7956 = vadd.f32 0.0, %v7955
    %7957 = vmatprep.mubr.bf16.mxu0 0
    %7958 = vmatmul.mubr.bf16.gmra.mxu0 %v7782
    %v7959 = vpop.f32.mrf.mxu0
    %v7960 = vadd.f32 0.0, %v7959
    %v7961 = vpop.f32.mrf.mxu0
    %v7962 = vadd.f32 0.0, %v7961
    %v7963 = vpop.f32.mrf.mxu0
    %v7964 = vadd.f32 0.0, %v7963
    %v7965 = vpop.f32.mrf.mxu0
    %v7966 = vadd.f32 0.0, %v7965
    %7967 = vmatprep.mubr.bf16.mxu0 0
    %7968 = vmatmul.mubr.bf16.gmra.mxu0 %v7785
    %v7969 = vpop.f32.mrf.mxu0
    %v7970 = vadd.f32 0.0, %v7969
    %v7971 = vpop.f32.mrf.mxu0
    %v7972 = vadd.f32 0.0, %v7971
    %v7973 = vpop.f32.mrf.mxu0
    %v7974 = vadd.f32 0.0, %v7973
    %v7975 = vpop.f32.mrf.mxu0
    %v7976 = vadd.f32 0.0, %v7975
    %7977 = vmatprep.mubr.bf16.mxu0 0
    %7978 = vmatmul.mubr.bf16.gmra.mxu0 %v7788
    %v7979 = vpop.f32.mrf.mxu0
    %v7980 = vadd.f32 0.0, %v7979
    %v7981 = vpop.f32.mrf.mxu0
    %v7982 = vadd.f32 0.0, %v7981
    %v7983 = vpop.f32.mrf.mxu0
    %v7984 = vadd.f32 0.0, %v7983
    %v7985 = vpop.f32.mrf.mxu0
    %v7986 = vadd.f32 0.0, %v7985
    %7987 = vmatprep.mubr.bf16.mxu0 0
    %7988 = vmatmul.mubr.bf16.gmra.mxu0 %v7791
    %v7989 = vpop.f32.mrf.mxu0
    %v7990 = vadd.f32 0.0, %v7989
    %v7991 = vpop.f32.mrf.mxu0
    %v7992 = vadd.f32 0.0, %v7991
    %v7993 = vpop.f32.mrf.mxu0
    %v7994 = vadd.f32 0.0, %v7993
    %v7995 = vpop.f32.mrf.mxu0
    %v7996 = vadd.f32 0.0, %v7995
    %7997 = vmatprep.mubr.bf16.mxu0 0
    %7998 = vmatmul.mubr.bf16.gmra.mxu0 %v7794
    %v7999 = vpop.f32.mrf.mxu0
    %v8000 = vadd.f32 0.0, %v7999
    %v8001 = vpop.f32.mrf.mxu0
    %v8002 = vadd.f32 0.0, %v8001
    %v8003 = vpop.f32.mrf.mxu0
    %v8004 = vadd.f32 0.0, %v8003
    %v8005 = vpop.f32.mrf.mxu0
    %v8006 = vadd.f32 0.0, %v8005
    %8007 = vmatprep.mubr.bf16.mxu0 0
    %8008 = vmatmul.mubr.bf16.gmra.mxu0 %v7797
    %v8009 = vpop.f32.mrf.mxu0
    %v8010 = vadd.f32 0.0, %v8009
    %v8011 = vpop.f32.mrf.mxu0
    %v8012 = vadd.f32 0.0, %v8011
    %v8013 = vpop.f32.mrf.mxu0
    %v8014 = vpop.f32.mrf.mxu0
    %8015 = vdwg.mxu0
    %v8016 = vpack.c.bf16 %v7844, %v7840
    %v8017 = vpack.c.bf16 %v7846, %v7842
    %v8018 = vpack.c.bf16 %v7854, %v7850
    %v8019 = vpack.c.bf16 %v7856, %v7852
    %v8020 = vpack.c.bf16 %v7864, %v7860
    %v8021 = vpack.c.bf16 %v7866, %v7862
    %v8022 = vpack.c.bf16 %v7874, %v7870
    %v8023 = vpack.c.bf16 %v7876, %v7872
    %v8024 = vpack.c.bf16 %v7884, %v7880
    %v8025 = vpack.c.bf16 %v7886, %v7882
    %v8026 = vpack.c.bf16 %v7894, %v7890
    %v8027 = vpack.c.bf16 %v7896, %v7892
    %v8028 = vpack.c.bf16 %v7904, %v7900
    %v8029 = vpack.c.bf16 %v7906, %v7902
    %v8030 = vpack.c.bf16 %v7914, %v7910
    %v8031 = vpack.c.bf16 %v7916, %v7912
    %v8032 = vpack.c.bf16 %v7924, %v7920
    %v8033 = vpack.c.bf16 %v7926, %v7922
    %v8034 = vpack.c.bf16 %v7934, %v7930
    %v8035 = vpack.c.bf16 %v7936, %v7932
    %v8036 = vpack.c.bf16 %v7944, %v7940
    %v8037 = vpack.c.bf16 %v7946, %v7942
    %v8038 = vpack.c.bf16 %v7954, %v7950
    %v8039 = vpack.c.bf16 %v7956, %v7952
    %v8040 = vpack.c.bf16 %v7964, %v7960
    %v8041 = vpack.c.bf16 %v7966, %v7962
    %v8042 = vpack.c.bf16 %v7974, %v7970
    %v8043 = vpack.c.bf16 %v7976, %v7972
    %v8044 = vpack.c.bf16 %v7984, %v7980
    %v8045 = vpack.c.bf16 %v7986, %v7982
    %v8046 = vpack.c.bf16 %v7994, %v7990
    %v8047 = vpack.c.bf16 %v7996, %v7992
    %v8048 = vpack.c.bf16 %v8004, %v8000
    %v8049 = vpack.c.bf16 %v8006, %v8002
    %v8050 = vpack.c.bf16 %v8010, %v8010
    %v8051 = vpack.c.bf16 %v8012, %v8012
    %vm8060 = vcmask 1043456
    %v8061 = vrot.slane %v8022, 4
    %v8062 = vrot.slane %v8024, 4
    %v8063 = vsel %vm8060, %v8061, %v8062
    %v8064 = vrot.slane %v8023, 4
    %v8065 = vrot.slane %v8025, 4
    %v8066 = vsel %vm8060, %v8064, %v8065
    %v8067 = vrot.slane %v8026, 4
    %v8068 = vsel %vm8060, %v8062, %v8067
    %v8069 = vrot.slane %v8027, 4
    %v8070 = vsel %vm8060, %v8065, %v8069
    %v8071 = vrot.slane %v8028, 4
    %v8072 = vsel %vm8060, %v8067, %v8071
    %v8073 = vrot.slane %v8029, 4
    %v8074 = vsel %vm8060, %v8069, %v8073
    %8075 = vrot.lane.b32.xlu0 %v8063, 96
    %v8076 = vpop.permute.xlu0 %8075
    %8077 = vrot.lane.b32.xlu0 %v8066, 96
    %v8078 = vpop.permute.xlu0 %8077
    %8079 = vrot.lane.b32.xlu0 %v8068, 96
    %v8080 = vpop.permute.xlu0 %8079
    %8081 = vrot.lane.b32.xlu0 %v8070, 96
    %v8082 = vpop.permute.xlu0 %8081
    %8083 = vrot.lane.b32.xlu0 %v8072, 96
    %v8084 = vpop.permute.xlu0 %8083
    %8085 = vrot.lane.b32.xlu0 %v8074, 96
    %v8086 = vpop.permute.xlu0 %8085
    %8087 = vrot.lane.b32.xlu0 %v8071, 96
    %v8088 = vpop.permute.xlu0 %8087
    %8089 = vrot.lane.b32.xlu0 %v8073, 96
    %v8090 = vpop.permute.xlu0 %8089
    %v8091 = vsel %vm2250, %v8076, %v8078
    %v8092 = vsel %vm2250, %v8080, %v8082
    %v8093 = vsel %vm2250, %v8084, %v8086
    %v8094 = vsel %vm2250, %v8088, %v8090
    %8107 = vrot.lane.b32.xlu0 %v8030, 64
    %v8108 = vpop.permute.xlu0 %8107
    %8109 = vrot.lane.b32.xlu0 %v8031, 64
    %v8110 = vpop.permute.xlu0 %8109
    %8111 = vrot.lane.b32.xlu0 %v8032, 64
    %v8112 = vpop.permute.xlu0 %8111
    %8113 = vrot.lane.b32.xlu0 %v8033, 64
    %v8114 = vpop.permute.xlu0 %8113
    %8115 = vrot.lane.b32.xlu0 %v8034, 64
    %v8116 = vpop.permute.xlu0 %8115
    %8117 = vrot.lane.b32.xlu0 %v8035, 64
    %v8118 = vpop.permute.xlu0 %8117
    %8119 = vrot.lane.b32.xlu0 %v8036, 64
    %v8120 = vpop.permute.xlu0 %8119
    %8121 = vrot.lane.b32.xlu0 %v8037, 64
    %v8122 = vpop.permute.xlu0 %8121
    %v8123 = vsel %vm2259, %v8108, %v8110
    %v8124 = vsel %vm2259, %v8112, %v8114
    %v8125 = vsel %vm2259, %v8116, %v8118
    %v8126 = vsel %vm2259, %v8120, %v8122
    %v8137 = vrot.slane %v8036, 4
    %v8138 = vrot.slane %v8038, 4
    %v8139 = vsel %vm8060, %v8137, %v8138
    %v8140 = vrot.slane %v8037, 4
    %v8141 = vrot.slane %v8039, 4
    %v8142 = vsel %vm8060, %v8140, %v8141
    %v8143 = vrot.slane %v8040, 4
    %v8144 = vsel %vm8060, %v8138, %v8143
    %v8145 = vrot.slane %v8041, 4
    %v8146 = vsel %vm8060, %v8141, %v8145
    %v8147 = vrot.slane %v8042, 4
    %v8148 = vsel %vm8060, %v8143, %v8147
    %v8149 = vrot.slane %v8043, 4
    %v8150 = vsel %vm8060, %v8145, %v8149
    %8151 = vrot.lane.b32.xlu0 %v8139, 32
    %v8152 = vpop.permute.xlu0 %8151
    %8153 = vrot.lane.b32.xlu0 %v8142, 32
    %v8154 = vpop.permute.xlu0 %8153
    %8155 = vrot.lane.b32.xlu0 %v8144, 32
    %v8156 = vpop.permute.xlu0 %8155
    %8157 = vrot.lane.b32.xlu0 %v8146, 32
    %v8158 = vpop.permute.xlu0 %8157
    %8159 = vrot.lane.b32.xlu0 %v8148, 32
    %v8160 = vpop.permute.xlu0 %8159
    %8161 = vrot.lane.b32.xlu0 %v8150, 32
    %v8162 = vpop.permute.xlu0 %8161
    %8163 = vrot.lane.b32.xlu0 %v8147, 32
    %v8164 = vpop.permute.xlu0 %8163
    %8165 = vrot.lane.b32.xlu0 %v8149, 32
    %v8166 = vpop.permute.xlu0 %8165
    %v8167 = vsel %vm2268, %v8152, %v8154
    %v8168 = vsel %vm2268, %v8156, %v8158
    %v8169 = vsel %vm2268, %v8160, %v8162
    %v8170 = vsel %vm2268, %v8164, %v8166
    %v8177 = vsel %vm2271, %v8017, %v8076
    %v8181 = vsel %vm2271, %v8019, %v8080
    %v8185 = vsel %vm2271, %v8021, %v8084
    %v8189 = vsel %vm2271, %v8023, %v8088
    %v8193 = vsel %vm2276, %v8078, %v8108
    %v8197 = vsel %vm2276, %v8082, %v8112
    %v8201 = vsel %vm2276, %v8086, %v8116
    %v8205 = vsel %vm2276, %v8090, %v8120
    %v8209 = vsel %vm2281, %v8110, %v8152
    %v8213 = vsel %vm2281, %v8114, %v8156
    %v8217 = vsel %vm2281, %v8118, %v8160
    %v8221 = vsel %vm2281, %v8122, %v8164
    %s8223 = smul.u32 %s2286, 1
    %s8224 = sshll.u32 %s8223, 4
    %8225 = dma.done %s1415, %s8224
    %v8226 = vld [vmem:[#allocation6] sm:$0xf]
    %v8227 = vld [vmem:[#allocation6 + $0x4] sm:$0xf]
    %v8228 = vld [vmem:[#allocation6 + $0x8] sm:$0xf]
    %v8229 = vld [vmem:[#allocation6 + $0xc] sm:$0xf]
    %v8230 = vld [vmem:[#allocation6 + $0x10] sm:$0xf]
    %v8231 = vld [vmem:[#allocation6 + $0x14] sm:$0xf]
    %v8232 = vld [vmem:[#allocation6 + $0x18] sm:$0xf]
    %v8233 = vld [vmem:[#allocation6 + $0x1c] sm:$0xf]
    %v8234 = vld [vmem:[#allocation6 + $0x20] sm:$0xf]
    %v8235 = vld [vmem:[#allocation6 + $0x24] sm:$0xf]
    %v8236 = vld [vmem:[#allocation6 + $0x28] sm:$0xf]
    %v8237 = vld [vmem:[#allocation6 + $0x2c] sm:$0xf]
    %v8238 = vld [vmem:[#allocation6 + $0x30] sm:$0xf]
    %v8239 = vld [vmem:[#allocation6 + $0x34] sm:$0xf]
    %v8240 = vld [vmem:[#allocation6 + $0x38] sm:$0xf]
    %v8241 = vld [vmem:[#allocation6 + $0x3c] sm:$0xf]
    %v8242 = vld [vmem:[#allocation6 + $0x40] sm:$0xf]
    %v8243 = vld [vmem:[#allocation6 + $0x44] sm:$0xf]
    %v8244 = vld [vmem:[#allocation6 + $0x48] sm:$0xf]
    %v8245 = vld [vmem:[#allocation6 + $0x4c] sm:$0xf]
    %v8246 = vld [vmem:[#allocation6 + $0x50] sm:$0xf]
    %v8247 = vld [vmem:[#allocation6 + $0x54] sm:$0xf]
    %v8248 = vld [vmem:[#allocation6 + $0x58] sm:$0xf]
    %v8249 = vld [vmem:[#allocation6 + $0x5c] sm:$0xf]
    %v8250 = vld [vmem:[#allocation6 + $0x60] sm:$0xf]
    %v8251 = vld [vmem:[#allocation6 + $0x64] sm:$0xf]
    %v8252 = vld [vmem:[#allocation6 + $0x68] sm:$0xf]
    %v8253 = vld [vmem:[#allocation6 + $0x6c] sm:$0xf]
    %v8254 = vld [vmem:[#allocation6 + $0x70] sm:$0xf]
    %v8255 = vld [vmem:[#allocation6 + $0x74] sm:$0xf]
    %v8256 = vld [vmem:[#allocation6 + $0x78] sm:$0xf]
    %v8257 = vld [vmem:[#allocation6 + $0x7c] sm:$0xf]
    %v8258 = vld [vmem:[#allocation6 + $0x80] sm:$0xf]
    %v8259 = vld [vmem:[#allocation6 + $0x84] sm:$0xf]
    %v8260 = vld [vmem:[#allocation6 + $0x88] sm:$0xf]
    %v8261 = vld [vmem:[#allocation6 + $0x8c] sm:$0xf]
    %v8262 = vld [vmem:[#allocation6 + $0x90] sm:$0xf]
    %v8263 = vld [vmem:[#allocation6 + $0x94] sm:$0xf]
    %v8264 = vld [vmem:[#allocation6 + $0x98] sm:$0xf]
    %v8265 = vld [vmem:[#allocation6 + $0x9c] sm:$0xf]
    %v8266 = vld [vmem:[#allocation6 + $0xa0] sm:$0xf]
    %v8267 = vld [vmem:[#allocation6 + $0xa4] sm:$0xf]
    %v8268 = vld [vmem:[#allocation6 + $0xa8] sm:$0xf]
    %v8269 = vld [vmem:[#allocation6 + $0xac] sm:$0xf]
    %v8270 = vld [vmem:[#allocation6 + $0xb0] sm:$0xf]
    %v8271 = vld [vmem:[#allocation6 + $0xb4] sm:$0xf]
    %v8272 = vld [vmem:[#allocation6 + $0xb8] sm:$0xf]
    %v8273 = vld [vmem:[#allocation6 + $0xbc] sm:$0xf]
    %v8274 = vld [vmem:[#allocation6 + $0xc0] sm:$0xf]
    %v8275 = vld [vmem:[#allocation6 + $0xc4] sm:$0xf]
    %v8276 = vld [vmem:[#allocation6 + $0xc8] sm:$0xf]
    %v8277 = vld [vmem:[#allocation6 + $0xcc] sm:$0xf]
    %v8278 = vld [vmem:[#allocation6 + $0xd0] sm:$0xf]
    %v8279 = vld [vmem:[#allocation6 + $0xd4] sm:$0xf]
    %v8280 = vld [vmem:[#allocation6 + $0xd8] sm:$0xf]
    %v8281 = vld [vmem:[#allocation6 + $0xdc] sm:$0xf]
    %v8282 = vld [vmem:[#allocation6 + $0xe0] sm:$0xf]
    %v8283 = vld [vmem:[#allocation6 + $0xe4] sm:$0xf]
    %v8284 = vld [vmem:[#allocation6 + $0xe8] sm:$0xf]
    %v8285 = vld [vmem:[#allocation6 + $0xec] sm:$0xf]
    %v8286 = vld [vmem:[#allocation6 + $0xf0] sm:$0xf]
    %v8287 = vld [vmem:[#allocation6 + $0xf4] sm:$0xf]
    %v8288 = vld [vmem:[#allocation6 + $0xf8] sm:$0xf]
    %v8289 = vld [vmem:[#allocation6 + $0xfc] sm:$0xf]
    %v8290 = vld [vmem:[#allocation6 + $0x100] sm:$0xf]
    %v8291 = vld [vmem:[#allocation6 + $0x104] sm:$0xf]
    %v8292 = vld [vmem:[#allocation6 + $0x108] sm:$0xf]
    %v8293 = vld [vmem:[#allocation6 + $0x10c] sm:$0xf]
    %v8294 = vld [vmem:[#allocation6 + $0x110] sm:$0xf]
    %v8295 = vld [vmem:[#allocation6 + $0x114] sm:$0xf]
    %v8296 = vld [vmem:[#allocation6 + $0x118] sm:$0xf]
    %v8297 = vld [vmem:[#allocation6 + $0x11c] sm:$0xf]
    %v8298 = vld [vmem:[#allocation6 + $0x120] sm:$0xf]
    %v8299 = vld [vmem:[#allocation6 + $0x124] sm:$0xf]
    %v8300 = vld [vmem:[#allocation6 + $0x128] sm:$0xf]
    %v8301 = vld [vmem:[#allocation6 + $0x12c] sm:$0xf]
    %v8302 = vld [vmem:[#allocation6 + $0x130] sm:$0xf]
    %v8303 = vld [vmem:[#allocation6 + $0x134] sm:$0xf]
    %v8304 = vld [vmem:[#allocation6 + $0x138] sm:$0xf]
    %v8305 = vld [vmem:[#allocation6 + $0x13c] sm:$0xf]
    %v8306 = vld [vmem:[#allocation6 + $0x140] sm:$0xf]
    %v8307 = vld [vmem:[#allocation6 + $0x144] sm:$0xf]
    %v8308 = vld [vmem:[#allocation6 + $0x148] sm:$0xf]
    %v8309 = vld [vmem:[#allocation6 + $0x14c] sm:$0xf]
    %v8310 = vld [vmem:[#allocation6 + $0x150] sm:$0xf]
    %v8311 = vld [vmem:[#allocation6 + $0x154] sm:$0xf]
    %v8312 = vld [vmem:[#allocation6 + $0x158] sm:$0xf]
    %v8313 = vld [vmem:[#allocation6 + $0x15c] sm:$0xf]
    %v8314 = vld [vmem:[#allocation6 + $0x160] sm:$0xf]
    %v8315 = vld [vmem:[#allocation6 + $0x164] sm:$0xf]
    %v8316 = vld [vmem:[#allocation6 + $0x168] sm:$0xf]
    %v8317 = vld [vmem:[#allocation6 + $0x16c] sm:$0xf]
    %v8318 = vld [vmem:[#allocation6 + $0x170] sm:$0xf]
    %v8319 = vld [vmem:[#allocation6 + $0x174] sm:$0xf]
    %v8320 = vld [vmem:[#allocation6 + $0x178] sm:$0xf]
    %v8321 = vld [vmem:[#allocation6 + $0x17c] sm:$0xf]
    %v8322 = vld [vmem:[#allocation6 + $0x180] sm:$0xf]
    %v8323 = vld [vmem:[#allocation6 + $0x184] sm:$0xf]
    %v8324 = vld [vmem:[#allocation6 + $0x188] sm:$0xf]
    %v8325 = vld [vmem:[#allocation6 + $0x18c] sm:$0xf]
    %v8326 = vld [vmem:[#allocation6 + $0x190] sm:$0xf]
    %v8327 = vld [vmem:[#allocation6 + $0x194] sm:$0xf]
    %v8328 = vld [vmem:[#allocation6 + $0x198] sm:$0xf]
    %v8329 = vld [vmem:[#allocation6 + $0x19c] sm:$0xf]
    %v8330 = vld [vmem:[#allocation6 + $0x1a0] sm:$0xf]
    %v8331 = vld [vmem:[#allocation6 + $0x1a4] sm:$0xf]
    %v8332 = vld [vmem:[#allocation6 + $0x1a8] sm:$0xf]
    %v8333 = vld [vmem:[#allocation6 + $0x1ac] sm:$0xf]
    %v8334 = vld [vmem:[#allocation6 + $0x1b0] sm:$0xf]
    %v8335 = vld [vmem:[#allocation6 + $0x1b4] sm:$0xf]
    %v8336 = vld [vmem:[#allocation6 + $0x1b8] sm:$0xf]
    %v8337 = vld [vmem:[#allocation6 + $0x1bc] sm:$0xf]
    %v8338 = vld [vmem:[#allocation6 + $0x1c0] sm:$0xf]
    %v8339 = vld [vmem:[#allocation6 + $0x1c4] sm:$0xf]
    %v8340 = vld [vmem:[#allocation6 + $0x1c8] sm:$0xf]
    %v8341 = vld [vmem:[#allocation6 + $0x1cc] sm:$0xf]
    %v8342 = vld [vmem:[#allocation6 + $0x1d0] sm:$0xf]
    %v8343 = vld [vmem:[#allocation6 + $0x1d4] sm:$0xf]
    %v8344 = vld [vmem:[#allocation6 + $0x1d8] sm:$0xf]
    %v8345 = vld [vmem:[#allocation6 + $0x1dc] sm:$0xf]
    %v8346 = vld [vmem:[#allocation6 + $0x1e0] sm:$0xf]
    %v8347 = vld [vmem:[#allocation6 + $0x1e4] sm:$0xf]
    %v8348 = vld [vmem:[#allocation6 + $0x1e8] sm:$0xf]
    %v8349 = vld [vmem:[#allocation6 + $0x1ec] sm:$0xf]
    %v8350 = vld [vmem:[#allocation6 + $0x1f0] sm:$0xf]
    %v8351 = vld [vmem:[#allocation6 + $0x1f4] sm:$0xf]
    %v8352 = vld [vmem:[#allocation6 + $0x1f8] sm:$0xf]
    %v8353 = vld [vmem:[#allocation6 + $0x1fc] sm:$0xf]
    %v8354 = vld [vmem:[#allocation6 + $0x200] sm:$0xf]
    %v8355 = vld [vmem:[#allocation6 + $0x204] sm:$0xf]
    %v8356 = vld [vmem:[#allocation6 + $0x208] sm:$0xf]
    %v8357 = vld [vmem:[#allocation6 + $0x20c] sm:$0xf]
    %v8358 = vld [vmem:[#allocation6 + $0x210] sm:$0xf]
    %v8359 = vld [vmem:[#allocation6 + $0x214] sm:$0xf]
    %v8360 = vld [vmem:[#allocation6 + $0x218] sm:$0xf]
    %v8361 = vld [vmem:[#allocation6 + $0x21c] sm:$0xf]
    %v8362 = vld [vmem:[#allocation6 + $0x220] sm:$0xf]
    %v8363 = vld [vmem:[#allocation6 + $0x224] sm:$0xf]
    %v8364 = vld [vmem:[#allocation6 + $0x228] sm:$0xf]
    %v8365 = vld [vmem:[#allocation6 + $0x22c] sm:$0xf]
    %v8366 = vld [vmem:[%s13] sm:$0x1]
    %v8368 = vlaneseq
    %v8369 = vshrl.u32 %v8368, 7
    %v8370 = vsub.s32 0, %v8369
    %v8371 = vrot.slane %v8366, %v8370
    %v8513 = vunpack.c.l.b16 %v8226
    %v8514 = vunpack.c.l.b16 %v8227
    %v8515 = vunpack.c.l.b16 %v8228
    %v8516 = vunpack.c.l.b16 %v8229
    %v8517 = vunpack.c.l.b16 %v8230
    %v8518 = vunpack.c.l.b16 %v8231
    %v8519 = vunpack.c.l.b16 %v8232
    %v8520 = vunpack.c.l.b16 %v8233
    %v8521 = vunpack.c.l.b16 %v8234
    %v8522 = vunpack.c.l.b16 %v8235
    %v8523 = vunpack.c.l.b16 %v8236
    %v8524 = vunpack.c.l.b16 %v8237
    %v8525 = vunpack.c.l.b16 %v8238
    %v8526 = vunpack.c.l.b16 %v8239
    %v8527 = vunpack.c.l.b16 %v8240
    %v8528 = vunpack.c.l.b16 %v8241
    %v8529 = vunpack.c.l.b16 %v8242
    %v8530 = vunpack.c.l.b16 %v8243
    %v8531 = vunpack.c.l.b16 %v8244
    %v8532 = vunpack.c.l.b16 %v8245
    %v8533 = vunpack.c.l.b16 %v8246
    %v8534 = vunpack.c.l.b16 %v8247
    %v8535 = vunpack.c.l.b16 %v8248
    %v8536 = vunpack.c.l.b16 %v8249
    %v8537 = vunpack.c.l.b16 %v8250
    %v8538 = vunpack.c.l.b16 %v8251
    %v8539 = vunpack.c.l.b16 %v8252
    %v8540 = vunpack.c.l.b16 %v8253
    %v8541 = vunpack.c.l.b16 %v8254
    %v8542 = vunpack.c.l.b16 %v8255
    %v8543 = vunpack.c.l.b16 %v8256
    %v8544 = vunpack.c.l.b16 %v8257
    %v8545 = vunpack.c.l.b16 %v8258
    %v8546 = vunpack.c.l.b16 %v8259
    %v8547 = vunpack.c.l.b16 %v8260
    %v8548 = vunpack.c.l.b16 %v8261
    %v8549 = vunpack.c.l.b16 %v8262
    %v8550 = vunpack.c.l.b16 %v8263
    %v8551 = vunpack.c.l.b16 %v8264
    %v8552 = vunpack.c.l.b16 %v8265
    %v8553 = vunpack.c.l.b16 %v8266
    %v8554 = vunpack.c.l.b16 %v8267
    %v8555 = vunpack.c.l.b16 %v8268
    %v8556 = vunpack.c.l.b16 %v8269
    %v8557 = vunpack.c.l.b16 %v8270
    %v8558 = vunpack.c.l.b16 %v8271
    %v8559 = vunpack.c.l.b16 %v8272
    %v8560 = vunpack.c.l.b16 %v8273
    %v8561 = vunpack.c.l.b16 %v8274
    %v8562 = vunpack.c.l.b16 %v8275
    %v8563 = vunpack.c.l.b16 %v8276
    %v8564 = vunpack.c.l.b16 %v8277
    %v8565 = vunpack.c.l.b16 %v8278
    %v8566 = vunpack.c.l.b16 %v8279
    %v8567 = vunpack.c.l.b16 %v8280
    %v8568 = vunpack.c.l.b16 %v8281
    %v8569 = vunpack.c.l.b16 %v8282
    %v8570 = vunpack.c.l.b16 %v8283
    %v8571 = vunpack.c.l.b16 %v8284
    %v8572 = vunpack.c.l.b16 %v8285
    %v8573 = vunpack.c.l.b16 %v8286
    %v8574 = vunpack.c.l.b16 %v8287
    %v8575 = vunpack.c.l.b16 %v8288
    %v8576 = vunpack.c.l.b16 %v8289
    %v8577 = vunpack.c.l.b16 %v8290
    %v8578 = vunpack.c.l.b16 %v8291
    %v8579 = vunpack.c.l.b16 %v8292
    %v8580 = vunpack.c.l.b16 %v8293
    %v8581 = vunpack.c.l.b16 %v8294
    %v8582 = vunpack.c.l.b16 %v8295
    %v8583 = vunpack.c.l.b16 %v8296
    %v8584 = vunpack.c.l.b16 %v8297
    %v8585 = vunpack.c.l.b16 %v8298
    %v8586 = vunpack.c.l.b16 %v8299
    %v8587 = vunpack.c.l.b16 %v8300
    %v8588 = vunpack.c.l.b16 %v8301
    %v8589 = vunpack.c.l.b16 %v8302
    %v8590 = vunpack.c.l.b16 %v8303
    %v8591 = vunpack.c.l.b16 %v8304
    %v8592 = vunpack.c.l.b16 %v8305
    %v8593 = vunpack.c.l.b16 %v8306
    %v8594 = vunpack.c.l.b16 %v8307
    %v8595 = vunpack.c.l.b16 %v8308
    %v8596 = vunpack.c.l.b16 %v8309
    %v8597 = vunpack.c.l.b16 %v8310
    %v8598 = vunpack.c.l.b16 %v8311
    %v8599 = vunpack.c.l.b16 %v8312
    %v8600 = vunpack.c.l.b16 %v8313
    %v8601 = vunpack.c.l.b16 %v8314
    %v8602 = vunpack.c.l.b16 %v8315
    %v8603 = vunpack.c.l.b16 %v8316
    %v8604 = vunpack.c.l.b16 %v8317
    %v8605 = vunpack.c.l.b16 %v8318
    %v8606 = vunpack.c.l.b16 %v8319
    %v8607 = vunpack.c.l.b16 %v8320
    %v8608 = vunpack.c.l.b16 %v8321
    %v8609 = vunpack.c.l.b16 %v8322
    %v8610 = vunpack.c.l.b16 %v8323
    %v8611 = vunpack.c.l.b16 %v8324
    %v8612 = vunpack.c.l.b16 %v8325
    %v8613 = vunpack.c.l.b16 %v8326
    %v8614 = vunpack.c.l.b16 %v8327
    %v8615 = vunpack.c.l.b16 %v8328
    %v8616 = vunpack.c.l.b16 %v8329
    %v8617 = vunpack.c.l.b16 %v8330
    %v8618 = vunpack.c.l.b16 %v8331
    %v8619 = vunpack.c.l.b16 %v8332
    %v8620 = vunpack.c.l.b16 %v8333
    %v8621 = vunpack.c.l.b16 %v8334
    %v8622 = vunpack.c.l.b16 %v8335
    %v8623 = vunpack.c.l.b16 %v8336
    %v8624 = vunpack.c.l.b16 %v8337
    %v8625 = vunpack.c.l.b16 %v8338
    %v8626 = vunpack.c.l.b16 %v8339
    %v8627 = vunpack.c.l.b16 %v8340
    %v8628 = vunpack.c.l.b16 %v8341
    %v8629 = vunpack.c.l.b16 %v8342
    %v8630 = vunpack.c.l.b16 %v8343
    %v8631 = vunpack.c.l.b16 %v8344
    %v8632 = vunpack.c.l.b16 %v8345
    %v8633 = vunpack.c.l.b16 %v8346
    %v8634 = vunpack.c.l.b16 %v8347
    %v8635 = vunpack.c.l.b16 %v8348
    %v8636 = vunpack.c.l.b16 %v8349
    %v8637 = vunpack.c.l.b16 %v8350
    %v8638 = vunpack.c.l.b16 %v8351
    %v8639 = vunpack.c.l.b16 %v8352
    %v8640 = vunpack.c.l.b16 %v8353
    %v8641 = vunpack.c.l.b16 %v8354
    %v8642 = vunpack.c.l.b16 %v8355
    %v8643 = vunpack.c.l.b16 %v8356
    %v8644 = vunpack.c.l.b16 %v8357
    %v8645 = vunpack.c.l.b16 %v8358
    %v8646 = vunpack.c.l.b16 %v8359
    %v8647 = vunpack.c.l.b16 %v8360
    %v8648 = vunpack.c.l.b16 %v8361
    %v8649 = vunpack.c.l.b16 %v8362
    %v8650 = vunpack.c.l.b16 %v8363
    %v8651 = vunpack.c.l.b16 %v8364
    %v8652 = vunpack.c.l.b16 %v8365
    %v8653 = vpack.c.b16 %v8514, %v8513
    %v8654 = vpack.c.b16 %v8516, %v8515
    %v8655 = vpack.c.b16 %v8518, %v8517
    %v8656 = vpack.c.b16 %v8520, %v8519
    %v8657 = vpack.c.b16 %v8522, %v8521
    %v8658 = vpack.c.b16 %v8524, %v8523
    %v8659 = vpack.c.b16 %v8526, %v8525
    %v8660 = vpack.c.b16 %v8528, %v8527
    %v8661 = vpack.c.b16 %v8530, %v8529
    %v8662 = vpack.c.b16 %v8532, %v8531
    %v8663 = vpack.c.b16 %v8534, %v8533
    %v8664 = vpack.c.b16 %v8536, %v8535
    %v8665 = vpack.c.b16 %v8538, %v8537
    %v8666 = vpack.c.b16 %v8540, %v8539
    %v8667 = vpack.c.b16 %v8542, %v8541
    %v8668 = vpack.c.b16 %v8544, %v8543
    %v8669 = vpack.c.b16 %v8546, %v8545
    %v8670 = vpack.c.b16 %v8548, %v8547
    %v8671 = vpack.c.b16 %v8550, %v8549
    %v8672 = vpack.c.b16 %v8552, %v8551
    %v8673 = vpack.c.b16 %v8554, %v8553
    %v8674 = vpack.c.b16 %v8556, %v8555
    %v8675 = vpack.c.b16 %v8558, %v8557
    %v8676 = vpack.c.b16 %v8560, %v8559
    %v8677 = vpack.c.b16 %v8562, %v8561
    %v8678 = vpack.c.b16 %v8564, %v8563
    %v8679 = vpack.c.b16 %v8566, %v8565
    %v8680 = vpack.c.b16 %v8568, %v8567
    %v8681 = vpack.c.b16 %v8570, %v8569
    %v8682 = vpack.c.b16 %v8572, %v8571
    %v8683 = vpack.c.b16 %v8574, %v8573
    %v8684 = vpack.c.b16 %v8576, %v8575
    %v8685 = vpack.c.b16 %v8578, %v8577
    %v8686 = vpack.c.b16 %v8580, %v8579
    %v8687 = vpack.c.b16 %v8582, %v8581
    %v8688 = vpack.c.b16 %v8584, %v8583
    %v8689 = vpack.c.b16 %v8586, %v8585
    %v8690 = vpack.c.b16 %v8588, %v8587
    %v8691 = vpack.c.b16 %v8590, %v8589
    %v8692 = vpack.c.b16 %v8592, %v8591
    %v8693 = vpack.c.b16 %v8594, %v8593
    %v8694 = vpack.c.b16 %v8596, %v8595
    %v8695 = vpack.c.b16 %v8598, %v8597
    %v8696 = vpack.c.b16 %v8600, %v8599
    %v8697 = vpack.c.b16 %v8602, %v8601
    %v8698 = vpack.c.b16 %v8604, %v8603
    %v8699 = vpack.c.b16 %v8606, %v8605
    %v8700 = vpack.c.b16 %v8608, %v8607
    %v8701 = vpack.c.b16 %v8610, %v8609
    %v8702 = vpack.c.b16 %v8612, %v8611
    %v8703 = vpack.c.b16 %v8614, %v8613
    %v8704 = vpack.c.b16 %v8616, %v8615
    %v8705 = vpack.c.b16 %v8618, %v8617
    %v8706 = vpack.c.b16 %v8620, %v8619
    %v8707 = vpack.c.b16 %v8622, %v8621
    %v8708 = vpack.c.b16 %v8624, %v8623
    %v8709 = vpack.c.b16 %v8626, %v8625
    %v8710 = vpack.c.b16 %v8628, %v8627
    %v8711 = vpack.c.b16 %v8630, %v8629
    %v8712 = vpack.c.b16 %v8632, %v8631
    %v8713 = vpack.c.b16 %v8634, %v8633
    %v8714 = vpack.c.b16 %v8636, %v8635
    %v8715 = vpack.c.b16 %v8638, %v8637
    %v8716 = vpack.c.b16 %v8640, %v8639
    %v8717 = vpack.c.b16 %v8642, %v8641
    %v8718 = vpack.c.b16 %v8644, %v8643
    %v8719 = vpack.c.b16 %v8646, %v8645
    %v8720 = vpack.c.b16 %v8648, %v8647
    %v8721 = vpack.c.b16 %v8650, %v8649
    %v8722 = vpack.c.b16 %v8652, %v8651
    %v8794 = vsel %vm2271, %v8045, 0
    %v8797 = vsel %vm2271, %v8047, 0
    %v8800 = vsel %vm2271, %v8049, 0
    %v8803 = vsel %vm2271, %v8051, 0
    %8805 = vmatprep.subr.bf16.mxu0 0
    %8806 = vmatpush1.bf16.msra.mxu0 %v8660
    %8807 = vmatprep.subr.bf16.mxu0 0
    %8808 = vmatpush1.bf16.msra.mxu0 %v8659
    %8809 = vmatprep.subr.bf16.mxu0 0
    %8810 = vmatpush1.bf16.msra.mxu0 %v8658
    %8811 = vmatprep.subr.bf16.mxu0 0
    %8812 = vmatpush1.bf16.msra.mxu0 %v8657
    %8813 = vmatprep.subr.bf16.mxu0 0
    %8814 = vmatpush1.bf16.msra.mxu0 %v8656
    %8815 = vmatprep.subr.bf16.mxu0 0
    %8816 = vmatpush1.bf16.msra.mxu0 %v8655
    %8817 = vmatprep.subr.bf16.mxu0 0
    %8818 = vmatpush1.bf16.msra.mxu0 %v8654
    %8819 = vmatprep.subr.bf16.mxu0 0
    %8820 = vmatpush1.bf16.msra.mxu0 %v8653
    %8821 = vmatprep.subr.bf16.mxu0 0
    %8822 = vmatpush2.bf16.msra.mxu0 %v8668
    %8823 = vmatprep.subr.bf16.mxu0 0
    %8824 = vmatpush2.bf16.msra.mxu0 %v8667
    %8825 = vmatprep.subr.bf16.mxu0 0
    %8826 = vmatpush2.bf16.msra.mxu0 %v8666
    %8827 = vmatprep.subr.bf16.mxu0 0
    %8828 = vmatpush2.bf16.msra.mxu0 %v8665
    %8829 = vmatprep.subr.bf16.mxu0 0
    %8830 = vmatpush2.bf16.msra.mxu0 %v8664
    %8831 = vmatprep.subr.bf16.mxu0 0
    %8832 = vmatpush2.bf16.msra.mxu0 %v8663
    %8833 = vmatprep.subr.bf16.mxu0 0
    %8834 = vmatpush2.bf16.msra.mxu0 %v8662
    %8835 = vmatprep.subr.bf16.mxu0 0
    %8836 = vmatpush2.bf16.msra.mxu0 %v8661
    %8837 = vmatprep.mubr.bf16.mxu0 %v8177
    %8838 = vmatmul.mubr.bf16.gmra.mxu0 %v8016
    %v8839 = vpop.f32.mrf.mxu0
    %v8840 = vadd.f32 %v8371, %v8839
    %v8841 = vpop.f32.mrf.mxu0
    %v8842 = vpop.f32.mrf.mxu0
    %v8843 = vadd.f32 %v8371, %v8842
    %v8844 = vpop.f32.mrf.mxu0
    %8845 = vmatprep.mubr.bf16.mxu0 %v8181
    %8846 = vmatmul.mubr.bf16.gmra.mxu0 %v8018
    %v8847 = vpop.f32.mrf.mxu0
    %v8848 = vadd.f32 %v8371, %v8847
    %v8849 = vpop.f32.mrf.mxu0
    %v8850 = vpop.f32.mrf.mxu0
    %v8851 = vadd.f32 %v8371, %v8850
    %v8852 = vpop.f32.mrf.mxu0
    %8853 = vmatprep.mubr.bf16.mxu0 %v8185
    %8854 = vmatmul.mubr.bf16.gmra.mxu0 %v8020
    %v8855 = vpop.f32.mrf.mxu0
    %v8856 = vadd.f32 %v8371, %v8855
    %v8857 = vpop.f32.mrf.mxu0
    %v8858 = vpop.f32.mrf.mxu0
    %v8859 = vadd.f32 %v8371, %v8858
    %v8860 = vpop.f32.mrf.mxu0
    %8861 = vmatprep.mubr.bf16.mxu0 %v8189
    %8862 = vmatmul.mubr.bf16.gmra.mxu0 %v8022
    %v8863 = vpop.f32.mrf.mxu0
    %v8864 = vadd.f32 %v8371, %v8863
    %v8865 = vpop.f32.mrf.mxu0
    %v8866 = vpop.f32.mrf.mxu0
    %v8867 = vpop.f32.mrf.mxu0
    %8868 = vdwg.mxu0
    %8869 = vmatprep.subr.bf16.mxu0 0
    %8870 = vmatpush1.bf16.msra.mxu0 %v8676
    %8871 = vmatprep.subr.bf16.mxu0 0
    %8872 = vmatpush1.bf16.msra.mxu0 %v8675
    %8873 = vmatprep.subr.bf16.mxu0 0
    %8874 = vmatpush1.bf16.msra.mxu0 %v8674
    %8875 = vmatprep.subr.bf16.mxu0 0
    %8876 = vmatpush1.bf16.msra.mxu0 %v8673
    %8877 = vmatprep.subr.bf16.mxu0 0
    %8878 = vmatpush1.bf16.msra.mxu0 %v8672
    %8879 = vmatprep.subr.bf16.mxu0 0
    %8880 = vmatpush1.bf16.msra.mxu0 %v8671
    %8881 = vmatprep.subr.bf16.mxu0 0
    %8882 = vmatpush1.bf16.msra.mxu0 %v8670
    %8883 = vmatprep.subr.bf16.mxu0 0
    %8884 = vmatpush1.bf16.msra.mxu0 %v8669
    %8885 = vmatprep.subr.bf16.mxu0 0
    %8886 = vmatpush2.bf16.msra.mxu0 %v8684
    %8887 = vmatprep.subr.bf16.mxu0 0
    %8888 = vmatpush2.bf16.msra.mxu0 %v8683
    %8889 = vmatprep.subr.bf16.mxu0 0
    %8890 = vmatpush2.bf16.msra.mxu0 %v8682
    %8891 = vmatprep.subr.bf16.mxu0 0
    %8892 = vmatpush2.bf16.msra.mxu0 %v8681
    %8893 = vmatprep.subr.bf16.mxu0 0
    %8894 = vmatpush2.bf16.msra.mxu0 %v8680
    %8895 = vmatprep.subr.bf16.mxu0 0
    %8896 = vmatpush2.bf16.msra.mxu0 %v8679
    %8897 = vmatprep.subr.bf16.mxu0 0
    %8898 = vmatpush2.bf16.msra.mxu0 %v8678
    %8899 = vmatprep.subr.bf16.mxu0 0
    %8900 = vmatpush2.bf16.msra.mxu0 %v8677
    %8901 = vmatprep.mubr.bf16.mxu0 %v8193
    %8902 = vmatmul.mubr.bf16.gmra.mxu0 %v8091
    %v8903 = vpop.f32.mrf.mxu0
    %v8904 = vadd.f32 %v8840, %v8903
    %v8905 = vpop.f32.mrf.mxu0
    %v8906 = vpop.f32.mrf.mxu0
    %v8907 = vadd.f32 %v8843, %v8906
    %v8908 = vpop.f32.mrf.mxu0
    %8909 = vmatprep.mubr.bf16.mxu0 %v8197
    %8910 = vmatmul.mubr.bf16.gmra.mxu0 %v8092
    %v8911 = vpop.f32.mrf.mxu0
    %v8912 = vadd.f32 %v8848, %v8911
    %v8913 = vpop.f32.mrf.mxu0
    %v8914 = vpop.f32.mrf.mxu0
    %v8915 = vadd.f32 %v8851, %v8914
    %v8916 = vpop.f32.mrf.mxu0
    %8917 = vmatprep.mubr.bf16.mxu0 %v8201
    %8918 = vmatmul.mubr.bf16.gmra.mxu0 %v8093
    %v8919 = vpop.f32.mrf.mxu0
    %v8920 = vadd.f32 %v8856, %v8919
    %v8921 = vpop.f32.mrf.mxu0
    %v8922 = vpop.f32.mrf.mxu0
    %v8923 = vadd.f32 %v8859, %v8922
    %v8924 = vpop.f32.mrf.mxu0
    %8925 = vmatprep.mubr.bf16.mxu0 %v8205
    %8926 = vmatmul.mubr.bf16.gmra.mxu0 %v8094
    %v8927 = vpop.f32.mrf.mxu0
    %v8928 = vadd.f32 %v8864, %v8927
    %v8929 = vpop.f32.mrf.mxu0
    %v8930 = vpop.f32.mrf.mxu0
    %v8931 = vpop.f32.mrf.mxu0
    %8932 = vdwg.mxu0
    %8933 = vmatprep.subr.bf16.mxu0 0
    %8934 = vmatpush1.bf16.msra.mxu0 %v8692
    %8935 = vmatprep.subr.bf16.mxu0 0
    %8936 = vmatpush1.bf16.msra.mxu0 %v8691
    %8937 = vmatprep.subr.bf16.mxu0 0
    %8938 = vmatpush1.bf16.msra.mxu0 %v8690
    %8939 = vmatprep.subr.bf16.mxu0 0
    %8940 = vmatpush1.bf16.msra.mxu0 %v8689
    %8941 = vmatprep.subr.bf16.mxu0 0
    %8942 = vmatpush1.bf16.msra.mxu0 %v8688
    %8943 = vmatprep.subr.bf16.mxu0 0
    %8944 = vmatpush1.bf16.msra.mxu0 %v8687
    %8945 = vmatprep.subr.bf16.mxu0 0
    %8946 = vmatpush1.bf16.msra.mxu0 %v8686
    %8947 = vmatprep.subr.bf16.mxu0 0
    %8948 = vmatpush1.bf16.msra.mxu0 %v8685
    %8949 = vmatprep.subr.bf16.mxu0 0
    %8950 = vmatpush2.bf16.msra.mxu0 %v8700
    %8951 = vmatprep.subr.bf16.mxu0 0
    %8952 = vmatpush2.bf16.msra.mxu0 %v8699
    %8953 = vmatprep.subr.bf16.mxu0 0
    %8954 = vmatpush2.bf16.msra.mxu0 %v8698
    %8955 = vmatprep.subr.bf16.mxu0 0
    %8956 = vmatpush2.bf16.msra.mxu0 %v8697
    %8957 = vmatprep.subr.bf16.mxu0 0
    %8958 = vmatpush2.bf16.msra.mxu0 %v8696
    %8959 = vmatprep.subr.bf16.mxu0 0
    %8960 = vmatpush2.bf16.msra.mxu0 %v8695
    %8961 = vmatprep.subr.bf16.mxu0 0
    %8962 = vmatpush2.bf16.msra.mxu0 %v8694
    %8963 = vmatprep.subr.bf16.mxu0 0
    %8964 = vmatpush2.bf16.msra.mxu0 %v8693
    %8965 = vmatprep.mubr.bf16.mxu0 %v8209
    %8966 = vmatmul.mubr.bf16.gmra.mxu0 %v8123
    %v8967 = vpop.f32.mrf.mxu0
    %v8968 = vadd.f32 %v8904, %v8967
    %v8969 = vpop.f32.mrf.mxu0
    %v8970 = vpop.f32.mrf.mxu0
    %v8971 = vadd.f32 %v8907, %v8970
    %v8972 = vpop.f32.mrf.mxu0
    %8973 = vmatprep.mubr.bf16.mxu0 %v8213
    %8974 = vmatmul.mubr.bf16.gmra.mxu0 %v8124
    %v8975 = vpop.f32.mrf.mxu0
    %v8976 = vadd.f32 %v8912, %v8975
    %v8977 = vpop.f32.mrf.mxu0
    %v8978 = vpop.f32.mrf.mxu0
    %v8979 = vadd.f32 %v8915, %v8978
    %v8980 = vpop.f32.mrf.mxu0
    %8981 = vmatprep.mubr.bf16.mxu0 %v8217
    %8982 = vmatmul.mubr.bf16.gmra.mxu0 %v8125
    %v8983 = vpop.f32.mrf.mxu0
    %v8984 = vadd.f32 %v8920, %v8983
    %v8985 = vpop.f32.mrf.mxu0
    %v8986 = vpop.f32.mrf.mxu0
    %v8987 = vadd.f32 %v8923, %v8986
    %v8988 = vpop.f32.mrf.mxu0
    %8989 = vmatprep.mubr.bf16.mxu0 %v8221
    %8990 = vmatmul.mubr.bf16.gmra.mxu0 %v8126
    %v8991 = vpop.f32.mrf.mxu0
    %v8992 = vadd.f32 %v8928, %v8991
    %v8993 = vpop.f32.mrf.mxu0
    %v8994 = vpop.f32.mrf.mxu0
    %v8995 = vpop.f32.mrf.mxu0
    %8996 = vdwg.mxu0
    %8997 = vmatprep.subr.bf16.mxu0 0
    %8998 = vmatpush1.bf16.msra.mxu0 %v8708
    %8999 = vmatprep.subr.bf16.mxu0 0
    %9000 = vmatpush1.bf16.msra.mxu0 %v8707
    %9001 = vmatprep.subr.bf16.mxu0 0
    %9002 = vmatpush1.bf16.msra.mxu0 %v8706
    %9003 = vmatprep.subr.bf16.mxu0 0
    %9004 = vmatpush1.bf16.msra.mxu0 %v8705
    %9005 = vmatprep.subr.bf16.mxu0 0
    %9006 = vmatpush1.bf16.msra.mxu0 %v8704
    %9007 = vmatprep.subr.bf16.mxu0 0
    %9008 = vmatpush1.bf16.msra.mxu0 %v8703
    %9009 = vmatprep.subr.bf16.mxu0 0
    %9010 = vmatpush1.bf16.msra.mxu0 %v8702
    %9011 = vmatprep.subr.bf16.mxu0 0
    %9012 = vmatpush1.bf16.msra.mxu0 %v8701
    %9013 = vmatprep.subr.bf16.mxu0 0
    %9014 = vmatpush2.bf16.msra.mxu0 %v8716
    %9015 = vmatprep.subr.bf16.mxu0 0
    %9016 = vmatpush2.bf16.msra.mxu0 %v8715
    %9017 = vmatprep.subr.bf16.mxu0 0
    %9018 = vmatpush2.bf16.msra.mxu0 %v8714
    %9019 = vmatprep.subr.bf16.mxu0 0
    %9020 = vmatpush2.bf16.msra.mxu0 %v8713
    %9021 = vmatprep.subr.bf16.mxu0 0
    %9022 = vmatpush2.bf16.msra.mxu0 %v8712
    %9023 = vmatprep.subr.bf16.mxu0 0
    %9024 = vmatpush2.bf16.msra.mxu0 %v8711
    %9025 = vmatprep.subr.bf16.mxu0 0
    %9026 = vmatpush2.bf16.msra.mxu0 %v8710
    %9027 = vmatprep.subr.bf16.mxu0 0
    %9028 = vmatpush2.bf16.msra.mxu0 %v8709
    %9029 = vmatprep.mubr.bf16.mxu0 %v8044
    %9030 = vmatmul.mubr.bf16.gmra.mxu0 %v8167
    %v9031 = vpop.f32.mrf.mxu0
    %v9032 = vadd.f32 %v8968, %v9031
    %v9033 = vpop.f32.mrf.mxu0
    %v9034 = vpop.f32.mrf.mxu0
    %v9035 = vadd.f32 %v8971, %v9034
    %v9036 = vpop.f32.mrf.mxu0
    %9037 = vmatprep.mubr.bf16.mxu0 %v8046
    %9038 = vmatmul.mubr.bf16.gmra.mxu0 %v8168
    %v9039 = vpop.f32.mrf.mxu0
    %v9040 = vadd.f32 %v8976, %v9039
    %v9041 = vpop.f32.mrf.mxu0
    %v9042 = vpop.f32.mrf.mxu0
    %v9043 = vadd.f32 %v8979, %v9042
    %v9044 = vpop.f32.mrf.mxu0
    %9045 = vmatprep.mubr.bf16.mxu0 %v8048
    %9046 = vmatmul.mubr.bf16.gmra.mxu0 %v8169
    %v9047 = vpop.f32.mrf.mxu0
    %v9048 = vadd.f32 %v8984, %v9047
    %v9049 = vpop.f32.mrf.mxu0
    %v9050 = vpop.f32.mrf.mxu0
    %v9051 = vadd.f32 %v8987, %v9050
    %v9052 = vpop.f32.mrf.mxu0
    %9053 = vmatprep.mubr.bf16.mxu0 %v8050
    %9054 = vmatmul.mubr.bf16.gmra.mxu0 %v8170
    %v9055 = vpop.f32.mrf.mxu0
    %v9056 = vadd.f32 %v8992, %v9055
    %v9057 = vpop.f32.mrf.mxu0
    %v9058 = vpop.f32.mrf.mxu0
    %v9059 = vpop.f32.mrf.mxu0
    %9060 = vdwg.mxu0
    %9061 = vmatprep.subr.bf16.mxu0 0
    %9062 = vmatpush1.bf16.msra.mxu0 0
    %9063 = vmatprep.subr.bf16.mxu0 0
    %9064 = vmatpush1.bf16.msra.mxu0 0
    %9065 = vmatprep.subr.bf16.mxu0 0
    %9066 = vmatpush1.bf16.msra.mxu0 %v8722
    %9067 = vmatprep.subr.bf16.mxu0 0
    %9068 = vmatpush1.bf16.msra.mxu0 %v8721
    %9069 = vmatprep.subr.bf16.mxu0 0
    %9070 = vmatpush1.bf16.msra.mxu0 %v8720
    %9071 = vmatprep.subr.bf16.mxu0 0
    %9072 = vmatpush1.bf16.msra.mxu0 %v8719
    %9073 = vmatprep.subr.bf16.mxu0 0
    %9074 = vmatpush1.bf16.msra.mxu0 %v8718
    %9075 = vmatprep.subr.bf16.mxu0 0
    %9076 = vmatpush1.bf16.msra.mxu0 %v8717
    %9077 = vmatprep.subr.bf16.mxu0 0
    %9078 = vmatpush2.bf16.msra.mxu0 0
    %9079 = vmatprep.subr.bf16.mxu0 0
    %9080 = vmatpush2.bf16.msra.mxu0 0
    %9081 = vmatprep.subr.bf16.mxu0 0
    %9082 = vmatpush2.bf16.msra.mxu0 0
    %9083 = vmatprep.subr.bf16.mxu0 0
    %9084 = vmatpush2.bf16.msra.mxu0 0
    %9085 = vmatprep.subr.bf16.mxu0 0
    %9086 = vmatpush2.bf16.msra.mxu0 0
    %9087 = vmatprep.subr.bf16.mxu0 0
    %9088 = vmatpush2.bf16.msra.mxu0 0
    %9089 = vmatprep.subr.bf16.mxu0 0
    %9090 = vmatpush2.bf16.msra.mxu0 0
    %9091 = vmatprep.subr.bf16.mxu0 0
    %9092 = vmatpush2.bf16.msra.mxu0 0
    %9093 = vmatprep.mubr.bf16.mxu0 0
    %9094 = vmatmul.mubr.bf16.gmra.mxu0 %v8794
    %v9095 = vpop.f32.mrf.mxu0
    %v9096 = vadd.f32 %v9032, %v9095
    %v9097 = vpop.f32.mrf.mxu0
    %v9098 = vpop.f32.mrf.mxu0
    %v9099 = vadd.f32 %v9035, %v9098
    %v9100 = vpop.f32.mrf.mxu0
    %9101 = vmatprep.mubr.bf16.mxu0 0
    %9102 = vmatmul.mubr.bf16.gmra.mxu0 %v8797
    %v9103 = vpop.f32.mrf.mxu0
    %v9104 = vadd.f32 %v9040, %v9103
    %v9105 = vpop.f32.mrf.mxu0
    %v9106 = vpop.f32.mrf.mxu0
    %v9107 = vadd.f32 %v9043, %v9106
    %v9108 = vpop.f32.mrf.mxu0
    %9109 = vmatprep.mubr.bf16.mxu0 0
    %9110 = vmatmul.mubr.bf16.gmra.mxu0 %v8800
    %v9111 = vpop.f32.mrf.mxu0
    %v9112 = vadd.f32 %v9048, %v9111
    %v9113 = vpop.f32.mrf.mxu0
    %v9114 = vpop.f32.mrf.mxu0
    %v9115 = vadd.f32 %v9051, %v9114
    %v9116 = vpop.f32.mrf.mxu0
    %9117 = vmatprep.mubr.bf16.mxu0 0
    %9118 = vmatmul.mubr.bf16.gmra.mxu0 %v8803
    %v9119 = vpop.f32.mrf.mxu0
    %v9120 = vadd.f32 %v9056, %v9119
    %v9121 = vpop.f32.mrf.mxu0
    %v9122 = vpop.f32.mrf.mxu0
    %v9123 = vpop.f32.mrf.mxu0
    %9124 = vdwg.mxu0
    %v9125 = vtanh.pop %v9096
    %v9126 = vtanh.pop %v9099
    %v9127 = vtanh.pop %v9104
    %v9128 = vtanh.pop %v9107
    %v9129 = vtanh.pop %v9112
    %v9130 = vtanh.pop %v9115
    %v9131 = vtanh.pop %v9120
    %9132 = vst.msk [vmem:[#allocation9] sm:$0xff] %vm1861, %v9125
    %9133 = vst.msk [vmem:[#allocation9 + $0x8] sm:$0xff] %vm1861, %v9126
    %9134 = vst.msk [vmem:[#allocation9 + $0x10] sm:$0xff] %vm1861, %v9127
    %9135 = vst.msk [vmem:[#allocation9 + $0x18] sm:$0xff] %vm1861, %v9128
    %9136 = vst.msk [vmem:[#allocation9 + $0x20] sm:$0xff] %vm1861, %v9129
    %9137 = vst.msk [vmem:[#allocation9 + $0x28] sm:$0xff] %vm1861, %v9130
    %9138 = vst.msk [vmem:[#allocation9 + $0x30] sm:$0xff] %vm1861, %v9131
    %9139 = vst [vmem:[#allocation11] sm:$0x3] %v4947
    %9140 = vst [vmem:[#allocation13] sm:$0x3] %v4949
    // Predicated region
    $region228: #{autoencoder_forward.1} parent=1 // pred_check
      _
    $region229: #{autoencoder_forward.1} parent=1 // pred_check_branch
      %9142 = sbr.rel (0) target = $region231
    $region230: #{autoencoder_forward.1} parent=1 // pred_region
      %s9144 = ssub.s32 896, 896
      %9145 = vsyncadd [#allocation10], %s9144
      %s9146 = sshll.u32 [#allocation9], 4
      %s9147 = int_to_ptr.vmem [resolvable:$true] %s9146
      %9152 = dma.vmem_to_hbm [thread:$0]  %s9147, 896, %s19, [#allocation10], 128, 128, 8
    $region231: #{autoencoder_forward.1} parent=1 // pred_fallthru
      _
    // Predicated region
    $region232: #{autoencoder_forward.1} parent=1 // pred_check
      _
    $region233: #{autoencoder_forward.1} parent=1 // pred_check_branch
      %9154 = sbr.rel (0) target = $region235
    $region234: #{autoencoder_forward.1} parent=1 // pred_region
      %s9156 = ssub.s32 32, 32
      %9157 = vsyncadd [#allocation12], %s9156
      %s9159 = sshll.u32 [#allocation11], 4
      %s9160 = int_to_ptr.vmem [resolvable:$true] %s9159
      %9162 = dma.vmem_to_hbm [thread:$0]  %s9160, 32, %s20, [#allocation12]
    $region235: #{autoencoder_forward.1} parent=1 // pred_fallthru
      _
    // Predicated region
    $region236: #{autoencoder_forward.1} parent=1 // pred_check
      _
    $region237: #{autoencoder_forward.1} parent=1 // pred_check_branch
      %9164 = sbr.rel (0) target = $region239
    $region238: #{autoencoder_forward.1} parent=1 // pred_region
      %s9166 = ssub.s32 32, 32
      %9167 = vsyncadd [#allocation12], %s9166
      %s9169 = sshll.u32 [#allocation13], 4
      %s9170 = int_to_ptr.vmem [resolvable:$true] %s9169
      %9172 = dma.vmem_to_hbm [thread:$0]  %s9170, 32, %s21, [#allocation12]
    $region239: #{autoencoder_forward.1} parent=1 // pred_fallthru
      _
    // Predicated region
    $region240: #{autoencoder_forward.1} parent=1 // pred_check
      _
    $region241: #{autoencoder_forward.1} parent=1 // pred_check_branch
      %9174 = sbr.rel (0) target = $region243
    $region242: #{autoencoder_forward.1} parent=1 // pred_region
      %9175 = dma.done [#allocation10], 896
    $region243: #{autoencoder_forward.1} parent=1 // pred_fallthru
      _
    // Predicated region
    $region244: #{autoencoder_forward.1} parent=1 // pred_check
      _
    $region245: #{autoencoder_forward.1} parent=1 // pred_check_branch
      %9177 = sbr.rel (0) target = $region247
    $region246: #{autoencoder_forward.1} parent=1 // pred_region
      %9178 = dma.done [#allocation12], 32
    $region247: #{autoencoder_forward.1} parent=1 // pred_fallthru
      _
    // Predicated region
    $region248: #{autoencoder_forward.1} parent=1 // pred_check
      _
    $region249: #{autoencoder_forward.1} parent=1 // pred_check_branch
      %9180 = sbr.rel (0) target = $region251
    $region250: #{autoencoder_forward.1} parent=1 // pred_region
      %9181 = dma.done [#allocation12], 32
    $region251: #{autoencoder_forward.1} parent=1 // pred_fallthru
      _
    %9182 = vsyncpa [#allocation10], 1
    %9183 = vsyncpa [#allocation12], 1
  %9184 = vsyncmov [#allocation8]
  %s9185 = vpop.sfrf %9184
  %p9186 = scmp.eq.s32.totalorder %s9185, 0
  %p9187 = pneg %p9186
  %9189 = shalt.err (%p9187)
  %s9190 = scalar_lea.sflag [#allocation8], 1
  %9191 = vsyncmov %s9190
  %s9192 = vpop.sfrf %9191
  %p9193 = scmp.eq.s32.totalorder %s9192, 0
  %p9194 = pneg %p9193
  %9196 = shalt.err (%p9194)
  %s9197 = scalar_lea.sflag [#allocation8], 2
  %9198 = vsyncmov %s9197
  %s9199 = vpop.sfrf %9198
  %p9200 = scmp.eq.s32.totalorder %s9199, 0
  %p9201 = pneg %p9200
  %9203 = shalt.err (%p9201)
  %s9204 = scalar_lea.sflag [#allocation8], 3
  %9205 = vsyncmov %s9204
  %s9206 = vpop.sfrf %9205
  %p9207 = scmp.eq.s32.totalorder %s9206, 0
  %p9208 = pneg %p9207
  %9210 = shalt.err (%p9208)
  %s9211 = scalar_lea.sflag [#allocation8], 4
  %9212 = vsyncmov %s9211
  %s9213 = vpop.sfrf %9212
  %p9214 = scmp.eq.s32.totalorder %s9213, 0
  %p9215 = pneg %p9214
  %9217 = shalt.err (%p9215)

</llo_original>
